<compile_context>
chip_gen: v7x
topology: tpu7x:2x2x1
jax: 0.10.0
libtpu: 0.0.40
codegen_flags: <defaults>
</compile_context>

<pallas_src>
import math

import jax
import jax.numpy as jnp
from jax import lax
from jax.experimental import pallas as pl
from jax.experimental.pallas import tpu as pltpu

NUM_HEADS = 8
LN_EPS = 1e-5
PAD_OUT = 128  # head output padded to a full lane width inside the kernel

# Row indices inside the stacked (NUM_VECS, hidden) parameter-vector input.
(V_B1, V_G1, V_BE1, V_B2, V_G2, V_BE2, V_BO,
 V_NG1, V_NB1, V_B3, V_B4, V_NG2, V_NB2, V_B5) = range(14)
NUM_VECS = 14
VEC_NAMES = ["b1", "g1", "be1", "b2", "g2", "be2", "bo",
             "ng1", "nb1", "b3", "b4", "ng2", "nb2", "b5"]


# ----------------------------------------------------------------------------
# Pallas kernel: full forward network for a tile of Bt batch elements
# ----------------------------------------------------------------------------
def _layernorm(x, g, b):
    mu = jnp.mean(x, axis=-1, keepdims=True)
    var = jnp.mean((x - mu) ** 2, axis=-1, keepdims=True)
    return (x - mu) * lax.rsqrt(var + LN_EPS) * g + b


def label_decoder_kernel(
    x_ref, pos_ref, mask_ref,
    w1_ref, wsq_ref, wqkv_ref, wo_ref, bqkv_ref, vecs_ref, w6_ref, b6_ref,
    out_ref,
    ctx_ref,
):
    bt, n, in_dim = x_ref.shape
    hid = pos_ref.shape[-1]
    nh = NUM_HEADS
    hd = hid // nh
    m = bt * n
    f32 = jnp.float32
    bf16 = jnp.bfloat16

    vecs = vecs_ref[...]  # (NUM_VECS, hid) f32

    def vrow(i):
        return vecs[i:i + 1, :]  # (1, hid)

    # ---- input_proj on the flattened (Bt*N, C) slab --------------------------
    x2 = x_ref[...].reshape(m, in_dim)                   # already bf16
    h = jnp.dot(x2, w1_ref[...], preferred_element_type=f32) + vrow(V_B1)
    h = jnp.maximum(_layernorm(h, vrow(V_G1), vrow(V_BE1)), 0.0)
    h = jnp.dot(h.astype(bf16), wsq_ref[0], preferred_element_type=f32) + vrow(V_B2)
    h = jnp.maximum(_layernorm(h, vrow(V_G2), vrow(V_BE2)), 0.0)
    h = h + pos_ref[...].reshape(m, hid).astype(f32)

    # ---- multi-head self-attention (key-padding mask) ------------------------
    # One fused (m, hid) @ (hid, 3*hid) projection for q/k/v of all heads.
    # 1/sqrt(hd) is already folded into wq/bq at pack time.
    h_bf = h.astype(bf16)
    qkv = jnp.dot(h_bf, wqkv_ref[...], preferred_element_type=f32) + bqkv_ref[...]
    qkv_bf = qkv.astype(bf16)                            # (m, 3*hid)

    # additive key-padding bias (0 / -1e9), broadcast over query rows & heads
    mb = mask_ref[...].astype(f32) * (-1e9)              # (bt, 1, n)

    for hi in range(nh):
        lo = hi * hd
        q_h = qkv_bf[:, lo:lo + hd].reshape(bt, n, hd)
        k_h = qkv_bf[:, hid + lo:hid + lo + hd].reshape(bt, n, hd)
        v_h = qkv_bf[:, 2 * hid + lo:2 * hid + lo + hd].reshape(bt, n, hd)

        s = jnp.einsum("bqd,bkd->bqk", q_h, k_h, preferred_element_type=f32)
        s = s + mb                                       # mask keys
        s = s - jnp.max(s, axis=-1, keepdims=True)
        e = jnp.exp(s)
        p = e * pl.reciprocal(jnp.sum(e, axis=-1, keepdims=True), approx=True)
        ctx_h = jnp.einsum("bqk,bkd->bqd", p.astype(bf16), v_h,
                           preferred_element_type=f32)
        # lane layout of ctx_ref matches the PyTorch head-concat order
        ctx_ref[:, lo:lo + hd] = ctx_h.reshape(m, hd)

    # Single full-width output projection (K = hid) over the concatenated heads.
    attn = jnp.dot(ctx_ref[...].astype(bf16), wo_ref[...],
                   preferred_element_type=f32) + vrow(V_BO)

    # residual + norm1
    h = _layernorm(h + attn, vrow(V_NG1), vrow(V_NB1))

    # mlp + residual + norm2
    mlp = jnp.maximum(
        jnp.dot(h.astype(bf16), wsq_ref[1], preferred_element_type=f32) + vrow(V_B3),
        0.0)
    mlp = jnp.dot(mlp.astype(bf16), wsq_ref[2], preferred_element_type=f32) + vrow(V_B4)
    h = _layernorm(mlp + h, vrow(V_NG2), vrow(V_NB2))

    # head: Linear -> ReLU -> Linear (output padded to PAD_OUT lanes, bf16 store)
    hh = jnp.maximum(
        jnp.dot(h.astype(bf16), wsq_ref[3], preferred_element_type=f32) + vrow(V_B5),
        0.0)
    logits = jnp.dot(hh.astype(bf16), w6_ref[...], preferred_element_type=f32) + b6_ref[...]
    out_ref[...] = logits.reshape(bt, n, out_ref.shape[-1]).astype(out_ref.dtype)


# ----------------------------------------------------------------------------
# Parameter packing (layout plumbing done once, outside the kernel)
# ----------------------------------------------------------------------------
def pack_params(params, num_heads=NUM_HEADS, pad_out=PAD_OUT):
    hid = params["w2"].shape[0]
    hd = hid // num_heads
    scale = 1.0 / math.sqrt(hd)
    bf16 = jnp.bfloat16
    f32 = jnp.float32

    w1 = params["w1"].astype(bf16)                                     # (in, hid)
    wsq = jnp.stack([params["w2"], params["w3"],
                     params["w4"], params["w5"]]).astype(bf16)         # (4, hid, hid)

    # Fused QKV weight; attention scale folded into the q slice.
    wqkv = jnp.concatenate(
        [params["wq"] * scale, params["wk"], params["wv"]], axis=1
    ).astype(bf16)                                                     # (hid, 3*hid)
    bqkv = jnp.concatenate(
        [params["bq"].reshape(1, hid) * scale,
         params["bk"].reshape(1, hid),
         params["bv"].reshape(1, hid)], axis=1
    ).astype(f32)                                                      # (1, 3*hid)

    wo = params["wo"].astype(bf16)                                     # (hid, hid)
    vecs = jnp.concatenate(
        [params[k].reshape(1, hid) for k in VEC_NAMES], axis=0
    ).astype(f32)                                                      # (NUM_VECS, hid)

    out_dim = params["w6"].shape[-1]
    w6 = jnp.pad(params["w6"], ((0, 0), (0, pad_out - out_dim))).astype(bf16)
    b6 = jnp.pad(params["b6"].reshape(1, -1),
                 ((0, 0), (0, pad_out - out_dim))).astype(f32)
    return w1, wsq, wqkv, wo, bqkv, vecs, w6, b6


def _pick_batch_tile(batch, n, target_rows=512):
    """Largest divisor of `batch` with roughly target_rows rows per grid step,
    capped so the grid has >= 2 steps when B > 1 (both v7x TensorCores busy)."""
    want = max(1, (target_rows + n - 1) // n)
    bt = min(batch, want)
    if batch > 1:
        bt = min(bt, max(1, batch // 2))
    while batch % bt:
        bt -= 1
    return bt


def _default_vmem_limit():
    # cap/2: 64 MiB on v5e/v6e (128 MiB physical), 32 MiB per core on v7x.
    try:
        cap = int(pltpu.get_tpu_info().vmem_capacity_bytes)
        return int(min(96 * 1024 * 1024, max(32 * 1024 * 1024, cap // 2)))
    except Exception:
        return 32 * 1024 * 1024


def run_decoder_net(x_bnc, pos_bnh, mask, params):
    """x_bnc: (B, N, IN), pos_bnh: (B, N, HID), mask: (B, N) bool -> (B, N, PAD_OUT) bf16."""
    B, N, in_dim = x_bnc.shape
    hid = pos_bnh.shape[-1]
    bt = _pick_batch_tile(B, N)
    grid = (B // bt,)

    weights = pack_params(params)
    mask_i32 = mask.astype(jnp.int32).reshape(B, 1, N)   # -1e9 bias built in-kernel

    args = (x_bnc.astype(jnp.bfloat16), pos_bnh.astype(jnp.bfloat16),
            mask_i32, *weights)

    def _call(buffer_weights):
        def const_spec(w):
            idx = (lambda r: (lambda b: (0,) * r))(w.ndim)
            if buffer_weights:
                # weights are grid-constant -> single-buffer them to save VMEM
                return pl.BlockSpec(w.shape, idx, pipeline_mode=pl.Buffered(1))
            return pl.BlockSpec(w.shape, idx)

        in_specs = [
            pl.BlockSpec((bt, N, in_dim), lambda b: (b, 0, 0)),
            pl.BlockSpec((bt, N, hid), lambda b: (b, 0, 0)),
            pl.BlockSpec((bt, 1, N), lambda b: (b, 0, 0)),
        ] + [const_spec(w) for w in weights]

        return pl.pallas_call(
            label_decoder_kernel,
            out_shape=jax.ShapeDtypeStruct((B, N, PAD_OUT), jnp.bfloat16),
            grid=grid,
            in_specs=in_specs,
            out_specs=pl.BlockSpec((bt, N, PAD_OUT), lambda b: (b, 0, 0)),
            scratch_shapes=[pltpu.VMEM((bt * N, hid), jnp.float32)],
            compiler_params=pltpu.CompilerParams(
                dimension_semantics=("parallel",),
                vmem_limit_bytes=_default_vmem_limit(),
            ),
        )(*args)

    try:
        return _call(True)
    except Exception:
        # TODO(synk): some jax versions reject pl.Buffered on grid-constant
        # blocks; fall back to default double-buffered weight specs.
        return _call(False)


# ----------------------------------------------------------------------------
# Plain-JAX glue (pos embedding, loss, accuracy, mask update)
# ----------------------------------------------------------------------------
def pos_embedding_sine(coords, d_model, temperature=10000.0):
    """coords: (B, 3, N) -> (B, N, d_model). Standard sine coord embedding."""
    # TODO(synk): exact PositionEmbeddingCoordsSine variant not provided; this is
    # a standard 3DETR-style sine embedding (deterministic, no learned params).
    B, ndim, N = coords.shape
    d_per = (d_model // ndim // 2) * 2
    rems = d_model - d_per * ndim
    embeds = []
    for d in range(ndim):
        cdim = d_per + (2 if rems > 0 else 0)
        if rems > 0:
            rems -= 2
        dim_t = temperature ** (
            2.0 * (jnp.arange(cdim, dtype=jnp.float32) // 2) / cdim
        )
        raw = coords[:, d, :]  # (B, N)
        p = raw[..., None] / dim_t  # (B, N, cdim)
        emb = jnp.stack(
            [jnp.sin(p[..., 0::2]), jnp.cos(p[..., 1::2])], axis=-1
        ).reshape(B, N, cdim)
        embeds.append(emb)
    return jnp.concatenate(embeds, axis=-1)  # (B, N, d_model)


def _bce_with_logits(logits, targets):
    return (
        jnp.maximum(logits, 0.0)
        - logits * targets
        + jnp.log1p(jnp.exp(-jnp.abs(logits)))
    )


def label_decoder_forward(
    accurate_labels, points_coor, points_fea, mask, params,
    num_classes=2, replace_mask=True, use_HNM=True,
):
    B, _, N = points_coor.shape
    x = jnp.transpose(points_fea, (0, 2, 1))  # (B, N, IN)
    pos = pos_embedding_sine(points_coor, params["w1"].shape[1])  # (B, N, HID)

    logits_pad = run_decoder_net(x, pos, mask, params)
    logits = logits_pad[..., :num_classes].astype(jnp.float32)  # (B, N, num_classes)

    valid = (accurate_labels >= 0) & (~mask)

    if use_HNM:
        # Static-shape formulation of hard-negative mining (masked top-k).
        flat_logits = logits.reshape(-1, num_classes)
        flat_dyn = (valid & (accurate_labels == 1)).reshape(-1)
        flat_stat = (valid & (accurate_labels == 0)).reshape(-1)
        n_dyn = jnp.sum(flat_dyn)
        n_stat = jnp.sum(flat_stat)
        k = jnp.minimum(3 * n_dyn, n_stat)

        ratio = jax.nn.softmax(flat_logits, axis=-1)[:, 1]
        ratio_m = jnp.where(flat_stat, ratio, -jnp.inf)
        order = jnp.argsort(-ratio_m)
        rank = jnp.zeros_like(order).at[order].set(
            jnp.arange(order.shape[0], dtype=order.dtype)
        )
        hard_neg = flat_stat & (rank < k)

        t_dyn = jax.nn.one_hot(1, num_classes, dtype=jnp.float32)
        t_stat = jax.nn.one_hot(0, num_classes, dtype=jnp.float32)
        loss_dyn = _bce_with_logits(flat_logits, t_dyn).sum(-1)
        loss_stat = _bce_with_logits(flat_logits, t_stat).sum(-1)
        total = jnp.sum(
            jnp.where(flat_dyn, loss_dyn, 0.0) + jnp.where(hard_neg, loss_stat, 0.0)
        )
        count = ((n_dyn + jnp.sum(hard_neg)) * num_classes).astype(jnp.float32)
        loss = total / jnp.maximum(count, 1.0)
    else:
        labels0 = jnp.where(valid, accurate_labels, 0)
        label_gt = jax.nn.one_hot(labels0, num_classes, dtype=jnp.float32)
        sample_weight = valid.astype(jnp.float32) / jnp.clip(
            jnp.sum(valid, axis=1, keepdims=True), 1
        )
        any_valid = jnp.any(valid, axis=1)
        batch_weight = any_valid.astype(jnp.float32) / jnp.clip(
            jnp.sum(any_valid), 1
        )
        loss_el = _bce_with_logits(logits, label_gt)
        loss = (loss_el * sample_weight[..., None]).sum(-1).sum(-1)
        loss = (loss * batch_weight).sum()

    pred = jnp.argmax(logits, axis=-1)
    accuracy = jnp.sum(((pred == accurate_labels) & valid).astype(jnp.float32)) / (
        jnp.maximum(jnp.sum(valid), 1).astype(jnp.float32)
    )

    dyn_mask = pred == 1
    too_many = jnp.sum(dyn_mask, axis=1) > 0.5 * N
    num_static = int(0.5 * N)
    _, static_idx = jax.lax.top_k(logits[:, :, 0], num_static)  # (B, num_static)
    clear = (
        jnp.zeros((B, N), dtype=bool)
        .at[jnp.arange(B)[:, None], static_idx]
        .set(True)
    )
    dyn_mask = jnp.where(too_many[:, None], dyn_mask & (~clear), dyn_mask)

    updated_mask = (mask | dyn_mask) if replace_mask else mask
    return loss, accuracy, updated_mask


# ----------------------------------------------------------------------------
# Deterministic parameter construction (synthetic weights, no checkpoint)
# ----------------------------------------------------------------------------
def init_params(key, in_dim, hidden, out_dim):
    ks = iter(jax.random.split(key, 12))

    def lin(k, i, o, scale=0.05):
        return jax.random.normal(k, (i, o), jnp.float32) * scale

    zeros_b = jnp.zeros((1, hidden), jnp.float32)
    ones_g = jnp.ones((1, hidden), jnp.float32)

    return dict(
        w1=lin(next(ks), in_dim, hidden), b1=zeros_b, g1=ones_g, be1=zeros_b,
        w2=lin(next(ks), hidden, hidden), b2=zeros_b, g2=ones_g, be2=zeros_b,
        wq=lin(next(ks), hidden, hidden), bq=zeros_b,
        wk=lin(next(ks), hidden, hidden), bk=zeros_b,
        wv=lin(next(ks), hidden, hidden), bv=zeros_b,
        wo=lin(next(ks), hidden, hidden), bo=zeros_b,
        ng1=ones_g, nb1=zeros_b,
        w3=lin(next(ks), hidden, hidden), b3=zeros_b,
        w4=lin(next(ks), hidden, hidden), b4=zeros_b,
        ng2=ones_g, nb2=zeros_b,
        w5=lin(next(ks), hidden, hidden), b5=zeros_b,
        w6=lin(next(ks), hidden, out_dim), b6=jnp.zeros((1, out_dim), jnp.float32),
    )


if __name__ == "__main__":
    B, N = 2, 8
    IN_DIM, HID, OUT = 128, 256, 2

    key = jax.random.PRNGKey(0)
    kc, kf, kp = jax.random.split(key, 3)

    points_coor = jax.random.normal(kc, (B, 3, N), jnp.float32)      # (B, 3, N)
    points_fea = jax.random.normal(kf, (B, IN_DIM, N), jnp.float32)  # (B, C, N)
    mask = jnp.zeros((B, N), dtype=bool).at[:, -2:].set(True)        # padded points
    accurate_labels = jnp.tile(
        jnp.array([0, 1, 0, 1, 0, -1, 1, 0], jnp.int32), (B, 1)
    )

    params = init_params(kp, IN_DIM, HID, OUT)

    loss, accuracy, updated_mask = label_decoder_forward(
        accurate_labels, points_coor, points_fea, mask, params,
        num_classes=OUT, replace_mask=True, use_HNM=True,
    )
    jax.block_until_ready((loss, accuracy, updated_mask))
    print("KERNEL_OK")
</pallas_src>

<mosaic_0001>
module attributes {stable_mosaic.version = 11 : i64} {
  func.func @label_decoder_kernel(%arg0: i32, %arg1: memref<1x8x128xbf16, #tpu.memory_space<vmem>>, %arg2: memref<1x8x256xbf16, #tpu.memory_space<vmem>>, %arg3: memref<1x1x8xi32, #tpu.memory_space<vmem>>, %arg4: memref<128x256xbf16, #tpu.memory_space<vmem>>, %arg5: memref<4x256x256xbf16, #tpu.memory_space<vmem>>, %arg6: memref<256x768xbf16, #tpu.memory_space<vmem>>, %arg7: memref<256x256xbf16, #tpu.memory_space<vmem>>, %arg8: memref<1x768xf32, #tpu.memory_space<vmem>>, %arg9: memref<14x256xf32, #tpu.memory_space<vmem>>, %arg10: memref<256x128xbf16, #tpu.memory_space<vmem>>, %arg11: memref<1x128xf32, #tpu.memory_space<vmem>>, %arg12: memref<1x8x128xbf16, #tpu.memory_space<vmem>>, %arg13: memref<8x256xf32, #tpu.memory_space<vmem>>) attributes {dimension_semantics = [#tpu.dimension_semantics<parallel>], iteration_bounds = array<i64: 2>, scalar_prefetch = 0 : i64, scratch_operands = 1 : i64, tpu.core_type = #tpu.core_type<tc>, window_params = [{transform_indices = @transform_0, window_bounds = array<i64: 1, 8, 128>}, {transform_indices = @transform_1, window_bounds = array<i64: 1, 8, 256>}, {transform_indices = @transform_2, window_bounds = array<i64: 1, 1, 8>}, {pipeline_mode = #tpu.pipeline_mode<synchronous>, transform_indices = @transform_3, window_bounds = array<i64: 128, 256>}, {pipeline_mode = #tpu.pipeline_mode<synchronous>, transform_indices = @transform_4, window_bounds = array<i64: 4, 256, 256>}, {pipeline_mode = #tpu.pipeline_mode<synchronous>, transform_indices = @transform_5, window_bounds = array<i64: 256, 768>}, {pipeline_mode = #tpu.pipeline_mode<synchronous>, transform_indices = @transform_6, window_bounds = array<i64: 256, 256>}, {pipeline_mode = #tpu.pipeline_mode<synchronous>, transform_indices = @transform_7, window_bounds = array<i64: 1, 768>}, {pipeline_mode = #tpu.pipeline_mode<synchronous>, transform_indices = @transform_8, window_bounds = array<i64: 14, 256>}, {pipeline_mode = #tpu.pipeline_mode<synchronous>, transform_indices = @transform_9, window_bounds = array<i64: 256, 128>}, {pipeline_mode = #tpu.pipeline_mode<synchronous>, transform_indices = @transform_10, window_bounds = array<i64: 1, 128>}, {transform_indices = @transform_11, window_bounds = array<i64: 1, 8, 128>}]} {
    %c0 = arith.constant 0 : index
    %c0_0 = arith.constant 0 : index
    %0 = vector.load %arg9[%c0, %c0_0] : memref<14x256xf32, #tpu.memory_space<vmem>>, vector<14x256xf32>
    %c0_1 = arith.constant 0 : index
    %c0_2 = arith.constant 0 : index
    %c0_3 = arith.constant 0 : index
    %1 = vector.load %arg1[%c0_1, %c0_2, %c0_3] : memref<1x8x128xbf16, #tpu.memory_space<vmem>>, vector<1x8x128xbf16>
    %2 = vector.shape_cast %1 : vector<1x8x128xbf16> to vector<8x128xbf16>
    %c0_4 = arith.constant 0 : index
    %c0_5 = arith.constant 0 : index
    %3 = vector.load %arg4[%c0_4, %c0_5] : memref<128x256xbf16, #tpu.memory_space<vmem>>, vector<128x256xbf16>
    %cst = arith.constant dense<0.000000e+00> : vector<8x256xf32>
    %4 = tpu.matmul %2, %3, %cst {dimension_numbers = #tpu.dot_dimension_numbers<[1], [0], [0], [1], [0, 0, 1, 1], [], []>} : vector<8x128xbf16>, vector<128x256xbf16>, vector<8x256xf32> -> vector<8x256xf32>
    %5 = vector.extract_strided_slice %0 {offsets = [0, 0], sizes = [1, 256], strides = [1, 1]} : vector<14x256xf32> to vector<1x256xf32>
    %6 = vector.broadcast %5 : vector<1x256xf32> to vector<8x256xf32>
    %7 = arith.addf %4, %6 : vector<8x256xf32>
    %8 = vector.extract_strided_slice %0 {offsets = [1, 0], sizes = [1, 256], strides = [1, 1]} : vector<14x256xf32> to vector<1x256xf32>
    %9 = vector.extract_strided_slice %0 {offsets = [2, 0], sizes = [1, 256], strides = [1, 1]} : vector<14x256xf32> to vector<1x256xf32>
    %cst_6 = arith.constant dense<0.000000e+00> : vector<8xf32>
    %10 = vector.multi_reduction <add>, %7, %cst_6 [1] : vector<8x256xf32> to vector<8xf32>
    %11 = vector.shape_cast %10 : vector<8xf32> to vector<8x1xf32>
    %cst_7 = arith.constant 2.560000e+02 : f32
    %12 = vector.broadcast %cst_7 : f32 to vector<8x1xf32>
    %13 = arith.divf %11, %12 : vector<8x1xf32>
    %14 = vector.broadcast %13 : vector<8x1xf32> to vector<8x256xf32>
    %15 = arith.subf %7, %14 : vector<8x256xf32>
    %16 = arith.mulf %15, %15 : vector<8x256xf32>
    %cst_8 = arith.constant dense<0.000000e+00> : vector<8xf32>
    %17 = vector.multi_reduction <add>, %16, %cst_8 [1] : vector<8x256xf32> to vector<8xf32>
    %18 = vector.shape_cast %17 : vector<8xf32> to vector<8x1xf32>
    %cst_9 = arith.constant 2.560000e+02 : f32
    %19 = vector.broadcast %cst_9 : f32 to vector<8x1xf32>
    %20 = arith.divf %18, %19 : vector<8x1xf32>
    %21 = vector.broadcast %13 : vector<8x1xf32> to vector<8x256xf32>
    %22 = arith.subf %7, %21 : vector<8x256xf32>
    %cst_10 = arith.constant 9.99999974E-6 : f32
    %23 = vector.broadcast %cst_10 : f32 to vector<8x1xf32>
    %24 = arith.addf %20, %23 : vector<8x1xf32>
    %25 = math.rsqrt %24 : vector<8x1xf32>
    %26 = vector.broadcast %25 : vector<8x1xf32> to vector<8x256xf32>
    %27 = arith.mulf %22, %26 : vector<8x256xf32>
    %28 = vector.broadcast %8 : vector<1x256xf32> to vector<8x256xf32>
    %29 = arith.mulf %27, %28 : vector<8x256xf32>
    %30 = vector.broadcast %9 : vector<1x256xf32> to vector<8x256xf32>
    %31 = arith.addf %29, %30 : vector<8x256xf32>
    %cst_11 = arith.constant 0.000000e+00 : f32
    %32 = vector.broadcast %cst_11 : f32 to vector<8x256xf32>
    %33 = arith.maximumf %31, %32 : vector<8x256xf32>
    %34 = arith.truncf %33 : vector<8x256xf32> to vector<8x256xbf16>
    %c0_12 = arith.constant 0 : index
    %c0_13 = arith.constant 0 : index
    %c0_14 = arith.constant 0 : index
    %35 = vector.load %arg5[%c0_12, %c0_13, %c0_14] : memref<4x256x256xbf16, #tpu.memory_space<vmem>>, vector<1x256x256xbf16>
    %36 = vector.shape_cast %35 : vector<1x256x256xbf16> to vector<256x256xbf16>
    %cst_15 = arith.constant dense<0.000000e+00> : vector<8x256xf32>
    %37 = tpu.matmul %34, %36, %cst_15 {dimension_numbers = #tpu.dot_dimension_numbers<[1], [0], [0], [1], [0, 0, 1, 1], [], []>} : vector<8x256xbf16>, vector<256x256xbf16>, vector<8x256xf32> -> vector<8x256xf32>
    %38 = vector.extract_strided_slice %0 {offsets = [3, 0], sizes = [1, 256], strides = [1, 1]} : vector<14x256xf32> to vector<1x256xf32>
    %39 = vector.broadcast %38 : vector<1x256xf32> to vector<8x256xf32>
    %40 = arith.addf %37, %39 : vector<8x256xf32>
    %41 = vector.extract_strided_slice %0 {offsets = [4, 0], sizes = [1, 256], strides = [1, 1]} : vector<14x256xf32> to vector<1x256xf32>
    %42 = vector.extract_strided_slice %0 {offsets = [5, 0], sizes = [1, 256], strides = [1, 1]} : vector<14x256xf32> to vector<1x256xf32>
    %cst_16 = arith.constant dense<0.000000e+00> : vector<8xf32>
    %43 = vector.multi_reduction <add>, %40, %cst_16 [1] : vector<8x256xf32> to vector<8xf32>
    %44 = vector.shape_cast %43 : vector<8xf32> to vector<8x1xf32>
    %cst_17 = arith.constant 2.560000e+02 : f32
    %45 = vector.broadcast %cst_17 : f32 to vector<8x1xf32>
    %46 = arith.divf %44, %45 : vector<8x1xf32>
    %47 = vector.broadcast %46 : vector<8x1xf32> to vector<8x256xf32>
    %48 = arith.subf %40, %47 : vector<8x256xf32>
    %49 = arith.mulf %48, %48 : vector<8x256xf32>
    %cst_18 = arith.constant dense<0.000000e+00> : vector<8xf32>
    %50 = vector.multi_reduction <add>, %49, %cst_18 [1] : vector<8x256xf32> to vector<8xf32>
    %51 = vector.shape_cast %50 : vector<8xf32> to vector<8x1xf32>
    %cst_19 = arith.constant 2.560000e+02 : f32
    %52 = vector.broadcast %cst_19 : f32 to vector<8x1xf32>
    %53 = arith.divf %51, %52 : vector<8x1xf32>
    %54 = vector.broadcast %46 : vector<8x1xf32> to vector<8x256xf32>
    %55 = arith.subf %40, %54 : vector<8x256xf32>
    %cst_20 = arith.constant 9.99999974E-6 : f32
    %56 = vector.broadcast %cst_20 : f32 to vector<8x1xf32>
    %57 = arith.addf %53, %56 : vector<8x1xf32>
    %58 = math.rsqrt %57 : vector<8x1xf32>
    %59 = vector.broadcast %58 : vector<8x1xf32> to vector<8x256xf32>
    %60 = arith.mulf %55, %59 : vector<8x256xf32>
    %61 = vector.broadcast %41 : vector<1x256xf32> to vector<8x256xf32>
    %62 = arith.mulf %60, %61 : vector<8x256xf32>
    %63 = vector.broadcast %42 : vector<1x256xf32> to vector<8x256xf32>
    %64 = arith.addf %62, %63 : vector<8x256xf32>
    %cst_21 = arith.constant 0.000000e+00 : f32
    %65 = vector.broadcast %cst_21 : f32 to vector<8x256xf32>
    %66 = arith.maximumf %64, %65 : vector<8x256xf32>
    %c0_22 = arith.constant 0 : index
    %c0_23 = arith.constant 0 : index
    %c0_24 = arith.constant 0 : index
    %67 = vector.load %arg2[%c0_22, %c0_23, %c0_24] : memref<1x8x256xbf16, #tpu.memory_space<vmem>>, vector<1x8x256xbf16>
    %68 = vector.shape_cast %67 : vector<1x8x256xbf16> to vector<8x256xbf16>
    %69 = arith.extf %68 : vector<8x256xbf16> to vector<8x256xf32>
    %70 = arith.addf %66, %69 : vector<8x256xf32>
    %71 = arith.truncf %70 : vector<8x256xf32> to vector<8x256xbf16>
    %c0_25 = arith.constant 0 : index
    %c0_26 = arith.constant 0 : index
    %72 = vector.load %arg6[%c0_25, %c0_26] : memref<256x768xbf16, #tpu.memory_space<vmem>>, vector<256x768xbf16>
    %cst_27 = arith.constant dense<0.000000e+00> : vector<8x768xf32>
    %73 = tpu.matmul %71, %72, %cst_27 {dimension_numbers = #tpu.dot_dimension_numbers<[1], [0], [0], [1], [0, 0, 1, 1], [], []>} : vector<8x256xbf16>, vector<256x768xbf16>, vector<8x768xf32> -> vector<8x768xf32>
    %c0_28 = arith.constant 0 : index
    %c0_29 = arith.constant 0 : index
    %74 = vector.load %arg8[%c0_28, %c0_29] : memref<1x768xf32, #tpu.memory_space<vmem>>, vector<1x768xf32>
    %75 = vector.broadcast %74 : vector<1x768xf32> to vector<8x768xf32>
    %76 = arith.addf %73, %75 : vector<8x768xf32>
    %77 = arith.truncf %76 : vector<8x768xf32> to vector<8x768xbf16>
    %c0_30 = arith.constant 0 : index
    %c0_31 = arith.constant 0 : index
    %c0_32 = arith.constant 0 : index
    %78 = vector.load %arg3[%c0_30, %c0_31, %c0_32] : memref<1x1x8xi32, #tpu.memory_space<vmem>>, vector<1x1x8xi32>
    %79 = arith.sitofp %78 : vector<1x1x8xi32> to vector<1x1x8xf32>
    %cst_33 = arith.constant -1.000000e+09 : f32
    %80 = vector.broadcast %cst_33 : f32 to vector<1x1x8xf32>
    %81 = arith.mulf %79, %80 : vector<1x1x8xf32>
    %82 = vector.extract_strided_slice %77 {offsets = [0, 0], sizes = [8, 32], strides = [1, 1]} : vector<8x768xbf16> to vector<8x32xbf16>
    %83 = vector.shape_cast %82 : vector<8x32xbf16> to vector<1x8x32xbf16>
    %84 = vector.extract_strided_slice %77 {offsets = [0, 256], sizes = [8, 32], strides = [1, 1]} : vector<8x768xbf16> to vector<8x32xbf16>
    %85 = vector.shape_cast %84 : vector<8x32xbf16> to vector<1x8x32xbf16>
    %86 = vector.extract_strided_slice %77 {offsets = [0, 512], sizes = [8, 32], strides = [1, 1]} : vector<8x768xbf16> to vector<8x32xbf16>
    %87 = vector.shape_cast %86 : vector<8x32xbf16> to vector<1x8x32xbf16>
    "tpu.trace_start"() <{level = 10 : i32, message = "bqd,bkd->bqk"}> : () -> ()
    %cst_34 = arith.constant dense<0.000000e+00> : vector<1x8x8xf32>
    %88 = tpu.matmul %83, %85, %cst_34 {dimension_numbers = #tpu.dot_dimension_numbers<[2], [2], [1], [1], [0, 0, 0, 1, 1, 1], [0], [0]>} : vector<1x8x32xbf16>, vector<1x8x32xbf16>, vector<1x8x8xf32> -> vector<1x8x8xf32>
    "tpu.trace_stop"() : () -> ()
    %89 = vector.broadcast %81 : vector<1x1x8xf32> to vector<1x8x8xf32>
    %90 = arith.addf %88, %89 : vector<1x8x8xf32>
    %cst_35 = arith.constant dense<0xFF800000> : vector<1x8xf32>
    %91 = vector.multi_reduction <maximumf>, %90, %cst_35 [2] : vector<1x8x8xf32> to vector<1x8xf32>
    %92 = vector.shape_cast %91 : vector<1x8xf32> to vector<1x8x1xf32>
    %93 = vector.broadcast %92 : vector<1x8x1xf32> to vector<1x8x8xf32>
    %94 = arith.subf %90, %93 : vector<1x8x8xf32>
    %95 = math.exp %94 : vector<1x8x8xf32>
    %cst_36 = arith.constant dense<0.000000e+00> : vector<1x8xf32>
    %96 = vector.multi_reduction <add>, %95, %cst_36 [2] : vector<1x8x8xf32> to vector<1x8xf32>
    %97 = vector.shape_cast %96 : vector<1x8xf32> to vector<1x8x1xf32>
    %98 = tpu.reciprocal %97 {approx = true} : vector<1x8x1xf32> -> vector<1x8x1xf32>
    %99 = vector.broadcast %98 : vector<1x8x1xf32> to vector<1x8x8xf32>
    %100 = arith.mulf %95, %99 : vector<1x8x8xf32>
    %101 = arith.truncf %100 : vector<1x8x8xf32> to vector<1x8x8xbf16>
    "tpu.trace_start"() <{level = 10 : i32, message = "bqk,bkd->bqd"}> : () -> ()
    %cst_37 = arith.constant dense<0.000000e+00> : vector<1x8x32xf32>
    %102 = tpu.matmul %101, %87, %cst_37 {dimension_numbers = #tpu.dot_dimension_numbers<[2], [1], [1], [2], [0, 0, 0, 1, 1, 2], [0], [0]>} : vector<1x8x8xbf16>, vector<1x8x32xbf16>, vector<1x8x32xf32> -> vector<1x8x32xf32>
    "tpu.trace_stop"() : () -> ()
    %103 = vector.shape_cast %102 : vector<1x8x32xf32> to vector<8x32xf32>
    %c0_38 = arith.constant 0 : index
    %c0_39 = arith.constant 0 : index
    %104 = vector.load %arg13[%c0_38, %c0_39] : memref<8x256xf32, #tpu.memory_space<vmem>>, vector<8x32xf32>
    tpu.vector_store %arg13[%c0_38, %c0_39], %103 {strides = array<i32>} : memref<8x256xf32, #tpu.memory_space<vmem>>, vector<8x32xf32>,
    %105 = vector.extract_strided_slice %77 {offsets = [0, 32], sizes = [8, 32], strides = [1, 1]} : vector<8x768xbf16> to vector<8x32xbf16>
    %106 = vector.shape_cast %105 : vector<8x32xbf16> to vector<1x8x32xbf16>
    %107 = vector.extract_strided_slice %77 {offsets = [0, 288], sizes = [8, 32], strides = [1, 1]} : vector<8x768xbf16> to vector<8x32xbf16>
    %108 = vector.shape_cast %107 : vector<8x32xbf16> to vector<1x8x32xbf16>
    %109 = vector.extract_strided_slice %77 {offsets = [0, 544], sizes = [8, 32], strides = [1, 1]} : vector<8x768xbf16> to vector<8x32xbf16>
    %110 = vector.shape_cast %109 : vector<8x32xbf16> to vector<1x8x32xbf16>
    "tpu.trace_start"() <{level = 10 : i32, message = "bqd,bkd->bqk"}> : () -> ()
    %cst_40 = arith.constant dense<0.000000e+00> : vector<1x8x8xf32>
    %111 = tpu.matmul %106, %108, %cst_40 {dimension_numbers = #tpu.dot_dimension_numbers<[2], [2], [1], [1], [0, 0, 0, 1, 1, 1], [0], [0]>} : vector<1x8x32xbf16>, vector<1x8x32xbf16>, vector<1x8x8xf32> -> vector<1x8x8xf32>
    "tpu.trace_stop"() : () -> ()
    %112 = vector.broadcast %81 : vector<1x1x8xf32> to vector<1x8x8xf32>
    %113 = arith.addf %111, %112 : vector<1x8x8xf32>
    %cst_41 = arith.constant dense<0xFF800000> : vector<1x8xf32>
    %114 = vector.multi_reduction <maximumf>, %113, %cst_41 [2] : vector<1x8x8xf32> to vector<1x8xf32>
    %115 = vector.shape_cast %114 : vector<1x8xf32> to vector<1x8x1xf32>
    %116 = vector.broadcast %115 : vector<1x8x1xf32> to vector<1x8x8xf32>
    %117 = arith.subf %113, %116 : vector<1x8x8xf32>
    %118 = math.exp %117 : vector<1x8x8xf32>
    %cst_42 = arith.constant dense<0.000000e+00> : vector<1x8xf32>
    %119 = vector.multi_reduction <add>, %118, %cst_42 [2] : vector<1x8x8xf32> to vector<1x8xf32>
    %120 = vector.shape_cast %119 : vector<1x8xf32> to vector<1x8x1xf32>
    %121 = tpu.reciprocal %120 {approx = true} : vector<1x8x1xf32> -> vector<1x8x1xf32>
    %122 = vector.broadcast %121 : vector<1x8x1xf32> to vector<1x8x8xf32>
    %123 = arith.mulf %118, %122 : vector<1x8x8xf32>
    %124 = arith.truncf %123 : vector<1x8x8xf32> to vector<1x8x8xbf16>
    "tpu.trace_start"() <{level = 10 : i32, message = "bqk,bkd->bqd"}> : () -> ()
    %cst_43 = arith.constant dense<0.000000e+00> : vector<1x8x32xf32>
    %125 = tpu.matmul %124, %110, %cst_43 {dimension_numbers = #tpu.dot_dimension_numbers<[2], [1], [1], [2], [0, 0, 0, 1, 1, 2], [0], [0]>} : vector<1x8x8xbf16>, vector<1x8x32xbf16>, vector<1x8x32xf32> -> vector<1x8x32xf32>
    "tpu.trace_stop"() : () -> ()
    %126 = vector.shape_cast %125 : vector<1x8x32xf32> to vector<8x32xf32>
    %c0_44 = arith.constant 0 : index
    %c32 = arith.constant 32 : index
    %127 = vector.load %arg13[%c0_44, %c32] : memref<8x256xf32, #tpu.memory_space<vmem>>, vector<8x32xf32>
    tpu.vector_store %arg13[%c0_44, %c32], %126 {strides = array<i32>} : memref<8x256xf32, #tpu.memory_space<vmem>>, vector<8x32xf32>,
    %128 = vector.extract_strided_slice %77 {offsets = [0, 64], sizes = [8, 32], strides = [1, 1]} : vector<8x768xbf16> to vector<8x32xbf16>
    %129 = vector.shape_cast %128 : vector<8x32xbf16> to vector<1x8x32xbf16>
    %130 = vector.extract_strided_slice %77 {offsets = [0, 320], sizes = [8, 32], strides = [1, 1]} : vector<8x768xbf16> to vector<8x32xbf16>
    %131 = vector.shape_cast %130 : vector<8x32xbf16> to vector<1x8x32xbf16>
    %132 = vector.extract_strided_slice %77 {offsets = [0, 576], sizes = [8, 32], strides = [1, 1]} : vector<8x768xbf16> to vector<8x32xbf16>
    %133 = vector.shape_cast %132 : vector<8x32xbf16> to vector<1x8x32xbf16>
    "tpu.trace_start"() <{level = 10 : i32, message = "bqd,bkd->bqk"}> : () -> ()
    %cst_45 = arith.constant dense<0.000000e+00> : vector<1x8x8xf32>
    %134 = tpu.matmul %129, %131, %cst_45 {dimension_numbers = #tpu.dot_dimension_numbers<[2], [2], [1], [1], [0, 0, 0, 1, 1, 1], [0], [0]>} : vector<1x8x32xbf16>, vector<1x8x32xbf16>, vector<1x8x8xf32> -> vector<1x8x8xf32>
    "tpu.trace_stop"() : () -> ()
    %135 = vector.broadcast %81 : vector<1x1x8xf32> to vector<1x8x8xf32>
    %136 = arith.addf %134, %135 : vector<1x8x8xf32>
    %cst_46 = arith.constant dense<0xFF800000> : vector<1x8xf32>
    %137 = vector.multi_reduction <maximumf>, %136, %cst_46 [2] : vector<1x8x8xf32> to vector<1x8xf32>
    %138 = vector.shape_cast %137 : vector<1x8xf32> to vector<1x8x1xf32>
    %139 = vector.broadcast %138 : vector<1x8x1xf32> to vector<1x8x8xf32>
    %140 = arith.subf %136, %139 : vector<1x8x8xf32>
    %141 = math.exp %140 : vector<1x8x8xf32>
    %cst_47 = arith.constant dense<0.000000e+00> : vector<1x8xf32>
    %142 = vector.multi_reduction <add>, %141, %cst_47 [2] : vector<1x8x8xf32> to vector<1x8xf32>
    %143 = vector.shape_cast %142 : vector<1x8xf32> to vector<1x8x1xf32>
    %144 = tpu.reciprocal %143 {approx = true} : vector<1x8x1xf32> -> vector<1x8x1xf32>
    %145 = vector.broadcast %144 : vector<1x8x1xf32> to vector<1x8x8xf32>
    %146 = arith.mulf %141, %145 : vector<1x8x8xf32>
    %147 = arith.truncf %146 : vector<1x8x8xf32> to vector<1x8x8xbf16>
    "tpu.trace_start"() <{level = 10 : i32, message = "bqk,bkd->bqd"}> : () -> ()
    %cst_48 = arith.constant dense<0.000000e+00> : vector<1x8x32xf32>
    %148 = tpu.matmul %147, %133, %cst_48 {dimension_numbers = #tpu.dot_dimension_numbers<[2], [1], [1], [2], [0, 0, 0, 1, 1, 2], [0], [0]>} : vector<1x8x8xbf16>, vector<1x8x32xbf16>, vector<1x8x32xf32> -> vector<1x8x32xf32>
    "tpu.trace_stop"() : () -> ()
    %149 = vector.shape_cast %148 : vector<1x8x32xf32> to vector<8x32xf32>
    %c0_49 = arith.constant 0 : index
    %c64 = arith.constant 64 : index
    %150 = vector.load %arg13[%c0_49, %c64] : memref<8x256xf32, #tpu.memory_space<vmem>>, vector<8x32xf32>
    tpu.vector_store %arg13[%c0_49, %c64], %149 {strides = array<i32>} : memref<8x256xf32, #tpu.memory_space<vmem>>, vector<8x32xf32>,
    %151 = vector.extract_strided_slice %77 {offsets = [0, 96], sizes = [8, 32], strides = [1, 1]} : vector<8x768xbf16> to vector<8x32xbf16>
    %152 = vector.shape_cast %151 : vector<8x32xbf16> to vector<1x8x32xbf16>
    %153 = vector.extract_strided_slice %77 {offsets = [0, 352], sizes = [8, 32], strides = [1, 1]} : vector<8x768xbf16> to vector<8x32xbf16>
    %154 = vector.shape_cast %153 : vector<8x32xbf16> to vector<1x8x32xbf16>
    %155 = vector.extract_strided_slice %77 {offsets = [0, 608], sizes = [8, 32], strides = [1, 1]} : vector<8x768xbf16> to vector<8x32xbf16>
    %156 = vector.shape_cast %155 : vector<8x32xbf16> to vector<1x8x32xbf16>
    "tpu.trace_start"() <{level = 10 : i32, message = "bqd,bkd->bqk"}> : () -> ()
    %cst_50 = arith.constant dense<0.000000e+00> : vector<1x8x8xf32>
    %157 = tpu.matmul %152, %154, %cst_50 {dimension_numbers = #tpu.dot_dimension_numbers<[2], [2], [1], [1], [0, 0, 0, 1, 1, 1], [0], [0]>} : vector<1x8x32xbf16>, vector<1x8x32xbf16>, vector<1x8x8xf32> -> vector<1x8x8xf32>
    "tpu.trace_stop"() : () -> ()
    %158 = vector.broadcast %81 : vector<1x1x8xf32> to vector<1x8x8xf32>
    %159 = arith.addf %157, %158 : vector<1x8x8xf32>
    %cst_51 = arith.constant dense<0xFF800000> : vector<1x8xf32>
    %160 = vector.multi_reduction <maximumf>, %159, %cst_51 [2] : vector<1x8x8xf32> to vector<1x8xf32>
    %161 = vector.shape_cast %160 : vector<1x8xf32> to vector<1x8x1xf32>
    %162 = vector.broadcast %161 : vector<1x8x1xf32> to vector<1x8x8xf32>
    %163 = arith.subf %159, %162 : vector<1x8x8xf32>
    %164 = math.exp %163 : vector<1x8x8xf32>
    %cst_52 = arith.constant dense<0.000000e+00> : vector<1x8xf32>
    %165 = vector.multi_reduction <add>, %164, %cst_52 [2] : vector<1x8x8xf32> to vector<1x8xf32>
    %166 = vector.shape_cast %165 : vector<1x8xf32> to vector<1x8x1xf32>
    %167 = tpu.reciprocal %166 {approx = true} : vector<1x8x1xf32> -> vector<1x8x1xf32>
    %168 = vector.broadcast %167 : vector<1x8x1xf32> to vector<1x8x8xf32>
    %169 = arith.mulf %164, %168 : vector<1x8x8xf32>
    %170 = arith.truncf %169 : vector<1x8x8xf32> to vector<1x8x8xbf16>
    "tpu.trace_start"() <{level = 10 : i32, message = "bqk,bkd->bqd"}> : () -> ()
    %cst_53 = arith.constant dense<0.000000e+00> : vector<1x8x32xf32>
    %171 = tpu.matmul %170, %156, %cst_53 {dimension_numbers = #tpu.dot_dimension_numbers<[2], [1], [1], [2], [0, 0, 0, 1, 1, 2], [0], [0]>} : vector<1x8x8xbf16>, vector<1x8x32xbf16>, vector<1x8x32xf32> -> vector<1x8x32xf32>
    "tpu.trace_stop"() : () -> ()
    %172 = vector.shape_cast %171 : vector<1x8x32xf32> to vector<8x32xf32>
    %c0_54 = arith.constant 0 : index
    %c96 = arith.constant 96 : index
    %173 = vector.load %arg13[%c0_54, %c96] : memref<8x256xf32, #tpu.memory_space<vmem>>, vector<8x32xf32>
    tpu.vector_store %arg13[%c0_54, %c96], %172 {strides = array<i32>} : memref<8x256xf32, #tpu.memory_space<vmem>>, vector<8x32xf32>,
    %174 = vector.extract_strided_slice %77 {offsets = [0, 128], sizes = [8, 32], strides = [1, 1]} : vector<8x768xbf16> to vector<8x32xbf16>
    %175 = vector.shape_cast %174 : vector<8x32xbf16> to vector<1x8x32xbf16>
    %176 = vector.extract_strided_slice %77 {offsets = [0, 384], sizes = [8, 32], strides = [1, 1]} : vector<8x768xbf16> to vector<8x32xbf16>
    %177 = vector.shape_cast %176 : vector<8x32xbf16> to vector<1x8x32xbf16>
    %178 = vector.extract_strided_slice %77 {offsets = [0, 640], sizes = [8, 32], strides = [1, 1]} : vector<8x768xbf16> to vector<8x32xbf16>
    %179 = vector.shape_cast %178 : vector<8x32xbf16> to vector<1x8x32xbf16>
    "tpu.trace_start"() <{level = 10 : i32, message = "bqd,bkd->bqk"}> : () -> ()
    %cst_55 = arith.constant dense<0.000000e+00> : vector<1x8x8xf32>
    %180 = tpu.matmul %175, %177, %cst_55 {dimension_numbers = #tpu.dot_dimension_numbers<[2], [2], [1], [1], [0, 0, 0, 1, 1, 1], [0], [0]>} : vector<1x8x32xbf16>, vector<1x8x32xbf16>, vector<1x8x8xf32> -> vector<1x8x8xf32>
    "tpu.trace_stop"() : () -> ()
    %181 = vector.broadcast %81 : vector<1x1x8xf32> to vector<1x8x8xf32>
    %182 = arith.addf %180, %181 : vector<1x8x8xf32>
    %cst_56 = arith.constant dense<0xFF800000> : vector<1x8xf32>
    %183 = vector.multi_reduction <maximumf>, %182, %cst_56 [2] : vector<1x8x8xf32> to vector<1x8xf32>
    %184 = vector.shape_cast %183 : vector<1x8xf32> to vector<1x8x1xf32>
    %185 = vector.broadcast %184 : vector<1x8x1xf32> to vector<1x8x8xf32>
    %186 = arith.subf %182, %185 : vector<1x8x8xf32>
    %187 = math.exp %186 : vector<1x8x8xf32>
    %cst_57 = arith.constant dense<0.000000e+00> : vector<1x8xf32>
    %188 = vector.multi_reduction <add>, %187, %cst_57 [2] : vector<1x8x8xf32> to vector<1x8xf32>
    %189 = vector.shape_cast %188 : vector<1x8xf32> to vector<1x8x1xf32>
    %190 = tpu.reciprocal %189 {approx = true} : vector<1x8x1xf32> -> vector<1x8x1xf32>
    %191 = vector.broadcast %190 : vector<1x8x1xf32> to vector<1x8x8xf32>
    %192 = arith.mulf %187, %191 : vector<1x8x8xf32>
    %193 = arith.truncf %192 : vector<1x8x8xf32> to vector<1x8x8xbf16>
    "tpu.trace_start"() <{level = 10 : i32, message = "bqk,bkd->bqd"}> : () -> ()
    %cst_58 = arith.constant dense<0.000000e+00> : vector<1x8x32xf32>
    %194 = tpu.matmul %193, %179, %cst_58 {dimension_numbers = #tpu.dot_dimension_numbers<[2], [1], [1], [2], [0, 0, 0, 1, 1, 2], [0], [0]>} : vector<1x8x8xbf16>, vector<1x8x32xbf16>, vector<1x8x32xf32> -> vector<1x8x32xf32>
    "tpu.trace_stop"() : () -> ()
    %195 = vector.shape_cast %194 : vector<1x8x32xf32> to vector<8x32xf32>
    %c0_59 = arith.constant 0 : index
    %c128 = arith.constant 128 : index
    %196 = vector.load %arg13[%c0_59, %c128] : memref<8x256xf32, #tpu.memory_space<vmem>>, vector<8x32xf32>
    tpu.vector_store %arg13[%c0_59, %c128], %195 {strides = array<i32>} : memref<8x256xf32, #tpu.memory_space<vmem>>, vector<8x32xf32>,
    %197 = vector.extract_strided_slice %77 {offsets = [0, 160], sizes = [8, 32], strides = [1, 1]} : vector<8x768xbf16> to vector<8x32xbf16>
    %198 = vector.shape_cast %197 : vector<8x32xbf16> to vector<1x8x32xbf16>
    %199 = vector.extract_strided_slice %77 {offsets = [0, 416], sizes = [8, 32], strides = [1, 1]} : vector<8x768xbf16> to vector<8x32xbf16>
    %200 = vector.shape_cast %199 : vector<8x32xbf16> to vector<1x8x32xbf16>
    %201 = vector.extract_strided_slice %77 {offsets = [0, 672], sizes = [8, 32], strides = [1, 1]} : vector<8x768xbf16> to vector<8x32xbf16>
    %202 = vector.shape_cast %201 : vector<8x32xbf16> to vector<1x8x32xbf16>
    "tpu.trace_start"() <{level = 10 : i32, message = "bqd,bkd->bqk"}> : () -> ()
    %cst_60 = arith.constant dense<0.000000e+00> : vector<1x8x8xf32>
    %203 = tpu.matmul %198, %200, %cst_60 {dimension_numbers = #tpu.dot_dimension_numbers<[2], [2], [1], [1], [0, 0, 0, 1, 1, 1], [0], [0]>} : vector<1x8x32xbf16>, vector<1x8x32xbf16>, vector<1x8x8xf32> -> vector<1x8x8xf32>
    "tpu.trace_stop"() : () -> ()
    %204 = vector.broadcast %81 : vector<1x1x8xf32> to vector<1x8x8xf32>
    %205 = arith.addf %203, %204 : vector<1x8x8xf32>
    %cst_61 = arith.constant dense<0xFF800000> : vector<1x8xf32>
    %206 = vector.multi_reduction <maximumf>, %205, %cst_61 [2] : vector<1x8x8xf32> to vector<1x8xf32>
    %207 = vector.shape_cast %206 : vector<1x8xf32> to vector<1x8x1xf32>
    %208 = vector.broadcast %207 : vector<1x8x1xf32> to vector<1x8x8xf32>
    %209 = arith.subf %205, %208 : vector<1x8x8xf32>
    %210 = math.exp %209 : vector<1x8x8xf32>
    %cst_62 = arith.constant dense<0.000000e+00> : vector<1x8xf32>
    %211 = vector.multi_reduction <add>, %210, %cst_62 [2] : vector<1x8x8xf32> to vector<1x8xf32>
    %212 = vector.shape_cast %211 : vector<1x8xf32> to vector<1x8x1xf32>
    %213 = tpu.reciprocal %212 {approx = true} : vector<1x8x1xf32> -> vector<1x8x1xf32>
    %214 = vector.broadcast %213 : vector<1x8x1xf32> to vector<1x8x8xf32>
    %215 = arith.mulf %210, %214 : vector<1x8x8xf32>
    %216 = arith.truncf %215 : vector<1x8x8xf32> to vector<1x8x8xbf16>
    "tpu.trace_start"() <{level = 10 : i32, message = "bqk,bkd->bqd"}> : () -> ()
    %cst_63 = arith.constant dense<0.000000e+00> : vector<1x8x32xf32>
    %217 = tpu.matmul %216, %202, %cst_63 {dimension_numbers = #tpu.dot_dimension_numbers<[2], [1], [1], [2], [0, 0, 0, 1, 1, 2], [0], [0]>} : vector<1x8x8xbf16>, vector<1x8x32xbf16>, vector<1x8x32xf32> -> vector<1x8x32xf32>
    "tpu.trace_stop"() : () -> ()
    %218 = vector.shape_cast %217 : vector<1x8x32xf32> to vector<8x32xf32>
    %c0_64 = arith.constant 0 : index
    %c160 = arith.constant 160 : index
    %219 = vector.load %arg13[%c0_64, %c160] : memref<8x256xf32, #tpu.memory_space<vmem>>, vector<8x32xf32>
    tpu.vector_store %arg13[%c0_64, %c160], %218 {strides = array<i32>} : memref<8x256xf32, #tpu.memory_space<vmem>>, vector<8x32xf32>,
    %220 = vector.extract_strided_slice %77 {offsets = [0, 192], sizes = [8, 32], strides = [1, 1]} : vector<8x768xbf16> to vector<8x32xbf16>
    %221 = vector.shape_cast %220 : vector<8x32xbf16> to vector<1x8x32xbf16>
    %222 = vector.extract_strided_slice %77 {offsets = [0, 448], sizes = [8, 32], strides = [1, 1]} : vector<8x768xbf16> to vector<8x32xbf16>
    %223 = vector.shape_cast %222 : vector<8x32xbf16> to vector<1x8x32xbf16>
    %224 = vector.extract_strided_slice %77 {offsets = [0, 704], sizes = [8, 32], strides = [1, 1]} : vector<8x768xbf16> to vector<8x32xbf16>
    %225 = vector.shape_cast %224 : vector<8x32xbf16> to vector<1x8x32xbf16>
    "tpu.trace_start"() <{level = 10 : i32, message = "bqd,bkd->bqk"}> : () -> ()
    %cst_65 = arith.constant dense<0.000000e+00> : vector<1x8x8xf32>
    %226 = tpu.matmul %221, %223, %cst_65 {dimension_numbers = #tpu.dot_dimension_numbers<[2], [2], [1], [1], [0, 0, 0, 1, 1, 1], [0], [0]>} : vector<1x8x32xbf16>, vector<1x8x32xbf16>, vector<1x8x8xf32> -> vector<1x8x8xf32>
    "tpu.trace_stop"() : () -> ()
    %227 = vector.broadcast %81 : vector<1x1x8xf32> to vector<1x8x8xf32>
    %228 = arith.addf %226, %227 : vector<1x8x8xf32>
    %cst_66 = arith.constant dense<0xFF800000> : vector<1x8xf32>
    %229 = vector.multi_reduction <maximumf>, %228, %cst_66 [2] : vector<1x8x8xf32> to vector<1x8xf32>
    %230 = vector.shape_cast %229 : vector<1x8xf32> to vector<1x8x1xf32>
    %231 = vector.broadcast %230 : vector<1x8x1xf32> to vector<1x8x8xf32>
    %232 = arith.subf %228, %231 : vector<1x8x8xf32>
    %233 = math.exp %232 : vector<1x8x8xf32>
    %cst_67 = arith.constant dense<0.000000e+00> : vector<1x8xf32>
    %234 = vector.multi_reduction <add>, %233, %cst_67 [2] : vector<1x8x8xf32> to vector<1x8xf32>
    %235 = vector.shape_cast %234 : vector<1x8xf32> to vector<1x8x1xf32>
    %236 = tpu.reciprocal %235 {approx = true} : vector<1x8x1xf32> -> vector<1x8x1xf32>
    %237 = vector.broadcast %236 : vector<1x8x1xf32> to vector<1x8x8xf32>
    %238 = arith.mulf %233, %237 : vector<1x8x8xf32>
    %239 = arith.truncf %238 : vector<1x8x8xf32> to vector<1x8x8xbf16>
    "tpu.trace_start"() <{level = 10 : i32, message = "bqk,bkd->bqd"}> : () -> ()
    %cst_68 = arith.constant dense<0.000000e+00> : vector<1x8x32xf32>
    %240 = tpu.matmul %239, %225, %cst_68 {dimension_numbers = #tpu.dot_dimension_numbers<[2], [1], [1], [2], [0, 0, 0, 1, 1, 2], [0], [0]>} : vector<1x8x8xbf16>, vector<1x8x32xbf16>, vector<1x8x32xf32> -> vector<1x8x32xf32>
    "tpu.trace_stop"() : () -> ()
    %241 = vector.shape_cast %240 : vector<1x8x32xf32> to vector<8x32xf32>
    %c0_69 = arith.constant 0 : index
    %c192 = arith.constant 192 : index
    %242 = vector.load %arg13[%c0_69, %c192] : memref<8x256xf32, #tpu.memory_space<vmem>>, vector<8x32xf32>
    tpu.vector_store %arg13[%c0_69, %c192], %241 {strides = array<i32>} : memref<8x256xf32, #tpu.memory_space<vmem>>, vector<8x32xf32>,
    %243 = vector.extract_strided_slice %77 {offsets = [0, 224], sizes = [8, 32], strides = [1, 1]} : vector<8x768xbf16> to vector<8x32xbf16>
    %244 = vector.shape_cast %243 : vector<8x32xbf16> to vector<1x8x32xbf16>
    %245 = vector.extract_strided_slice %77 {offsets = [0, 480], sizes = [8, 32], strides = [1, 1]} : vector<8x768xbf16> to vector<8x32xbf16>
    %246 = vector.shape_cast %245 : vector<8x32xbf16> to vector<1x8x32xbf16>
    %247 = vector.extract_strided_slice %77 {offsets = [0, 736], sizes = [8, 32], strides = [1, 1]} : vector<8x768xbf16> to vector<8x32xbf16>
    %248 = vector.shape_cast %247 : vector<8x32xbf16> to vector<1x8x32xbf16>
    "tpu.trace_start"() <{level = 10 : i32, message = "bqd,bkd->bqk"}> : () -> ()
    %cst_70 = arith.constant dense<0.000000e+00> : vector<1x8x8xf32>
    %249 = tpu.matmul %244, %246, %cst_70 {dimension_numbers = #tpu.dot_dimension_numbers<[2], [2], [1], [1], [0, 0, 0, 1, 1, 1], [0], [0]>} : vector<1x8x32xbf16>, vector<1x8x32xbf16>, vector<1x8x8xf32> -> vector<1x8x8xf32>
    "tpu.trace_stop"() : () -> ()
    %250 = vector.broadcast %81 : vector<1x1x8xf32> to vector<1x8x8xf32>
    %251 = arith.addf %249, %250 : vector<1x8x8xf32>
    %cst_71 = arith.constant dense<0xFF800000> : vector<1x8xf32>
    %252 = vector.multi_reduction <maximumf>, %251, %cst_71 [2] : vector<1x8x8xf32> to vector<1x8xf32>
    %253 = vector.shape_cast %252 : vector<1x8xf32> to vector<1x8x1xf32>
    %254 = vector.broadcast %253 : vector<1x8x1xf32> to vector<1x8x8xf32>
    %255 = arith.subf %251, %254 : vector<1x8x8xf32>
    %256 = math.exp %255 : vector<1x8x8xf32>
    %cst_72 = arith.constant dense<0.000000e+00> : vector<1x8xf32>
    %257 = vector.multi_reduction <add>, %256, %cst_72 [2] : vector<1x8x8xf32> to vector<1x8xf32>
    %258 = vector.shape_cast %257 : vector<1x8xf32> to vector<1x8x1xf32>
    %259 = tpu.reciprocal %258 {approx = true} : vector<1x8x1xf32> -> vector<1x8x1xf32>
    %260 = vector.broadcast %259 : vector<1x8x1xf32> to vector<1x8x8xf32>
    %261 = arith.mulf %256, %260 : vector<1x8x8xf32>
    %262 = arith.truncf %261 : vector<1x8x8xf32> to vector<1x8x8xbf16>
    "tpu.trace_start"() <{level = 10 : i32, message = "bqk,bkd->bqd"}> : () -> ()
    %cst_73 = arith.constant dense<0.000000e+00> : vector<1x8x32xf32>
    %263 = tpu.matmul %262, %248, %cst_73 {dimension_numbers = #tpu.dot_dimension_numbers<[2], [1], [1], [2], [0, 0, 0, 1, 1, 2], [0], [0]>} : vector<1x8x8xbf16>, vector<1x8x32xbf16>, vector<1x8x32xf32> -> vector<1x8x32xf32>
    "tpu.trace_stop"() : () -> ()
    %264 = vector.shape_cast %263 : vector<1x8x32xf32> to vector<8x32xf32>
    %c0_74 = arith.constant 0 : index
    %c224 = arith.constant 224 : index
    %265 = vector.load %arg13[%c0_74, %c224] : memref<8x256xf32, #tpu.memory_space<vmem>>, vector<8x32xf32>
    tpu.vector_store %arg13[%c0_74, %c224], %264 {strides = array<i32>} : memref<8x256xf32, #tpu.memory_space<vmem>>, vector<8x32xf32>,
    %c0_75 = arith.constant 0 : index
    %c0_76 = arith.constant 0 : index
    %266 = vector.load %arg13[%c0_75, %c0_76] : memref<8x256xf32, #tpu.memory_space<vmem>>, vector<8x256xf32>
    %267 = arith.truncf %266 : vector<8x256xf32> to vector<8x256xbf16>
    %c0_77 = arith.constant 0 : index
    %c0_78 = arith.constant 0 : index
    %268 = vector.load %arg7[%c0_77, %c0_78] : memref<256x256xbf16, #tpu.memory_space<vmem>>, vector<256x256xbf16>
    %cst_79 = arith.constant dense<0.000000e+00> : vector<8x256xf32>
    %269 = tpu.matmul %267, %268, %cst_79 {dimension_numbers = #tpu.dot_dimension_numbers<[1], [0], [0], [1], [0, 0, 1, 1], [], []>} : vector<8x256xbf16>, vector<256x256xbf16>, vector<8x256xf32> -> vector<8x256xf32>
    %270 = vector.extract_strided_slice %0 {offsets = [6, 0], sizes = [1, 256], strides = [1, 1]} : vector<14x256xf32> to vector<1x256xf32>
    %271 = vector.broadcast %270 : vector<1x256xf32> to vector<8x256xf32>
    %272 = arith.addf %269, %271 : vector<8x256xf32>
    %273 = arith.addf %70, %272 : vector<8x256xf32>
    %274 = vector.extract_strided_slice %0 {offsets = [7, 0], sizes = [1, 256], strides = [1, 1]} : vector<14x256xf32> to vector<1x256xf32>
    %275 = vector.extract_strided_slice %0 {offsets = [8, 0], sizes = [1, 256], strides = [1, 1]} : vector<14x256xf32> to vector<1x256xf32>
    %cst_80 = arith.constant dense<0.000000e+00> : vector<8xf32>
    %276 = vector.multi_reduction <add>, %273, %cst_80 [1] : vector<8x256xf32> to vector<8xf32>
    %277 = vector.shape_cast %276 : vector<8xf32> to vector<8x1xf32>
    %cst_81 = arith.constant 2.560000e+02 : f32
    %278 = vector.broadcast %cst_81 : f32 to vector<8x1xf32>
    %279 = arith.divf %277, %278 : vector<8x1xf32>
    %280 = vector.broadcast %279 : vector<8x1xf32> to vector<8x256xf32>
    %281 = arith.subf %273, %280 : vector<8x256xf32>
    %282 = arith.mulf %281, %281 : vector<8x256xf32>
    %cst_82 = arith.constant dense<0.000000e+00> : vector<8xf32>
    %283 = vector.multi_reduction <add>, %282, %cst_82 [1] : vector<8x256xf32> to vector<8xf32>
    %284 = vector.shape_cast %283 : vector<8xf32> to vector<8x1xf32>
    %cst_83 = arith.constant 2.560000e+02 : f32
    %285 = vector.broadcast %cst_83 : f32 to vector<8x1xf32>
    %286 = arith.divf %284, %285 : vector<8x1xf32>
    %287 = vector.broadcast %279 : vector<8x1xf32> to vector<8x256xf32>
    %288 = arith.subf %273, %287 : vector<8x256xf32>
    %cst_84 = arith.constant 9.99999974E-6 : f32
    %289 = vector.broadcast %cst_84 : f32 to vector<8x1xf32>
    %290 = arith.addf %286, %289 : vector<8x1xf32>
    %291 = math.rsqrt %290 : vector<8x1xf32>
    %292 = vector.broadcast %291 : vector<8x1xf32> to vector<8x256xf32>
    %293 = arith.mulf %288, %292 : vector<8x256xf32>
    %294 = vector.broadcast %274 : vector<1x256xf32> to vector<8x256xf32>
    %295 = arith.mulf %293, %294 : vector<8x256xf32>
    %296 = vector.broadcast %275 : vector<1x256xf32> to vector<8x256xf32>
    %297 = arith.addf %295, %296 : vector<8x256xf32>
    %298 = arith.truncf %297 : vector<8x256xf32> to vector<8x256xbf16>
    %c1 = arith.constant 1 : index
    %c0_85 = arith.constant 0 : index
    %c0_86 = arith.constant 0 : index
    %299 = vector.load %arg5[%c1, %c0_85, %c0_86] : memref<4x256x256xbf16, #tpu.memory_space<vmem>>, vector<1x256x256xbf16>
    %300 = vector.shape_cast %299 : vector<1x256x256xbf16> to vector<256x256xbf16>
    %cst_87 = arith.constant dense<0.000000e+00> : vector<8x256xf32>
    %301 = tpu.matmul %298, %300, %cst_87 {dimension_numbers = #tpu.dot_dimension_numbers<[1], [0], [0], [1], [0, 0, 1, 1], [], []>} : vector<8x256xbf16>, vector<256x256xbf16>, vector<8x256xf32> -> vector<8x256xf32>
    %302 = vector.extract_strided_slice %0 {offsets = [9, 0], sizes = [1, 256], strides = [1, 1]} : vector<14x256xf32> to vector<1x256xf32>
    %303 = vector.broadcast %302 : vector<1x256xf32> to vector<8x256xf32>
    %304 = arith.addf %301, %303 : vector<8x256xf32>
    %cst_88 = arith.constant 0.000000e+00 : f32
    %305 = vector.broadcast %cst_88 : f32 to vector<8x256xf32>
    %306 = arith.maximumf %304, %305 : vector<8x256xf32>
    %307 = arith.truncf %306 : vector<8x256xf32> to vector<8x256xbf16>
    %c2 = arith.constant 2 : index
    %c0_89 = arith.constant 0 : index
    %c0_90 = arith.constant 0 : index
    %308 = vector.load %arg5[%c2, %c0_89, %c0_90] : memref<4x256x256xbf16, #tpu.memory_space<vmem>>, vector<1x256x256xbf16>
    %309 = vector.shape_cast %308 : vector<1x256x256xbf16> to vector<256x256xbf16>
    %cst_91 = arith.constant dense<0.000000e+00> : vector<8x256xf32>
    %310 = tpu.matmul %307, %309, %cst_91 {dimension_numbers = #tpu.dot_dimension_numbers<[1], [0], [0], [1], [0, 0, 1, 1], [], []>} : vector<8x256xbf16>, vector<256x256xbf16>, vector<8x256xf32> -> vector<8x256xf32>
    %311 = vector.extract_strided_slice %0 {offsets = [10, 0], sizes = [1, 256], strides = [1, 1]} : vector<14x256xf32> to vector<1x256xf32>
    %312 = vector.broadcast %311 : vector<1x256xf32> to vector<8x256xf32>
    %313 = arith.addf %310, %312 : vector<8x256xf32>
    %314 = arith.addf %313, %297 : vector<8x256xf32>
    %315 = vector.extract_strided_slice %0 {offsets = [11, 0], sizes = [1, 256], strides = [1, 1]} : vector<14x256xf32> to vector<1x256xf32>
    %316 = vector.extract_strided_slice %0 {offsets = [12, 0], sizes = [1, 256], strides = [1, 1]} : vector<14x256xf32> to vector<1x256xf32>
    %cst_92 = arith.constant dense<0.000000e+00> : vector<8xf32>
    %317 = vector.multi_reduction <add>, %314, %cst_92 [1] : vector<8x256xf32> to vector<8xf32>
    %318 = vector.shape_cast %317 : vector<8xf32> to vector<8x1xf32>
    %cst_93 = arith.constant 2.560000e+02 : f32
    %319 = vector.broadcast %cst_93 : f32 to vector<8x1xf32>
    %320 = arith.divf %318, %319 : vector<8x1xf32>
    %321 = vector.broadcast %320 : vector<8x1xf32> to vector<8x256xf32>
    %322 = arith.subf %314, %321 : vector<8x256xf32>
    %323 = arith.mulf %322, %322 : vector<8x256xf32>
    %cst_94 = arith.constant dense<0.000000e+00> : vector<8xf32>
    %324 = vector.multi_reduction <add>, %323, %cst_94 [1] : vector<8x256xf32> to vector<8xf32>
    %325 = vector.shape_cast %324 : vector<8xf32> to vector<8x1xf32>
    %cst_95 = arith.constant 2.560000e+02 : f32
    %326 = vector.broadcast %cst_95 : f32 to vector<8x1xf32>
    %327 = arith.divf %325, %326 : vector<8x1xf32>
    %328 = vector.broadcast %320 : vector<8x1xf32> to vector<8x256xf32>
    %329 = arith.subf %314, %328 : vector<8x256xf32>
    %cst_96 = arith.constant 9.99999974E-6 : f32
    %330 = vector.broadcast %cst_96 : f32 to vector<8x1xf32>
    %331 = arith.addf %327, %330 : vector<8x1xf32>
    %332 = math.rsqrt %331 : vector<8x1xf32>
    %333 = vector.broadcast %332 : vector<8x1xf32> to vector<8x256xf32>
    %334 = arith.mulf %329, %333 : vector<8x256xf32>
    %335 = vector.broadcast %315 : vector<1x256xf32> to vector<8x256xf32>
    %336 = arith.mulf %334, %335 : vector<8x256xf32>
    %337 = vector.broadcast %316 : vector<1x256xf32> to vector<8x256xf32>
    %338 = arith.addf %336, %337 : vector<8x256xf32>
    %339 = arith.truncf %338 : vector<8x256xf32> to vector<8x256xbf16>
    %c3 = arith.constant 3 : index
    %c0_97 = arith.constant 0 : index
    %c0_98 = arith.constant 0 : index
    %340 = vector.load %arg5[%c3, %c0_97, %c0_98] : memref<4x256x256xbf16, #tpu.memory_space<vmem>>, vector<1x256x256xbf16>
    %341 = vector.shape_cast %340 : vector<1x256x256xbf16> to vector<256x256xbf16>
    %cst_99 = arith.constant dense<0.000000e+00> : vector<8x256xf32>
    %342 = tpu.matmul %339, %341, %cst_99 {dimension_numbers = #tpu.dot_dimension_numbers<[1], [0], [0], [1], [0, 0, 1, 1], [], []>} : vector<8x256xbf16>, vector<256x256xbf16>, vector<8x256xf32> -> vector<8x256xf32>
    %343 = vector.extract_strided_slice %0 {offsets = [13, 0], sizes = [1, 256], strides = [1, 1]} : vector<14x256xf32> to vector<1x256xf32>
    %344 = vector.broadcast %343 : vector<1x256xf32> to vector<8x256xf32>
    %345 = arith.addf %342, %344 : vector<8x256xf32>
    %cst_100 = arith.constant 0.000000e+00 : f32
    %346 = vector.broadcast %cst_100 : f32 to vector<8x256xf32>
    %347 = arith.maximumf %345, %346 : vector<8x256xf32>
    %348 = arith.truncf %347 : vector<8x256xf32> to vector<8x256xbf16>
    %c0_101 = arith.constant 0 : index
    %c0_102 = arith.constant 0 : index
    %349 = vector.load %arg10[%c0_101, %c0_102] : memref<256x128xbf16, #tpu.memory_space<vmem>>, vector<256x128xbf16>
    %cst_103 = arith.constant dense<0.000000e+00> : vector<8x128xf32>
    %350 = tpu.matmul %348, %349, %cst_103 {dimension_numbers = #tpu.dot_dimension_numbers<[1], [0], [0], [1], [0, 0, 1, 1], [], []>} : vector<8x256xbf16>, vector<256x128xbf16>, vector<8x128xf32> -> vector<8x128xf32>
    %c0_104 = arith.constant 0 : index
    %c0_105 = arith.constant 0 : index
    %351 = vector.load %arg11[%c0_104, %c0_105] : memref<1x128xf32, #tpu.memory_space<vmem>>, vector<1x128xf32>
    %352 = vector.broadcast %351 : vector<1x128xf32> to vector<8x128xf32>
    %353 = arith.addf %350, %352 : vector<8x128xf32>
    %354 = vector.shape_cast %353 : vector<8x128xf32> to vector<1x8x128xf32>
    %355 = arith.truncf %354 : vector<1x8x128xf32> to vector<1x8x128xbf16>
    %c0_106 = arith.constant 0 : index
    %c0_107 = arith.constant 0 : index
    %c0_108 = arith.constant 0 : index
    %356 = vector.load %arg12[%c0_106, %c0_107, %c0_108] : memref<1x8x128xbf16, #tpu.memory_space<vmem>>, vector<1x8x128xbf16>
    tpu.vector_store %arg12[%c0_106, %c0_107, %c0_108], %355 {strides = array<i32>} : memref<1x8x128xbf16, #tpu.memory_space<vmem>>, vector<1x8x128xbf16>,
    return
  }
  func.func @transform_0(%arg0: i32) -> (i32, i32, i32) {
    %c0_i32 = arith.constant 0 : i32
    %c0_i32_0 = arith.constant 0 : i32
    %c0_i32_1 = arith.constant 0 : i32
    return %arg0, %c0_i32, %c0_i32_0 : i32, i32, i32
  }
  func.func @transform_1(%arg0: i32) -> (i32, i32, i32) {
    %c0_i32 = arith.constant 0 : i32
    %c0_i32_0 = arith.constant 0 : i32
    %c0_i32_1 = arith.constant 0 : i32
    return %arg0, %c0_i32, %c0_i32_0 : i32, i32, i32
  }
  func.func @transform_2(%arg0: i32) -> (i32, i32, i32) {
    %c0_i32 = arith.constant 0 : i32
    %c0_i32_0 = arith.constant 0 : i32
    %c0_i32_1 = arith.constant 0 : i32
    return %arg0, %c0_i32, %c0_i32_0 : i32, i32, i32
  }
  func.func @transform_3(%arg0: i32) -> (i32, i32) {
    %c0_i32 = arith.constant 0 : i32
    %c0_i32_0 = arith.constant 0 : i32
    %c0_i32_1 = arith.constant 0 : i32
    return %c0_i32, %c0_i32_0 : i32, i32
  }
  func.func @transform_4(%arg0: i32) -> (i32, i32, i32) {
    %c0_i32 = arith.constant 0 : i32
    %c0_i32_0 = arith.constant 0 : i32
    %c0_i32_1 = arith.constant 0 : i32
    %c0_i32_2 = arith.constant 0 : i32
    return %c0_i32, %c0_i32_0, %c0_i32_1 : i32, i32, i32
  }
  func.func @transform_5(%arg0: i32) -> (i32, i32) {
    %c0_i32 = arith.constant 0 : i32
    %c0_i32_0 = arith.constant 0 : i32
    %c0_i32_1 = arith.constant 0 : i32
    return %c0_i32, %c0_i32_0 : i32, i32
  }
  func.func @transform_6(%arg0: i32) -> (i32, i32) {
    %c0_i32 = arith.constant 0 : i32
    %c0_i32_0 = arith.constant 0 : i32
    %c0_i32_1 = arith.constant 0 : i32
    return %c0_i32, %c0_i32_0 : i32, i32
  }
  func.func @transform_7(%arg0: i32) -> (i32, i32) {
    %c0_i32 = arith.constant 0 : i32
    %c0_i32_0 = arith.constant 0 : i32
    %c0_i32_1 = arith.constant 0 : i32
    return %c0_i32, %c0_i32_0 : i32, i32
  }
  func.func @transform_8(%arg0: i32) -> (i32, i32) {
    %c0_i32 = arith.constant 0 : i32
    %c0_i32_0 = arith.constant 0 : i32
    %c0_i32_1 = arith.constant 0 : i32
    return %c0_i32, %c0_i32_0 : i32, i32
  }
  func.func @transform_9(%arg0: i32) -> (i32, i32) {
    %c0_i32 = arith.constant 0 : i32
    %c0_i32_0 = arith.constant 0 : i32
    %c0_i32_1 = arith.constant 0 : i32
    return %c0_i32, %c0_i32_0 : i32, i32
  }
  func.func @transform_10(%arg0: i32) -> (i32, i32) {
    %c0_i32 = arith.constant 0 : i32
    %c0_i32_0 = arith.constant 0 : i32
    %c0_i32_1 = arith.constant 0 : i32
    return %c0_i32, %c0_i32_0 : i32, i32
  }
  func.func @transform_11(%arg0: i32) -> (i32, i32, i32) {
    %c0_i32 = arith.constant 0 : i32
    %c0_i32_0 = arith.constant 0 : i32
    %c0_i32_1 = arith.constant 0 : i32
    return %arg0, %c0_i32, %c0_i32_0 : i32, i32, i32
  }
}

module attributes {stable_mosaic.version = 11 : i64} {
  func.func @label_decoder_kernel(%arg0: i32, %arg1: memref<1x8x128xbf16, #tpu.memory_space<vmem>>, %arg2: memref<1x8x256xbf16, #tpu.memory_space<vmem>>, %arg3: memref<1x1x8xi32, #tpu.memory_space<vmem>>, %arg4: memref<128x256xbf16, #tpu.memory_space<vmem>>, %arg5: memref<4x256x256xbf16, #tpu.memory_space<vmem>>, %arg6: memref<256x768xbf16, #tpu.memory_space<vmem>>, %arg7: memref<256x256xbf16, #tpu.memory_space<vmem>>, %arg8: memref<1x768xf32, #tpu.memory_space<vmem>>, %arg9: memref<14x256xf32, #tpu.memory_space<vmem>>, %arg10: memref<256x128xbf16, #tpu.memory_space<vmem>>, %arg11: memref<1x128xf32, #tpu.memory_space<vmem>>, %arg12: memref<1x8x128xbf16, #tpu.memory_space<vmem>>, %arg13: memref<8x256xf32, #tpu.memory_space<vmem>>) attributes {dimension_semantics = [#tpu.dimension_semantics<parallel>], iteration_bounds = array<i64: 2>, scalar_prefetch = 0 : i64, scratch_operands = 1 : i64, tpu.core_type = #tpu.core_type<tc>, window_params = [{transform_indices = @transform_0, window_bounds = array<i64: 1, 8, 128>}, {transform_indices = @transform_1, window_bounds = array<i64: 1, 8, 256>}, {transform_indices = @transform_2, window_bounds = array<i64: 1, 1, 8>}, {pipeline_mode = #tpu.pipeline_mode<synchronous>, transform_indices = @transform_3, window_bounds = array<i64: 128, 256>}, {pipeline_mode = #tpu.pipeline_mode<synchronous>, transform_indices = @transform_4, window_bounds = array<i64: 4, 256, 256>}, {pipeline_mode = #tpu.pipeline_mode<synchronous>, transform_indices = @transform_5, window_bounds = array<i64: 256, 768>}, {pipeline_mode = #tpu.pipeline_mode<synchronous>, transform_indices = @transform_6, window_bounds = array<i64: 256, 256>}, {pipeline_mode = #tpu.pipeline_mode<synchronous>, transform_indices = @transform_7, window_bounds = array<i64: 1, 768>}, {pipeline_mode = #tpu.pipeline_mode<synchronous>, transform_indices = @transform_8, window_bounds = array<i64: 14, 256>}, {pipeline_mode = #tpu.pipeline_mode<synchronous>, transform_indices = @transform_9, window_bounds = array<i64: 256, 128>}, {pipeline_mode = #tpu.pipeline_mode<synchronous>, transform_indices = @transform_10, window_bounds = array<i64: 1, 128>}, {transform_indices = @transform_11, window_bounds = array<i64: 1, 8, 128>}]} {
    %c0 = arith.constant 0 : index
    %c0_0 = arith.constant 0 : index
    %0 = vector.load %arg9[%c0, %c0_0] : memref<14x256xf32, #tpu.memory_space<vmem>>, vector<14x256xf32>
    %c0_1 = arith.constant 0 : index
    %c0_2 = arith.constant 0 : index
    %c0_3 = arith.constant 0 : index
    %1 = vector.load %arg1[%c0_1, %c0_2, %c0_3] : memref<1x8x128xbf16, #tpu.memory_space<vmem>>, vector<1x8x128xbf16>
    %2 = vector.shape_cast %1 : vector<1x8x128xbf16> to vector<8x128xbf16>
    %c0_4 = arith.constant 0 : index
    %c0_5 = arith.constant 0 : index
    %3 = vector.load %arg4[%c0_4, %c0_5] : memref<128x256xbf16, #tpu.memory_space<vmem>>, vector<128x256xbf16>
    %cst = arith.constant dense<0.000000e+00> : vector<8x256xf32>
    %4 = tpu.matmul %2, %3, %cst {dimension_numbers = #tpu.dot_dimension_numbers<[1], [0], [0], [1], [0, 0, 1, 1], [], []>} : vector<8x128xbf16>, vector<128x256xbf16>, vector<8x256xf32> -> vector<8x256xf32>
    %5 = vector.extract_strided_slice %0 {offsets = [0, 0], sizes = [1, 256], strides = [1, 1]} : vector<14x256xf32> to vector<1x256xf32>
    %6 = vector.broadcast %5 : vector<1x256xf32> to vector<8x256xf32>
    %7 = arith.addf %4, %6 : vector<8x256xf32>
    %8 = vector.extract_strided_slice %0 {offsets = [1, 0], sizes = [1, 256], strides = [1, 1]} : vector<14x256xf32> to vector<1x256xf32>
    %9 = vector.extract_strided_slice %0 {offsets = [2, 0], sizes = [1, 256], strides = [1, 1]} : vector<14x256xf32> to vector<1x256xf32>
    %cst_6 = arith.constant dense<0.000000e+00> : vector<8xf32>
    %10 = vector.multi_reduction <add>, %7, %cst_6 [1] : vector<8x256xf32> to vector<8xf32>
    %11 = vector.shape_cast %10 : vector<8xf32> to vector<8x1xf32>
    %cst_7 = arith.constant 2.560000e+02 : f32
    %12 = vector.broadcast %cst_7 : f32 to vector<8x1xf32>
    %13 = arith.divf %11, %12 : vector<8x1xf32>
    %14 = vector.broadcast %13 : vector<8x1xf32> to vector<8x256xf32>
    %15 = arith.subf %7, %14 : vector<8x256xf32>
    %16 = arith.mulf %15, %15 : vector<8x256xf32>
    %cst_8 = arith.constant dense<0.000000e+00> : vector<8xf32>
    %17 = vector.multi_reduction <add>, %16, %cst_8 [1] : vector<8x256xf32> to vector<8xf32>
    %18 = vector.shape_cast %17 : vector<8xf32> to vector<8x1xf32>
    %cst_9 = arith.constant 2.560000e+02 : f32
    %19 = vector.broadcast %cst_9 : f32 to vector<8x1xf32>
    %20 = arith.divf %18, %19 : vector<8x1xf32>
    %21 = vector.broadcast %13 : vector<8x1xf32> to vector<8x256xf32>
    %22 = arith.subf %7, %21 : vector<8x256xf32>
    %cst_10 = arith.constant 9.99999974E-6 : f32
    %23 = vector.broadcast %cst_10 : f32 to vector<8x1xf32>
    %24 = arith.addf %20, %23 : vector<8x1xf32>
    %25 = math.rsqrt %24 : vector<8x1xf32>
    %26 = vector.broadcast %25 : vector<8x1xf32> to vector<8x256xf32>
    %27 = arith.mulf %22, %26 : vector<8x256xf32>
    %28 = vector.broadcast %8 : vector<1x256xf32> to vector<8x256xf32>
    %29 = arith.mulf %27, %28 : vector<8x256xf32>
    %30 = vector.broadcast %9 : vector<1x256xf32> to vector<8x256xf32>
    %31 = arith.addf %29, %30 : vector<8x256xf32>
    %cst_11 = arith.constant 0.000000e+00 : f32
    %32 = vector.broadcast %cst_11 : f32 to vector<8x256xf32>
    %33 = arith.maximumf %31, %32 : vector<8x256xf32>
    %34 = arith.truncf %33 : vector<8x256xf32> to vector<8x256xbf16>
    %c0_12 = arith.constant 0 : index
    %c0_13 = arith.constant 0 : index
    %c0_14 = arith.constant 0 : index
    %35 = vector.load %arg5[%c0_12, %c0_13, %c0_14] : memref<4x256x256xbf16, #tpu.memory_space<vmem>>, vector<1x256x256xbf16>
    %36 = vector.shape_cast %35 : vector<1x256x256xbf16> to vector<256x256xbf16>
    %cst_15 = arith.constant dense<0.000000e+00> : vector<8x256xf32>
    %37 = tpu.matmul %34, %36, %cst_15 {dimension_numbers = #tpu.dot_dimension_numbers<[1], [0], [0], [1], [0, 0, 1, 1], [], []>} : vector<8x256xbf16>, vector<256x256xbf16>, vector<8x256xf32> -> vector<8x256xf32>
    %38 = vector.extract_strided_slice %0 {offsets = [3, 0], sizes = [1, 256], strides = [1, 1]} : vector<14x256xf32> to vector<1x256xf32>
    %39 = vector.broadcast %38 : vector<1x256xf32> to vector<8x256xf32>
    %40 = arith.addf %37, %39 : vector<8x256xf32>
    %41 = vector.extract_strided_slice %0 {offsets = [4, 0], sizes = [1, 256], strides = [1, 1]} : vector<14x256xf32> to vector<1x256xf32>
    %42 = vector.extract_strided_slice %0 {offsets = [5, 0], sizes = [1, 256], strides = [1, 1]} : vector<14x256xf32> to vector<1x256xf32>
    %cst_16 = arith.constant dense<0.000000e+00> : vector<8xf32>
    %43 = vector.multi_reduction <add>, %40, %cst_16 [1] : vector<8x256xf32> to vector<8xf32>
    %44 = vector.shape_cast %43 : vector<8xf32> to vector<8x1xf32>
    %cst_17 = arith.constant 2.560000e+02 : f32
    %45 = vector.broadcast %cst_17 : f32 to vector<8x1xf32>
    %46 = arith.divf %44, %45 : vector<8x1xf32>
    %47 = vector.broadcast %46 : vector<8x1xf32> to vector<8x256xf32>
    %48 = arith.subf %40, %47 : vector<8x256xf32>
    %49 = arith.mulf %48, %48 : vector<8x256xf32>
    %cst_18 = arith.constant dense<0.000000e+00> : vector<8xf32>
    %50 = vector.multi_reduction <add>, %49, %cst_18 [1] : vector<8x256xf32> to vector<8xf32>
    %51 = vector.shape_cast %50 : vector<8xf32> to vector<8x1xf32>
    %cst_19 = arith.constant 2.560000e+02 : f32
    %52 = vector.broadcast %cst_19 : f32 to vector<8x1xf32>
    %53 = arith.divf %51, %52 : vector<8x1xf32>
    %54 = vector.broadcast %46 : vector<8x1xf32> to vector<8x256xf32>
    %55 = arith.subf %40, %54 : vector<8x256xf32>
    %cst_20 = arith.constant 9.99999974E-6 : f32
    %56 = vector.broadcast %cst_20 : f32 to vector<8x1xf32>
    %57 = arith.addf %53, %56 : vector<8x1xf32>
    %58 = math.rsqrt %57 : vector<8x1xf32>
    %59 = vector.broadcast %58 : vector<8x1xf32> to vector<8x256xf32>
    %60 = arith.mulf %55, %59 : vector<8x256xf32>
    %61 = vector.broadcast %41 : vector<1x256xf32> to vector<8x256xf32>
    %62 = arith.mulf %60, %61 : vector<8x256xf32>
    %63 = vector.broadcast %42 : vector<1x256xf32> to vector<8x256xf32>
    %64 = arith.addf %62, %63 : vector<8x256xf32>
    %cst_21 = arith.constant 0.000000e+00 : f32
    %65 = vector.broadcast %cst_21 : f32 to vector<8x256xf32>
    %66 = arith.maximumf %64, %65 : vector<8x256xf32>
    %c0_22 = arith.constant 0 : index
    %c0_23 = arith.constant 0 : index
    %c0_24 = arith.constant 0 : index
    %67 = vector.load %arg2[%c0_22, %c0_23, %c0_24] : memref<1x8x256xbf16, #tpu.memory_space<vmem>>, vector<1x8x256xbf16>
    %68 = vector.shape_cast %67 : vector<1x8x256xbf16> to vector<8x256xbf16>
    %69 = arith.extf %68 : vector<8x256xbf16> to vector<8x256xf32>
    %70 = arith.addf %66, %69 : vector<8x256xf32>
    %71 = arith.truncf %70 : vector<8x256xf32> to vector<8x256xbf16>
    %c0_25 = arith.constant 0 : index
    %c0_26 = arith.constant 0 : index
    %72 = vector.load %arg6[%c0_25, %c0_26] : memref<256x768xbf16, #tpu.memory_space<vmem>>, vector<256x768xbf16>
    %cst_27 = arith.constant dense<0.000000e+00> : vector<8x768xf32>
    %73 = tpu.matmul %71, %72, %cst_27 {dimension_numbers = #tpu.dot_dimension_numbers<[1], [0], [0], [1], [0, 0, 1, 1], [], []>} : vector<8x256xbf16>, vector<256x768xbf16>, vector<8x768xf32> -> vector<8x768xf32>
    %c0_28 = arith.constant 0 : index
    %c0_29 = arith.constant 0 : index
    %74 = vector.load %arg8[%c0_28, %c0_29] : memref<1x768xf32, #tpu.memory_space<vmem>>, vector<1x768xf32>
    %75 = vector.broadcast %74 : vector<1x768xf32> to vector<8x768xf32>
    %76 = arith.addf %73, %75 : vector<8x768xf32>
    %77 = arith.truncf %76 : vector<8x768xf32> to vector<8x768xbf16>
    %c0_30 = arith.constant 0 : index
    %c0_31 = arith.constant 0 : index
    %c0_32 = arith.constant 0 : index
    %78 = vector.load %arg3[%c0_30, %c0_31, %c0_32] : memref<1x1x8xi32, #tpu.memory_space<vmem>>, vector<1x1x8xi32>
    %79 = arith.sitofp %78 : vector<1x1x8xi32> to vector<1x1x8xf32>
    %cst_33 = arith.constant -1.000000e+09 : f32
    %80 = vector.broadcast %cst_33 : f32 to vector<1x1x8xf32>
    %81 = arith.mulf %79, %80 : vector<1x1x8xf32>
    %82 = vector.extract_strided_slice %77 {offsets = [0, 0], sizes = [8, 32], strides = [1, 1]} : vector<8x768xbf16> to vector<8x32xbf16>
    %83 = vector.shape_cast %82 : vector<8x32xbf16> to vector<1x8x32xbf16>
    %84 = vector.extract_strided_slice %77 {offsets = [0, 256], sizes = [8, 32], strides = [1, 1]} : vector<8x768xbf16> to vector<8x32xbf16>
    %85 = vector.shape_cast %84 : vector<8x32xbf16> to vector<1x8x32xbf16>
    %86 = vector.extract_strided_slice %77 {offsets = [0, 512], sizes = [8, 32], strides = [1, 1]} : vector<8x768xbf16> to vector<8x32xbf16>
    %87 = vector.shape_cast %86 : vector<8x32xbf16> to vector<1x8x32xbf16>
    "tpu.trace_start"() <{level = 10 : i32, message = "bqd,bkd->bqk"}> : () -> ()
    %cst_34 = arith.constant dense<0.000000e+00> : vector<1x8x8xf32>
    %88 = tpu.matmul %83, %85, %cst_34 {dimension_numbers = #tpu.dot_dimension_numbers<[2], [2], [1], [1], [0, 0, 0, 1, 1, 1], [0], [0]>} : vector<1x8x32xbf16>, vector<1x8x32xbf16>, vector<1x8x8xf32> -> vector<1x8x8xf32>
    "tpu.trace_stop"() : () -> ()
    %89 = vector.broadcast %81 : vector<1x1x8xf32> to vector<1x8x8xf32>
    %90 = arith.addf %88, %89 : vector<1x8x8xf32>
    %cst_35 = arith.constant dense<0xFF800000> : vector<1x8xf32>
    %91 = vector.multi_reduction <maximumf>, %90, %cst_35 [2] : vector<1x8x8xf32> to vector<1x8xf32>
    %92 = vector.shape_cast %91 : vector<1x8xf32> to vector<1x8x1xf32>
    %93 = vector.broadcast %92 : vector<1x8x1xf32> to vector<1x8x8xf32>
    %94 = arith.subf %90, %93 : vector<1x8x8xf32>
    %95 = math.exp %94 : vector<1x8x8xf32>
    %cst_36 = arith.constant dense<0.000000e+00> : vector<1x8xf32>
    %96 = vector.multi_reduction <add>, %95, %cst_36 [2] : vector<1x8x8xf32> to vector<1x8xf32>
    %97 = vector.shape_cast %96 : vector<1x8xf32> to vector<1x8x1xf32>
    %98 = tpu.reciprocal %97 {approx = true} : vector<1x8x1xf32> -> vector<1x8x1xf32>
    %99 = vector.broadcast %98 : vector<1x8x1xf32> to vector<1x8x8xf32>
    %100 = arith.mulf %95, %99 : vector<1x8x8xf32>
    %101 = arith.truncf %100 : vector<1x8x8xf32> to vector<1x8x8xbf16>
    "tpu.trace_start"() <{level = 10 : i32, message = "bqk,bkd->bqd"}> : () -> ()
    %cst_37 = arith.constant dense<0.000000e+00> : vector<1x8x32xf32>
    %102 = tpu.matmul %101, %87, %cst_37 {dimension_numbers = #tpu.dot_dimension_numbers<[2], [1], [1], [2], [0, 0, 0, 1, 1, 2], [0], [0]>} : vector<1x8x8xbf16>, vector<1x8x32xbf16>, vector<1x8x32xf32> -> vector<1x8x32xf32>
    "tpu.trace_stop"() : () -> ()
    %103 = vector.shape_cast %102 : vector<1x8x32xf32> to vector<8x32xf32>
    %c0_38 = arith.constant 0 : index
    %c0_39 = arith.constant 0 : index
    %104 = vector.load %arg13[%c0_38, %c0_39] : memref<8x256xf32, #tpu.memory_space<vmem>>, vector<8x32xf32>
    tpu.vector_store %arg13[%c0_38, %c0_39], %103 {strides = array<i32>} : memref<8x256xf32, #tpu.memory_space<vmem>>, vector<8x32xf32>,
    %105 = vector.extract_strided_slice %77 {offsets = [0, 32], sizes = [8, 32], strides = [1, 1]} : vector<8x768xbf16> to vector<8x32xbf16>
    %106 = vector.shape_cast %105 : vector<8x32xbf16> to vector<1x8x32xbf16>
    %107 = vector.extract_strided_slice %77 {offsets = [0, 288], sizes = [8, 32], strides = [1, 1]} : vector<8x768xbf16> to vector<8x32xbf16>
    %108 = vector.shape_cast %107 : vector<8x32xbf16> to vector<1x8x32xbf16>
    %109 = vector.extract_strided_slice %77 {offsets = [0, 544], sizes = [8, 32], strides = [1, 1]} : vector<8x768xbf16> to vector<8x32xbf16>
    %110 = vector.shape_cast %109 : vector<8x32xbf16> to vector<1x8x32xbf16>
    "tpu.trace_start"() <{level = 10 : i32, message = "bqd,bkd->bqk"}> : () -> ()
    %cst_40 = arith.constant dense<0.000000e+00> : vector<1x8x8xf32>
    %111 = tpu.matmul %106, %108, %cst_40 {dimension_numbers = #tpu.dot_dimension_numbers<[2], [2], [1], [1], [0, 0, 0, 1, 1, 1], [0], [0]>} : vector<1x8x32xbf16>, vector<1x8x32xbf16>, vector<1x8x8xf32> -> vector<1x8x8xf32>
    "tpu.trace_stop"() : () -> ()
    %112 = vector.broadcast %81 : vector<1x1x8xf32> to vector<1x8x8xf32>
    %113 = arith.addf %111, %112 : vector<1x8x8xf32>
    %cst_41 = arith.constant dense<0xFF800000> : vector<1x8xf32>
    %114 = vector.multi_reduction <maximumf>, %113, %cst_41 [2] : vector<1x8x8xf32> to vector<1x8xf32>
    %115 = vector.shape_cast %114 : vector<1x8xf32> to vector<1x8x1xf32>
    %116 = vector.broadcast %115 : vector<1x8x1xf32> to vector<1x8x8xf32>
    %117 = arith.subf %113, %116 : vector<1x8x8xf32>
    %118 = math.exp %117 : vector<1x8x8xf32>
    %cst_42 = arith.constant dense<0.000000e+00> : vector<1x8xf32>
    %119 = vector.multi_reduction <add>, %118, %cst_42 [2] : vector<1x8x8xf32> to vector<1x8xf32>
    %120 = vector.shape_cast %119 : vector<1x8xf32> to vector<1x8x1xf32>
    %121 = tpu.reciprocal %120 {approx = true} : vector<1x8x1xf32> -> vector<1x8x1xf32>
    %122 = vector.broadcast %121 : vector<1x8x1xf32> to vector<1x8x8xf32>
    %123 = arith.mulf %118, %122 : vector<1x8x8xf32>
    %124 = arith.truncf %123 : vector<1x8x8xf32> to vector<1x8x8xbf16>
    "tpu.trace_start"() <{level = 10 : i32, message = "bqk,bkd->bqd"}> : () -> ()
    %cst_43 = arith.constant dense<0.000000e+00> : vector<1x8x32xf32>
    %125 = tpu.matmul %124, %110, %cst_43 {dimension_numbers = #tpu.dot_dimension_numbers<[2], [1], [1], [2], [0, 0, 0, 1, 1, 2], [0], [0]>} : vector<1x8x8xbf16>, vector<1x8x32xbf16>, vector<1x8x32xf32> -> vector<1x8x32xf32>
    "tpu.trace_stop"() : () -> ()
    %126 = vector.shape_cast %125 : vector<1x8x32xf32> to vector<8x32xf32>
    %c0_44 = arith.constant 0 : index
    %c32 = arith.constant 32 : index
    %127 = vector.load %arg13[%c0_44, %c32] : memref<8x256xf32, #tpu.memory_space<vmem>>, vector<8x32xf32>
    tpu.vector_store %arg13[%c0_44, %c32], %126 {strides = array<i32>} : memref<8x256xf32, #tpu.memory_space<vmem>>, vector<8x32xf32>,
    %128 = vector.extract_strided_slice %77 {offsets = [0, 64], sizes = [8, 32], strides = [1, 1]} : vector<8x768xbf16> to vector<8x32xbf16>
    %129 = vector.shape_cast %128 : vector<8x32xbf16> to vector<1x8x32xbf16>
    %130 = vector.extract_strided_slice %77 {offsets = [0, 320], sizes = [8, 32], strides = [1, 1]} : vector<8x768xbf16> to vector<8x32xbf16>
    %131 = vector.shape_cast %130 : vector<8x32xbf16> to vector<1x8x32xbf16>
    %132 = vector.extract_strided_slice %77 {offsets = [0, 576], sizes = [8, 32], strides = [1, 1]} : vector<8x768xbf16> to vector<8x32xbf16>
    %133 = vector.shape_cast %132 : vector<8x32xbf16> to vector<1x8x32xbf16>
    "tpu.trace_start"() <{level = 10 : i32, message = "bqd,bkd->bqk"}> : () -> ()
    %cst_45 = arith.constant dense<0.000000e+00> : vector<1x8x8xf32>
    %134 = tpu.matmul %129, %131, %cst_45 {dimension_numbers = #tpu.dot_dimension_numbers<[2], [2], [1], [1], [0, 0, 0, 1, 1, 1], [0], [0]>} : vector<1x8x32xbf16>, vector<1x8x32xbf16>, vector<1x8x8xf32> -> vector<1x8x8xf32>
    "tpu.trace_stop"() : () -> ()
    %135 = vector.broadcast %81 : vector<1x1x8xf32> to vector<1x8x8xf32>
    %136 = arith.addf %134, %135 : vector<1x8x8xf32>
    %cst_46 = arith.constant dense<0xFF800000> : vector<1x8xf32>
    %137 = vector.multi_reduction <maximumf>, %136, %cst_46 [2] : vector<1x8x8xf32> to vector<1x8xf32>
    %138 = vector.shape_cast %137 : vector<1x8xf32> to vector<1x8x1xf32>
    %139 = vector.broadcast %138 : vector<1x8x1xf32> to vector<1x8x8xf32>
    %140 = arith.subf %136, %139 : vector<1x8x8xf32>
    %141 = math.exp %140 : vector<1x8x8xf32>
    %cst_47 = arith.constant dense<0.000000e+00> : vector<1x8xf32>
    %142 = vector.multi_reduction <add>, %141, %cst_47 [2] : vector<1x8x8xf32> to vector<1x8xf32>
    %143 = vector.shape_cast %142 : vector<1x8xf32> to vector<1x8x1xf32>
    %144 = tpu.reciprocal %143 {approx = true} : vector<1x8x1xf32> -> vector<1x8x1xf32>
    %145 = vector.broadcast %144 : vector<1x8x1xf32> to vector<1x8x8xf32>
    %146 = arith.mulf %141, %145 : vector<1x8x8xf32>
    %147 = arith.truncf %146 : vector<1x8x8xf32> to vector<1x8x8xbf16>
    "tpu.trace_start"() <{level = 10 : i32, message = "bqk,bkd->bqd"}> : () -> ()
    %cst_48 = arith.constant dense<0.000000e+00> : vector<1x8x32xf32>
    %148 = tpu.matmul %147, %133, %cst_48 {dimension_numbers = #tpu.dot_dimension_numbers<[2], [1], [1], [2], [0, 0, 0, 1, 1, 2], [0], [0]>} : vector<1x8x8xbf16>, vector<1x8x32xbf16>, vector<1x8x32xf32> -> vector<1x8x32xf32>
    "tpu.trace_stop"() : () -> ()
    %149 = vector.shape_cast %148 : vector<1x8x32xf32> to vector<8x32xf32>
    %c0_49 = arith.constant 0 : index
    %c64 = arith.constant 64 : index
    %150 = vector.load %arg13[%c0_49, %c64] : memref<8x256xf32, #tpu.memory_space<vmem>>, vector<8x32xf32>
    tpu.vector_store %arg13[%c0_49, %c64], %149 {strides = array<i32>} : memref<8x256xf32, #tpu.memory_space<vmem>>, vector<8x32xf32>,
    %151 = vector.extract_strided_slice %77 {offsets = [0, 96], sizes = [8, 32], strides = [1, 1]} : vector<8x768xbf16> to vector<8x32xbf16>
    %152 = vector.shape_cast %151 : vector<8x32xbf16> to vector<1x8x32xbf16>
    %153 = vector.extract_strided_slice %77 {offsets = [0, 352], sizes = [8, 32], strides = [1, 1]} : vector<8x768xbf16> to vector<8x32xbf16>
    %154 = vector.shape_cast %153 : vector<8x32xbf16> to vector<1x8x32xbf16>
    %155 = vector.extract_strided_slice %77 {offsets = [0, 608], sizes = [8, 32], strides = [1, 1]} : vector<8x768xbf16> to vector<8x32xbf16>
    %156 = vector.shape_cast %155 : vector<8x32xbf16> to vector<1x8x32xbf16>
    "tpu.trace_start"() <{level = 10 : i32, message = "bqd,bkd->bqk"}> : () -> ()
    %cst_50 = arith.constant dense<0.000000e+00> : vector<1x8x8xf32>
    %157 = tpu.matmul %152, %154, %cst_50 {dimension_numbers = #tpu.dot_dimension_numbers<[2], [2], [1], [1], [0, 0, 0, 1, 1, 1], [0], [0]>} : vector<1x8x32xbf16>, vector<1x8x32xbf16>, vector<1x8x8xf32> -> vector<1x8x8xf32>
    "tpu.trace_stop"() : () -> ()
    %158 = vector.broadcast %81 : vector<1x1x8xf32> to vector<1x8x8xf32>
    %159 = arith.addf %157, %158 : vector<1x8x8xf32>
    %cst_51 = arith.constant dense<0xFF800000> : vector<1x8xf32>
    %160 = vector.multi_reduction <maximumf>, %159, %cst_51 [2] : vector<1x8x8xf32> to vector<1x8xf32>
    %161 = vector.shape_cast %160 : vector<1x8xf32> to vector<1x8x1xf32>
    %162 = vector.broadcast %161 : vector<1x8x1xf32> to vector<1x8x8xf32>
    %163 = arith.subf %159, %162 : vector<1x8x8xf32>
    %164 = math.exp %163 : vector<1x8x8xf32>
    %cst_52 = arith.constant dense<0.000000e+00> : vector<1x8xf32>
    %165 = vector.multi_reduction <add>, %164, %cst_52 [2] : vector<1x8x8xf32> to vector<1x8xf32>
    %166 = vector.shape_cast %165 : vector<1x8xf32> to vector<1x8x1xf32>
    %167 = tpu.reciprocal %166 {approx = true} : vector<1x8x1xf32> -> vector<1x8x1xf32>
    %168 = vector.broadcast %167 : vector<1x8x1xf32> to vector<1x8x8xf32>
    %169 = arith.mulf %164, %168 : vector<1x8x8xf32>
    %170 = arith.truncf %169 : vector<1x8x8xf32> to vector<1x8x8xbf16>
    "tpu.trace_start"() <{level = 10 : i32, message = "bqk,bkd->bqd"}> : () -> ()
    %cst_53 = arith.constant dense<0.000000e+00> : vector<1x8x32xf32>
    %171 = tpu.matmul %170, %156, %cst_53 {dimension_numbers = #tpu.dot_dimension_numbers<[2], [1], [1], [2], [0, 0, 0, 1, 1, 2], [0], [0]>} : vector<1x8x8xbf16>, vector<1x8x32xbf16>, vector<1x8x32xf32> -> vector<1x8x32xf32>
    "tpu.trace_stop"() : () -> ()
    %172 = vector.shape_cast %171 : vector<1x8x32xf32> to vector<8x32xf32>
    %c0_54 = arith.constant 0 : index
    %c96 = arith.constant 96 : index
    %173 = vector.load %arg13[%c0_54, %c96] : memref<8x256xf32, #tpu.memory_space<vmem>>, vector<8x32xf32>
    tpu.vector_store %arg13[%c0_54, %c96], %172 {strides = array<i32>} : memref<8x256xf32, #tpu.memory_space<vmem>>, vector<8x32xf32>,
    %174 = vector.extract_strided_slice %77 {offsets = [0, 128], sizes = [8, 32], strides = [1, 1]} : vector<8x768xbf16> to vector<8x32xbf16>
    %175 = vector.shape_cast %174 : vector<8x32xbf16> to vector<1x8x32xbf16>
    %176 = vector.extract_strided_slice %77 {offsets = [0, 384], sizes = [8, 32], strides = [1, 1]} : vector<8x768xbf16> to vector<8x32xbf16>
    %177 = vector.shape_cast %176 : vector<8x32xbf16> to vector<1x8x32xbf16>
    %178 = vector.extract_strided_slice %77 {offsets = [0, 640], sizes = [8, 32], strides = [1, 1]} : vector<8x768xbf16> to vector<8x32xbf16>
    %179 = vector.shape_cast %178 : vector<8x32xbf16> to vector<1x8x32xbf16>
    "tpu.trace_start"() <{level = 10 : i32, message = "bqd,bkd->bqk"}> : () -> ()
    %cst_55 = arith.constant dense<0.000000e+00> : vector<1x8x8xf32>
    %180 = tpu.matmul %175, %177, %cst_55 {dimension_numbers = #tpu.dot_dimension_numbers<[2], [2], [1], [1], [0, 0, 0, 1, 1, 1], [0], [0]>} : vector<1x8x32xbf16>, vector<1x8x32xbf16>, vector<1x8x8xf32> -> vector<1x8x8xf32>
    "tpu.trace_stop"() : () -> ()
    %181 = vector.broadcast %81 : vector<1x1x8xf32> to vector<1x8x8xf32>
    %182 = arith.addf %180, %181 : vector<1x8x8xf32>
    %cst_56 = arith.constant dense<0xFF800000> : vector<1x8xf32>
    %183 = vector.multi_reduction <maximumf>, %182, %cst_56 [2] : vector<1x8x8xf32> to vector<1x8xf32>
    %184 = vector.shape_cast %183 : vector<1x8xf32> to vector<1x8x1xf32>
    %185 = vector.broadcast %184 : vector<1x8x1xf32> to vector<1x8x8xf32>
    %186 = arith.subf %182, %185 : vector<1x8x8xf32>
    %187 = math.exp %186 : vector<1x8x8xf32>
    %cst_57 = arith.constant dense<0.000000e+00> : vector<1x8xf32>
    %188 = vector.multi_reduction <add>, %187, %cst_57 [2] : vector<1x8x8xf32> to vector<1x8xf32>
    %189 = vector.shape_cast %188 : vector<1x8xf32> to vector<1x8x1xf32>
    %190 = tpu.reciprocal %189 {approx = true} : vector<1x8x1xf32> -> vector<1x8x1xf32>
    %191 = vector.broadcast %190 : vector<1x8x1xf32> to vector<1x8x8xf32>
    %192 = arith.mulf %187, %191 : vector<1x8x8xf32>
    %193 = arith.truncf %192 : vector<1x8x8xf32> to vector<1x8x8xbf16>
    "tpu.trace_start"() <{level = 10 : i32, message = "bqk,bkd->bqd"}> : () -> ()
    %cst_58 = arith.constant dense<0.000000e+00> : vector<1x8x32xf32>
    %194 = tpu.matmul %193, %179, %cst_58 {dimension_numbers = #tpu.dot_dimension_numbers<[2], [1], [1], [2], [0, 0, 0, 1, 1, 2], [0], [0]>} : vector<1x8x8xbf16>, vector<1x8x32xbf16>, vector<1x8x32xf32> -> vector<1x8x32xf32>
    "tpu.trace_stop"() : () -> ()
    %195 = vector.shape_cast %194 : vector<1x8x32xf32> to vector<8x32xf32>
    %c0_59 = arith.constant 0 : index
    %c128 = arith.constant 128 : index
    %196 = vector.load %arg13[%c0_59, %c128] : memref<8x256xf32, #tpu.memory_space<vmem>>, vector<8x32xf32>
    tpu.vector_store %arg13[%c0_59, %c128], %195 {strides = array<i32>} : memref<8x256xf32, #tpu.memory_space<vmem>>, vector<8x32xf32>,
    %197 = vector.extract_strided_slice %77 {offsets = [0, 160], sizes = [8, 32], strides = [1, 1]} : vector<8x768xbf16> to vector<8x32xbf16>
    %198 = vector.shape_cast %197 : vector<8x32xbf16> to vector<1x8x32xbf16>
    %199 = vector.extract_strided_slice %77 {offsets = [0, 416], sizes = [8, 32], strides = [1, 1]} : vector<8x768xbf16> to vector<8x32xbf16>
    %200 = vector.shape_cast %199 : vector<8x32xbf16> to vector<1x8x32xbf16>
    %201 = vector.extract_strided_slice %77 {offsets = [0, 672], sizes = [8, 32], strides = [1, 1]} : vector<8x768xbf16> to vector<8x32xbf16>
    %202 = vector.shape_cast %201 : vector<8x32xbf16> to vector<1x8x32xbf16>
    "tpu.trace_start"() <{level = 10 : i32, message = "bqd,bkd->bqk"}> : () -> ()
    %cst_60 = arith.constant dense<0.000000e+00> : vector<1x8x8xf32>
    %203 = tpu.matmul %198, %200, %cst_60 {dimension_numbers = #tpu.dot_dimension_numbers<[2], [2], [1], [1], [0, 0, 0, 1, 1, 1], [0], [0]>} : vector<1x8x32xbf16>, vector<1x8x32xbf16>, vector<1x8x8xf32> -> vector<1x8x8xf32>
    "tpu.trace_stop"() : () -> ()
    %204 = vector.broadcast %81 : vector<1x1x8xf32> to vector<1x8x8xf32>
    %205 = arith.addf %203, %204 : vector<1x8x8xf32>
    %cst_61 = arith.constant dense<0xFF800000> : vector<1x8xf32>
    %206 = vector.multi_reduction <maximumf>, %205, %cst_61 [2] : vector<1x8x8xf32> to vector<1x8xf32>
    %207 = vector.shape_cast %206 : vector<1x8xf32> to vector<1x8x1xf32>
    %208 = vector.broadcast %207 : vector<1x8x1xf32> to vector<1x8x8xf32>
    %209 = arith.subf %205, %208 : vector<1x8x8xf32>
    %210 = math.exp %209 : vector<1x8x8xf32>
    %cst_62 = arith.constant dense<0.000000e+00> : vector<1x8xf32>
    %211 = vector.multi_reduction <add>, %210, %cst_62 [2] : vector<1x8x8xf32> to vector<1x8xf32>
    %212 = vector.shape_cast %211 : vector<1x8xf32> to vector<1x8x1xf32>
    %213 = tpu.reciprocal %212 {approx = true} : vector<1x8x1xf32> -> vector<1x8x1xf32>
    %214 = vector.broadcast %213 : vector<1x8x1xf32> to vector<1x8x8xf32>
    %215 = arith.mulf %210, %214 : vector<1x8x8xf32>
    %216 = arith.truncf %215 : vector<1x8x8xf32> to vector<1x8x8xbf16>
    "tpu.trace_start"() <{level = 10 : i32, message = "bqk,bkd->bqd"}> : () -> ()
    %cst_63 = arith.constant dense<0.000000e+00> : vector<1x8x32xf32>
    %217 = tpu.matmul %216, %202, %cst_63 {dimension_numbers = #tpu.dot_dimension_numbers<[2], [1], [1], [2], [0, 0, 0, 1, 1, 2], [0], [0]>} : vector<1x8x8xbf16>, vector<1x8x32xbf16>, vector<1x8x32xf32> -> vector<1x8x32xf32>
    "tpu.trace_stop"() : () -> ()
    %218 = vector.shape_cast %217 : vector<1x8x32xf32> to vector<8x32xf32>
    %c0_64 = arith.constant 0 : index
    %c160 = arith.constant 160 : index
    %219 = vector.load %arg13[%c0_64, %c160] : memref<8x256xf32, #tpu.memory_space<vmem>>, vector<8x32xf32>
    tpu.vector_store %arg13[%c0_64, %c160], %218 {strides = array<i32>} : memref<8x256xf32, #tpu.memory_space<vmem>>, vector<8x32xf32>,
    %220 = vector.extract_strided_slice %77 {offsets = [0, 192], sizes = [8, 32], strides = [1, 1]} : vector<8x768xbf16> to vector<8x32xbf16>
    %221 = vector.shape_cast %220 : vector<8x32xbf16> to vector<1x8x32xbf16>
    %222 = vector.extract_strided_slice %77 {offsets = [0, 448], sizes = [8, 32], strides = [1, 1]} : vector<8x768xbf16> to vector<8x32xbf16>
    %223 = vector.shape_cast %222 : vector<8x32xbf16> to vector<1x8x32xbf16>
    %224 = vector.extract_strided_slice %77 {offsets = [0, 704], sizes = [8, 32], strides = [1, 1]} : vector<8x768xbf16> to vector<8x32xbf16>
    %225 = vector.shape_cast %224 : vector<8x32xbf16> to vector<1x8x32xbf16>
    "tpu.trace_start"() <{level = 10 : i32, message = "bqd,bkd->bqk"}> : () -> ()
    %cst_65 = arith.constant dense<0.000000e+00> : vector<1x8x8xf32>
    %226 = tpu.matmul %221, %223, %cst_65 {dimension_numbers = #tpu.dot_dimension_numbers<[2], [2], [1], [1], [0, 0, 0, 1, 1, 1], [0], [0]>} : vector<1x8x32xbf16>, vector<1x8x32xbf16>, vector<1x8x8xf32> -> vector<1x8x8xf32>
    "tpu.trace_stop"() : () -> ()
    %227 = vector.broadcast %81 : vector<1x1x8xf32> to vector<1x8x8xf32>
    %228 = arith.addf %226, %227 : vector<1x8x8xf32>
    %cst_66 = arith.constant dense<0xFF800000> : vector<1x8xf32>
    %229 = vector.multi_reduction <maximumf>, %228, %cst_66 [2] : vector<1x8x8xf32> to vector<1x8xf32>
    %230 = vector.shape_cast %229 : vector<1x8xf32> to vector<1x8x1xf32>
    %231 = vector.broadcast %230 : vector<1x8x1xf32> to vector<1x8x8xf32>
    %232 = arith.subf %228, %231 : vector<1x8x8xf32>
    %233 = math.exp %232 : vector<1x8x8xf32>
    %cst_67 = arith.constant dense<0.000000e+00> : vector<1x8xf32>
    %234 = vector.multi_reduction <add>, %233, %cst_67 [2] : vector<1x8x8xf32> to vector<1x8xf32>
    %235 = vector.shape_cast %234 : vector<1x8xf32> to vector<1x8x1xf32>
    %236 = tpu.reciprocal %235 {approx = true} : vector<1x8x1xf32> -> vector<1x8x1xf32>
    %237 = vector.broadcast %236 : vector<1x8x1xf32> to vector<1x8x8xf32>
    %238 = arith.mulf %233, %237 : vector<1x8x8xf32>
    %239 = arith.truncf %238 : vector<1x8x8xf32> to vector<1x8x8xbf16>
    "tpu.trace_start"() <{level = 10 : i32, message = "bqk,bkd->bqd"}> : () -> ()
    %cst_68 = arith.constant dense<0.000000e+00> : vector<1x8x32xf32>
    %240 = tpu.matmul %239, %225, %cst_68 {dimension_numbers = #tpu.dot_dimension_numbers<[2], [1], [1], [2], [0, 0, 0, 1, 1, 2], [0], [0]>} : vector<1x8x8xbf16>, vector<1x8x32xbf16>, vector<1x8x32xf32> -> vector<1x8x32xf32>
    "tpu.trace_stop"() : () -> ()
    %241 = vector.shape_cast %240 : vector<1x8x32xf32> to vector<8x32xf32>
    %c0_69 = arith.constant 0 : index
    %c192 = arith.constant 192 : index
    %242 = vector.load %arg13[%c0_69, %c192] : memref<8x256xf32, #tpu.memory_space<vmem>>, vector<8x32xf32>
    tpu.vector_store %arg13[%c0_69, %c192], %241 {strides = array<i32>} : memref<8x256xf32, #tpu.memory_space<vmem>>, vector<8x32xf32>,
    %243 = vector.extract_strided_slice %77 {offsets = [0, 224], sizes = [8, 32], strides = [1, 1]} : vector<8x768xbf16> to vector<8x32xbf16>
    %244 = vector.shape_cast %243 : vector<8x32xbf16> to vector<1x8x32xbf16>
    %245 = vector.extract_strided_slice %77 {offsets = [0, 480], sizes = [8, 32], strides = [1, 1]} : vector<8x768xbf16> to vector<8x32xbf16>
    %246 = vector.shape_cast %245 : vector<8x32xbf16> to vector<1x8x32xbf16>
    %247 = vector.extract_strided_slice %77 {offsets = [0, 736], sizes = [8, 32], strides = [1, 1]} : vector<8x768xbf16> to vector<8x32xbf16>
    %248 = vector.shape_cast %247 : vector<8x32xbf16> to vector<1x8x32xbf16>
    "tpu.trace_start"() <{level = 10 : i32, message = "bqd,bkd->bqk"}> : () -> ()
    %cst_70 = arith.constant dense<0.000000e+00> : vector<1x8x8xf32>
    %249 = tpu.matmul %244, %246, %cst_70 {dimension_numbers = #tpu.dot_dimension_numbers<[2], [2], [1], [1], [0, 0, 0, 1, 1, 1], [0], [0]>} : vector<1x8x32xbf16>, vector<1x8x32xbf16>, vector<1x8x8xf32> -> vector<1x8x8xf32>
    "tpu.trace_stop"() : () -> ()
    %250 = vector.broadcast %81 : vector<1x1x8xf32> to vector<1x8x8xf32>
    %251 = arith.addf %249, %250 : vector<1x8x8xf32>
    %cst_71 = arith.constant dense<0xFF800000> : vector<1x8xf32>
    %252 = vector.multi_reduction <maximumf>, %251, %cst_71 [2] : vector<1x8x8xf32> to vector<1x8xf32>
    %253 = vector.shape_cast %252 : vector<1x8xf32> to vector<1x8x1xf32>
    %254 = vector.broadcast %253 : vector<1x8x1xf32> to vector<1x8x8xf32>
    %255 = arith.subf %251, %254 : vector<1x8x8xf32>
    %256 = math.exp %255 : vector<1x8x8xf32>
    %cst_72 = arith.constant dense<0.000000e+00> : vector<1x8xf32>
    %257 = vector.multi_reduction <add>, %256, %cst_72 [2] : vector<1x8x8xf32> to vector<1x8xf32>
    %258 = vector.shape_cast %257 : vector<1x8xf32> to vector<1x8x1xf32>
    %259 = tpu.reciprocal %258 {approx = true} : vector<1x8x1xf32> -> vector<1x8x1xf32>
    %260 = vector.broadcast %259 : vector<1x8x1xf32> to vector<1x8x8xf32>
    %261 = arith.mulf %256, %260 : vector<1x8x8xf32>
    %262 = arith.truncf %261 : vector<1x8x8xf32> to vector<1x8x8xbf16>
    "tpu.trace_start"() <{level = 10 : i32, message = "bqk,bkd->bqd"}> : () -> ()
    %cst_73 = arith.constant dense<0.000000e+00> : vector<1x8x32xf32>
    %263 = tpu.matmul %262, %248, %cst_73 {dimension_numbers = #tpu.dot_dimension_numbers<[2], [1], [1], [2], [0, 0, 0, 1, 1, 2], [0], [0]>} : vector<1x8x8xbf16>, vector<1x8x32xbf16>, vector<1x8x32xf32> -> vector<1x8x32xf32>
    "tpu.trace_stop"() : () -> ()
    %264 = vector.shape_cast %263 : vector<1x8x32xf32> to vector<8x32xf32>
    %c0_74 = arith.constant 0 : index
    %c224 = arith.constant 224 : index
    %265 = vector.load %arg13[%c0_74, %c224] : memref<8x256xf32, #tpu.memory_space<vmem>>, vector<8x32xf32>
    tpu.vector_store %arg13[%c0_74, %c224], %264 {strides = array<i32>} : memref<8x256xf32, #tpu.memory_space<vmem>>, vector<8x32xf32>,
    %c0_75 = arith.constant 0 : index
    %c0_76 = arith.constant 0 : index
    %266 = vector.load %arg13[%c0_75, %c0_76] : memref<8x256xf32, #tpu.memory_space<vmem>>, vector<8x256xf32>
    %267 = arith.truncf %266 : vector<8x256xf32> to vector<8x256xbf16>
    %c0_77 = arith.constant 0 : index
    %c0_78 = arith.constant 0 : index
    %268 = vector.load %arg7[%c0_77, %c0_78] : memref<256x256xbf16, #tpu.memory_space<vmem>>, vector<256x256xbf16>
    %cst_79 = arith.constant dense<0.000000e+00> : vector<8x256xf32>
    %269 = tpu.matmul %267, %268, %cst_79 {dimension_numbers = #tpu.dot_dimension_numbers<[1], [0], [0], [1], [0, 0, 1, 1], [], []>} : vector<8x256xbf16>, vector<256x256xbf16>, vector<8x256xf32> -> vector<8x256xf32>
    %270 = vector.extract_strided_slice %0 {offsets = [6, 0], sizes = [1, 256], strides = [1, 1]} : vector<14x256xf32> to vector<1x256xf32>
    %271 = vector.broadcast %270 : vector<1x256xf32> to vector<8x256xf32>
    %272 = arith.addf %269, %271 : vector<8x256xf32>
    %273 = arith.addf %70, %272 : vector<8x256xf32>
    %274 = vector.extract_strided_slice %0 {offsets = [7, 0], sizes = [1, 256], strides = [1, 1]} : vector<14x256xf32> to vector<1x256xf32>
    %275 = vector.extract_strided_slice %0 {offsets = [8, 0], sizes = [1, 256], strides = [1, 1]} : vector<14x256xf32> to vector<1x256xf32>
    %cst_80 = arith.constant dense<0.000000e+00> : vector<8xf32>
    %276 = vector.multi_reduction <add>, %273, %cst_80 [1] : vector<8x256xf32> to vector<8xf32>
    %277 = vector.shape_cast %276 : vector<8xf32> to vector<8x1xf32>
    %cst_81 = arith.constant 2.560000e+02 : f32
    %278 = vector.broadcast %cst_81 : f32 to vector<8x1xf32>
    %279 = arith.divf %277, %278 : vector<8x1xf32>
    %280 = vector.broadcast %279 : vector<8x1xf32> to vector<8x256xf32>
    %281 = arith.subf %273, %280 : vector<8x256xf32>
    %282 = arith.mulf %281, %281 : vector<8x256xf32>
    %cst_82 = arith.constant dense<0.000000e+00> : vector<8xf32>
    %283 = vector.multi_reduction <add>, %282, %cst_82 [1] : vector<8x256xf32> to vector<8xf32>
    %284 = vector.shape_cast %283 : vector<8xf32> to vector<8x1xf32>
    %cst_83 = arith.constant 2.560000e+02 : f32
    %285 = vector.broadcast %cst_83 : f32 to vector<8x1xf32>
    %286 = arith.divf %284, %285 : vector<8x1xf32>
    %287 = vector.broadcast %279 : vector<8x1xf32> to vector<8x256xf32>
    %288 = arith.subf %273, %287 : vector<8x256xf32>
    %cst_84 = arith.constant 9.99999974E-6 : f32
    %289 = vector.broadcast %cst_84 : f32 to vector<8x1xf32>
    %290 = arith.addf %286, %289 : vector<8x1xf32>
    %291 = math.rsqrt %290 : vector<8x1xf32>
    %292 = vector.broadcast %291 : vector<8x1xf32> to vector<8x256xf32>
    %293 = arith.mulf %288, %292 : vector<8x256xf32>
    %294 = vector.broadcast %274 : vector<1x256xf32> to vector<8x256xf32>
    %295 = arith.mulf %293, %294 : vector<8x256xf32>
    %296 = vector.broadcast %275 : vector<1x256xf32> to vector<8x256xf32>
    %297 = arith.addf %295, %296 : vector<8x256xf32>
    %298 = arith.truncf %297 : vector<8x256xf32> to vector<8x256xbf16>
    %c1 = arith.constant 1 : index
    %c0_85 = arith.constant 0 : index
    %c0_86 = arith.constant 0 : index
    %299 = vector.load %arg5[%c1, %c0_85, %c0_86] : memref<4x256x256xbf16, #tpu.memory_space<vmem>>, vector<1x256x256xbf16>
    %300 = vector.shape_cast %299 : vector<1x256x256xbf16> to vector<256x256xbf16>
    %cst_87 = arith.constant dense<0.000000e+00> : vector<8x256xf32>
    %301 = tpu.matmul %298, %300, %cst_87 {dimension_numbers = #tpu.dot_dimension_numbers<[1], [0], [0], [1], [0, 0, 1, 1], [], []>} : vector<8x256xbf16>, vector<256x256xbf16>, vector<8x256xf32> -> vector<8x256xf32>
    %302 = vector.extract_strided_slice %0 {offsets = [9, 0], sizes = [1, 256], strides = [1, 1]} : vector<14x256xf32> to vector<1x256xf32>
    %303 = vector.broadcast %302 : vector<1x256xf32> to vector<8x256xf32>
    %304 = arith.addf %301, %303 : vector<8x256xf32>
    %cst_88 = arith.constant 0.000000e+00 : f32
    %305 = vector.broadcast %cst_88 : f32 to vector<8x256xf32>
    %306 = arith.maximumf %304, %305 : vector<8x256xf32>
    %307 = arith.truncf %306 : vector<8x256xf32> to vector<8x256xbf16>
    %c2 = arith.constant 2 : index
    %c0_89 = arith.constant 0 : index
    %c0_90 = arith.constant 0 : index
    %308 = vector.load %arg5[%c2, %c0_89, %c0_90] : memref<4x256x256xbf16, #tpu.memory_space<vmem>>, vector<1x256x256xbf16>
    %309 = vector.shape_cast %308 : vector<1x256x256xbf16> to vector<256x256xbf16>
    %cst_91 = arith.constant dense<0.000000e+00> : vector<8x256xf32>
    %310 = tpu.matmul %307, %309, %cst_91 {dimension_numbers = #tpu.dot_dimension_numbers<[1], [0], [0], [1], [0, 0, 1, 1], [], []>} : vector<8x256xbf16>, vector<256x256xbf16>, vector<8x256xf32> -> vector<8x256xf32>
    %311 = vector.extract_strided_slice %0 {offsets = [10, 0], sizes = [1, 256], strides = [1, 1]} : vector<14x256xf32> to vector<1x256xf32>
    %312 = vector.broadcast %311 : vector<1x256xf32> to vector<8x256xf32>
    %313 = arith.addf %310, %312 : vector<8x256xf32>
    %314 = arith.addf %313, %297 : vector<8x256xf32>
    %315 = vector.extract_strided_slice %0 {offsets = [11, 0], sizes = [1, 256], strides = [1, 1]} : vector<14x256xf32> to vector<1x256xf32>
    %316 = vector.extract_strided_slice %0 {offsets = [12, 0], sizes = [1, 256], strides = [1, 1]} : vector<14x256xf32> to vector<1x256xf32>
    %cst_92 = arith.constant dense<0.000000e+00> : vector<8xf32>
    %317 = vector.multi_reduction <add>, %314, %cst_92 [1] : vector<8x256xf32> to vector<8xf32>
    %318 = vector.shape_cast %317 : vector<8xf32> to vector<8x1xf32>
    %cst_93 = arith.constant 2.560000e+02 : f32
    %319 = vector.broadcast %cst_93 : f32 to vector<8x1xf32>
    %320 = arith.divf %318, %319 : vector<8x1xf32>
    %321 = vector.broadcast %320 : vector<8x1xf32> to vector<8x256xf32>
    %322 = arith.subf %314, %321 : vector<8x256xf32>
    %323 = arith.mulf %322, %322 : vector<8x256xf32>
    %cst_94 = arith.constant dense<0.000000e+00> : vector<8xf32>
    %324 = vector.multi_reduction <add>, %323, %cst_94 [1] : vector<8x256xf32> to vector<8xf32>
    %325 = vector.shape_cast %324 : vector<8xf32> to vector<8x1xf32>
    %cst_95 = arith.constant 2.560000e+02 : f32
    %326 = vector.broadcast %cst_95 : f32 to vector<8x1xf32>
    %327 = arith.divf %325, %326 : vector<8x1xf32>
    %328 = vector.broadcast %320 : vector<8x1xf32> to vector<8x256xf32>
    %329 = arith.subf %314, %328 : vector<8x256xf32>
    %cst_96 = arith.constant 9.99999974E-6 : f32
    %330 = vector.broadcast %cst_96 : f32 to vector<8x1xf32>
    %331 = arith.addf %327, %330 : vector<8x1xf32>
    %332 = math.rsqrt %331 : vector<8x1xf32>
    %333 = vector.broadcast %332 : vector<8x1xf32> to vector<8x256xf32>
    %334 = arith.mulf %329, %333 : vector<8x256xf32>
    %335 = vector.broadcast %315 : vector<1x256xf32> to vector<8x256xf32>
    %336 = arith.mulf %334, %335 : vector<8x256xf32>
    %337 = vector.broadcast %316 : vector<1x256xf32> to vector<8x256xf32>
    %338 = arith.addf %336, %337 : vector<8x256xf32>
    %339 = arith.truncf %338 : vector<8x256xf32> to vector<8x256xbf16>
    %c3 = arith.constant 3 : index
    %c0_97 = arith.constant 0 : index
    %c0_98 = arith.constant 0 : index
    %340 = vector.load %arg5[%c3, %c0_97, %c0_98] : memref<4x256x256xbf16, #tpu.memory_space<vmem>>, vector<1x256x256xbf16>
    %341 = vector.shape_cast %340 : vector<1x256x256xbf16> to vector<256x256xbf16>
    %cst_99 = arith.constant dense<0.000000e+00> : vector<8x256xf32>
    %342 = tpu.matmul %339, %341, %cst_99 {dimension_numbers = #tpu.dot_dimension_numbers<[1], [0], [0], [1], [0, 0, 1, 1], [], []>} : vector<8x256xbf16>, vector<256x256xbf16>, vector<8x256xf32> -> vector<8x256xf32>
    %343 = vector.extract_strided_slice %0 {offsets = [13, 0], sizes = [1, 256], strides = [1, 1]} : vector<14x256xf32> to vector<1x256xf32>
    %344 = vector.broadcast %343 : vector<1x256xf32> to vector<8x256xf32>
    %345 = arith.addf %342, %344 : vector<8x256xf32>
    %cst_100 = arith.constant 0.000000e+00 : f32
    %346 = vector.broadcast %cst_100 : f32 to vector<8x256xf32>
    %347 = arith.maximumf %345, %346 : vector<8x256xf32>
    %348 = arith.truncf %347 : vector<8x256xf32> to vector<8x256xbf16>
    %c0_101 = arith.constant 0 : index
    %c0_102 = arith.constant 0 : index
    %349 = vector.load %arg10[%c0_101, %c0_102] : memref<256x128xbf16, #tpu.memory_space<vmem>>, vector<256x128xbf16>
    %cst_103 = arith.constant dense<0.000000e+00> : vector<8x128xf32>
    %350 = tpu.matmul %348, %349, %cst_103 {dimension_numbers = #tpu.dot_dimension_numbers<[1], [0], [0], [1], [0, 0, 1, 1], [], []>} : vector<8x256xbf16>, vector<256x128xbf16>, vector<8x128xf32> -> vector<8x128xf32>
    %c0_104 = arith.constant 0 : index
    %c0_105 = arith.constant 0 : index
    %351 = vector.load %arg11[%c0_104, %c0_105] : memref<1x128xf32, #tpu.memory_space<vmem>>, vector<1x128xf32>
    %352 = vector.broadcast %351 : vector<1x128xf32> to vector<8x128xf32>
    %353 = arith.addf %350, %352 : vector<8x128xf32>
    %354 = vector.shape_cast %353 : vector<8x128xf32> to vector<1x8x128xf32>
    %355 = arith.truncf %354 : vector<1x8x128xf32> to vector<1x8x128xbf16>
    %c0_106 = arith.constant 0 : index
    %c0_107 = arith.constant 0 : index
    %c0_108 = arith.constant 0 : index
    %356 = vector.load %arg12[%c0_106, %c0_107, %c0_108] : memref<1x8x128xbf16, #tpu.memory_space<vmem>>, vector<1x8x128xbf16>
    tpu.vector_store %arg12[%c0_106, %c0_107, %c0_108], %355 {strides = array<i32>} : memref<1x8x128xbf16, #tpu.memory_space<vmem>>, vector<1x8x128xbf16>,
    return
  }
  func.func @transform_0(%arg0: i32) -> (i32, i32, i32) {
    %c0_i32 = arith.constant 0 : i32
    %c0_i32_0 = arith.constant 0 : i32
    %c0_i32_1 = arith.constant 0 : i32
    return %arg0, %c0_i32, %c0_i32_0 : i32, i32, i32
  }
  func.func @transform_1(%arg0: i32) -> (i32, i32, i32) {
    %c0_i32 = arith.constant 0 : i32
    %c0_i32_0 = arith.constant 0 : i32
    %c0_i32_1 = arith.constant 0 : i32
    return %arg0, %c0_i32, %c0_i32_0 : i32, i32, i32
  }
  func.func @transform_2(%arg0: i32) -> (i32, i32, i32) {
    %c0_i32 = arith.constant 0 : i32
    %c0_i32_0 = arith.constant 0 : i32
    %c0_i32_1 = arith.constant 0 : i32
    return %arg0, %c0_i32, %c0_i32_0 : i32, i32, i32
  }
  func.func @transform_3(%arg0: i32) -> (i32, i32) {
    %c0_i32 = arith.constant 0 : i32
    %c0_i32_0 = arith.constant 0 : i32
    %c0_i32_1 = arith.constant 0 : i32
    return %c0_i32, %c0_i32_0 : i32, i32
  }
  func.func @transform_4(%arg0: i32) -> (i32, i32, i32) {
    %c0_i32 = arith.constant 0 : i32
    %c0_i32_0 = arith.constant 0 : i32
    %c0_i32_1 = arith.constant 0 : i32
    %c0_i32_2 = arith.constant 0 : i32
    return %c0_i32, %c0_i32_0, %c0_i32_1 : i32, i32, i32
  }
  func.func @transform_5(%arg0: i32) -> (i32, i32) {
    %c0_i32 = arith.constant 0 : i32
    %c0_i32_0 = arith.constant 0 : i32
    %c0_i32_1 = arith.constant 0 : i32
    return %c0_i32, %c0_i32_0 : i32, i32
  }
  func.func @transform_6(%arg0: i32) -> (i32, i32) {
    %c0_i32 = arith.constant 0 : i32
    %c0_i32_0 = arith.constant 0 : i32
    %c0_i32_1 = arith.constant 0 : i32
    return %c0_i32, %c0_i32_0 : i32, i32
  }
  func.func @transform_7(%arg0: i32) -> (i32, i32) {
    %c0_i32 = arith.constant 0 : i32
    %c0_i32_0 = arith.constant 0 : i32
    %c0_i32_1 = arith.constant 0 : i32
    return %c0_i32, %c0_i32_0 : i32, i32
  }
  func.func @transform_8(%arg0: i32) -> (i32, i32) {
    %c0_i32 = arith.constant 0 : i32
    %c0_i32_0 = arith.constant 0 : i32
    %c0_i32_1 = arith.constant 0 : i32
    return %c0_i32, %c0_i32_0 : i32, i32
  }
  func.func @transform_9(%arg0: i32) -> (i32, i32) {
    %c0_i32 = arith.constant 0 : i32
    %c0_i32_0 = arith.constant 0 : i32
    %c0_i32_1 = arith.constant 0 : i32
    return %c0_i32, %c0_i32_0 : i32, i32
  }
  func.func @transform_10(%arg0: i32) -> (i32, i32) {
    %c0_i32 = arith.constant 0 : i32
    %c0_i32_0 = arith.constant 0 : i32
    %c0_i32_1 = arith.constant 0 : i32
    return %c0_i32, %c0_i32_0 : i32, i32
  }
  func.func @transform_11(%arg0: i32) -> (i32, i32, i32) {
    %c0_i32 = arith.constant 0 : i32
    %c0_i32_0 = arith.constant 0 : i32
    %c0_i32_1 = arith.constant 0 : i32
    return %arg0, %c0_i32, %c0_i32_0 : i32, i32, i32
  }
}

</mosaic_0001>

<llo_original>
// kernel: tpu_custom_call.1
$region0: #{tpu_custom_call.1}
  #allocation0 [shape = 'u32[]', space=smem, size = 0x4, offset = 0x4, fixed_abs, tag = 'smem constant byte address 0x4 - core index']
  #allocation1 [shape = 'u32[144,128]{1,0:T(1,128)}', space=vmem, size = 0x12000, scoped, tag = 'internal scratch']
  #allocation2 [shape = 'f32[8,256]{1,0:T(8,128)}', space=vmem, size = 0x2000, scoped, tag = 'scratch operand']
  %s0 = inlined_call_operand.hbm [shape: bf16[2,8,128], index: 0, kind: input, shape index: {}]
  %s1 = inlined_call_operand.hbm [shape: bf16[2,8,256], index: 1, kind: input, shape index: {}]
  %s2 = inlined_call_operand.vmem [shape: s32[2,1,8], index: 2, kind: input, shape index: {}]
  %s3 = inlined_call_operand.hbm [shape: bf16[128,256], index: 3, kind: input, shape index: {}]
  %s4 = inlined_call_operand.hbm [shape: bf16[4,256,256], index: 4, kind: input, shape index: {}]
  %s5 = inlined_call_operand.hbm [shape: bf16[256,768], index: 5, kind: input, shape index: {}]
  %s6 = inlined_call_operand.hbm [shape: bf16[256,256], index: 6, kind: input, shape index: {}]
  %s7 = inlined_call_operand.vmem [shape: f32[1,768], index: 7, kind: input, shape index: {}]
  %s8 = inlined_call_operand.hbm [shape: f32[14,256], index: 8, kind: input, shape index: {}]
  %s9 = inlined_call_operand.hbm [shape: bf16[256,128], index: 9, kind: input, shape index: {}]
  %s10 = inlined_call_operand.vmem [shape: f32[1,128], index: 10, kind: input, shape index: {}]
  %s11 = inlined_call_operand.hbm [shape: bf16[2,8,128], index: 11, kind: output, shape index: {}]
  %s12 = sld [smem:[#allocation0]]
  $region109: #{tpu_custom_call.1} parent=0
    _
  %s14 = ssub.s32 1, %s12
  %s15 = scalar_select 0, %s14, %s12
  $region1: #{tpu_custom_call.1} parent=0
    #allocation3 [shape = 'u8[4096]{0}', space=vmem, size = 0x1000, scoped, tag = 'input window, operand 0']
    #allocation4 [shape = 's32[2]{0}', space=sflag, size = 0x8, scoped, tag = 'scoped memory for tpu_custom_call.1']
    #allocation5 [shape = 's32[2]{0}', space=sflag, size = 0x8, scoped, tag = 'scoped memory for tpu_custom_call.1']
    #allocation6 [shape = 'u8[8192]{0}', space=vmem, size = 0x2000, scoped, tag = 'input window, operand 1']
    #allocation7 [shape = 's32[2]{0}', space=sflag, size = 0x8, scoped, tag = 'scoped memory for tpu_custom_call.1']
    #allocation8 [shape = 'u8[65536]{0}', space=vmem, size = 0x10000, scoped, tag = 'input window, operand 3, single buffered']
    #allocation9 [shape = 'u8[524288]{0}', space=vmem, size = 0x80000, scoped, tag = 'input window, operand 4, single buffered']
    #allocation10 [shape = 's32[1]{0}', space=sflag, size = 0x4, scoped, tag = 'scoped memory for tpu_custom_call.1']
    #allocation11 [shape = 'u8[393216]{0}', space=vmem, size = 0x60000, scoped, tag = 'input window, operand 5, single buffered']
    #allocation12 [shape = 'u8[131072]{0}', space=vmem, size = 0x20000, scoped, tag = 'input window, operand 6, single buffered']
    #allocation13 [shape = 's32[1]{0}', space=sflag, size = 0x4, scoped, tag = 'scoped memory for tpu_custom_call.1']
    #allocation14 [shape = 'u8[16384]{0}', space=vmem, size = 0x4000, scoped, tag = 'input window, operand 8, single buffered']
    #allocation15 [shape = 'u8[65536]{0}', space=vmem, size = 0x10000, scoped, tag = 'input window, operand 9, single buffered']
    #allocation16 [shape = 's32[1]{0}', space=sflag, size = 0x4, scoped, tag = 'scoped memory for tpu_custom_call.1']
    #allocation17 [shape = 'u8[4096]{0}', space=vmem, size = 0x1000, scoped, tag = 'output window, operand 0']
    %16 = vsyncpa [#allocation4], 0
    %s17 = scalar_lea.sflag [#allocation4], 1
    %18 = vsyncpa %s17, 0
    %19 = vsyncpa [#allocation7], 0
    %s20 = scalar_lea.sflag [#allocation7], 1
    %21 = vsyncpa %s20, 0
    %22 = vsyncpa [#allocation10], 0
    %23 = vsyncpa [#allocation13], 0
    %24 = vsyncpa [#allocation16], 0
    %25 = vsyncpa [#allocation5], 0
    %s26 = scalar_lea.sflag [#allocation5], 1
    %27 = vsyncpa %s26, 0
    loop: start=0, step=1, limit=4
    $region2: #{tpu_custom_call.1} parent=1 // loop_pre_header
      _
    $region3: #{tpu_custom_call.1} parent=1 // loop_header
      %s29 = sphi 0, %s33
      %p30 = scmp.ge.s32.totalorder %s29, 4
      %s39 = sphi 0, %s41
      %s42 = sphi 0, %s39
      %s43 = sphi 0, %s42
      %s59 = sphi 0, %s43
      %s65 = sphi 0, %s67
      %s68 = sphi 0, %s65
      %s69 = sphi 0, %s68
      %s85 = sphi 0, %s69
      %s91 = sphi 0, %s93
      %s94 = sphi 0, %s91
      %s95 = sphi 0, %s94
      %s111 = sphi 0, %s95
      %s115 = sphi 0, %s115
      %s117 = sphi 0, %s115
      %s118 = sphi 0, %s117
      %s132 = sphi 0, %s118
      %s136 = sphi 0, %s136
      %s138 = sphi 0, %s136
      %s139 = sphi 0, %s138
      %s153 = sphi 0, %s139
      %s157 = sphi 0, %s157
      %s159 = sphi 0, %s157
      %s160 = sphi 0, %s159
      %s174 = sphi 0, %s160
      %s178 = sphi 0, %s178
      %s180 = sphi 0, %s178
      %s181 = sphi 0, %s180
      %s195 = sphi 0, %s181
      %s199 = sphi 0, %s199
      %s201 = sphi 0, %s199
      %s202 = sphi 0, %s201
      %s216 = sphi 0, %s202
      %s220 = sphi 0, %s220
      %s222 = sphi 0, %s220
      %s223 = sphi 0, %s222
      %s237 = sphi 0, %s223
      %s241 = sphi 0, %s241
      %s243 = sphi 0, %s241
      %s244 = sphi 0, %s243
      %s258 = sphi 0, %s244
      %s262 = sphi 0, %s262
      %s264 = sphi 0, %s262
      %s265 = sphi 0, %s264
      %s279 = sphi 0, %s265
      %s285 = sphi 0, %s287
      %s288 = sphi 0, %s285
      %s289 = sphi 0, %s288
      %s305 = sphi 0, %s289
    $region4: #{tpu_custom_call.1} parent=1 // loop_header_branch
      %32 = sbr.rel (%p30) target = $region8
    $region5: #{tpu_custom_call.1} parent=1 // loop_body
      %s34 = ssub.s32 %s29, 1
      %s35 = ssub.s32 %s29, 2
      %s36 = sadd.s32 %s29, 1
      %s37 = ssub.s32 %s29, %s36
      %p38 = scmp.eq.s32.totalorder %s37, 0
      %s40 = sadd.s32 %s39, 1
      %s41 = scalar_select %p38, %s39, %s40
      %p44 = pneg %p38
      %p45 = scmp.eq.s32.totalorder %s29, 1
      %p46 = por %p44, %p45
      %p47 = scmp.ne.s32.totalorder %s39, %s42
      %p48 = scmp.eq.s32.totalorder %s29, 0
      %p49 = por %p47, %p48
      %p50 = scmp.ne.s32.totalorder %s39, %s42
      %p51 = scmp.eq.s32.totalorder %s34, 1
      %p52 = por %p50, %p51
      %p53 = scmp.ne.s32.totalorder %s42, %s43
      %p54 = scmp.eq.s32.totalorder %s34, 0
      %p55 = por %p53, %p54
      %p56 = scmp.ne.s32.totalorder %s42, %s43
      %p57 = scmp.eq.s32.totalorder %s35, 1
      %p58 = por %p56, %p57
      %p60 = scmp.ne.s32.totalorder %s43, %s59
      %p61 = scmp.eq.s32.totalorder %s35, 0
      %p62 = por %p60, %p61
      %s63 = ssub.s32 %s29, %s36
      %p64 = scmp.eq.s32.totalorder %s63, 0
      %s66 = sadd.s32 %s65, 1
      %s67 = scalar_select %p64, %s65, %s66
      %p70 = pneg %p64
      %p71 = scmp.eq.s32.totalorder %s29, 1
      %p72 = por %p70, %p71
      %p73 = scmp.ne.s32.totalorder %s65, %s68
      %p74 = scmp.eq.s32.totalorder %s29, 0
      %p75 = por %p73, %p74
      %p76 = scmp.ne.s32.totalorder %s65, %s68
      %p77 = scmp.eq.s32.totalorder %s34, 1
      %p78 = por %p76, %p77
      %p79 = scmp.ne.s32.totalorder %s68, %s69
      %p80 = scmp.eq.s32.totalorder %s34, 0
      %p81 = por %p79, %p80
      %p82 = scmp.ne.s32.totalorder %s68, %s69
      %p83 = scmp.eq.s32.totalorder %s35, 1
      %p84 = por %p82, %p83
      %p86 = scmp.ne.s32.totalorder %s69, %s85
      %p87 = scmp.eq.s32.totalorder %s35, 0
      %p88 = por %p86, %p87
      %s89 = ssub.s32 %s29, %s36
      %p90 = scmp.eq.s32.totalorder %s89, 0
      %s92 = sadd.s32 %s91, 1
      %s93 = scalar_select %p90, %s91, %s92
      %p96 = pneg %p90
      %p97 = scmp.eq.s32.totalorder %s29, 1
      %p98 = por %p96, %p97
      %p99 = scmp.ne.s32.totalorder %s91, %s94
      %p100 = scmp.eq.s32.totalorder %s29, 0
      %p101 = por %p99, %p100
      %p102 = scmp.ne.s32.totalorder %s91, %s94
      %p103 = scmp.eq.s32.totalorder %s34, 1
      %p104 = por %p102, %p103
      %p105 = scmp.ne.s32.totalorder %s94, %s95
      %p106 = scmp.eq.s32.totalorder %s34, 0
      %p107 = por %p105, %p106
      %p108 = scmp.ne.s32.totalorder %s94, %s95
      %p109 = scmp.eq.s32.totalorder %s35, 1
      %p110 = por %p108, %p109
      %p112 = scmp.ne.s32.totalorder %s95, %s111
      %p113 = scmp.eq.s32.totalorder %s35, 0
      %p114 = por %p112, %p113
      %s116 = sadd.s32 %s115, 1
      %p119 = scmp.eq.s32.totalorder %s29, 1
      %p120 = scmp.ne.s32.totalorder %s115, %s117
      %p121 = scmp.eq.s32.totalorder %s29, 0
      %p122 = por %p120, %p121
      %p123 = scmp.ne.s32.totalorder %s115, %s117
      %p124 = scmp.eq.s32.totalorder %s34, 1
      %p125 = por %p123, %p124
      %p126 = scmp.ne.s32.totalorder %s117, %s118
      %p127 = scmp.eq.s32.totalorder %s34, 0
      %p128 = por %p126, %p127
      %p129 = scmp.ne.s32.totalorder %s117, %s118
      %p130 = scmp.eq.s32.totalorder %s35, 1
      %p131 = por %p129, %p130
      %p133 = scmp.ne.s32.totalorder %s118, %s132
      %p134 = scmp.eq.s32.totalorder %s35, 0
      %p135 = por %p133, %p134
      %s137 = sadd.s32 %s136, 1
      %p140 = scmp.eq.s32.totalorder %s29, 1
      %p141 = scmp.ne.s32.totalorder %s136, %s138
      %p142 = scmp.eq.s32.totalorder %s29, 0
      %p143 = por %p141, %p142
      %p144 = scmp.ne.s32.totalorder %s136, %s138
      %p145 = scmp.eq.s32.totalorder %s34, 1
      %p146 = por %p144, %p145
      %p147 = scmp.ne.s32.totalorder %s138, %s139
      %p148 = scmp.eq.s32.totalorder %s34, 0
      %p149 = por %p147, %p148
      %p150 = scmp.ne.s32.totalorder %s138, %s139
      %p151 = scmp.eq.s32.totalorder %s35, 1
      %p152 = por %p150, %p151
      %p154 = scmp.ne.s32.totalorder %s139, %s153
      %p155 = scmp.eq.s32.totalorder %s35, 0
      %p156 = por %p154, %p155
      %s158 = sadd.s32 %s157, 1
      %p161 = scmp.eq.s32.totalorder %s29, 1
      %p162 = scmp.ne.s32.totalorder %s157, %s159
      %p163 = scmp.eq.s32.totalorder %s29, 0
      %p164 = por %p162, %p163
      %p165 = scmp.ne.s32.totalorder %s157, %s159
      %p166 = scmp.eq.s32.totalorder %s34, 1
      %p167 = por %p165, %p166
      %p168 = scmp.ne.s32.totalorder %s159, %s160
      %p169 = scmp.eq.s32.totalorder %s34, 0
      %p170 = por %p168, %p169
      %p171 = scmp.ne.s32.totalorder %s159, %s160
      %p172 = scmp.eq.s32.totalorder %s35, 1
      %p173 = por %p171, %p172
      %p175 = scmp.ne.s32.totalorder %s160, %s174
      %p176 = scmp.eq.s32.totalorder %s35, 0
      %p177 = por %p175, %p176
      %s179 = sadd.s32 %s178, 1
      %p182 = scmp.eq.s32.totalorder %s29, 1
      %p183 = scmp.ne.s32.totalorder %s178, %s180
      %p184 = scmp.eq.s32.totalorder %s29, 0
      %p185 = por %p183, %p184
      %p186 = scmp.ne.s32.totalorder %s178, %s180
      %p187 = scmp.eq.s32.totalorder %s34, 1
      %p188 = por %p186, %p187
      %p189 = scmp.ne.s32.totalorder %s180, %s181
      %p190 = scmp.eq.s32.totalorder %s34, 0
      %p191 = por %p189, %p190
      %p192 = scmp.ne.s32.totalorder %s180, %s181
      %p193 = scmp.eq.s32.totalorder %s35, 1
      %p194 = por %p192, %p193
      %p196 = scmp.ne.s32.totalorder %s181, %s195
      %p197 = scmp.eq.s32.totalorder %s35, 0
      %p198 = por %p196, %p197
      %s200 = sadd.s32 %s199, 1
      %p203 = scmp.eq.s32.totalorder %s29, 1
      %p204 = scmp.ne.s32.totalorder %s199, %s201
      %p205 = scmp.eq.s32.totalorder %s29, 0
      %p206 = por %p204, %p205
      %p207 = scmp.ne.s32.totalorder %s199, %s201
      %p208 = scmp.eq.s32.totalorder %s34, 1
      %p209 = por %p207, %p208
      %p210 = scmp.ne.s32.totalorder %s201, %s202
      %p211 = scmp.eq.s32.totalorder %s34, 0
      %p212 = por %p210, %p211
      %p213 = scmp.ne.s32.totalorder %s201, %s202
      %p214 = scmp.eq.s32.totalorder %s35, 1
      %p215 = por %p213, %p214
      %p217 = scmp.ne.s32.totalorder %s202, %s216
      %p218 = scmp.eq.s32.totalorder %s35, 0
      %p219 = por %p217, %p218
      %s221 = sadd.s32 %s220, 1
      %p224 = scmp.eq.s32.totalorder %s29, 1
      %p225 = scmp.ne.s32.totalorder %s220, %s222
      %p226 = scmp.eq.s32.totalorder %s29, 0
      %p227 = por %p225, %p226
      %p228 = scmp.ne.s32.totalorder %s220, %s222
      %p229 = scmp.eq.s32.totalorder %s34, 1
      %p230 = por %p228, %p229
      %p231 = scmp.ne.s32.totalorder %s222, %s223
      %p232 = scmp.eq.s32.totalorder %s34, 0
      %p233 = por %p231, %p232
      %p234 = scmp.ne.s32.totalorder %s222, %s223
      %p235 = scmp.eq.s32.totalorder %s35, 1
      %p236 = por %p234, %p235
      %p238 = scmp.ne.s32.totalorder %s223, %s237
      %p239 = scmp.eq.s32.totalorder %s35, 0
      %p240 = por %p238, %p239
      %s242 = sadd.s32 %s241, 1
      %p245 = scmp.eq.s32.totalorder %s29, 1
      %p246 = scmp.ne.s32.totalorder %s241, %s243
      %p247 = scmp.eq.s32.totalorder %s29, 0
      %p248 = por %p246, %p247
      %p249 = scmp.ne.s32.totalorder %s241, %s243
      %p250 = scmp.eq.s32.totalorder %s34, 1
      %p251 = por %p249, %p250
      %p252 = scmp.ne.s32.totalorder %s243, %s244
      %p253 = scmp.eq.s32.totalorder %s34, 0
      %p254 = por %p252, %p253
      %p255 = scmp.ne.s32.totalorder %s243, %s244
      %p256 = scmp.eq.s32.totalorder %s35, 1
      %p257 = por %p255, %p256
      %p259 = scmp.ne.s32.totalorder %s244, %s258
      %p260 = scmp.eq.s32.totalorder %s35, 0
      %p261 = por %p259, %p260
      %s263 = sadd.s32 %s262, 1
      %p266 = scmp.eq.s32.totalorder %s29, 1
      %p267 = scmp.ne.s32.totalorder %s262, %s264
      %p268 = scmp.eq.s32.totalorder %s29, 0
      %p269 = por %p267, %p268
      %p270 = scmp.ne.s32.totalorder %s262, %s264
      %p271 = scmp.eq.s32.totalorder %s34, 1
      %p272 = por %p270, %p271
      %p273 = scmp.ne.s32.totalorder %s264, %s265
      %p274 = scmp.eq.s32.totalorder %s34, 0
      %p275 = por %p273, %p274
      %p276 = scmp.ne.s32.totalorder %s264, %s265
      %p277 = scmp.eq.s32.totalorder %s35, 1
      %p278 = por %p276, %p277
      %p280 = scmp.ne.s32.totalorder %s265, %s279
      %p281 = scmp.eq.s32.totalorder %s35, 0
      %p282 = por %p280, %p281
      %s283 = ssub.s32 %s29, %s36
      %p284 = scmp.eq.s32.totalorder %s283, 0
      %s286 = sadd.s32 %s285, 1
      %s287 = scalar_select %p284, %s285, %s286
      %p290 = pneg %p284
      %p291 = scmp.eq.s32.totalorder %s29, 1
      %p292 = por %p290, %p291
      %p293 = scmp.ne.s32.totalorder %s285, %s288
      %p294 = scmp.eq.s32.totalorder %s29, 0
      %p295 = por %p293, %p294
      %p296 = scmp.ne.s32.totalorder %s285, %s288
      %p297 = scmp.eq.s32.totalorder %s34, 1
      %p298 = por %p296, %p297
      %p299 = scmp.ne.s32.totalorder %s288, %s289
      %p300 = scmp.eq.s32.totalorder %s34, 0
      %p301 = por %p299, %p300
      %p302 = scmp.ne.s32.totalorder %s288, %s289
      %p303 = scmp.eq.s32.totalorder %s35, 1
      %p304 = por %p302, %p303
      %p306 = scmp.ne.s32.totalorder %s289, %s305
      %p307 = scmp.eq.s32.totalorder %s35, 0
      %p308 = por %p306, %p307
      %p309 = scmp.le.s32.totalorder 1, %s29
      %p310 = scmp.lt.s32.totalorder %s29, 3
      %p311 = pnand %p309, %p310
      %p312 = pneg %p311
      // Predicated region
      $region9: #{tpu_custom_call.1} parent=5 // pred_check
        _
      $region10: #{tpu_custom_call.1} parent=5 // pred_check_branch
        %314 = sbr.rel (%p311) target = $region12
      $region11: #{tpu_custom_call.1} parent=5 // pred_region
        %s315 = ssub.s32 %s29, 1
        // Predicated region
        $region13: #{tpu_custom_call.1} parent=11 // pred_check
          %p316 = pneg %p128
        $region14: #{tpu_custom_call.1} parent=11 // pred_check_branch
          %318 = sbr.rel (%p316) target = $region16
        $region15: #{tpu_custom_call.1} parent=11 // pred_region
          %s320 = ssub.s32 2048, 2048
          %321 = vsyncadd [#allocation7], %s320
          %s322 = sshll.u32 [#allocation8], 4
          %s323 = int_to_ptr.vmem [resolvable:$true] %s322
          %328 = dma.hbm_to_vmem [thread:$0]  %s3, 2048, %s323, [#allocation7], 128, 128, 8
        $region16: #{tpu_custom_call.1} parent=11 // pred_fallthru
          _
        // Predicated region
        $region17: #{tpu_custom_call.1} parent=11 // pred_check
          %p329 = pneg %p149
        $region18: #{tpu_custom_call.1} parent=11 // pred_check_branch
          %331 = sbr.rel (%p329) target = $region20
        $region19: #{tpu_custom_call.1} parent=11 // pred_region
          %s333 = ssub.s32 16384, 16384
          %334 = vsyncadd [#allocation10], %s333
          %s335 = sshll.u32 [#allocation9], 4
          %s336 = int_to_ptr.vmem [resolvable:$true] %s335
          %341 = dma.hbm_to_vmem [thread:$0]  %s4, 16384, %s336, [#allocation10], 128, 128, 8
        $region20: #{tpu_custom_call.1} parent=11 // pred_fallthru
          _
        // Predicated region
        $region21: #{tpu_custom_call.1} parent=11 // pred_check
          %p342 = pneg %p170
        $region22: #{tpu_custom_call.1} parent=11 // pred_check_branch
          %344 = sbr.rel (%p342) target = $region24
        $region23: #{tpu_custom_call.1} parent=11 // pred_region
          %s346 = ssub.s32 12288, 12288
          %347 = vsyncadd [#allocation10], %s346
          %s348 = sshll.u32 [#allocation11], 4
          %s349 = int_to_ptr.vmem [resolvable:$true] %s348
          %354 = dma.hbm_to_vmem [thread:$0]  %s5, 12288, %s349, [#allocation10], 384, 384, 24
        $region24: #{tpu_custom_call.1} parent=11 // pred_fallthru
          _
        // Predicated region
        $region25: #{tpu_custom_call.1} parent=11 // pred_check
          %p355 = pneg %p191
        $region26: #{tpu_custom_call.1} parent=11 // pred_check_branch
          %357 = sbr.rel (%p355) target = $region28
        $region27: #{tpu_custom_call.1} parent=11 // pred_region
          %s359 = ssub.s32 4096, 4096
          %360 = vsyncadd [#allocation13], %s359
          %s361 = sshll.u32 [#allocation12], 4
          %s362 = int_to_ptr.vmem [resolvable:$true] %s361
          %367 = dma.hbm_to_vmem [thread:$0]  %s6, 4096, %s362, [#allocation13], 128, 128, 8
        $region28: #{tpu_custom_call.1} parent=11 // pred_fallthru
          _
        // Predicated region
        $region29: #{tpu_custom_call.1} parent=11 // pred_check
          %p368 = pneg %p212
        $region30: #{tpu_custom_call.1} parent=11 // pred_check_branch
          %370 = sbr.rel (%p368) target = $region32
        $region31: #{tpu_custom_call.1} parent=11 // pred_region
          _
        $region32: #{tpu_custom_call.1} parent=11 // pred_fallthru
          _
        // Predicated region
        $region33: #{tpu_custom_call.1} parent=11 // pred_check
          %p371 = pneg %p233
        $region34: #{tpu_custom_call.1} parent=11 // pred_check_branch
          %373 = sbr.rel (%p371) target = $region36
        $region35: #{tpu_custom_call.1} parent=11 // pred_region
          %s375 = ssub.s32 512, 512
          %376 = vsyncadd [#allocation13], %s375
          %s377 = sshll.u32 [#allocation14], 4
          %s378 = int_to_ptr.vmem [resolvable:$true] %s377
          %383 = dma.hbm_to_vmem [thread:$0]  %s8, 512, %s378, [#allocation13], 256, 256, 16
        $region36: #{tpu_custom_call.1} parent=11 // pred_fallthru
          _
        // Predicated region
        $region37: #{tpu_custom_call.1} parent=11 // pred_check
          %p384 = pneg %p254
        $region38: #{tpu_custom_call.1} parent=11 // pred_check_branch
          %386 = sbr.rel (%p384) target = $region40
        $region39: #{tpu_custom_call.1} parent=11 // pred_region
          %s388 = ssub.s32 2048, 2048
          %389 = vsyncadd [#allocation16], %s388
          %s390 = sshll.u32 [#allocation15], 4
          %s391 = int_to_ptr.vmem [resolvable:$true] %s390
          %396 = dma.hbm_to_vmem [thread:$0]  %s9, 2048, %s391, [#allocation16], 64, 64, 4
        $region40: #{tpu_custom_call.1} parent=11 // pred_fallthru
          _
        // Predicated region
        $region41: #{tpu_custom_call.1} parent=11 // pred_check
          %p397 = pneg %p275
        $region42: #{tpu_custom_call.1} parent=11 // pred_check_branch
          %399 = sbr.rel (%p397) target = $region44
        $region43: #{tpu_custom_call.1} parent=11 // pred_region
          _
        $region44: #{tpu_custom_call.1} parent=11 // pred_fallthru
          _
      $region12: #{tpu_custom_call.1} parent=5 // pred_fallthru
        _
      %p400 = scmp.lt.s32.totalorder %s29, 2
      // Predicated region
      $region45: #{tpu_custom_call.1} parent=5 // pred_check
        %p401 = pneg %p400
      $region46: #{tpu_custom_call.1} parent=5 // pred_check_branch
        %403 = sbr.rel (%p401) target = $region48
      $region47: #{tpu_custom_call.1} parent=5 // pred_region
        // Predicated region
        $region49: #{tpu_custom_call.1} parent=47 // pred_check
          %p404 = pneg %p49
        $region50: #{tpu_custom_call.1} parent=47 // pred_check_branch
          %406 = sbr.rel (%p404) target = $region52
        $region51: #{tpu_custom_call.1} parent=47 // pred_region
          %s407 = sand.u32 %s39, 1
          %s408 = scalar_lea.sflag [#allocation4], %s407
          %s409 = sand.u32 %s39, 1
          %s410 = smul.addr %s409, 4
          %s411 = scalar_lea.vmem [#allocation3], %s410
          %s413 = ssub.s32 64, 64
          %414 = vsyncadd %s408, %s413
          %s415 = smul.addr %s29, 64
          %s416 = scalar_lea.hbm %s0, %s415
          %s418 = sshll.u32 %s411, 4
          %s419 = int_to_ptr.vmem [resolvable:$true] %s418
          %421 = dma.hbm_to_vmem [thread:$0]  %s416, 64, %s419, %s408
        $region52: #{tpu_custom_call.1} parent=47 // pred_fallthru
          _
        // Predicated region
        $region53: #{tpu_custom_call.1} parent=47 // pred_check
          %p422 = pneg %p75
        $region54: #{tpu_custom_call.1} parent=47 // pred_check_branch
          %424 = sbr.rel (%p422) target = $region56
        $region55: #{tpu_custom_call.1} parent=47 // pred_region
          %s425 = sand.u32 %s29, 1
          %s426 = scalar_lea.sflag [#allocation7], %s425
          %s427 = sand.u32 %s65, 1
          %s428 = smul.addr %s427, 8
          %s429 = scalar_lea.vmem [#allocation6], %s428
          %s431 = ssub.s32 128, 128
          %432 = vsyncadd %s426, %s431
          %s433 = smul.addr %s29, 2
          %s434 = smul.addr %s433, 64
          %s435 = scalar_lea.hbm %s1, %s434
          %s437 = sshll.u32 %s429, 4
          %s438 = int_to_ptr.vmem [resolvable:$true] %s437
          %440 = dma.hbm_to_vmem [thread:$0]  %s435, 128, %s438, %s426
        $region56: #{tpu_custom_call.1} parent=47 // pred_fallthru
          _
        // Predicated region
        $region57: #{tpu_custom_call.1} parent=47 // pred_check
          %p441 = pneg %p101
        $region58: #{tpu_custom_call.1} parent=47 // pred_check_branch
          %443 = sbr.rel (%p441) target = $region60
        $region59: #{tpu_custom_call.1} parent=47 // pred_region
          %p444 = scmp.lt.s32.totalorder %s29, 1
          %s445 = scalar_select %p444, %s29, 1
          %s446 = scalar_lea.vmem %s2, %s445
        $region60: #{tpu_custom_call.1} parent=47 // pred_fallthru
          _
      $region48: #{tpu_custom_call.1} parent=5 // pred_fallthru
        _
      %p447 = scmp.le.s32.totalorder 1, %s29
      %p448 = scmp.lt.s32.totalorder %s29, 3
      %p449 = pnand %p447, %p448
      %p450 = pneg %p449
      // Predicated region
      $region61: #{tpu_custom_call.1} parent=5 // pred_check
        _
      $region62: #{tpu_custom_call.1} parent=5 // pred_check_branch
        %452 = sbr.rel (%p449) target = $region64
      $region63: #{tpu_custom_call.1} parent=5 // pred_region
        %s453 = ssub.s32 %s29, 1
        %s454 = sand.u32 %s42, 1
        %s455 = scalar_lea.sflag [#allocation4], %s454
        %s456 = sand.u32 %s42, 1
        %s457 = smul.addr %s456, 4
        %s458 = scalar_lea.vmem [#allocation3], %s457
        // Predicated region
        $region65: #{tpu_custom_call.1} parent=63 // pred_check
          %p459 = pneg %p55
        $region66: #{tpu_custom_call.1} parent=63 // pred_check_branch
          %461 = sbr.rel (%p459) target = $region68
        $region67: #{tpu_custom_call.1} parent=63 // pred_region
          %462 = dma.done %s455, 64
        $region68: #{tpu_custom_call.1} parent=63 // pred_fallthru
          _
        %s463 = sand.u32 %s34, 1
        %s464 = scalar_lea.sflag [#allocation7], %s463
        %s465 = sand.u32 %s68, 1
        %s466 = smul.addr %s465, 8
        %s467 = scalar_lea.vmem [#allocation6], %s466
        // Predicated region
        $region69: #{tpu_custom_call.1} parent=63 // pred_check
          %p468 = pneg %p81
        $region70: #{tpu_custom_call.1} parent=63 // pred_check_branch
          %470 = sbr.rel (%p468) target = $region72
        $region71: #{tpu_custom_call.1} parent=63 // pred_region
          %471 = dma.done %s464, 128
        $region72: #{tpu_custom_call.1} parent=63 // pred_fallthru
          _
        // Predicated region
        $region73: #{tpu_custom_call.1} parent=63 // pred_check
          %p472 = pneg %p128
        $region74: #{tpu_custom_call.1} parent=63 // pred_check_branch
          %474 = sbr.rel (%p472) target = $region76
        $region75: #{tpu_custom_call.1} parent=63 // pred_region
          %475 = dma.done [#allocation7], 2048
        $region76: #{tpu_custom_call.1} parent=63 // pred_fallthru
          _
        // Predicated region
        $region77: #{tpu_custom_call.1} parent=63 // pred_check
          %p476 = pneg %p149
        $region78: #{tpu_custom_call.1} parent=63 // pred_check_branch
          %478 = sbr.rel (%p476) target = $region80
        $region79: #{tpu_custom_call.1} parent=63 // pred_region
          %479 = dma.done [#allocation10], 16384
        $region80: #{tpu_custom_call.1} parent=63 // pred_fallthru
          _
        // Predicated region
        $region81: #{tpu_custom_call.1} parent=63 // pred_check
          %p480 = pneg %p170
        $region82: #{tpu_custom_call.1} parent=63 // pred_check_branch
          %482 = sbr.rel (%p480) target = $region84
        $region83: #{tpu_custom_call.1} parent=63 // pred_region
          %483 = dma.done [#allocation10], 12288
        $region84: #{tpu_custom_call.1} parent=63 // pred_fallthru
          _
        // Predicated region
        $region85: #{tpu_custom_call.1} parent=63 // pred_check
          %p484 = pneg %p191
        $region86: #{tpu_custom_call.1} parent=63 // pred_check_branch
          %486 = sbr.rel (%p484) target = $region88
        $region87: #{tpu_custom_call.1} parent=63 // pred_region
          %487 = dma.done [#allocation13], 4096
        $region88: #{tpu_custom_call.1} parent=63 // pred_fallthru
          _
        // Predicated region
        $region89: #{tpu_custom_call.1} parent=63 // pred_check
          %p488 = pneg %p233
        $region90: #{tpu_custom_call.1} parent=63 // pred_check_branch
          %490 = sbr.rel (%p488) target = $region92
        $region91: #{tpu_custom_call.1} parent=63 // pred_region
          %491 = dma.done [#allocation13], 512
        $region92: #{tpu_custom_call.1} parent=63 // pred_fallthru
          _
        // Predicated region
        $region93: #{tpu_custom_call.1} parent=63 // pred_check
          %p492 = pneg %p254
        $region94: #{tpu_custom_call.1} parent=63 // pred_check_branch
          %494 = sbr.rel (%p492) target = $region96
        $region95: #{tpu_custom_call.1} parent=63 // pred_region
          %495 = dma.done [#allocation16], 2048
        $region96: #{tpu_custom_call.1} parent=63 // pred_fallthru
          _
        %s496 = sand.u32 %s42, 1
        %s497 = scalar_lea.sflag [#allocation4], %s496
        %s498 = sand.u32 %s42, 1
        %s499 = smul.addr %s498, 4
        %s500 = scalar_lea.vmem [#allocation3], %s499
        %p501 = pneg %p55
        %p502 = pneg %p52
        %s503 = sand.u32 %s34, 1
        %s504 = scalar_lea.sflag [#allocation7], %s503
        %s505 = sand.u32 %s68, 1
        %s506 = smul.addr %s505, 8
        %s507 = scalar_lea.vmem [#allocation6], %s506
        %p508 = pneg %p81
        %p509 = pneg %p78
        %p510 = scmp.lt.s32.totalorder %s34, 1
        %s511 = scalar_select %p510, %s34, 1
        %s512 = scalar_lea.vmem %s2, %s511
        %p513 = pneg %p107
        %p514 = pneg %p104
        %p515 = pneg %p128
        %p516 = pneg %p125
        %p517 = pneg %p149
        %p518 = pneg %p146
        %p519 = pneg %p170
        %p520 = pneg %p167
        %p521 = pneg %p191
        %p522 = pneg %p188
        %p523 = pneg %p212
        %p524 = pneg %p209
        %p525 = pneg %p233
        %p526 = pneg %p230
        %p527 = pneg %p254
        %p528 = pneg %p251
        %p529 = pneg %p275
        %p530 = pneg %p272
        %p531 = pneg %p301
        %p532 = pneg %p298
        %s533 = sand.u32 %s288, 1
        %s534 = scalar_lea.sflag [#allocation5], %s533
        %s535 = sand.u32 %s288, 1
        %s536 = smul.addr %s535, 4
        %s537 = scalar_lea.vmem [#allocation17], %s536
        %p538 = scmp.lt.s32.totalorder %s34, 1
        %s539 = scalar_select %p538, %s34, 1
        %s540 = scalar_lea.vmem %s2, %s539
        %v542 = vld [vmem:[#allocation14] sm:$0xff]
        %v543 = vld [vmem:[#allocation14 + $0x8] sm:$0xff]
        %v544 = vld [vmem:[#allocation14 + $0x10] sm:$0x3f]
        %v545 = vld [vmem:[#allocation14 + $0x18] sm:$0x3f]
        %v546 = vld [vmem:[%s458] sm:$0xf]
        %v547 = vld [vmem:[#allocation8] sm:$0xff]
        %v548 = vld [vmem:[#allocation8 + $0x8] sm:$0xff]
        %v549 = vld [vmem:[#allocation8 + $0x10] sm:$0xff]
        %v550 = vld [vmem:[#allocation8 + $0x18] sm:$0xff]
        %v551 = vld [vmem:[#allocation8 + $0x20] sm:$0xff]
        %v552 = vld [vmem:[#allocation8 + $0x28] sm:$0xff]
        %v553 = vld [vmem:[#allocation8 + $0x30] sm:$0xff]
        %v554 = vld [vmem:[#allocation8 + $0x38] sm:$0xff]
        %v555 = vld [vmem:[#allocation8 + $0x40] sm:$0xff]
        %v556 = vld [vmem:[#allocation8 + $0x48] sm:$0xff]
        %v557 = vld [vmem:[#allocation8 + $0x50] sm:$0xff]
        %v558 = vld [vmem:[#allocation8 + $0x58] sm:$0xff]
        %v559 = vld [vmem:[#allocation8 + $0x60] sm:$0xff]
        %v560 = vld [vmem:[#allocation8 + $0x68] sm:$0xff]
        %v561 = vld [vmem:[#allocation8 + $0x70] sm:$0xff]
        %v562 = vld [vmem:[#allocation8 + $0x78] sm:$0xff]
        %v563 = vlaneseq
        %v564 = vshrl.u32 %v563, 7
        %v565 = vsub.s32 0, %v564
        %v566 = vrot.slane %v542, %v565
        %v567 = vlaneseq
        %v568 = vshrl.u32 %v567, 7
        %v569 = vsub.s32 0, %v568
        %v570 = vrot.slane %v543, %v569
        %v587 = vunpack.c.l.b16 %v547
        %v588 = vunpack.c.h.b16 %v547
        %v589 = vunpack.c.l.b16 %v548
        %v590 = vunpack.c.h.b16 %v548
        %v591 = vunpack.c.l.b16 %v549
        %v592 = vunpack.c.h.b16 %v549
        %v593 = vunpack.c.l.b16 %v550
        %v594 = vunpack.c.h.b16 %v550
        %v595 = vunpack.c.l.b16 %v551
        %v596 = vunpack.c.h.b16 %v551
        %v597 = vunpack.c.l.b16 %v552
        %v598 = vunpack.c.h.b16 %v552
        %v599 = vunpack.c.l.b16 %v553
        %v600 = vunpack.c.h.b16 %v553
        %v601 = vunpack.c.l.b16 %v554
        %v602 = vunpack.c.h.b16 %v554
        %v603 = vunpack.c.l.b16 %v555
        %v604 = vunpack.c.h.b16 %v555
        %v605 = vunpack.c.l.b16 %v556
        %v606 = vunpack.c.h.b16 %v556
        %v607 = vunpack.c.l.b16 %v557
        %v608 = vunpack.c.h.b16 %v557
        %v609 = vunpack.c.l.b16 %v558
        %v610 = vunpack.c.h.b16 %v558
        %v611 = vunpack.c.l.b16 %v559
        %v612 = vunpack.c.h.b16 %v559
        %v613 = vunpack.c.l.b16 %v560
        %v614 = vunpack.c.h.b16 %v560
        %v615 = vunpack.c.l.b16 %v561
        %v616 = vunpack.c.h.b16 %v561
        %v617 = vunpack.c.l.b16 %v562
        %v618 = vunpack.c.h.b16 %v562
        %v619 = vpack.c.b16 %v589, %v587
        %v620 = vpack.c.b16 %v590, %v588
        %v621 = vpack.c.b16 %v593, %v591
        %v622 = vpack.c.b16 %v594, %v592
        %v623 = vpack.c.b16 %v597, %v595
        %v624 = vpack.c.b16 %v598, %v596
        %v625 = vpack.c.b16 %v601, %v599
        %v626 = vpack.c.b16 %v602, %v600
        %v627 = vpack.c.b16 %v605, %v603
        %v628 = vpack.c.b16 %v606, %v604
        %v629 = vpack.c.b16 %v609, %v607
        %v630 = vpack.c.b16 %v610, %v608
        %v631 = vpack.c.b16 %v613, %v611
        %v632 = vpack.c.b16 %v614, %v612
        %v633 = vpack.c.b16 %v617, %v615
        %v634 = vpack.c.b16 %v618, %v616
        %651 = vmatprep.subr.bf16.mxu0 %v620
        %652 = vmatpush1.bf16.msra.mxu0 %v619
        %653 = vmatprep.subr.bf16.mxu0 %v622
        %654 = vmatpush1.bf16.msra.mxu0 %v621
        %655 = vmatprep.subr.bf16.mxu0 %v624
        %656 = vmatpush1.bf16.msra.mxu0 %v623
        %657 = vmatprep.subr.bf16.mxu0 %v626
        %658 = vmatpush1.bf16.msra.mxu0 %v625
        %659 = vmatprep.subr.bf16.mxu0 %v628
        %660 = vmatpush1.bf16.msra.mxu0 %v627
        %661 = vmatprep.subr.bf16.mxu0 %v630
        %662 = vmatpush1.bf16.msra.mxu0 %v629
        %663 = vmatprep.subr.bf16.mxu0 %v632
        %664 = vmatpush1.bf16.msra.mxu0 %v631
        %665 = vmatprep.subr.bf16.mxu0 %v634
        %666 = vmatpush1.bf16.msra.mxu0 %v633
        %667 = vmatprep.subr.bf16.mxu0 0
        %668 = vmatpush1.bf16.msra.mxu0 0
        %669 = vmatprep.subr.bf16.mxu0 0
        %670 = vmatpush1.bf16.msra.mxu0 0
        %671 = vmatprep.subr.bf16.mxu0 0
        %672 = vmatpush1.bf16.msra.mxu0 0
        %673 = vmatprep.subr.bf16.mxu0 0
        %674 = vmatpush1.bf16.msra.mxu0 0
        %675 = vmatprep.subr.bf16.mxu0 0
        %676 = vmatpush1.bf16.msra.mxu0 0
        %677 = vmatprep.subr.bf16.mxu0 0
        %678 = vmatpush1.bf16.msra.mxu0 0
        %679 = vmatprep.subr.bf16.mxu0 0
        %680 = vmatpush1.bf16.msra.mxu0 0
        %681 = vmatprep.subr.bf16.mxu0 0
        %682 = vmatpush1.bf16.msra.mxu0 0
        %683 = vmatprep.mubr.bf16.mxu0 0
        %684 = vmatmul.mubr.bf16.gmra.mrb[0].mxu0 %v546
        %v685 = vpop.f32.mrb[0].mxu0
        %v686 = vadd.f32 %v566, %v685
        %v687 = vpop.f32.mrb[0].mxu0
        %v688 = vadd.f32 %v570, %v687
        %v689 = vpop.f32.mrb[0].mxu0
        %v690 = vpop.f32.mrb[0].mxu0
        %691 = vdwg.mxu0
        %v692 = vadd.f32 %v686, %v688
        %693 = vadd.xlane.f32.xlu0 %v692
        %v694 = vpop.xlane.xlu0 %693
        %v695 = vrcp.pop 256.0
        %v696 = vmul.f32 %v694, %v695
        %v697 = vsub.f32 %v686, %v696
        %v698 = vsub.f32 %v688, %v696
        %v699 = vmul.f32 %v697, %v697
        %v700 = vmul.f32 %v698, %v698
        %v701 = vadd.f32 %v699, %v700
        %702 = vadd.xlane.f32.xlu0 %v701
        %v703 = vpop.xlane.xlu0 %702
        %v704 = vmul.f32 %v703, %v695
        %v705 = vadd.f32 %v704, 1e-05
        %v706 = vrsqrt.pop %v705
        %v707 = vmul.f32 %v697, %v706
        %v708 = vmul.f32 %v698, %v706
        %v709 = vlaneseq
        %v710 = vshrl.u32 %v709, 7
        %v711 = vsub.s32 1, %v710
        %v712 = vrot.slane %v542, %v711
        %v713 = vlaneseq
        %v714 = vshrl.u32 %v713, 7
        %v715 = vsub.s32 1, %v714
        %v716 = vrot.slane %v543, %v715
        %v717 = vmul.f32 %v707, %v712
        %v718 = vmul.f32 %v708, %v716
        %v719 = vlaneseq
        %v720 = vshrl.u32 %v719, 7
        %v721 = vsub.s32 2, %v720
        %v722 = vrot.slane %v542, %v721
        %v723 = vlaneseq
        %v724 = vshrl.u32 %v723, 7
        %v725 = vsub.s32 2, %v724
        %v726 = vrot.slane %v543, %v725
        %v727 = vadd.f32 %v717, %v722
        %v728 = vadd.f32 %v718, %v726
        %v729 = vmax.f32 %v727, 0.0
        %v730 = vmax.f32 %v728, 0.0
        %v731 = vpack.c.bf16 %v729, %v729
        %v732 = vpack.c.bf16 %v730, %v730
        %v733 = vld [vmem:[#allocation9] sm:$0xff]
        %v734 = vld [vmem:[#allocation9 + $0x8] sm:$0xff]
        %v735 = vld [vmem:[#allocation9 + $0x10] sm:$0xff]
        %v736 = vld [vmem:[#allocation9 + $0x18] sm:$0xff]
        %v737 = vld [vmem:[#allocation9 + $0x20] sm:$0xff]
        %v738 = vld [vmem:[#allocation9 + $0x28] sm:$0xff]
        %v739 = vld [vmem:[#allocation9 + $0x30] sm:$0xff]
        %v740 = vld [vmem:[#allocation9 + $0x38] sm:$0xff]
        %v741 = vld [vmem:[#allocation9 + $0x40] sm:$0xff]
        %v742 = vld [vmem:[#allocation9 + $0x48] sm:$0xff]
        %v743 = vld [vmem:[#allocation9 + $0x50] sm:$0xff]
        %v744 = vld [vmem:[#allocation9 + $0x58] sm:$0xff]
        %v745 = vld [vmem:[#allocation9 + $0x60] sm:$0xff]
        %v746 = vld [vmem:[#allocation9 + $0x68] sm:$0xff]
        %v747 = vld [vmem:[#allocation9 + $0x70] sm:$0xff]
        %v748 = vld [vmem:[#allocation9 + $0x78] sm:$0xff]
        %v749 = vld [vmem:[#allocation9 + $0x80] sm:$0xff]
        %v750 = vld [vmem:[#allocation9 + $0x88] sm:$0xff]
        %v751 = vld [vmem:[#allocation9 + $0x90] sm:$0xff]
        %v752 = vld [vmem:[#allocation9 + $0x98] sm:$0xff]
        %v753 = vld [vmem:[#allocation9 + $0xa0] sm:$0xff]
        %v754 = vld [vmem:[#allocation9 + $0xa8] sm:$0xff]
        %v755 = vld [vmem:[#allocation9 + $0xb0] sm:$0xff]
        %v756 = vld [vmem:[#allocation9 + $0xb8] sm:$0xff]
        %v757 = vld [vmem:[#allocation9 + $0xc0] sm:$0xff]
        %v758 = vld [vmem:[#allocation9 + $0xc8] sm:$0xff]
        %v759 = vld [vmem:[#allocation9 + $0xd0] sm:$0xff]
        %v760 = vld [vmem:[#allocation9 + $0xd8] sm:$0xff]
        %v761 = vld [vmem:[#allocation9 + $0xe0] sm:$0xff]
        %v762 = vld [vmem:[#allocation9 + $0xe8] sm:$0xff]
        %v763 = vld [vmem:[#allocation9 + $0xf0] sm:$0xff]
        %v764 = vld [vmem:[#allocation9 + $0xf8] sm:$0xff]
        %v765 = vlaneseq
        %v766 = vshrl.u32 %v765, 7
        %v767 = vsub.s32 3, %v766
        %v768 = vrot.slane %v542, %v767
        %v769 = vlaneseq
        %v770 = vshrl.u32 %v769, 7
        %v771 = vsub.s32 3, %v770
        %v772 = vrot.slane %v543, %v771
        %v805 = vunpack.c.l.b16 %v733
        %v806 = vunpack.c.h.b16 %v733
        %v807 = vunpack.c.l.b16 %v734
        %v808 = vunpack.c.h.b16 %v734
        %v809 = vunpack.c.l.b16 %v735
        %v810 = vunpack.c.h.b16 %v735
        %v811 = vunpack.c.l.b16 %v736
        %v812 = vunpack.c.h.b16 %v736
        %v813 = vunpack.c.l.b16 %v737
        %v814 = vunpack.c.h.b16 %v737
        %v815 = vunpack.c.l.b16 %v738
        %v816 = vunpack.c.h.b16 %v738
        %v817 = vunpack.c.l.b16 %v739
        %v818 = vunpack.c.h.b16 %v739
        %v819 = vunpack.c.l.b16 %v740
        %v820 = vunpack.c.h.b16 %v740
        %v821 = vunpack.c.l.b16 %v741
        %v822 = vunpack.c.h.b16 %v741
        %v823 = vunpack.c.l.b16 %v742
        %v824 = vunpack.c.h.b16 %v742
        %v825 = vunpack.c.l.b16 %v743
        %v826 = vunpack.c.h.b16 %v743
        %v827 = vunpack.c.l.b16 %v744
        %v828 = vunpack.c.h.b16 %v744
        %v829 = vunpack.c.l.b16 %v745
        %v830 = vunpack.c.h.b16 %v745
        %v831 = vunpack.c.l.b16 %v746
        %v832 = vunpack.c.h.b16 %v746
        %v833 = vunpack.c.l.b16 %v747
        %v834 = vunpack.c.h.b16 %v747
        %v835 = vunpack.c.l.b16 %v748
        %v836 = vunpack.c.h.b16 %v748
        %v837 = vunpack.c.l.b16 %v749
        %v838 = vunpack.c.h.b16 %v749
        %v839 = vunpack.c.l.b16 %v750
        %v840 = vunpack.c.h.b16 %v750
        %v841 = vunpack.c.l.b16 %v751
        %v842 = vunpack.c.h.b16 %v751
        %v843 = vunpack.c.l.b16 %v752
        %v844 = vunpack.c.h.b16 %v752
        %v845 = vunpack.c.l.b16 %v753
        %v846 = vunpack.c.h.b16 %v753
        %v847 = vunpack.c.l.b16 %v754
        %v848 = vunpack.c.h.b16 %v754
        %v849 = vunpack.c.l.b16 %v755
        %v850 = vunpack.c.h.b16 %v755
        %v851 = vunpack.c.l.b16 %v756
        %v852 = vunpack.c.h.b16 %v756
        %v853 = vunpack.c.l.b16 %v757
        %v854 = vunpack.c.h.b16 %v757
        %v855 = vunpack.c.l.b16 %v758
        %v856 = vunpack.c.h.b16 %v758
        %v857 = vunpack.c.l.b16 %v759
        %v858 = vunpack.c.h.b16 %v759
        %v859 = vunpack.c.l.b16 %v760
        %v860 = vunpack.c.h.b16 %v760
        %v861 = vunpack.c.l.b16 %v761
        %v862 = vunpack.c.h.b16 %v761
        %v863 = vunpack.c.l.b16 %v762
        %v864 = vunpack.c.h.b16 %v762
        %v865 = vunpack.c.l.b16 %v763
        %v866 = vunpack.c.h.b16 %v763
        %v867 = vunpack.c.l.b16 %v764
        %v868 = vunpack.c.h.b16 %v764
        %v869 = vpack.c.b16 %v807, %v805
        %v870 = vpack.c.b16 %v808, %v806
        %v871 = vpack.c.b16 %v811, %v809
        %v872 = vpack.c.b16 %v812, %v810
        %v873 = vpack.c.b16 %v815, %v813
        %v874 = vpack.c.b16 %v816, %v814
        %v875 = vpack.c.b16 %v819, %v817
        %v876 = vpack.c.b16 %v820, %v818
        %v877 = vpack.c.b16 %v823, %v821
        %v878 = vpack.c.b16 %v824, %v822
        %v879 = vpack.c.b16 %v827, %v825
        %v880 = vpack.c.b16 %v828, %v826
        %v881 = vpack.c.b16 %v831, %v829
        %v882 = vpack.c.b16 %v832, %v830
        %v883 = vpack.c.b16 %v835, %v833
        %v884 = vpack.c.b16 %v836, %v834
        %v885 = vpack.c.b16 %v839, %v837
        %v886 = vpack.c.b16 %v840, %v838
        %v887 = vpack.c.b16 %v843, %v841
        %v888 = vpack.c.b16 %v844, %v842
        %v889 = vpack.c.b16 %v847, %v845
        %v890 = vpack.c.b16 %v848, %v846
        %v891 = vpack.c.b16 %v851, %v849
        %v892 = vpack.c.b16 %v852, %v850
        %v893 = vpack.c.b16 %v855, %v853
        %v894 = vpack.c.b16 %v856, %v854
        %v895 = vpack.c.b16 %v859, %v857
        %v896 = vpack.c.b16 %v860, %v858
        %v897 = vpack.c.b16 %v863, %v861
        %v898 = vpack.c.b16 %v864, %v862
        %v899 = vpack.c.b16 %v867, %v865
        %v900 = vpack.c.b16 %v868, %v866
        %933 = vmatprep.subr.bf16.mxu0 %v870
        %934 = vmatpush1.bf16.msra.mxu0 %v869
        %935 = vmatprep.subr.bf16.mxu0 %v872
        %936 = vmatpush1.bf16.msra.mxu0 %v871
        %937 = vmatprep.subr.bf16.mxu0 %v874
        %938 = vmatpush1.bf16.msra.mxu0 %v873
        %939 = vmatprep.subr.bf16.mxu0 %v876
        %940 = vmatpush1.bf16.msra.mxu0 %v875
        %941 = vmatprep.subr.bf16.mxu0 %v878
        %942 = vmatpush1.bf16.msra.mxu0 %v877
        %943 = vmatprep.subr.bf16.mxu0 %v880
        %944 = vmatpush1.bf16.msra.mxu0 %v879
        %945 = vmatprep.subr.bf16.mxu0 %v882
        %946 = vmatpush1.bf16.msra.mxu0 %v881
        %947 = vmatprep.subr.bf16.mxu0 %v884
        %948 = vmatpush1.bf16.msra.mxu0 %v883
        %949 = vmatprep.subr.bf16.mxu0 %v886
        %950 = vmatpush1.bf16.msra.mxu0 %v885
        %951 = vmatprep.subr.bf16.mxu0 %v888
        %952 = vmatpush1.bf16.msra.mxu0 %v887
        %953 = vmatprep.subr.bf16.mxu0 %v890
        %954 = vmatpush1.bf16.msra.mxu0 %v889
        %955 = vmatprep.subr.bf16.mxu0 %v892
        %956 = vmatpush1.bf16.msra.mxu0 %v891
        %957 = vmatprep.subr.bf16.mxu0 %v894
        %958 = vmatpush1.bf16.msra.mxu0 %v893
        %959 = vmatprep.subr.bf16.mxu0 %v896
        %960 = vmatpush1.bf16.msra.mxu0 %v895
        %961 = vmatprep.subr.bf16.mxu0 %v898
        %962 = vmatpush1.bf16.msra.mxu0 %v897
        %963 = vmatprep.subr.bf16.mxu0 %v900
        %964 = vmatpush1.bf16.msra.mxu0 %v899
        %965 = vmatprep.mubr.bf16.mxu0 %v732
        %966 = vmatmul.mubr.bf16.gmra.mrb[0].mxu0 %v731
        %v967 = vpop.f32.mrb[0].mxu0
        %v968 = vadd.f32 %v768, %v967
        %v969 = vpop.f32.mrb[0].mxu0
        %v970 = vadd.f32 %v772, %v969
        %v971 = vpop.f32.mrb[0].mxu0
        %v972 = vpop.f32.mrb[0].mxu0
        %973 = vdwg.mxu0
        %v974 = vadd.f32 %v968, %v970
        %975 = vadd.xlane.f32.xlu0 %v974
        %v976 = vpop.xlane.xlu0 %975
        %v977 = vmul.f32 %v976, %v695
        %v978 = vsub.f32 %v968, %v977
        %v979 = vsub.f32 %v970, %v977
        %v980 = vmul.f32 %v978, %v978
        %v981 = vmul.f32 %v979, %v979
        %v982 = vadd.f32 %v980, %v981
        %983 = vadd.xlane.f32.xlu0 %v982
        %v984 = vpop.xlane.xlu0 %983
        %v985 = vmul.f32 %v984, %v695
        %v986 = vadd.f32 %v985, 1e-05
        %v987 = vrsqrt.pop %v986
        %v988 = vmul.f32 %v978, %v987
        %v989 = vmul.f32 %v979, %v987
        %v990 = vlaneseq
        %v991 = vshrl.u32 %v990, 7
        %v992 = vsub.s32 4, %v991
        %v993 = vrot.slane %v542, %v992
        %v994 = vlaneseq
        %v995 = vshrl.u32 %v994, 7
        %v996 = vsub.s32 4, %v995
        %v997 = vrot.slane %v543, %v996
        %v998 = vmul.f32 %v988, %v993
        %v999 = vmul.f32 %v989, %v997
        %v1000 = vlaneseq
        %v1001 = vshrl.u32 %v1000, 7
        %v1002 = vsub.s32 5, %v1001
        %v1003 = vrot.slane %v542, %v1002
        %v1004 = vlaneseq
        %v1005 = vshrl.u32 %v1004, 7
        %v1006 = vsub.s32 5, %v1005
        %v1007 = vrot.slane %v543, %v1006
        %v1008 = vadd.f32 %v998, %v1003
        %v1009 = vadd.f32 %v999, %v1007
        %v1010 = vmax.f32 %v1008, 0.0
        %v1011 = vmax.f32 %v1009, 0.0
        %v1012 = vld [vmem:[%s467] sm:$0xff]
        %v1013 = vunpack.c.l.bf16 %v1012
        %v1014 = vunpack.c.h.bf16 %v1012
        %v1015 = vadd.f32 %v1010, %v1013
        %v1016 = vadd.f32 %v1011, %v1014
        %v1017 = vpack.c.bf16 %v1015, %v1015
        %v1018 = vpack.c.bf16 %v1016, %v1016
        %v1019 = vld [vmem:[#allocation11] sm:$0xff]
        %v1020 = vld [vmem:[#allocation11 + $0x8] sm:$0xff]
        %v1021 = vld [vmem:[#allocation11 + $0x10] sm:$0xff]
        %v1022 = vld [vmem:[#allocation11 + $0x18] sm:$0xff]
        %v1023 = vld [vmem:[#allocation11 + $0x20] sm:$0xff]
        %v1024 = vld [vmem:[#allocation11 + $0x28] sm:$0xff]
        %v1025 = vld [vmem:[#allocation11 + $0x30] sm:$0xff]
        %v1026 = vld [vmem:[#allocation11 + $0x38] sm:$0xff]
        %v1027 = vld [vmem:[#allocation11 + $0x40] sm:$0xff]
        %v1028 = vld [vmem:[#allocation11 + $0x48] sm:$0xff]
        %v1029 = vld [vmem:[#allocation11 + $0x50] sm:$0xff]
        %v1030 = vld [vmem:[#allocation11 + $0x58] sm:$0xff]
        %v1031 = vld [vmem:[#allocation11 + $0x60] sm:$0xff]
        %v1032 = vld [vmem:[#allocation11 + $0x68] sm:$0xff]
        %v1033 = vld [vmem:[#allocation11 + $0x70] sm:$0xff]
        %v1034 = vld [vmem:[#allocation11 + $0x78] sm:$0xff]
        %v1035 = vld [vmem:[#allocation11 + $0x80] sm:$0xff]
        %v1036 = vld [vmem:[#allocation11 + $0x88] sm:$0xff]
        %v1037 = vld [vmem:[#allocation11 + $0x90] sm:$0xff]
        %v1038 = vld [vmem:[#allocation11 + $0x98] sm:$0xff]
        %v1039 = vld [vmem:[#allocation11 + $0xa0] sm:$0xff]
        %v1040 = vld [vmem:[#allocation11 + $0xa8] sm:$0xff]
        %v1041 = vld [vmem:[#allocation11 + $0xb0] sm:$0xff]
        %v1042 = vld [vmem:[#allocation11 + $0xb8] sm:$0xff]
        %v1043 = vld [vmem:[#allocation11 + $0xc0] sm:$0xff]
        %v1044 = vld [vmem:[#allocation11 + $0xc8] sm:$0xff]
        %v1045 = vld [vmem:[#allocation11 + $0xd0] sm:$0xff]
        %v1046 = vld [vmem:[#allocation11 + $0xd8] sm:$0xff]
        %v1047 = vld [vmem:[#allocation11 + $0xe0] sm:$0xff]
        %v1048 = vld [vmem:[#allocation11 + $0xe8] sm:$0xff]
        %v1049 = vld [vmem:[#allocation11 + $0xf0] sm:$0xff]
        %v1050 = vld [vmem:[#allocation11 + $0xf8] sm:$0xff]
        %v1051 = vld [vmem:[#allocation11 + $0x100] sm:$0xff]
        %v1052 = vld [vmem:[#allocation11 + $0x108] sm:$0xff]
        %v1053 = vld [vmem:[#allocation11 + $0x110] sm:$0xff]
        %v1054 = vld [vmem:[#allocation11 + $0x118] sm:$0xff]
        %v1055 = vld [vmem:[#allocation11 + $0x120] sm:$0xff]
        %v1056 = vld [vmem:[#allocation11 + $0x128] sm:$0xff]
        %v1057 = vld [vmem:[#allocation11 + $0x130] sm:$0xff]
        %v1058 = vld [vmem:[#allocation11 + $0x138] sm:$0xff]
        %v1059 = vld [vmem:[#allocation11 + $0x140] sm:$0xff]
        %v1060 = vld [vmem:[#allocation11 + $0x148] sm:$0xff]
        %v1061 = vld [vmem:[#allocation11 + $0x150] sm:$0xff]
        %v1062 = vld [vmem:[#allocation11 + $0x158] sm:$0xff]
        %v1063 = vld [vmem:[#allocation11 + $0x160] sm:$0xff]
        %v1064 = vld [vmem:[#allocation11 + $0x168] sm:$0xff]
        %v1065 = vld [vmem:[#allocation11 + $0x170] sm:$0xff]
        %v1066 = vld [vmem:[#allocation11 + $0x178] sm:$0xff]
        %v1067 = vld [vmem:[#allocation11 + $0x180] sm:$0xff]
        %v1068 = vld [vmem:[#allocation11 + $0x188] sm:$0xff]
        %v1069 = vld [vmem:[#allocation11 + $0x190] sm:$0xff]
        %v1070 = vld [vmem:[#allocation11 + $0x198] sm:$0xff]
        %v1071 = vld [vmem:[#allocation11 + $0x1a0] sm:$0xff]
        %v1072 = vld [vmem:[#allocation11 + $0x1a8] sm:$0xff]
        %v1073 = vld [vmem:[#allocation11 + $0x1b0] sm:$0xff]
        %v1074 = vld [vmem:[#allocation11 + $0x1b8] sm:$0xff]
        %v1075 = vld [vmem:[#allocation11 + $0x1c0] sm:$0xff]
        %v1076 = vld [vmem:[#allocation11 + $0x1c8] sm:$0xff]
        %v1077 = vld [vmem:[#allocation11 + $0x1d0] sm:$0xff]
        %v1078 = vld [vmem:[#allocation11 + $0x1d8] sm:$0xff]
        %v1079 = vld [vmem:[#allocation11 + $0x1e0] sm:$0xff]
        %v1080 = vld [vmem:[#allocation11 + $0x1e8] sm:$0xff]
        %v1081 = vld [vmem:[#allocation11 + $0x1f0] sm:$0xff]
        %v1082 = vld [vmem:[#allocation11 + $0x1f8] sm:$0xff]
        %v1083 = vld [vmem:[#allocation11 + $0x200] sm:$0xff]
        %v1084 = vld [vmem:[#allocation11 + $0x208] sm:$0xff]
        %v1085 = vld [vmem:[#allocation11 + $0x210] sm:$0xff]
        %v1086 = vld [vmem:[#allocation11 + $0x218] sm:$0xff]
        %v1087 = vld [vmem:[#allocation11 + $0x220] sm:$0xff]
        %v1088 = vld [vmem:[#allocation11 + $0x228] sm:$0xff]
        %v1089 = vld [vmem:[#allocation11 + $0x230] sm:$0xff]
        %v1090 = vld [vmem:[#allocation11 + $0x238] sm:$0xff]
        %v1091 = vld [vmem:[#allocation11 + $0x240] sm:$0xff]
        %v1092 = vld [vmem:[#allocation11 + $0x248] sm:$0xff]
        %v1093 = vld [vmem:[#allocation11 + $0x250] sm:$0xff]
        %v1094 = vld [vmem:[#allocation11 + $0x258] sm:$0xff]
        %v1095 = vld [vmem:[#allocation11 + $0x260] sm:$0xff]
        %v1096 = vld [vmem:[#allocation11 + $0x268] sm:$0xff]
        %v1097 = vld [vmem:[#allocation11 + $0x270] sm:$0xff]
        %v1098 = vld [vmem:[#allocation11 + $0x278] sm:$0xff]
        %v1099 = vld [vmem:[#allocation11 + $0x280] sm:$0xff]
        %v1100 = vld [vmem:[#allocation11 + $0x288] sm:$0xff]
        %v1101 = vld [vmem:[#allocation11 + $0x290] sm:$0xff]
        %v1102 = vld [vmem:[#allocation11 + $0x298] sm:$0xff]
        %v1103 = vld [vmem:[#allocation11 + $0x2a0] sm:$0xff]
        %v1104 = vld [vmem:[#allocation11 + $0x2a8] sm:$0xff]
        %v1105 = vld [vmem:[#allocation11 + $0x2b0] sm:$0xff]
        %v1106 = vld [vmem:[#allocation11 + $0x2b8] sm:$0xff]
        %v1107 = vld [vmem:[#allocation11 + $0x2c0] sm:$0xff]
        %v1108 = vld [vmem:[#allocation11 + $0x2c8] sm:$0xff]
        %v1109 = vld [vmem:[#allocation11 + $0x2d0] sm:$0xff]
        %v1110 = vld [vmem:[#allocation11 + $0x2d8] sm:$0xff]
        %v1111 = vld [vmem:[#allocation11 + $0x2e0] sm:$0xff]
        %v1112 = vld [vmem:[#allocation11 + $0x2e8] sm:$0xff]
        %v1113 = vld [vmem:[#allocation11 + $0x2f0] sm:$0xff]
        %v1114 = vld [vmem:[#allocation11 + $0x2f8] sm:$0xff]
        %v1115 = vld [vmem:[%s7] sm:$0x3f]
        %v1117 = vlaneseq
        %v1118 = vshrl.u32 %v1117, 7
        %v1119 = vsub.s32 0, %v1118
        %v1120 = vrot.slane %v1115, %v1119
        %v1121 = vlaneseq
        %v1122 = vshrl.u32 %v1121, 7
        %v1123 = vsub.s32 1, %v1122
        %v1124 = vrot.slane %v1115, %v1123
        %v1125 = vlaneseq
        %v1126 = vshrl.u32 %v1125, 7
        %v1127 = vsub.s32 2, %v1126
        %v1128 = vrot.slane %v1115, %v1127
        %v1129 = vlaneseq
        %v1130 = vshrl.u32 %v1129, 7
        %v1131 = vsub.s32 3, %v1130
        %v1132 = vrot.slane %v1115, %v1131
        %v1133 = vlaneseq
        %v1134 = vshrl.u32 %v1133, 7
        %v1135 = vsub.s32 4, %v1134
        %v1136 = vrot.slane %v1115, %v1135
        %v1137 = vlaneseq
        %v1138 = vshrl.u32 %v1137, 7
        %v1139 = vsub.s32 5, %v1138
        %v1140 = vrot.slane %v1115, %v1139
        %v1243 = vunpack.c.l.b16 %v1019
        %v1244 = vunpack.c.h.b16 %v1019
        %v1245 = vunpack.c.l.b16 %v1020
        %v1246 = vunpack.c.h.b16 %v1020
        %v1247 = vunpack.c.l.b16 %v1021
        %v1248 = vunpack.c.h.b16 %v1021
        %v1249 = vunpack.c.l.b16 %v1022
        %v1250 = vunpack.c.h.b16 %v1022
        %v1251 = vunpack.c.l.b16 %v1023
        %v1252 = vunpack.c.h.b16 %v1023
        %v1253 = vunpack.c.l.b16 %v1024
        %v1254 = vunpack.c.h.b16 %v1024
        %v1255 = vunpack.c.l.b16 %v1025
        %v1256 = vunpack.c.h.b16 %v1025
        %v1257 = vunpack.c.l.b16 %v1026
        %v1258 = vunpack.c.h.b16 %v1026
        %v1259 = vunpack.c.l.b16 %v1027
        %v1260 = vunpack.c.h.b16 %v1027
        %v1261 = vunpack.c.l.b16 %v1028
        %v1262 = vunpack.c.h.b16 %v1028
        %v1263 = vunpack.c.l.b16 %v1029
        %v1264 = vunpack.c.h.b16 %v1029
        %v1265 = vunpack.c.l.b16 %v1030
        %v1266 = vunpack.c.h.b16 %v1030
        %v1267 = vunpack.c.l.b16 %v1031
        %v1268 = vunpack.c.h.b16 %v1031
        %v1269 = vunpack.c.l.b16 %v1032
        %v1270 = vunpack.c.h.b16 %v1032
        %v1271 = vunpack.c.l.b16 %v1033
        %v1272 = vunpack.c.h.b16 %v1033
        %v1273 = vunpack.c.l.b16 %v1034
        %v1274 = vunpack.c.h.b16 %v1034
        %v1275 = vunpack.c.l.b16 %v1035
        %v1276 = vunpack.c.h.b16 %v1035
        %v1277 = vunpack.c.l.b16 %v1036
        %v1278 = vunpack.c.h.b16 %v1036
        %v1279 = vunpack.c.l.b16 %v1037
        %v1280 = vunpack.c.h.b16 %v1037
        %v1281 = vunpack.c.l.b16 %v1038
        %v1282 = vunpack.c.h.b16 %v1038
        %v1283 = vunpack.c.l.b16 %v1039
        %v1284 = vunpack.c.h.b16 %v1039
        %v1285 = vunpack.c.l.b16 %v1040
        %v1286 = vunpack.c.h.b16 %v1040
        %v1287 = vunpack.c.l.b16 %v1041
        %v1288 = vunpack.c.h.b16 %v1041
        %v1289 = vunpack.c.l.b16 %v1042
        %v1290 = vunpack.c.h.b16 %v1042
        %v1291 = vunpack.c.l.b16 %v1043
        %v1292 = vunpack.c.h.b16 %v1043
        %v1293 = vunpack.c.l.b16 %v1044
        %v1294 = vunpack.c.h.b16 %v1044
        %v1295 = vunpack.c.l.b16 %v1045
        %v1296 = vunpack.c.h.b16 %v1045
        %v1297 = vunpack.c.l.b16 %v1046
        %v1298 = vunpack.c.h.b16 %v1046
        %v1299 = vunpack.c.l.b16 %v1047
        %v1300 = vunpack.c.h.b16 %v1047
        %v1301 = vunpack.c.l.b16 %v1048
        %v1302 = vunpack.c.h.b16 %v1048
        %v1303 = vunpack.c.l.b16 %v1049
        %v1304 = vunpack.c.h.b16 %v1049
        %v1305 = vunpack.c.l.b16 %v1050
        %v1306 = vunpack.c.h.b16 %v1050
        %v1307 = vunpack.c.l.b16 %v1051
        %v1308 = vunpack.c.h.b16 %v1051
        %v1309 = vunpack.c.l.b16 %v1052
        %v1310 = vunpack.c.h.b16 %v1052
        %v1311 = vunpack.c.l.b16 %v1053
        %v1312 = vunpack.c.h.b16 %v1053
        %v1313 = vunpack.c.l.b16 %v1054
        %v1314 = vunpack.c.h.b16 %v1054
        %v1315 = vunpack.c.l.b16 %v1055
        %v1316 = vunpack.c.h.b16 %v1055
        %v1317 = vunpack.c.l.b16 %v1056
        %v1318 = vunpack.c.h.b16 %v1056
        %v1319 = vunpack.c.l.b16 %v1057
        %v1320 = vunpack.c.h.b16 %v1057
        %v1321 = vunpack.c.l.b16 %v1058
        %v1322 = vunpack.c.h.b16 %v1058
        %v1323 = vunpack.c.l.b16 %v1059
        %v1324 = vunpack.c.h.b16 %v1059
        %v1325 = vunpack.c.l.b16 %v1060
        %v1326 = vunpack.c.h.b16 %v1060
        %v1327 = vunpack.c.l.b16 %v1061
        %v1328 = vunpack.c.h.b16 %v1061
        %v1329 = vunpack.c.l.b16 %v1062
        %v1330 = vunpack.c.h.b16 %v1062
        %v1331 = vunpack.c.l.b16 %v1063
        %v1332 = vunpack.c.h.b16 %v1063
        %v1333 = vunpack.c.l.b16 %v1064
        %v1334 = vunpack.c.h.b16 %v1064
        %v1335 = vunpack.c.l.b16 %v1065
        %v1336 = vunpack.c.h.b16 %v1065
        %v1337 = vunpack.c.l.b16 %v1066
        %v1338 = vunpack.c.h.b16 %v1066
        %v1339 = vunpack.c.l.b16 %v1067
        %v1340 = vunpack.c.h.b16 %v1067
        %v1341 = vunpack.c.l.b16 %v1068
        %v1342 = vunpack.c.h.b16 %v1068
        %v1343 = vunpack.c.l.b16 %v1069
        %v1344 = vunpack.c.h.b16 %v1069
        %v1345 = vunpack.c.l.b16 %v1070
        %v1346 = vunpack.c.h.b16 %v1070
        %v1347 = vunpack.c.l.b16 %v1071
        %v1348 = vunpack.c.h.b16 %v1071
        %v1349 = vunpack.c.l.b16 %v1072
        %v1350 = vunpack.c.h.b16 %v1072
        %v1351 = vunpack.c.l.b16 %v1073
        %v1352 = vunpack.c.h.b16 %v1073
        %v1353 = vunpack.c.l.b16 %v1074
        %v1354 = vunpack.c.h.b16 %v1074
        %v1355 = vunpack.c.l.b16 %v1075
        %v1356 = vunpack.c.h.b16 %v1075
        %v1357 = vunpack.c.l.b16 %v1076
        %v1358 = vunpack.c.h.b16 %v1076
        %v1359 = vunpack.c.l.b16 %v1077
        %v1360 = vunpack.c.h.b16 %v1077
        %v1361 = vunpack.c.l.b16 %v1078
        %v1362 = vunpack.c.h.b16 %v1078
        %v1363 = vunpack.c.l.b16 %v1079
        %v1364 = vunpack.c.h.b16 %v1079
        %v1365 = vunpack.c.l.b16 %v1080
        %v1366 = vunpack.c.h.b16 %v1080
        %v1367 = vunpack.c.l.b16 %v1081
        %v1368 = vunpack.c.h.b16 %v1081
        %v1369 = vunpack.c.l.b16 %v1082
        %v1370 = vunpack.c.h.b16 %v1082
        %v1371 = vunpack.c.l.b16 %v1083
        %v1372 = vunpack.c.h.b16 %v1083
        %v1373 = vunpack.c.l.b16 %v1084
        %v1374 = vunpack.c.h.b16 %v1084
        %v1375 = vunpack.c.l.b16 %v1085
        %v1376 = vunpack.c.h.b16 %v1085
        %v1377 = vunpack.c.l.b16 %v1086
        %v1378 = vunpack.c.h.b16 %v1086
        %v1379 = vunpack.c.l.b16 %v1087
        %v1380 = vunpack.c.h.b16 %v1087
        %v1381 = vunpack.c.l.b16 %v1088
        %v1382 = vunpack.c.h.b16 %v1088
        %v1383 = vunpack.c.l.b16 %v1089
        %v1384 = vunpack.c.h.b16 %v1089
        %v1385 = vunpack.c.l.b16 %v1090
        %v1386 = vunpack.c.h.b16 %v1090
        %v1387 = vunpack.c.l.b16 %v1091
        %v1388 = vunpack.c.h.b16 %v1091
        %v1389 = vunpack.c.l.b16 %v1092
        %v1390 = vunpack.c.h.b16 %v1092
        %v1391 = vunpack.c.l.b16 %v1093
        %v1392 = vunpack.c.h.b16 %v1093
        %v1393 = vunpack.c.l.b16 %v1094
        %v1394 = vunpack.c.h.b16 %v1094
        %v1395 = vunpack.c.l.b16 %v1095
        %v1396 = vunpack.c.h.b16 %v1095
        %v1397 = vunpack.c.l.b16 %v1096
        %v1398 = vunpack.c.h.b16 %v1096
        %v1399 = vunpack.c.l.b16 %v1097
        %v1400 = vunpack.c.h.b16 %v1097
        %v1401 = vunpack.c.l.b16 %v1098
        %v1402 = vunpack.c.h.b16 %v1098
        %v1403 = vunpack.c.l.b16 %v1099
        %v1404 = vunpack.c.h.b16 %v1099
        %v1405 = vunpack.c.l.b16 %v1100
        %v1406 = vunpack.c.h.b16 %v1100
        %v1407 = vunpack.c.l.b16 %v1101
        %v1408 = vunpack.c.h.b16 %v1101
        %v1409 = vunpack.c.l.b16 %v1102
        %v1410 = vunpack.c.h.b16 %v1102
        %v1411 = vunpack.c.l.b16 %v1103
        %v1412 = vunpack.c.h.b16 %v1103
        %v1413 = vunpack.c.l.b16 %v1104
        %v1414 = vunpack.c.h.b16 %v1104
        %v1415 = vunpack.c.l.b16 %v1105
        %v1416 = vunpack.c.h.b16 %v1105
        %v1417 = vunpack.c.l.b16 %v1106
        %v1418 = vunpack.c.h.b16 %v1106
        %v1419 = vunpack.c.l.b16 %v1107
        %v1420 = vunpack.c.h.b16 %v1107
        %v1421 = vunpack.c.l.b16 %v1108
        %v1422 = vunpack.c.h.b16 %v1108
        %v1423 = vunpack.c.l.b16 %v1109
        %v1424 = vunpack.c.h.b16 %v1109
        %v1425 = vunpack.c.l.b16 %v1110
        %v1426 = vunpack.c.h.b16 %v1110
        %v1427 = vunpack.c.l.b16 %v1111
        %v1428 = vunpack.c.h.b16 %v1111
        %v1429 = vunpack.c.l.b16 %v1112
        %v1430 = vunpack.c.h.b16 %v1112
        %v1431 = vunpack.c.l.b16 %v1113
        %v1432 = vunpack.c.h.b16 %v1113
        %v1433 = vunpack.c.l.b16 %v1114
        %v1434 = vunpack.c.h.b16 %v1114
        %v1435 = vpack.c.b16 %v1249, %v1243
        %v1436 = vpack.c.b16 %v1250, %v1244
        %v1437 = vpack.c.b16 %v1251, %v1245
        %v1438 = vpack.c.b16 %v1252, %v1246
        %v1439 = vpack.c.b16 %v1253, %v1247
        %v1440 = vpack.c.b16 %v1254, %v1248
        %v1441 = vpack.c.b16 %v1261, %v1255
        %v1442 = vpack.c.b16 %v1262, %v1256
        %v1443 = vpack.c.b16 %v1263, %v1257
        %v1444 = vpack.c.b16 %v1264, %v1258
        %v1445 = vpack.c.b16 %v1265, %v1259
        %v1446 = vpack.c.b16 %v1266, %v1260
        %v1447 = vpack.c.b16 %v1273, %v1267
        %v1448 = vpack.c.b16 %v1274, %v1268
        %v1449 = vpack.c.b16 %v1275, %v1269
        %v1450 = vpack.c.b16 %v1276, %v1270
        %v1451 = vpack.c.b16 %v1277, %v1271
        %v1452 = vpack.c.b16 %v1278, %v1272
        %v1453 = vpack.c.b16 %v1285, %v1279
        %v1454 = vpack.c.b16 %v1286, %v1280
        %v1455 = vpack.c.b16 %v1287, %v1281
        %v1456 = vpack.c.b16 %v1288, %v1282
        %v1457 = vpack.c.b16 %v1289, %v1283
        %v1458 = vpack.c.b16 %v1290, %v1284
        %v1459 = vpack.c.b16 %v1297, %v1291
        %v1460 = vpack.c.b16 %v1298, %v1292
        %v1461 = vpack.c.b16 %v1299, %v1293
        %v1462 = vpack.c.b16 %v1300, %v1294
        %v1463 = vpack.c.b16 %v1301, %v1295
        %v1464 = vpack.c.b16 %v1302, %v1296
        %v1465 = vpack.c.b16 %v1309, %v1303
        %v1466 = vpack.c.b16 %v1310, %v1304
        %v1467 = vpack.c.b16 %v1311, %v1305
        %v1468 = vpack.c.b16 %v1312, %v1306
        %v1469 = vpack.c.b16 %v1313, %v1307
        %v1470 = vpack.c.b16 %v1314, %v1308
        %v1471 = vpack.c.b16 %v1321, %v1315
        %v1472 = vpack.c.b16 %v1322, %v1316
        %v1473 = vpack.c.b16 %v1323, %v1317
        %v1474 = vpack.c.b16 %v1324, %v1318
        %v1475 = vpack.c.b16 %v1325, %v1319
        %v1476 = vpack.c.b16 %v1326, %v1320
        %v1477 = vpack.c.b16 %v1333, %v1327
        %v1478 = vpack.c.b16 %v1334, %v1328
        %v1479 = vpack.c.b16 %v1335, %v1329
        %v1480 = vpack.c.b16 %v1336, %v1330
        %v1481 = vpack.c.b16 %v1337, %v1331
        %v1482 = vpack.c.b16 %v1338, %v1332
        %v1483 = vpack.c.b16 %v1345, %v1339
        %v1484 = vpack.c.b16 %v1346, %v1340
        %v1485 = vpack.c.b16 %v1347, %v1341
        %v1486 = vpack.c.b16 %v1348, %v1342
        %v1487 = vpack.c.b16 %v1349, %v1343
        %v1488 = vpack.c.b16 %v1350, %v1344
        %v1489 = vpack.c.b16 %v1357, %v1351
        %v1490 = vpack.c.b16 %v1358, %v1352
        %v1491 = vpack.c.b16 %v1359, %v1353
        %v1492 = vpack.c.b16 %v1360, %v1354
        %v1493 = vpack.c.b16 %v1361, %v1355
        %v1494 = vpack.c.b16 %v1362, %v1356
        %v1495 = vpack.c.b16 %v1369, %v1363
        %v1496 = vpack.c.b16 %v1370, %v1364
        %v1497 = vpack.c.b16 %v1371, %v1365
        %v1498 = vpack.c.b16 %v1372, %v1366
        %v1499 = vpack.c.b16 %v1373, %v1367
        %v1500 = vpack.c.b16 %v1374, %v1368
        %v1501 = vpack.c.b16 %v1381, %v1375
        %v1502 = vpack.c.b16 %v1382, %v1376
        %v1503 = vpack.c.b16 %v1383, %v1377
        %v1504 = vpack.c.b16 %v1384, %v1378
        %v1505 = vpack.c.b16 %v1385, %v1379
        %v1506 = vpack.c.b16 %v1386, %v1380
        %v1507 = vpack.c.b16 %v1393, %v1387
        %v1508 = vpack.c.b16 %v1394, %v1388
        %v1509 = vpack.c.b16 %v1395, %v1389
        %v1510 = vpack.c.b16 %v1396, %v1390
        %v1511 = vpack.c.b16 %v1397, %v1391
        %v1512 = vpack.c.b16 %v1398, %v1392
        %v1513 = vpack.c.b16 %v1405, %v1399
        %v1514 = vpack.c.b16 %v1406, %v1400
        %v1515 = vpack.c.b16 %v1407, %v1401
        %v1516 = vpack.c.b16 %v1408, %v1402
        %v1517 = vpack.c.b16 %v1409, %v1403
        %v1518 = vpack.c.b16 %v1410, %v1404
        %v1519 = vpack.c.b16 %v1417, %v1411
        %v1520 = vpack.c.b16 %v1418, %v1412
        %v1521 = vpack.c.b16 %v1419, %v1413
        %v1522 = vpack.c.b16 %v1420, %v1414
        %v1523 = vpack.c.b16 %v1421, %v1415
        %v1524 = vpack.c.b16 %v1422, %v1416
        %v1525 = vpack.c.b16 %v1429, %v1423
        %v1526 = vpack.c.b16 %v1430, %v1424
        %v1527 = vpack.c.b16 %v1431, %v1425
        %v1528 = vpack.c.b16 %v1432, %v1426
        %v1529 = vpack.c.b16 %v1433, %v1427
        %v1530 = vpack.c.b16 %v1434, %v1428
        %1627 = vmatprep.subr.bf16.mxu0 %v1436
        %1628 = vmatpush1.bf16.msra.mxu0 %v1435
        %1629 = vmatprep.subr.bf16.mxu0 %v1442
        %1630 = vmatpush1.bf16.msra.mxu0 %v1441
        %1631 = vmatprep.subr.bf16.mxu0 %v1448
        %1632 = vmatpush1.bf16.msra.mxu0 %v1447
        %1633 = vmatprep.subr.bf16.mxu0 %v1454
        %1634 = vmatpush1.bf16.msra.mxu0 %v1453
        %1635 = vmatprep.subr.bf16.mxu0 %v1460
        %1636 = vmatpush1.bf16.msra.mxu0 %v1459
        %1637 = vmatprep.subr.bf16.mxu0 %v1466
        %1638 = vmatpush1.bf16.msra.mxu0 %v1465
        %1639 = vmatprep.subr.bf16.mxu0 %v1472
        %1640 = vmatpush1.bf16.msra.mxu0 %v1471
        %1641 = vmatprep.subr.bf16.mxu0 %v1478
        %1642 = vmatpush1.bf16.msra.mxu0 %v1477
        %1643 = vmatprep.subr.bf16.mxu0 %v1484
        %1644 = vmatpush1.bf16.msra.mxu0 %v1483
        %1645 = vmatprep.subr.bf16.mxu0 %v1490
        %1646 = vmatpush1.bf16.msra.mxu0 %v1489
        %1647 = vmatprep.subr.bf16.mxu0 %v1496
        %1648 = vmatpush1.bf16.msra.mxu0 %v1495
        %1649 = vmatprep.subr.bf16.mxu0 %v1502
        %1650 = vmatpush1.bf16.msra.mxu0 %v1501
        %1651 = vmatprep.subr.bf16.mxu0 %v1508
        %1652 = vmatpush1.bf16.msra.mxu0 %v1507
        %1653 = vmatprep.subr.bf16.mxu0 %v1514
        %1654 = vmatpush1.bf16.msra.mxu0 %v1513
        %1655 = vmatprep.subr.bf16.mxu0 %v1520
        %1656 = vmatpush1.bf16.msra.mxu0 %v1519
        %1657 = vmatprep.subr.bf16.mxu0 %v1526
        %1658 = vmatpush1.bf16.msra.mxu0 %v1525
        %1659 = vmatprep.mubr.bf16.mxu0 %v1018
        %1660 = vmatmul.mubr.bf16.gmra.mrb[0].mxu0 %v1017
        %v1661 = vpop.f32.mrb[0].mxu0
        %v1662 = vadd.f32 %v1120, %v1661
        %v1663 = vpop.f32.mrb[0].mxu0
        %v1664 = vadd.f32 %v1124, %v1663
        %v1665 = vpop.f32.mrb[0].mxu0
        %v1666 = vpop.f32.mrb[0].mxu0
        %1667 = vdwg.mxu0
        %1668 = vmatprep.subr.bf16.mxu0 %v1438
        %1669 = vmatpush1.bf16.msra.mxu0 %v1437
        %1670 = vmatprep.subr.bf16.mxu0 %v1444
        %1671 = vmatpush1.bf16.msra.mxu0 %v1443
        %1672 = vmatprep.subr.bf16.mxu0 %v1450
        %1673 = vmatpush1.bf16.msra.mxu0 %v1449
        %1674 = vmatprep.subr.bf16.mxu0 %v1456
        %1675 = vmatpush1.bf16.msra.mxu0 %v1455
        %1676 = vmatprep.subr.bf16.mxu0 %v1462
        %1677 = vmatpush1.bf16.msra.mxu0 %v1461
        %1678 = vmatprep.subr.bf16.mxu0 %v1468
        %1679 = vmatpush1.bf16.msra.mxu0 %v1467
        %1680 = vmatprep.subr.bf16.mxu0 %v1474
        %1681 = vmatpush1.bf16.msra.mxu0 %v1473
        %1682 = vmatprep.subr.bf16.mxu0 %v1480
        %1683 = vmatpush1.bf16.msra.mxu0 %v1479
        %1684 = vmatprep.subr.bf16.mxu0 %v1486
        %1685 = vmatpush1.bf16.msra.mxu0 %v1485
        %1686 = vmatprep.subr.bf16.mxu0 %v1492
        %1687 = vmatpush1.bf16.msra.mxu0 %v1491
        %1688 = vmatprep.subr.bf16.mxu0 %v1498
        %1689 = vmatpush1.bf16.msra.mxu0 %v1497
        %1690 = vmatprep.subr.bf16.mxu0 %v1504
        %1691 = vmatpush1.bf16.msra.mxu0 %v1503
        %1692 = vmatprep.subr.bf16.mxu0 %v1510
        %1693 = vmatpush1.bf16.msra.mxu0 %v1509
        %1694 = vmatprep.subr.bf16.mxu0 %v1516
        %1695 = vmatpush1.bf16.msra.mxu0 %v1515
        %1696 = vmatprep.subr.bf16.mxu0 %v1522
        %1697 = vmatpush1.bf16.msra.mxu0 %v1521
        %1698 = vmatprep.subr.bf16.mxu0 %v1528
        %1699 = vmatpush1.bf16.msra.mxu0 %v1527
        %1700 = vmatprep.mubr.bf16.mxu0 %v1018
        %1701 = vmatmul.mubr.bf16.gmra.mrb[0].mxu0 %v1017
        %v1702 = vpop.f32.mrb[0].mxu0
        %v1703 = vadd.f32 %v1128, %v1702
        %v1704 = vpop.f32.mrb[0].mxu0
        %v1705 = vadd.f32 %v1132, %v1704
        %v1706 = vpop.f32.mrb[0].mxu0
        %v1707 = vpop.f32.mrb[0].mxu0
        %1708 = vdwg.mxu0
        %1709 = vmatprep.subr.bf16.mxu0 %v1440
        %1710 = vmatpush1.bf16.msra.mxu0 %v1439
        %1711 = vmatprep.subr.bf16.mxu0 %v1446
        %1712 = vmatpush1.bf16.msra.mxu0 %v1445
        %1713 = vmatprep.subr.bf16.mxu0 %v1452
        %1714 = vmatpush1.bf16.msra.mxu0 %v1451
        %1715 = vmatprep.subr.bf16.mxu0 %v1458
        %1716 = vmatpush1.bf16.msra.mxu0 %v1457
        %1717 = vmatprep.subr.bf16.mxu0 %v1464
        %1718 = vmatpush1.bf16.msra.mxu0 %v1463
        %1719 = vmatprep.subr.bf16.mxu0 %v1470
        %1720 = vmatpush1.bf16.msra.mxu0 %v1469
        %1721 = vmatprep.subr.bf16.mxu0 %v1476
        %1722 = vmatpush1.bf16.msra.mxu0 %v1475
        %1723 = vmatprep.subr.bf16.mxu0 %v1482
        %1724 = vmatpush1.bf16.msra.mxu0 %v1481
        %1725 = vmatprep.subr.bf16.mxu0 %v1488
        %1726 = vmatpush1.bf16.msra.mxu0 %v1487
        %1727 = vmatprep.subr.bf16.mxu0 %v1494
        %1728 = vmatpush1.bf16.msra.mxu0 %v1493
        %1729 = vmatprep.subr.bf16.mxu0 %v1500
        %1730 = vmatpush1.bf16.msra.mxu0 %v1499
        %1731 = vmatprep.subr.bf16.mxu0 %v1506
        %1732 = vmatpush1.bf16.msra.mxu0 %v1505
        %1733 = vmatprep.subr.bf16.mxu0 %v1512
        %1734 = vmatpush1.bf16.msra.mxu0 %v1511
        %1735 = vmatprep.subr.bf16.mxu0 %v1518
        %1736 = vmatpush1.bf16.msra.mxu0 %v1517
        %1737 = vmatprep.subr.bf16.mxu0 %v1524
        %1738 = vmatpush1.bf16.msra.mxu0 %v1523
        %1739 = vmatprep.subr.bf16.mxu0 %v1530
        %1740 = vmatpush1.bf16.msra.mxu0 %v1529
        %1741 = vmatprep.mubr.bf16.mxu0 %v1018
        %1742 = vmatmul.mubr.bf16.gmra.mrb[0].mxu0 %v1017
        %v1743 = vpop.f32.mrb[0].mxu0
        %v1744 = vadd.f32 %v1136, %v1743
        %v1745 = vpop.f32.mrb[0].mxu0
        %v1746 = vadd.f32 %v1140, %v1745
        %v1747 = vpop.f32.mrb[0].mxu0
        %v1748 = vpop.f32.mrb[0].mxu0
        %1749 = vdwg.mxu0
        %v1750 = vpack.c.bf16 %v1662, %v1662
        %v1751 = vpack.c.bf16 %v1664, %v1664
        %v1752 = vpack.c.bf16 %v1703, %v1703
        %v1753 = vpack.c.bf16 %v1705, %v1705
        %v1754 = vpack.c.bf16 %v1744, %v1744
        %v1755 = vpack.c.bf16 %v1746, %v1746
        %v1756 = vld [vmem:[%s540] sm:$0x1]
        %v1757 = vcvt.s32.f32 %v1756
        %v1758 = vmul.f32 %v1757, -1e+09
        %v1760 = vlaneseq
        %v1761 = vshrl.u32 %v1760, 7
        %v1762 = vsub.s32 0, %v1761
        %v1763 = vrot.slane %v1758, %v1762
        %vm1765 = vcmask 261120
        %v1767 = vsel %vm1765, %v1750, 0
        %v1770 = vsel %vm1765, %v1752, 0
        %1772 = vmatprep.subr.bf16.mxu0 0
        %1773 = vmatpush1.bf16.xpose.msra.mxu0 %v1770
        %1774 = vmatprep.subr.bf16.mxu0 0
        %1775 = vmatpush1.bf16.xpose.msra.mxu0 0
        %1776 = vmatprep.subr.bf16.mxu0 0
        %1777 = vmatpush1.bf16.xpose.msra.mxu0 0
        %1778 = vmatprep.subr.bf16.mxu0 0
        %1779 = vmatpush1.bf16.xpose.msra.mxu0 0
        %1780 = vmatprep.subr.bf16.mxu0 0
        %1781 = vmatpush1.bf16.xpose.msra.mxu0 0
        %1782 = vmatprep.subr.bf16.mxu0 0
        %1783 = vmatpush1.bf16.xpose.msra.mxu0 0
        %1784 = vmatprep.subr.bf16.mxu0 0
        %1785 = vmatpush1.bf16.xpose.msra.mxu0 0
        %1786 = vmatprep.subr.bf16.mxu0 0
        %1787 = vmatpush1.bf16.xpose.msra.mxu0 0
        %1788 = vmatprep.subr.bf16.mxu0 0
        %1789 = vmatpush1.bf16.xpose.msra.mxu0 0
        %1790 = vmatprep.subr.bf16.mxu0 0
        %1791 = vmatpush1.bf16.xpose.msra.mxu0 0
        %1792 = vmatprep.subr.bf16.mxu0 0
        %1793 = vmatpush1.bf16.xpose.msra.mxu0 0
        %1794 = vmatprep.subr.bf16.mxu0 0
        %1795 = vmatpush1.bf16.xpose.msra.mxu0 0
        %1796 = vmatprep.subr.bf16.mxu0 0
        %1797 = vmatpush1.bf16.xpose.msra.mxu0 0
        %1798 = vmatprep.subr.bf16.mxu0 0
        %1799 = vmatpush1.bf16.xpose.msra.mxu0 0
        %1800 = vmatprep.subr.bf16.mxu0 0
        %1801 = vmatpush1.bf16.xpose.msra.mxu0 0
        %1802 = vmatprep.subr.bf16.mxu0 0
        %1803 = vmatpush1.bf16.xpose.msra.mxu0 0
        %1804 = vmatprep.mubr.bf16.mxu0 0
        %1805 = vmatmul.mubr.bf16.gmra.mrb[0].mxu0 %v1767
        %v1806 = vpop.f32.mrb[0].mxu0
        %v1807 = vadd.f32 %v1763, %v1806
        %v1808 = vpop.f32.mrb[0].mxu0
        %v1809 = vpop.f32.mrb[0].mxu0
        %v1810 = vpop.f32.mrb[0].mxu0
        %1811 = vdwg.mxu0
        %vm1812 = vcmask 64512
        %v1813 = vsel %vm1812, %v1807, -inf
        %1814 = vmax.xlane.f32.xlu0 %v1813
        %v1815 = vpop.xlane.xlu0 %1814
        %v1816 = vsub.f32 %v1807, %v1815
        %v1817 = vmul.f32 %v1816, 1.442695
        %v1818 = vpow.pop %v1817
        %v1819 = vsel %vm1812, %v1818, 0.0
        %1820 = vadd.xlane.f32.xlu0 %v1819
        %v1821 = vpop.xlane.xlu0 %1820
        %v1822 = vrcp.pop %v1821
        %v1823 = vmul.f32 %v1818, %v1822
        %v1824 = vpack.c.bf16 %v1823, %v1823
        %v1826 = vsel %vm1812, %v1824, 0
        %vm1828 = vcmask 1043456
        %v1830 = vsel %vm1828, %v1754, 0
        %1832 = vmatprep.subr.bf16.mxu0 0
        %1833 = vmatpush1.bf16.msra.mxu0 %v1830
        %1834 = vmatprep.subr.bf16.mxu0 0
        %1835 = vmatpush1.bf16.msra.mxu0 0
        %1836 = vmatprep.subr.bf16.mxu0 0
        %1837 = vmatpush1.bf16.msra.mxu0 0
        %1838 = vmatprep.subr.bf16.mxu0 0
        %1839 = vmatpush1.bf16.msra.mxu0 0
        %1840 = vmatprep.subr.bf16.mxu0 0
        %1841 = vmatpush1.bf16.msra.mxu0 0
        %1842 = vmatprep.subr.bf16.mxu0 0
        %1843 = vmatpush1.bf16.msra.mxu0 0
        %1844 = vmatprep.subr.bf16.mxu0 0
        %1845 = vmatpush1.bf16.msra.mxu0 0
        %1846 = vmatprep.subr.bf16.mxu0 0
        %1847 = vmatpush1.bf16.msra.mxu0 0
        %1848 = vmatprep.subr.bf16.mxu0 0
        %1849 = vmatpush1.bf16.msra.mxu0 0
        %1850 = vmatprep.subr.bf16.mxu0 0
        %1851 = vmatpush1.bf16.msra.mxu0 0
        %1852 = vmatprep.subr.bf16.mxu0 0
        %1853 = vmatpush1.bf16.msra.mxu0 0
        %1854 = vmatprep.subr.bf16.mxu0 0
        %1855 = vmatpush1.bf16.msra.mxu0 0
        %1856 = vmatprep.subr.bf16.mxu0 0
        %1857 = vmatpush1.bf16.msra.mxu0 0
        %1858 = vmatprep.subr.bf16.mxu0 0
        %1859 = vmatpush1.bf16.msra.mxu0 0
        %1860 = vmatprep.subr.bf16.mxu0 0
        %1861 = vmatpush1.bf16.msra.mxu0 0
        %1862 = vmatprep.subr.bf16.mxu0 0
        %1863 = vmatpush1.bf16.msra.mxu0 0
        %1864 = vmatprep.mubr.bf16.mxu0 0
        %1865 = vmatmul.mubr.bf16.gmra.mrb[0].mxu0 %v1826
        %v1866 = vpop.f32.mrb[0].mxu0
        %v1867 = vadd.f32 0.0, %v1866
        %v1868 = vpop.f32.mrb[0].mxu0
        %v1869 = vpop.f32.mrb[0].mxu0
        %v1870 = vpop.f32.mrb[0].mxu0
        %1871 = vdwg.mxu0
        %1872 = vst.msk [vmem:[#allocation2] sm:$0xff] %vm1765, %v1867
        %1874 = vrot.lane.b32.xlu0 %v1750, 96
        %v1875 = vpop.permute.xlu0 %1874
        %1877 = vrot.lane.b32.xlu0 %v1752, 96
        %v1878 = vpop.permute.xlu0 %1877
        %v1880 = vsel %vm1765, %v1875, 0
        %v1883 = vsel %vm1765, %v1878, 0
        %1885 = vmatprep.subr.bf16.mxu0 0
        %1886 = vmatpush1.bf16.xpose.msra.mxu0 %v1883
        %1887 = vmatprep.subr.bf16.mxu0 0
        %1888 = vmatpush1.bf16.xpose.msra.mxu0 0
        %1889 = vmatprep.subr.bf16.mxu0 0
        %1890 = vmatpush1.bf16.xpose.msra.mxu0 0
        %1891 = vmatprep.subr.bf16.mxu0 0
        %1892 = vmatpush1.bf16.xpose.msra.mxu0 0
        %1893 = vmatprep.subr.bf16.mxu0 0
        %1894 = vmatpush1.bf16.xpose.msra.mxu0 0
        %1895 = vmatprep.subr.bf16.mxu0 0
        %1896 = vmatpush1.bf16.xpose.msra.mxu0 0
        %1897 = vmatprep.subr.bf16.mxu0 0
        %1898 = vmatpush1.bf16.xpose.msra.mxu0 0
        %1899 = vmatprep.subr.bf16.mxu0 0
        %1900 = vmatpush1.bf16.xpose.msra.mxu0 0
        %1901 = vmatprep.subr.bf16.mxu0 0
        %1902 = vmatpush1.bf16.xpose.msra.mxu0 0
        %1903 = vmatprep.subr.bf16.mxu0 0
        %1904 = vmatpush1.bf16.xpose.msra.mxu0 0
        %1905 = vmatprep.subr.bf16.mxu0 0
        %1906 = vmatpush1.bf16.xpose.msra.mxu0 0
        %1907 = vmatprep.subr.bf16.mxu0 0
        %1908 = vmatpush1.bf16.xpose.msra.mxu0 0
        %1909 = vmatprep.subr.bf16.mxu0 0
        %1910 = vmatpush1.bf16.xpose.msra.mxu0 0
        %1911 = vmatprep.subr.bf16.mxu0 0
        %1912 = vmatpush1.bf16.xpose.msra.mxu0 0
        %1913 = vmatprep.subr.bf16.mxu0 0
        %1914 = vmatpush1.bf16.xpose.msra.mxu0 0
        %1915 = vmatprep.subr.bf16.mxu0 0
        %1916 = vmatpush1.bf16.xpose.msra.mxu0 0
        %1917 = vmatprep.mubr.bf16.mxu0 0
        %1918 = vmatmul.mubr.bf16.gmra.mrb[0].mxu0 %v1880
        %v1919 = vpop.f32.mrb[0].mxu0
        %v1920 = vadd.f32 %v1763, %v1919
        %v1921 = vpop.f32.mrb[0].mxu0
        %v1922 = vpop.f32.mrb[0].mxu0
        %v1923 = vpop.f32.mrb[0].mxu0
        %1924 = vdwg.mxu0
        %v1925 = vsel %vm1812, %v1920, -inf
        %1926 = vmax.xlane.f32.xlu0 %v1925
        %v1927 = vpop.xlane.xlu0 %1926
        %v1928 = vsub.f32 %v1920, %v1927
        %v1929 = vmul.f32 %v1928, 1.442695
        %v1930 = vpow.pop %v1929
        %v1931 = vsel %vm1812, %v1930, 0.0
        %1932 = vadd.xlane.f32.xlu0 %v1931
        %v1933 = vpop.xlane.xlu0 %1932
        %v1934 = vrcp.pop %v1933
        %v1935 = vmul.f32 %v1930, %v1934
        %v1936 = vpack.c.bf16 %v1935, %v1935
        %1938 = vrot.lane.b32.xlu0 %v1754, 96
        %v1939 = vpop.permute.xlu0 %1938
        %v1941 = vsel %vm1812, %v1936, 0
        %v1944 = vsel %vm1828, %v1939, 0
        %1946 = vmatprep.subr.bf16.mxu0 0
        %1947 = vmatpush1.bf16.msra.mxu0 %v1944
        %1948 = vmatprep.subr.bf16.mxu0 0
        %1949 = vmatpush1.bf16.msra.mxu0 0
        %1950 = vmatprep.subr.bf16.mxu0 0
        %1951 = vmatpush1.bf16.msra.mxu0 0
        %1952 = vmatprep.subr.bf16.mxu0 0
        %1953 = vmatpush1.bf16.msra.mxu0 0
        %1954 = vmatprep.subr.bf16.mxu0 0
        %1955 = vmatpush1.bf16.msra.mxu0 0
        %1956 = vmatprep.subr.bf16.mxu0 0
        %1957 = vmatpush1.bf16.msra.mxu0 0
        %1958 = vmatprep.subr.bf16.mxu0 0
        %1959 = vmatpush1.bf16.msra.mxu0 0
        %1960 = vmatprep.subr.bf16.mxu0 0
        %1961 = vmatpush1.bf16.msra.mxu0 0
        %1962 = vmatprep.subr.bf16.mxu0 0
        %1963 = vmatpush1.bf16.msra.mxu0 0
        %1964 = vmatprep.subr.bf16.mxu0 0
        %1965 = vmatpush1.bf16.msra.mxu0 0
        %1966 = vmatprep.subr.bf16.mxu0 0
        %1967 = vmatpush1.bf16.msra.mxu0 0
        %1968 = vmatprep.subr.bf16.mxu0 0
        %1969 = vmatpush1.bf16.msra.mxu0 0
        %1970 = vmatprep.subr.bf16.mxu0 0
        %1971 = vmatpush1.bf16.msra.mxu0 0
        %1972 = vmatprep.subr.bf16.mxu0 0
        %1973 = vmatpush1.bf16.msra.mxu0 0
        %1974 = vmatprep.subr.bf16.mxu0 0
        %1975 = vmatpush1.bf16.msra.mxu0 0
        %1976 = vmatprep.subr.bf16.mxu0 0
        %1977 = vmatpush1.bf16.msra.mxu0 0
        %1978 = vmatprep.mubr.bf16.mxu0 0
        %1979 = vmatmul.mubr.bf16.gmra.mrb[0].mxu0 %v1941
        %v1980 = vpop.f32.mrb[0].mxu0
        %v1981 = vadd.f32 0.0, %v1980
        %v1982 = vpop.f32.mrb[0].mxu0
        %v1983 = vpop.f32.mrb[0].mxu0
        %v1984 = vpop.f32.mrb[0].mxu0
        %1985 = vdwg.mxu0
        %1987 = vrot.lane.b32.xlu0 %v1981, 32
        %v1988 = vpop.permute.xlu0 %1987
        %vm1990 = vcmask 523520
        %1991 = vst.msk [vmem:[#allocation2] sm:$0xff] %vm1990, %v1988
        %1992 = vrot.lane.b32.xlu0 %v1750, 64
        %v1993 = vpop.permute.xlu0 %1992
        %1994 = vrot.lane.b32.xlu0 %v1752, 64
        %v1995 = vpop.permute.xlu0 %1994
        %v1997 = vsel %vm1765, %v1993, 0
        %v2000 = vsel %vm1765, %v1995, 0
        %2002 = vmatprep.subr.bf16.mxu0 0
        %2003 = vmatpush1.bf16.xpose.msra.mxu0 %v2000
        %2004 = vmatprep.subr.bf16.mxu0 0
        %2005 = vmatpush1.bf16.xpose.msra.mxu0 0
        %2006 = vmatprep.subr.bf16.mxu0 0
        %2007 = vmatpush1.bf16.xpose.msra.mxu0 0
        %2008 = vmatprep.subr.bf16.mxu0 0
        %2009 = vmatpush1.bf16.xpose.msra.mxu0 0
        %2010 = vmatprep.subr.bf16.mxu0 0
        %2011 = vmatpush1.bf16.xpose.msra.mxu0 0
        %2012 = vmatprep.subr.bf16.mxu0 0
        %2013 = vmatpush1.bf16.xpose.msra.mxu0 0
        %2014 = vmatprep.subr.bf16.mxu0 0
        %2015 = vmatpush1.bf16.xpose.msra.mxu0 0
        %2016 = vmatprep.subr.bf16.mxu0 0
        %2017 = vmatpush1.bf16.xpose.msra.mxu0 0
        %2018 = vmatprep.subr.bf16.mxu0 0
        %2019 = vmatpush1.bf16.xpose.msra.mxu0 0
        %2020 = vmatprep.subr.bf16.mxu0 0
        %2021 = vmatpush1.bf16.xpose.msra.mxu0 0
        %2022 = vmatprep.subr.bf16.mxu0 0
        %2023 = vmatpush1.bf16.xpose.msra.mxu0 0
        %2024 = vmatprep.subr.bf16.mxu0 0
        %2025 = vmatpush1.bf16.xpose.msra.mxu0 0
        %2026 = vmatprep.subr.bf16.mxu0 0
        %2027 = vmatpush1.bf16.xpose.msra.mxu0 0
        %2028 = vmatprep.subr.bf16.mxu0 0
        %2029 = vmatpush1.bf16.xpose.msra.mxu0 0
        %2030 = vmatprep.subr.bf16.mxu0 0
        %2031 = vmatpush1.bf16.xpose.msra.mxu0 0
        %2032 = vmatprep.subr.bf16.mxu0 0
        %2033 = vmatpush1.bf16.xpose.msra.mxu0 0
        %2034 = vmatprep.mubr.bf16.mxu0 0
        %2035 = vmatmul.mubr.bf16.gmra.mrb[0].mxu0 %v1997
        %v2036 = vpop.f32.mrb[0].mxu0
        %v2037 = vadd.f32 %v1763, %v2036
        %v2038 = vpop.f32.mrb[0].mxu0
        %v2039 = vpop.f32.mrb[0].mxu0
        %v2040 = vpop.f32.mrb[0].mxu0
        %2041 = vdwg.mxu0
        %v2042 = vsel %vm1812, %v2037, -inf
        %2043 = vmax.xlane.f32.xlu0 %v2042
        %v2044 = vpop.xlane.xlu0 %2043
        %v2045 = vsub.f32 %v2037, %v2044
        %v2046 = vmul.f32 %v2045, 1.442695
        %v2047 = vpow.pop %v2046
        %v2048 = vsel %vm1812, %v2047, 0.0
        %2049 = vadd.xlane.f32.xlu0 %v2048
        %v2050 = vpop.xlane.xlu0 %2049
        %v2051 = vrcp.pop %v2050
        %v2052 = vmul.f32 %v2047, %v2051
        %v2053 = vpack.c.bf16 %v2052, %v2052
        %2054 = vrot.lane.b32.xlu0 %v1754, 64
        %v2055 = vpop.permute.xlu0 %2054
        %v2057 = vsel %vm1812, %v2053, 0
        %v2060 = vsel %vm1828, %v2055, 0
        %2062 = vmatprep.subr.bf16.mxu0 0
        %2063 = vmatpush1.bf16.msra.mxu0 %v2060
        %2064 = vmatprep.subr.bf16.mxu0 0
        %2065 = vmatpush1.bf16.msra.mxu0 0
        %2066 = vmatprep.subr.bf16.mxu0 0
        %2067 = vmatpush1.bf16.msra.mxu0 0
        %2068 = vmatprep.subr.bf16.mxu0 0
        %2069 = vmatpush1.bf16.msra.mxu0 0
        %2070 = vmatprep.subr.bf16.mxu0 0
        %2071 = vmatpush1.bf16.msra.mxu0 0
        %2072 = vmatprep.subr.bf16.mxu0 0
        %2073 = vmatpush1.bf16.msra.mxu0 0
        %2074 = vmatprep.subr.bf16.mxu0 0
        %2075 = vmatpush1.bf16.msra.mxu0 0
        %2076 = vmatprep.subr.bf16.mxu0 0
        %2077 = vmatpush1.bf16.msra.mxu0 0
        %2078 = vmatprep.subr.bf16.mxu0 0
        %2079 = vmatpush1.bf16.msra.mxu0 0
        %2080 = vmatprep.subr.bf16.mxu0 0
        %2081 = vmatpush1.bf16.msra.mxu0 0
        %2082 = vmatprep.subr.bf16.mxu0 0
        %2083 = vmatpush1.bf16.msra.mxu0 0
        %2084 = vmatprep.subr.bf16.mxu0 0
        %2085 = vmatpush1.bf16.msra.mxu0 0
        %2086 = vmatprep.subr.bf16.mxu0 0
        %2087 = vmatpush1.bf16.msra.mxu0 0
        %2088 = vmatprep.subr.bf16.mxu0 0
        %2089 = vmatpush1.bf16.msra.mxu0 0
        %2090 = vmatprep.subr.bf16.mxu0 0
        %2091 = vmatpush1.bf16.msra.mxu0 0
        %2092 = vmatprep.subr.bf16.mxu0 0
        %2093 = vmatpush1.bf16.msra.mxu0 0
        %2094 = vmatprep.mubr.bf16.mxu0 0
        %2095 = vmatmul.mubr.bf16.gmra.mrb[0].mxu0 %v2057
        %v2096 = vpop.f32.mrb[0].mxu0
        %v2097 = vadd.f32 0.0, %v2096
        %v2098 = vpop.f32.mrb[0].mxu0
        %v2099 = vpop.f32.mrb[0].mxu0
        %v2100 = vpop.f32.mrb[0].mxu0
        %2101 = vdwg.mxu0
        %2103 = vrot.lane.b32.xlu0 %v2097, 64
        %v2104 = vpop.permute.xlu0 %2103
        %vm2106 = vcmask 785920
        %2107 = vst.msk [vmem:[#allocation2] sm:$0xff] %vm2106, %v2104
        %2108 = vrot.lane.b32.xlu0 %v1750, 32
        %v2109 = vpop.permute.xlu0 %2108
        %2110 = vrot.lane.b32.xlu0 %v1752, 32
        %v2111 = vpop.permute.xlu0 %2110
        %v2113 = vsel %vm1765, %v2109, 0
        %v2116 = vsel %vm1765, %v2111, 0
        %2118 = vmatprep.subr.bf16.mxu0 0
        %2119 = vmatpush1.bf16.xpose.msra.mxu0 %v2116
        %2120 = vmatprep.subr.bf16.mxu0 0
        %2121 = vmatpush1.bf16.xpose.msra.mxu0 0
        %2122 = vmatprep.subr.bf16.mxu0 0
        %2123 = vmatpush1.bf16.xpose.msra.mxu0 0
        %2124 = vmatprep.subr.bf16.mxu0 0
        %2125 = vmatpush1.bf16.xpose.msra.mxu0 0
        %2126 = vmatprep.subr.bf16.mxu0 0
        %2127 = vmatpush1.bf16.xpose.msra.mxu0 0
        %2128 = vmatprep.subr.bf16.mxu0 0
        %2129 = vmatpush1.bf16.xpose.msra.mxu0 0
        %2130 = vmatprep.subr.bf16.mxu0 0
        %2131 = vmatpush1.bf16.xpose.msra.mxu0 0
        %2132 = vmatprep.subr.bf16.mxu0 0
        %2133 = vmatpush1.bf16.xpose.msra.mxu0 0
        %2134 = vmatprep.subr.bf16.mxu0 0
        %2135 = vmatpush1.bf16.xpose.msra.mxu0 0
        %2136 = vmatprep.subr.bf16.mxu0 0
        %2137 = vmatpush1.bf16.xpose.msra.mxu0 0
        %2138 = vmatprep.subr.bf16.mxu0 0
        %2139 = vmatpush1.bf16.xpose.msra.mxu0 0
        %2140 = vmatprep.subr.bf16.mxu0 0
        %2141 = vmatpush1.bf16.xpose.msra.mxu0 0
        %2142 = vmatprep.subr.bf16.mxu0 0
        %2143 = vmatpush1.bf16.xpose.msra.mxu0 0
        %2144 = vmatprep.subr.bf16.mxu0 0
        %2145 = vmatpush1.bf16.xpose.msra.mxu0 0
        %2146 = vmatprep.subr.bf16.mxu0 0
        %2147 = vmatpush1.bf16.xpose.msra.mxu0 0
        %2148 = vmatprep.subr.bf16.mxu0 0
        %2149 = vmatpush1.bf16.xpose.msra.mxu0 0
        %2150 = vmatprep.mubr.bf16.mxu0 0
        %2151 = vmatmul.mubr.bf16.gmra.mrb[0].mxu0 %v2113
        %v2152 = vpop.f32.mrb[0].mxu0
        %v2153 = vadd.f32 %v1763, %v2152
        %v2154 = vpop.f32.mrb[0].mxu0
        %v2155 = vpop.f32.mrb[0].mxu0
        %v2156 = vpop.f32.mrb[0].mxu0
        %2157 = vdwg.mxu0
        %v2158 = vsel %vm1812, %v2153, -inf
        %2159 = vmax.xlane.f32.xlu0 %v2158
        %v2160 = vpop.xlane.xlu0 %2159
        %v2161 = vsub.f32 %v2153, %v2160
        %v2162 = vmul.f32 %v2161, 1.442695
        %v2163 = vpow.pop %v2162
        %v2164 = vsel %vm1812, %v2163, 0.0
        %2165 = vadd.xlane.f32.xlu0 %v2164
        %v2166 = vpop.xlane.xlu0 %2165
        %v2167 = vrcp.pop %v2166
        %v2168 = vmul.f32 %v2163, %v2167
        %v2169 = vpack.c.bf16 %v2168, %v2168
        %2170 = vrot.lane.b32.xlu0 %v1754, 32
        %v2171 = vpop.permute.xlu0 %2170
        %v2173 = vsel %vm1812, %v2169, 0
        %v2176 = vsel %vm1828, %v2171, 0
        %2178 = vmatprep.subr.bf16.mxu0 0
        %2179 = vmatpush1.bf16.msra.mxu0 %v2176
        %2180 = vmatprep.subr.bf16.mxu0 0
        %2181 = vmatpush1.bf16.msra.mxu0 0
        %2182 = vmatprep.subr.bf16.mxu0 0
        %2183 = vmatpush1.bf16.msra.mxu0 0
        %2184 = vmatprep.subr.bf16.mxu0 0
        %2185 = vmatpush1.bf16.msra.mxu0 0
        %2186 = vmatprep.subr.bf16.mxu0 0
        %2187 = vmatpush1.bf16.msra.mxu0 0
        %2188 = vmatprep.subr.bf16.mxu0 0
        %2189 = vmatpush1.bf16.msra.mxu0 0
        %2190 = vmatprep.subr.bf16.mxu0 0
        %2191 = vmatpush1.bf16.msra.mxu0 0
        %2192 = vmatprep.subr.bf16.mxu0 0
        %2193 = vmatpush1.bf16.msra.mxu0 0
        %2194 = vmatprep.subr.bf16.mxu0 0
        %2195 = vmatpush1.bf16.msra.mxu0 0
        %2196 = vmatprep.subr.bf16.mxu0 0
        %2197 = vmatpush1.bf16.msra.mxu0 0
        %2198 = vmatprep.subr.bf16.mxu0 0
        %2199 = vmatpush1.bf16.msra.mxu0 0
        %2200 = vmatprep.subr.bf16.mxu0 0
        %2201 = vmatpush1.bf16.msra.mxu0 0
        %2202 = vmatprep.subr.bf16.mxu0 0
        %2203 = vmatpush1.bf16.msra.mxu0 0
        %2204 = vmatprep.subr.bf16.mxu0 0
        %2205 = vmatpush1.bf16.msra.mxu0 0
        %2206 = vmatprep.subr.bf16.mxu0 0
        %2207 = vmatpush1.bf16.msra.mxu0 0
        %2208 = vmatprep.subr.bf16.mxu0 0
        %2209 = vmatpush1.bf16.msra.mxu0 0
        %2210 = vmatprep.mubr.bf16.mxu0 0
        %2211 = vmatmul.mubr.bf16.gmra.mrb[0].mxu0 %v2173
        %v2212 = vpop.f32.mrb[0].mxu0
        %v2213 = vadd.f32 0.0, %v2212
        %v2214 = vpop.f32.mrb[0].mxu0
        %v2215 = vpop.f32.mrb[0].mxu0
        %v2216 = vpop.f32.mrb[0].mxu0
        %2217 = vdwg.mxu0
        %2219 = vrot.lane.b32.xlu0 %v2213, 96
        %v2220 = vpop.permute.xlu0 %2219
        %vm2222 = vcmask 1048320
        %2223 = vst.msk [vmem:[#allocation2] sm:$0xff] %vm2222, %v2220
        %v2225 = vsel %vm1765, %v1751, 0
        %v2228 = vsel %vm1765, %v1753, 0
        %2230 = vmatprep.subr.bf16.mxu0 0
        %2231 = vmatpush1.bf16.xpose.msra.mxu0 %v2228
        %2232 = vmatprep.subr.bf16.mxu0 0
        %2233 = vmatpush1.bf16.xpose.msra.mxu0 0
        %2234 = vmatprep.subr.bf16.mxu0 0
        %2235 = vmatpush1.bf16.xpose.msra.mxu0 0
        %2236 = vmatprep.subr.bf16.mxu0 0
        %2237 = vmatpush1.bf16.xpose.msra.mxu0 0
        %2238 = vmatprep.subr.bf16.mxu0 0
        %2239 = vmatpush1.bf16.xpose.msra.mxu0 0
        %2240 = vmatprep.subr.bf16.mxu0 0
        %2241 = vmatpush1.bf16.xpose.msra.mxu0 0
        %2242 = vmatprep.subr.bf16.mxu0 0
        %2243 = vmatpush1.bf16.xpose.msra.mxu0 0
        %2244 = vmatprep.subr.bf16.mxu0 0
        %2245 = vmatpush1.bf16.xpose.msra.mxu0 0
        %2246 = vmatprep.subr.bf16.mxu0 0
        %2247 = vmatpush1.bf16.xpose.msra.mxu0 0
        %2248 = vmatprep.subr.bf16.mxu0 0
        %2249 = vmatpush1.bf16.xpose.msra.mxu0 0
        %2250 = vmatprep.subr.bf16.mxu0 0
        %2251 = vmatpush1.bf16.xpose.msra.mxu0 0
        %2252 = vmatprep.subr.bf16.mxu0 0
        %2253 = vmatpush1.bf16.xpose.msra.mxu0 0
        %2254 = vmatprep.subr.bf16.mxu0 0
        %2255 = vmatpush1.bf16.xpose.msra.mxu0 0
        %2256 = vmatprep.subr.bf16.mxu0 0
        %2257 = vmatpush1.bf16.xpose.msra.mxu0 0
        %2258 = vmatprep.subr.bf16.mxu0 0
        %2259 = vmatpush1.bf16.xpose.msra.mxu0 0
        %2260 = vmatprep.subr.bf16.mxu0 0
        %2261 = vmatpush1.bf16.xpose.msra.mxu0 0
        %2262 = vmatprep.mubr.bf16.mxu0 0
        %2263 = vmatmul.mubr.bf16.gmra.mrb[0].mxu0 %v2225
        %v2264 = vpop.f32.mrb[0].mxu0
        %v2265 = vadd.f32 %v1763, %v2264
        %v2266 = vpop.f32.mrb[0].mxu0
        %v2267 = vpop.f32.mrb[0].mxu0
        %v2268 = vpop.f32.mrb[0].mxu0
        %2269 = vdwg.mxu0
        %v2270 = vsel %vm1812, %v2265, -inf
        %2271 = vmax.xlane.f32.xlu0 %v2270
        %v2272 = vpop.xlane.xlu0 %2271
        %v2273 = vsub.f32 %v2265, %v2272
        %v2274 = vmul.f32 %v2273, 1.442695
        %v2275 = vpow.pop %v2274
        %v2276 = vsel %vm1812, %v2275, 0.0
        %2277 = vadd.xlane.f32.xlu0 %v2276
        %v2278 = vpop.xlane.xlu0 %2277
        %v2279 = vrcp.pop %v2278
        %v2280 = vmul.f32 %v2275, %v2279
        %v2281 = vpack.c.bf16 %v2280, %v2280
        %v2283 = vsel %vm1812, %v2281, 0
        %v2286 = vsel %vm1828, %v1755, 0
        %2288 = vmatprep.subr.bf16.mxu0 0
        %2289 = vmatpush1.bf16.msra.mxu0 %v2286
        %2290 = vmatprep.subr.bf16.mxu0 0
        %2291 = vmatpush1.bf16.msra.mxu0 0
        %2292 = vmatprep.subr.bf16.mxu0 0
        %2293 = vmatpush1.bf16.msra.mxu0 0
        %2294 = vmatprep.subr.bf16.mxu0 0
        %2295 = vmatpush1.bf16.msra.mxu0 0
        %2296 = vmatprep.subr.bf16.mxu0 0
        %2297 = vmatpush1.bf16.msra.mxu0 0
        %2298 = vmatprep.subr.bf16.mxu0 0
        %2299 = vmatpush1.bf16.msra.mxu0 0
        %2300 = vmatprep.subr.bf16.mxu0 0
        %2301 = vmatpush1.bf16.msra.mxu0 0
        %2302 = vmatprep.subr.bf16.mxu0 0
        %2303 = vmatpush1.bf16.msra.mxu0 0
        %2304 = vmatprep.subr.bf16.mxu0 0
        %2305 = vmatpush1.bf16.msra.mxu0 0
        %2306 = vmatprep.subr.bf16.mxu0 0
        %2307 = vmatpush1.bf16.msra.mxu0 0
        %2308 = vmatprep.subr.bf16.mxu0 0
        %2309 = vmatpush1.bf16.msra.mxu0 0
        %2310 = vmatprep.subr.bf16.mxu0 0
        %2311 = vmatpush1.bf16.msra.mxu0 0
        %2312 = vmatprep.subr.bf16.mxu0 0
        %2313 = vmatpush1.bf16.msra.mxu0 0
        %2314 = vmatprep.subr.bf16.mxu0 0
        %2315 = vmatpush1.bf16.msra.mxu0 0
        %2316 = vmatprep.subr.bf16.mxu0 0
        %2317 = vmatpush1.bf16.msra.mxu0 0
        %2318 = vmatprep.subr.bf16.mxu0 0
        %2319 = vmatpush1.bf16.msra.mxu0 0
        %2320 = vmatprep.mubr.bf16.mxu0 0
        %2321 = vmatmul.mubr.bf16.gmra.mrb[0].mxu0 %v2283
        %v2322 = vpop.f32.mrb[0].mxu0
        %v2323 = vadd.f32 0.0, %v2322
        %v2324 = vpop.f32.mrb[0].mxu0
        %v2325 = vpop.f32.mrb[0].mxu0
        %v2326 = vpop.f32.mrb[0].mxu0
        %2327 = vdwg.mxu0
        %2328 = vst.msk [vmem:[#allocation2 + $0x8] sm:$0xff] %vm1765, %v2323
        %2330 = vrot.lane.b32.xlu0 %v1751, 96
        %v2331 = vpop.permute.xlu0 %2330
        %2333 = vrot.lane.b32.xlu0 %v1753, 96
        %v2334 = vpop.permute.xlu0 %2333
        %v2336 = vsel %vm1765, %v2331, 0
        %v2339 = vsel %vm1765, %v2334, 0
        %2341 = vmatprep.subr.bf16.mxu0 0
        %2342 = vmatpush1.bf16.xpose.msra.mxu0 %v2339
        %2343 = vmatprep.subr.bf16.mxu0 0
        %2344 = vmatpush1.bf16.xpose.msra.mxu0 0
        %2345 = vmatprep.subr.bf16.mxu0 0
        %2346 = vmatpush1.bf16.xpose.msra.mxu0 0
        %2347 = vmatprep.subr.bf16.mxu0 0
        %2348 = vmatpush1.bf16.xpose.msra.mxu0 0
        %2349 = vmatprep.subr.bf16.mxu0 0
        %2350 = vmatpush1.bf16.xpose.msra.mxu0 0
        %2351 = vmatprep.subr.bf16.mxu0 0
        %2352 = vmatpush1.bf16.xpose.msra.mxu0 0
        %2353 = vmatprep.subr.bf16.mxu0 0
        %2354 = vmatpush1.bf16.xpose.msra.mxu0 0
        %2355 = vmatprep.subr.bf16.mxu0 0
        %2356 = vmatpush1.bf16.xpose.msra.mxu0 0
        %2357 = vmatprep.subr.bf16.mxu0 0
        %2358 = vmatpush1.bf16.xpose.msra.mxu0 0
        %2359 = vmatprep.subr.bf16.mxu0 0
        %2360 = vmatpush1.bf16.xpose.msra.mxu0 0
        %2361 = vmatprep.subr.bf16.mxu0 0
        %2362 = vmatpush1.bf16.xpose.msra.mxu0 0
        %2363 = vmatprep.subr.bf16.mxu0 0
        %2364 = vmatpush1.bf16.xpose.msra.mxu0 0
        %2365 = vmatprep.subr.bf16.mxu0 0
        %2366 = vmatpush1.bf16.xpose.msra.mxu0 0
        %2367 = vmatprep.subr.bf16.mxu0 0
        %2368 = vmatpush1.bf16.xpose.msra.mxu0 0
        %2369 = vmatprep.subr.bf16.mxu0 0
        %2370 = vmatpush1.bf16.xpose.msra.mxu0 0
        %2371 = vmatprep.subr.bf16.mxu0 0
        %2372 = vmatpush1.bf16.xpose.msra.mxu0 0
        %2373 = vmatprep.mubr.bf16.mxu0 0
        %2374 = vmatmul.mubr.bf16.gmra.mrb[0].mxu0 %v2336
        %v2375 = vpop.f32.mrb[0].mxu0
        %v2376 = vadd.f32 %v1763, %v2375
        %v2377 = vpop.f32.mrb[0].mxu0
        %v2378 = vpop.f32.mrb[0].mxu0
        %v2379 = vpop.f32.mrb[0].mxu0
        %2380 = vdwg.mxu0
        %v2381 = vsel %vm1812, %v2376, -inf
        %2382 = vmax.xlane.f32.xlu0 %v2381
        %v2383 = vpop.xlane.xlu0 %2382
        %v2384 = vsub.f32 %v2376, %v2383
        %v2385 = vmul.f32 %v2384, 1.442695
        %v2386 = vpow.pop %v2385
        %v2387 = vsel %vm1812, %v2386, 0.0
        %2388 = vadd.xlane.f32.xlu0 %v2387
        %v2389 = vpop.xlane.xlu0 %2388
        %v2390 = vrcp.pop %v2389
        %v2391 = vmul.f32 %v2386, %v2390
        %v2392 = vpack.c.bf16 %v2391, %v2391
        %2394 = vrot.lane.b32.xlu0 %v1755, 96
        %v2395 = vpop.permute.xlu0 %2394
        %v2397 = vsel %vm1812, %v2392, 0
        %v2400 = vsel %vm1828, %v2395, 0
        %2402 = vmatprep.subr.bf16.mxu0 0
        %2403 = vmatpush1.bf16.msra.mxu0 %v2400
        %2404 = vmatprep.subr.bf16.mxu0 0
        %2405 = vmatpush1.bf16.msra.mxu0 0
        %2406 = vmatprep.subr.bf16.mxu0 0
        %2407 = vmatpush1.bf16.msra.mxu0 0
        %2408 = vmatprep.subr.bf16.mxu0 0
        %2409 = vmatpush1.bf16.msra.mxu0 0
        %2410 = vmatprep.subr.bf16.mxu0 0
        %2411 = vmatpush1.bf16.msra.mxu0 0
        %2412 = vmatprep.subr.bf16.mxu0 0
        %2413 = vmatpush1.bf16.msra.mxu0 0
        %2414 = vmatprep.subr.bf16.mxu0 0
        %2415 = vmatpush1.bf16.msra.mxu0 0
        %2416 = vmatprep.subr.bf16.mxu0 0
        %2417 = vmatpush1.bf16.msra.mxu0 0
        %2418 = vmatprep.subr.bf16.mxu0 0
        %2419 = vmatpush1.bf16.msra.mxu0 0
        %2420 = vmatprep.subr.bf16.mxu0 0
        %2421 = vmatpush1.bf16.msra.mxu0 0
        %2422 = vmatprep.subr.bf16.mxu0 0
        %2423 = vmatpush1.bf16.msra.mxu0 0
        %2424 = vmatprep.subr.bf16.mxu0 0
        %2425 = vmatpush1.bf16.msra.mxu0 0
        %2426 = vmatprep.subr.bf16.mxu0 0
        %2427 = vmatpush1.bf16.msra.mxu0 0
        %2428 = vmatprep.subr.bf16.mxu0 0
        %2429 = vmatpush1.bf16.msra.mxu0 0
        %2430 = vmatprep.subr.bf16.mxu0 0
        %2431 = vmatpush1.bf16.msra.mxu0 0
        %2432 = vmatprep.subr.bf16.mxu0 0
        %2433 = vmatpush1.bf16.msra.mxu0 0
        %2434 = vmatprep.mubr.bf16.mxu0 0
        %2435 = vmatmul.mubr.bf16.gmra.mrb[0].mxu0 %v2397
        %v2436 = vpop.f32.mrb[0].mxu0
        %v2437 = vadd.f32 0.0, %v2436
        %v2438 = vpop.f32.mrb[0].mxu0
        %v2439 = vpop.f32.mrb[0].mxu0
        %v2440 = vpop.f32.mrb[0].mxu0
        %2441 = vdwg.mxu0
        %2443 = vrot.lane.b32.xlu0 %v2437, 32
        %v2444 = vpop.permute.xlu0 %2443
        %2446 = vst.msk [vmem:[#allocation2 + $0x8] sm:$0xff] %vm1990, %v2444
        %2447 = vrot.lane.b32.xlu0 %v1751, 64
        %v2448 = vpop.permute.xlu0 %2447
        %2449 = vrot.lane.b32.xlu0 %v1753, 64
        %v2450 = vpop.permute.xlu0 %2449
        %v2452 = vsel %vm1765, %v2448, 0
        %v2455 = vsel %vm1765, %v2450, 0
        %2457 = vmatprep.subr.bf16.mxu0 0
        %2458 = vmatpush1.bf16.xpose.msra.mxu0 %v2455
        %2459 = vmatprep.subr.bf16.mxu0 0
        %2460 = vmatpush1.bf16.xpose.msra.mxu0 0
        %2461 = vmatprep.subr.bf16.mxu0 0
        %2462 = vmatpush1.bf16.xpose.msra.mxu0 0
        %2463 = vmatprep.subr.bf16.mxu0 0
        %2464 = vmatpush1.bf16.xpose.msra.mxu0 0
        %2465 = vmatprep.subr.bf16.mxu0 0
        %2466 = vmatpush1.bf16.xpose.msra.mxu0 0
        %2467 = vmatprep.subr.bf16.mxu0 0
        %2468 = vmatpush1.bf16.xpose.msra.mxu0 0
        %2469 = vmatprep.subr.bf16.mxu0 0
        %2470 = vmatpush1.bf16.xpose.msra.mxu0 0
        %2471 = vmatprep.subr.bf16.mxu0 0
        %2472 = vmatpush1.bf16.xpose.msra.mxu0 0
        %2473 = vmatprep.subr.bf16.mxu0 0
        %2474 = vmatpush1.bf16.xpose.msra.mxu0 0
        %2475 = vmatprep.subr.bf16.mxu0 0
        %2476 = vmatpush1.bf16.xpose.msra.mxu0 0
        %2477 = vmatprep.subr.bf16.mxu0 0
        %2478 = vmatpush1.bf16.xpose.msra.mxu0 0
        %2479 = vmatprep.subr.bf16.mxu0 0
        %2480 = vmatpush1.bf16.xpose.msra.mxu0 0
        %2481 = vmatprep.subr.bf16.mxu0 0
        %2482 = vmatpush1.bf16.xpose.msra.mxu0 0
        %2483 = vmatprep.subr.bf16.mxu0 0
        %2484 = vmatpush1.bf16.xpose.msra.mxu0 0
        %2485 = vmatprep.subr.bf16.mxu0 0
        %2486 = vmatpush1.bf16.xpose.msra.mxu0 0
        %2487 = vmatprep.subr.bf16.mxu0 0
        %2488 = vmatpush1.bf16.xpose.msra.mxu0 0
        %2489 = vmatprep.mubr.bf16.mxu0 0
        %2490 = vmatmul.mubr.bf16.gmra.mrb[0].mxu0 %v2452
        %v2491 = vpop.f32.mrb[0].mxu0
        %v2492 = vadd.f32 %v1763, %v2491
        %v2493 = vpop.f32.mrb[0].mxu0
        %v2494 = vpop.f32.mrb[0].mxu0
        %v2495 = vpop.f32.mrb[0].mxu0
        %2496 = vdwg.mxu0
        %v2497 = vsel %vm1812, %v2492, -inf
        %2498 = vmax.xlane.f32.xlu0 %v2497
        %v2499 = vpop.xlane.xlu0 %2498
        %v2500 = vsub.f32 %v2492, %v2499
        %v2501 = vmul.f32 %v2500, 1.442695
        %v2502 = vpow.pop %v2501
        %v2503 = vsel %vm1812, %v2502, 0.0
        %2504 = vadd.xlane.f32.xlu0 %v2503
        %v2505 = vpop.xlane.xlu0 %2504
        %v2506 = vrcp.pop %v2505
        %v2507 = vmul.f32 %v2502, %v2506
        %v2508 = vpack.c.bf16 %v2507, %v2507
        %2509 = vrot.lane.b32.xlu0 %v1755, 64
        %v2510 = vpop.permute.xlu0 %2509
        %v2512 = vsel %vm1812, %v2508, 0
        %v2515 = vsel %vm1828, %v2510, 0
        %2517 = vmatprep.subr.bf16.mxu0 0
        %2518 = vmatpush1.bf16.msra.mxu0 %v2515
        %2519 = vmatprep.subr.bf16.mxu0 0
        %2520 = vmatpush1.bf16.msra.mxu0 0
        %2521 = vmatprep.subr.bf16.mxu0 0
        %2522 = vmatpush1.bf16.msra.mxu0 0
        %2523 = vmatprep.subr.bf16.mxu0 0
        %2524 = vmatpush1.bf16.msra.mxu0 0
        %2525 = vmatprep.subr.bf16.mxu0 0
        %2526 = vmatpush1.bf16.msra.mxu0 0
        %2527 = vmatprep.subr.bf16.mxu0 0
        %2528 = vmatpush1.bf16.msra.mxu0 0
        %2529 = vmatprep.subr.bf16.mxu0 0
        %2530 = vmatpush1.bf16.msra.mxu0 0
        %2531 = vmatprep.subr.bf16.mxu0 0
        %2532 = vmatpush1.bf16.msra.mxu0 0
        %2533 = vmatprep.subr.bf16.mxu0 0
        %2534 = vmatpush1.bf16.msra.mxu0 0
        %2535 = vmatprep.subr.bf16.mxu0 0
        %2536 = vmatpush1.bf16.msra.mxu0 0
        %2537 = vmatprep.subr.bf16.mxu0 0
        %2538 = vmatpush1.bf16.msra.mxu0 0
        %2539 = vmatprep.subr.bf16.mxu0 0
        %2540 = vmatpush1.bf16.msra.mxu0 0
        %2541 = vmatprep.subr.bf16.mxu0 0
        %2542 = vmatpush1.bf16.msra.mxu0 0
        %2543 = vmatprep.subr.bf16.mxu0 0
        %2544 = vmatpush1.bf16.msra.mxu0 0
        %2545 = vmatprep.subr.bf16.mxu0 0
        %2546 = vmatpush1.bf16.msra.mxu0 0
        %2547 = vmatprep.subr.bf16.mxu0 0
        %2548 = vmatpush1.bf16.msra.mxu0 0
        %2549 = vmatprep.mubr.bf16.mxu0 0
        %2550 = vmatmul.mubr.bf16.gmra.mrb[0].mxu0 %v2512
        %v2551 = vpop.f32.mrb[0].mxu0
        %v2552 = vadd.f32 0.0, %v2551
        %v2553 = vpop.f32.mrb[0].mxu0
        %v2554 = vpop.f32.mrb[0].mxu0
        %v2555 = vpop.f32.mrb[0].mxu0
        %2556 = vdwg.mxu0
        %2558 = vrot.lane.b32.xlu0 %v2552, 64
        %v2559 = vpop.permute.xlu0 %2558
        %2561 = vst.msk [vmem:[#allocation2 + $0x8] sm:$0xff] %vm2106, %v2559
        %2562 = vrot.lane.b32.xlu0 %v1751, 32
        %v2563 = vpop.permute.xlu0 %2562
        %2564 = vrot.lane.b32.xlu0 %v1753, 32
        %v2565 = vpop.permute.xlu0 %2564
        %v2567 = vsel %vm1765, %v2563, 0
        %v2570 = vsel %vm1765, %v2565, 0
        %2572 = vmatprep.subr.bf16.mxu0 0
        %2573 = vmatpush1.bf16.xpose.msra.mxu0 %v2570
        %2574 = vmatprep.subr.bf16.mxu0 0
        %2575 = vmatpush1.bf16.xpose.msra.mxu0 0
        %2576 = vmatprep.subr.bf16.mxu0 0
        %2577 = vmatpush1.bf16.xpose.msra.mxu0 0
        %2578 = vmatprep.subr.bf16.mxu0 0
        %2579 = vmatpush1.bf16.xpose.msra.mxu0 0
        %2580 = vmatprep.subr.bf16.mxu0 0
        %2581 = vmatpush1.bf16.xpose.msra.mxu0 0
        %2582 = vmatprep.subr.bf16.mxu0 0
        %2583 = vmatpush1.bf16.xpose.msra.mxu0 0
        %2584 = vmatprep.subr.bf16.mxu0 0
        %2585 = vmatpush1.bf16.xpose.msra.mxu0 0
        %2586 = vmatprep.subr.bf16.mxu0 0
        %2587 = vmatpush1.bf16.xpose.msra.mxu0 0
        %2588 = vmatprep.subr.bf16.mxu0 0
        %2589 = vmatpush1.bf16.xpose.msra.mxu0 0
        %2590 = vmatprep.subr.bf16.mxu0 0
        %2591 = vmatpush1.bf16.xpose.msra.mxu0 0
        %2592 = vmatprep.subr.bf16.mxu0 0
        %2593 = vmatpush1.bf16.xpose.msra.mxu0 0
        %2594 = vmatprep.subr.bf16.mxu0 0
        %2595 = vmatpush1.bf16.xpose.msra.mxu0 0
        %2596 = vmatprep.subr.bf16.mxu0 0
        %2597 = vmatpush1.bf16.xpose.msra.mxu0 0
        %2598 = vmatprep.subr.bf16.mxu0 0
        %2599 = vmatpush1.bf16.xpose.msra.mxu0 0
        %2600 = vmatprep.subr.bf16.mxu0 0
        %2601 = vmatpush1.bf16.xpose.msra.mxu0 0
        %2602 = vmatprep.subr.bf16.mxu0 0
        %2603 = vmatpush1.bf16.xpose.msra.mxu0 0
        %2604 = vmatprep.mubr.bf16.mxu0 0
        %2605 = vmatmul.mubr.bf16.gmra.mrb[0].mxu0 %v2567
        %v2606 = vpop.f32.mrb[0].mxu0
        %v2607 = vadd.f32 %v1763, %v2606
        %v2608 = vpop.f32.mrb[0].mxu0
        %v2609 = vpop.f32.mrb[0].mxu0
        %v2610 = vpop.f32.mrb[0].mxu0
        %2611 = vdwg.mxu0
        %v2612 = vsel %vm1812, %v2607, -inf
        %2613 = vmax.xlane.f32.xlu0 %v2612
        %v2614 = vpop.xlane.xlu0 %2613
        %v2615 = vsub.f32 %v2607, %v2614
        %v2616 = vmul.f32 %v2615, 1.442695
        %v2617 = vpow.pop %v2616
        %v2618 = vsel %vm1812, %v2617, 0.0
        %2619 = vadd.xlane.f32.xlu0 %v2618
        %v2620 = vpop.xlane.xlu0 %2619
        %v2621 = vrcp.pop %v2620
        %v2622 = vmul.f32 %v2617, %v2621
        %v2623 = vpack.c.bf16 %v2622, %v2622
        %2624 = vrot.lane.b32.xlu0 %v1755, 32
        %v2625 = vpop.permute.xlu0 %2624
        %v2627 = vsel %vm1812, %v2623, 0
        %v2630 = vsel %vm1828, %v2625, 0
        %2632 = vmatprep.subr.bf16.mxu0 0
        %2633 = vmatpush1.bf16.msra.mxu0 %v2630
        %2634 = vmatprep.subr.bf16.mxu0 0
        %2635 = vmatpush1.bf16.msra.mxu0 0
        %2636 = vmatprep.subr.bf16.mxu0 0
        %2637 = vmatpush1.bf16.msra.mxu0 0
        %2638 = vmatprep.subr.bf16.mxu0 0
        %2639 = vmatpush1.bf16.msra.mxu0 0
        %2640 = vmatprep.subr.bf16.mxu0 0
        %2641 = vmatpush1.bf16.msra.mxu0 0
        %2642 = vmatprep.subr.bf16.mxu0 0
        %2643 = vmatpush1.bf16.msra.mxu0 0
        %2644 = vmatprep.subr.bf16.mxu0 0
        %2645 = vmatpush1.bf16.msra.mxu0 0
        %2646 = vmatprep.subr.bf16.mxu0 0
        %2647 = vmatpush1.bf16.msra.mxu0 0
        %2648 = vmatprep.subr.bf16.mxu0 0
        %2649 = vmatpush1.bf16.msra.mxu0 0
        %2650 = vmatprep.subr.bf16.mxu0 0
        %2651 = vmatpush1.bf16.msra.mxu0 0
        %2652 = vmatprep.subr.bf16.mxu0 0
        %2653 = vmatpush1.bf16.msra.mxu0 0
        %2654 = vmatprep.subr.bf16.mxu0 0
        %2655 = vmatpush1.bf16.msra.mxu0 0
        %2656 = vmatprep.subr.bf16.mxu0 0
        %2657 = vmatpush1.bf16.msra.mxu0 0
        %2658 = vmatprep.subr.bf16.mxu0 0
        %2659 = vmatpush1.bf16.msra.mxu0 0
        %2660 = vmatprep.subr.bf16.mxu0 0
        %2661 = vmatpush1.bf16.msra.mxu0 0
        %2662 = vmatprep.subr.bf16.mxu0 0
        %2663 = vmatpush1.bf16.msra.mxu0 0
        %2664 = vmatprep.mubr.bf16.mxu0 0
        %2665 = vmatmul.mubr.bf16.gmra.mrb[0].mxu0 %v2627
        %v2666 = vpop.f32.mrb[0].mxu0
        %v2667 = vadd.f32 0.0, %v2666
        %v2668 = vpop.f32.mrb[0].mxu0
        %v2669 = vpop.f32.mrb[0].mxu0
        %v2670 = vpop.f32.mrb[0].mxu0
        %2671 = vdwg.mxu0
        %2673 = vrot.lane.b32.xlu0 %v2667, 96
        %v2674 = vpop.permute.xlu0 %2673
        %2676 = vst.msk [vmem:[#allocation2 + $0x8] sm:$0xff] %vm2222, %v2674
        %v2677 = vld [vmem:[#allocation2] sm:$0xff]
        %v2678 = vld [vmem:[#allocation2 + $0x8] sm:$0xff]
        %v2679 = vpack.c.bf16 %v2677, %v2677
        %v2680 = vpack.c.bf16 %v2678, %v2678
        %v2681 = vld [vmem:[#allocation12] sm:$0xff]
        %v2682 = vld [vmem:[#allocation12 + $0x8] sm:$0xff]
        %v2683 = vld [vmem:[#allocation12 + $0x10] sm:$0xff]
        %v2684 = vld [vmem:[#allocation12 + $0x18] sm:$0xff]
        %v2685 = vld [vmem:[#allocation12 + $0x20] sm:$0xff]
        %v2686 = vld [vmem:[#allocation12 + $0x28] sm:$0xff]
        %v2687 = vld [vmem:[#allocation12 + $0x30] sm:$0xff]
        %v2688 = vld [vmem:[#allocation12 + $0x38] sm:$0xff]
        %v2689 = vld [vmem:[#allocation12 + $0x40] sm:$0xff]
        %v2690 = vld [vmem:[#allocation12 + $0x48] sm:$0xff]
        %v2691 = vld [vmem:[#allocation12 + $0x50] sm:$0xff]
        %v2692 = vld [vmem:[#allocation12 + $0x58] sm:$0xff]
        %v2693 = vld [vmem:[#allocation12 + $0x60] sm:$0xff]
        %v2694 = vld [vmem:[#allocation12 + $0x68] sm:$0xff]
        %v2695 = vld [vmem:[#allocation12 + $0x70] sm:$0xff]
        %v2696 = vld [vmem:[#allocation12 + $0x78] sm:$0xff]
        %v2697 = vld [vmem:[#allocation12 + $0x80] sm:$0xff]
        %v2698 = vld [vmem:[#allocation12 + $0x88] sm:$0xff]
        %v2699 = vld [vmem:[#allocation12 + $0x90] sm:$0xff]
        %v2700 = vld [vmem:[#allocation12 + $0x98] sm:$0xff]
        %v2701 = vld [vmem:[#allocation12 + $0xa0] sm:$0xff]
        %v2702 = vld [vmem:[#allocation12 + $0xa8] sm:$0xff]
        %v2703 = vld [vmem:[#allocation12 + $0xb0] sm:$0xff]
        %v2704 = vld [vmem:[#allocation12 + $0xb8] sm:$0xff]
        %v2705 = vld [vmem:[#allocation12 + $0xc0] sm:$0xff]
        %v2706 = vld [vmem:[#allocation12 + $0xc8] sm:$0xff]
        %v2707 = vld [vmem:[#allocation12 + $0xd0] sm:$0xff]
        %v2708 = vld [vmem:[#allocation12 + $0xd8] sm:$0xff]
        %v2709 = vld [vmem:[#allocation12 + $0xe0] sm:$0xff]
        %v2710 = vld [vmem:[#allocation12 + $0xe8] sm:$0xff]
        %v2711 = vld [vmem:[#allocation12 + $0xf0] sm:$0xff]
        %v2712 = vld [vmem:[#allocation12 + $0xf8] sm:$0xff]
        %v2713 = vlaneseq
        %v2714 = vshrl.u32 %v2713, 7
        %v2715 = vsub.s32 6, %v2714
        %v2716 = vrot.slane %v542, %v2715
        %v2717 = vlaneseq
        %v2718 = vshrl.u32 %v2717, 7
        %v2719 = vsub.s32 6, %v2718
        %v2720 = vrot.slane %v543, %v2719
        %v2753 = vunpack.c.l.b16 %v2681
        %v2754 = vunpack.c.h.b16 %v2681
        %v2755 = vunpack.c.l.b16 %v2682
        %v2756 = vunpack.c.h.b16 %v2682
        %v2757 = vunpack.c.l.b16 %v2683
        %v2758 = vunpack.c.h.b16 %v2683
        %v2759 = vunpack.c.l.b16 %v2684
        %v2760 = vunpack.c.h.b16 %v2684
        %v2761 = vunpack.c.l.b16 %v2685
        %v2762 = vunpack.c.h.b16 %v2685
        %v2763 = vunpack.c.l.b16 %v2686
        %v2764 = vunpack.c.h.b16 %v2686
        %v2765 = vunpack.c.l.b16 %v2687
        %v2766 = vunpack.c.h.b16 %v2687
        %v2767 = vunpack.c.l.b16 %v2688
        %v2768 = vunpack.c.h.b16 %v2688
        %v2769 = vunpack.c.l.b16 %v2689
        %v2770 = vunpack.c.h.b16 %v2689
        %v2771 = vunpack.c.l.b16 %v2690
        %v2772 = vunpack.c.h.b16 %v2690
        %v2773 = vunpack.c.l.b16 %v2691
        %v2774 = vunpack.c.h.b16 %v2691
        %v2775 = vunpack.c.l.b16 %v2692
        %v2776 = vunpack.c.h.b16 %v2692
        %v2777 = vunpack.c.l.b16 %v2693
        %v2778 = vunpack.c.h.b16 %v2693
        %v2779 = vunpack.c.l.b16 %v2694
        %v2780 = vunpack.c.h.b16 %v2694
        %v2781 = vunpack.c.l.b16 %v2695
        %v2782 = vunpack.c.h.b16 %v2695
        %v2783 = vunpack.c.l.b16 %v2696
        %v2784 = vunpack.c.h.b16 %v2696
        %v2785 = vunpack.c.l.b16 %v2697
        %v2786 = vunpack.c.h.b16 %v2697
        %v2787 = vunpack.c.l.b16 %v2698
        %v2788 = vunpack.c.h.b16 %v2698
        %v2789 = vunpack.c.l.b16 %v2699
        %v2790 = vunpack.c.h.b16 %v2699
        %v2791 = vunpack.c.l.b16 %v2700
        %v2792 = vunpack.c.h.b16 %v2700
        %v2793 = vunpack.c.l.b16 %v2701
        %v2794 = vunpack.c.h.b16 %v2701
        %v2795 = vunpack.c.l.b16 %v2702
        %v2796 = vunpack.c.h.b16 %v2702
        %v2797 = vunpack.c.l.b16 %v2703
        %v2798 = vunpack.c.h.b16 %v2703
        %v2799 = vunpack.c.l.b16 %v2704
        %v2800 = vunpack.c.h.b16 %v2704
        %v2801 = vunpack.c.l.b16 %v2705
        %v2802 = vunpack.c.h.b16 %v2705
        %v2803 = vunpack.c.l.b16 %v2706
        %v2804 = vunpack.c.h.b16 %v2706
        %v2805 = vunpack.c.l.b16 %v2707
        %v2806 = vunpack.c.h.b16 %v2707
        %v2807 = vunpack.c.l.b16 %v2708
        %v2808 = vunpack.c.h.b16 %v2708
        %v2809 = vunpack.c.l.b16 %v2709
        %v2810 = vunpack.c.h.b16 %v2709
        %v2811 = vunpack.c.l.b16 %v2710
        %v2812 = vunpack.c.h.b16 %v2710
        %v2813 = vunpack.c.l.b16 %v2711
        %v2814 = vunpack.c.h.b16 %v2711
        %v2815 = vunpack.c.l.b16 %v2712
        %v2816 = vunpack.c.h.b16 %v2712
        %v2817 = vpack.c.b16 %v2755, %v2753
        %v2818 = vpack.c.b16 %v2756, %v2754
        %v2819 = vpack.c.b16 %v2759, %v2757
        %v2820 = vpack.c.b16 %v2760, %v2758
        %v2821 = vpack.c.b16 %v2763, %v2761
        %v2822 = vpack.c.b16 %v2764, %v2762
        %v2823 = vpack.c.b16 %v2767, %v2765
        %v2824 = vpack.c.b16 %v2768, %v2766
        %v2825 = vpack.c.b16 %v2771, %v2769
        %v2826 = vpack.c.b16 %v2772, %v2770
        %v2827 = vpack.c.b16 %v2775, %v2773
        %v2828 = vpack.c.b16 %v2776, %v2774
        %v2829 = vpack.c.b16 %v2779, %v2777
        %v2830 = vpack.c.b16 %v2780, %v2778
        %v2831 = vpack.c.b16 %v2783, %v2781
        %v2832 = vpack.c.b16 %v2784, %v2782
        %v2833 = vpack.c.b16 %v2787, %v2785
        %v2834 = vpack.c.b16 %v2788, %v2786
        %v2835 = vpack.c.b16 %v2791, %v2789
        %v2836 = vpack.c.b16 %v2792, %v2790
        %v2837 = vpack.c.b16 %v2795, %v2793
        %v2838 = vpack.c.b16 %v2796, %v2794
        %v2839 = vpack.c.b16 %v2799, %v2797
        %v2840 = vpack.c.b16 %v2800, %v2798
        %v2841 = vpack.c.b16 %v2803, %v2801
        %v2842 = vpack.c.b16 %v2804, %v2802
        %v2843 = vpack.c.b16 %v2807, %v2805
        %v2844 = vpack.c.b16 %v2808, %v2806
        %v2845 = vpack.c.b16 %v2811, %v2809
        %v2846 = vpack.c.b16 %v2812, %v2810
        %v2847 = vpack.c.b16 %v2815, %v2813
        %v2848 = vpack.c.b16 %v2816, %v2814
        %2881 = vmatprep.subr.bf16.mxu0 %v2818
        %2882 = vmatpush1.bf16.msra.mxu0 %v2817
        %2883 = vmatprep.subr.bf16.mxu0 %v2820
        %2884 = vmatpush1.bf16.msra.mxu0 %v2819
        %2885 = vmatprep.subr.bf16.mxu0 %v2822
        %2886 = vmatpush1.bf16.msra.mxu0 %v2821
        %2887 = vmatprep.subr.bf16.mxu0 %v2824
        %2888 = vmatpush1.bf16.msra.mxu0 %v2823
        %2889 = vmatprep.subr.bf16.mxu0 %v2826
        %2890 = vmatpush1.bf16.msra.mxu0 %v2825
        %2891 = vmatprep.subr.bf16.mxu0 %v2828
        %2892 = vmatpush1.bf16.msra.mxu0 %v2827
        %2893 = vmatprep.subr.bf16.mxu0 %v2830
        %2894 = vmatpush1.bf16.msra.mxu0 %v2829
        %2895 = vmatprep.subr.bf16.mxu0 %v2832
        %2896 = vmatpush1.bf16.msra.mxu0 %v2831
        %2897 = vmatprep.subr.bf16.mxu0 %v2834
        %2898 = vmatpush1.bf16.msra.mxu0 %v2833
        %2899 = vmatprep.subr.bf16.mxu0 %v2836
        %2900 = vmatpush1.bf16.msra.mxu0 %v2835
        %2901 = vmatprep.subr.bf16.mxu0 %v2838
        %2902 = vmatpush1.bf16.msra.mxu0 %v2837
        %2903 = vmatprep.subr.bf16.mxu0 %v2840
        %2904 = vmatpush1.bf16.msra.mxu0 %v2839
        %2905 = vmatprep.subr.bf16.mxu0 %v2842
        %2906 = vmatpush1.bf16.msra.mxu0 %v2841
        %2907 = vmatprep.subr.bf16.mxu0 %v2844
        %2908 = vmatpush1.bf16.msra.mxu0 %v2843
        %2909 = vmatprep.subr.bf16.mxu0 %v2846
        %2910 = vmatpush1.bf16.msra.mxu0 %v2845
        %2911 = vmatprep.subr.bf16.mxu0 %v2848
        %2912 = vmatpush1.bf16.msra.mxu0 %v2847
        %2913 = vmatprep.mubr.bf16.mxu0 %v2680
        %2914 = vmatmul.mubr.bf16.gmra.mrb[0].mxu0 %v2679
        %v2915 = vpop.f32.mrb[0].mxu0
        %v2916 = vadd.f32 %v2716, %v2915
        %v2917 = vpop.f32.mrb[0].mxu0
        %v2918 = vadd.f32 %v2720, %v2917
        %v2919 = vpop.f32.mrb[0].mxu0
        %v2920 = vpop.f32.mrb[0].mxu0
        %2921 = vdwg.mxu0
        %v2922 = vadd.f32 %v1015, %v2916
        %v2923 = vadd.f32 %v1016, %v2918
        %v2924 = vadd.f32 %v2922, %v2923
        %2925 = vadd.xlane.f32.xlu0 %v2924
        %v2926 = vpop.xlane.xlu0 %2925
        %v2927 = vmul.f32 %v2926, %v695
        %v2928 = vsub.f32 %v2922, %v2927
        %v2929 = vsub.f32 %v2923, %v2927
        %v2930 = vmul.f32 %v2928, %v2928
        %v2931 = vmul.f32 %v2929, %v2929
        %v2932 = vadd.f32 %v2930, %v2931
        %2933 = vadd.xlane.f32.xlu0 %v2932
        %v2934 = vpop.xlane.xlu0 %2933
        %v2935 = vmul.f32 %v2934, %v695
        %v2936 = vadd.f32 %v2935, 1e-05
        %v2937 = vrsqrt.pop %v2936
        %v2938 = vmul.f32 %v2928, %v2937
        %v2939 = vmul.f32 %v2929, %v2937
        %v2940 = vlaneseq
        %v2941 = vshrl.u32 %v2940, 7
        %v2942 = vsub.s32 7, %v2941
        %v2943 = vrot.slane %v542, %v2942
        %v2944 = vlaneseq
        %v2945 = vshrl.u32 %v2944, 7
        %v2946 = vsub.s32 7, %v2945
        %v2947 = vrot.slane %v543, %v2946
        %v2948 = vmul.f32 %v2938, %v2943
        %v2949 = vmul.f32 %v2939, %v2947
        %v2950 = vlaneseq
        %v2951 = vshrl.u32 %v2950, 7
        %v2952 = vsub.s32 0, %v2951
        %v2953 = vrot.slane %v544, %v2952
        %v2954 = vlaneseq
        %v2955 = vshrl.u32 %v2954, 7
        %v2956 = vsub.s32 0, %v2955
        %v2957 = vrot.slane %v545, %v2956
        %v2958 = vadd.f32 %v2948, %v2953
        %v2959 = vadd.f32 %v2949, %v2957
        %v2960 = vpack.c.bf16 %v2958, %v2958
        %v2961 = vpack.c.bf16 %v2959, %v2959
        %s2962 = scalar_lea.vmem [#allocation9], 256
        %v2963 = vld [vmem:[%s2962] sm:$0xff]
        %v2964 = vld [vmem:[%s2962 + $0x8] sm:$0xff]
        %v2965 = vld [vmem:[%s2962 + $0x10] sm:$0xff]
        %v2966 = vld [vmem:[%s2962 + $0x18] sm:$0xff]
        %v2967 = vld [vmem:[%s2962 + $0x20] sm:$0xff]
        %v2968 = vld [vmem:[%s2962 + $0x28] sm:$0xff]
        %v2969 = vld [vmem:[%s2962 + $0x30] sm:$0xff]
        %v2970 = vld [vmem:[%s2962 + $0x38] sm:$0xff]
        %v2971 = vld [vmem:[%s2962 + $0x40] sm:$0xff]
        %v2972 = vld [vmem:[%s2962 + $0x48] sm:$0xff]
        %v2973 = vld [vmem:[%s2962 + $0x50] sm:$0xff]
        %v2974 = vld [vmem:[%s2962 + $0x58] sm:$0xff]
        %v2975 = vld [vmem:[%s2962 + $0x60] sm:$0xff]
        %v2976 = vld [vmem:[%s2962 + $0x68] sm:$0xff]
        %v2977 = vld [vmem:[%s2962 + $0x70] sm:$0xff]
        %v2978 = vld [vmem:[%s2962 + $0x78] sm:$0xff]
        %v2979 = vld [vmem:[%s2962 + $0x80] sm:$0xff]
        %v2980 = vld [vmem:[%s2962 + $0x88] sm:$0xff]
        %v2981 = vld [vmem:[%s2962 + $0x90] sm:$0xff]
        %v2982 = vld [vmem:[%s2962 + $0x98] sm:$0xff]
        %v2983 = vld [vmem:[%s2962 + $0xa0] sm:$0xff]
        %v2984 = vld [vmem:[%s2962 + $0xa8] sm:$0xff]
        %v2985 = vld [vmem:[%s2962 + $0xb0] sm:$0xff]
        %v2986 = vld [vmem:[%s2962 + $0xb8] sm:$0xff]
        %v2987 = vld [vmem:[%s2962 + $0xc0] sm:$0xff]
        %v2988 = vld [vmem:[%s2962 + $0xc8] sm:$0xff]
        %v2989 = vld [vmem:[%s2962 + $0xd0] sm:$0xff]
        %v2990 = vld [vmem:[%s2962 + $0xd8] sm:$0xff]
        %v2991 = vld [vmem:[%s2962 + $0xe0] sm:$0xff]
        %v2992 = vld [vmem:[%s2962 + $0xe8] sm:$0xff]
        %v2993 = vld [vmem:[%s2962 + $0xf0] sm:$0xff]
        %v2994 = vld [vmem:[%s2962 + $0xf8] sm:$0xff]
        %v2995 = vlaneseq
        %v2996 = vshrl.u32 %v2995, 7
        %v2997 = vsub.s32 1, %v2996
        %v2998 = vrot.slane %v544, %v2997
        %v2999 = vlaneseq
        %v3000 = vshrl.u32 %v2999, 7
        %v3001 = vsub.s32 1, %v3000
        %v3002 = vrot.slane %v545, %v3001
        %v3035 = vunpack.c.l.b16 %v2963
        %v3036 = vunpack.c.h.b16 %v2963
        %v3037 = vunpack.c.l.b16 %v2964
        %v3038 = vunpack.c.h.b16 %v2964
        %v3039 = vunpack.c.l.b16 %v2965
        %v3040 = vunpack.c.h.b16 %v2965
        %v3041 = vunpack.c.l.b16 %v2966
        %v3042 = vunpack.c.h.b16 %v2966
        %v3043 = vunpack.c.l.b16 %v2967
        %v3044 = vunpack.c.h.b16 %v2967
        %v3045 = vunpack.c.l.b16 %v2968
        %v3046 = vunpack.c.h.b16 %v2968
        %v3047 = vunpack.c.l.b16 %v2969
        %v3048 = vunpack.c.h.b16 %v2969
        %v3049 = vunpack.c.l.b16 %v2970
        %v3050 = vunpack.c.h.b16 %v2970
        %v3051 = vunpack.c.l.b16 %v2971
        %v3052 = vunpack.c.h.b16 %v2971
        %v3053 = vunpack.c.l.b16 %v2972
        %v3054 = vunpack.c.h.b16 %v2972
        %v3055 = vunpack.c.l.b16 %v2973
        %v3056 = vunpack.c.h.b16 %v2973
        %v3057 = vunpack.c.l.b16 %v2974
        %v3058 = vunpack.c.h.b16 %v2974
        %v3059 = vunpack.c.l.b16 %v2975
        %v3060 = vunpack.c.h.b16 %v2975
        %v3061 = vunpack.c.l.b16 %v2976
        %v3062 = vunpack.c.h.b16 %v2976
        %v3063 = vunpack.c.l.b16 %v2977
        %v3064 = vunpack.c.h.b16 %v2977
        %v3065 = vunpack.c.l.b16 %v2978
        %v3066 = vunpack.c.h.b16 %v2978
        %v3067 = vunpack.c.l.b16 %v2979
        %v3068 = vunpack.c.h.b16 %v2979
        %v3069 = vunpack.c.l.b16 %v2980
        %v3070 = vunpack.c.h.b16 %v2980
        %v3071 = vunpack.c.l.b16 %v2981
        %v3072 = vunpack.c.h.b16 %v2981
        %v3073 = vunpack.c.l.b16 %v2982
        %v3074 = vunpack.c.h.b16 %v2982
        %v3075 = vunpack.c.l.b16 %v2983
        %v3076 = vunpack.c.h.b16 %v2983
        %v3077 = vunpack.c.l.b16 %v2984
        %v3078 = vunpack.c.h.b16 %v2984
        %v3079 = vunpack.c.l.b16 %v2985
        %v3080 = vunpack.c.h.b16 %v2985
        %v3081 = vunpack.c.l.b16 %v2986
        %v3082 = vunpack.c.h.b16 %v2986
        %v3083 = vunpack.c.l.b16 %v2987
        %v3084 = vunpack.c.h.b16 %v2987
        %v3085 = vunpack.c.l.b16 %v2988
        %v3086 = vunpack.c.h.b16 %v2988
        %v3087 = vunpack.c.l.b16 %v2989
        %v3088 = vunpack.c.h.b16 %v2989
        %v3089 = vunpack.c.l.b16 %v2990
        %v3090 = vunpack.c.h.b16 %v2990
        %v3091 = vunpack.c.l.b16 %v2991
        %v3092 = vunpack.c.h.b16 %v2991
        %v3093 = vunpack.c.l.b16 %v2992
        %v3094 = vunpack.c.h.b16 %v2992
        %v3095 = vunpack.c.l.b16 %v2993
        %v3096 = vunpack.c.h.b16 %v2993
        %v3097 = vunpack.c.l.b16 %v2994
        %v3098 = vunpack.c.h.b16 %v2994
        %v3099 = vpack.c.b16 %v3037, %v3035
        %v3100 = vpack.c.b16 %v3038, %v3036
        %v3101 = vpack.c.b16 %v3041, %v3039
        %v3102 = vpack.c.b16 %v3042, %v3040
        %v3103 = vpack.c.b16 %v3045, %v3043
        %v3104 = vpack.c.b16 %v3046, %v3044
        %v3105 = vpack.c.b16 %v3049, %v3047
        %v3106 = vpack.c.b16 %v3050, %v3048
        %v3107 = vpack.c.b16 %v3053, %v3051
        %v3108 = vpack.c.b16 %v3054, %v3052
        %v3109 = vpack.c.b16 %v3057, %v3055
        %v3110 = vpack.c.b16 %v3058, %v3056
        %v3111 = vpack.c.b16 %v3061, %v3059
        %v3112 = vpack.c.b16 %v3062, %v3060
        %v3113 = vpack.c.b16 %v3065, %v3063
        %v3114 = vpack.c.b16 %v3066, %v3064
        %v3115 = vpack.c.b16 %v3069, %v3067
        %v3116 = vpack.c.b16 %v3070, %v3068
        %v3117 = vpack.c.b16 %v3073, %v3071
        %v3118 = vpack.c.b16 %v3074, %v3072
        %v3119 = vpack.c.b16 %v3077, %v3075
        %v3120 = vpack.c.b16 %v3078, %v3076
        %v3121 = vpack.c.b16 %v3081, %v3079
        %v3122 = vpack.c.b16 %v3082, %v3080
        %v3123 = vpack.c.b16 %v3085, %v3083
        %v3124 = vpack.c.b16 %v3086, %v3084
        %v3125 = vpack.c.b16 %v3089, %v3087
        %v3126 = vpack.c.b16 %v3090, %v3088
        %v3127 = vpack.c.b16 %v3093, %v3091
        %v3128 = vpack.c.b16 %v3094, %v3092
        %v3129 = vpack.c.b16 %v3097, %v3095
        %v3130 = vpack.c.b16 %v3098, %v3096
        %3163 = vmatprep.subr.bf16.mxu0 %v3100
        %3164 = vmatpush1.bf16.msra.mxu0 %v3099
        %3165 = vmatprep.subr.bf16.mxu0 %v3102
        %3166 = vmatpush1.bf16.msra.mxu0 %v3101
        %3167 = vmatprep.subr.bf16.mxu0 %v3104
        %3168 = vmatpush1.bf16.msra.mxu0 %v3103
        %3169 = vmatprep.subr.bf16.mxu0 %v3106
        %3170 = vmatpush1.bf16.msra.mxu0 %v3105
        %3171 = vmatprep.subr.bf16.mxu0 %v3108
        %3172 = vmatpush1.bf16.msra.mxu0 %v3107
        %3173 = vmatprep.subr.bf16.mxu0 %v3110
        %3174 = vmatpush1.bf16.msra.mxu0 %v3109
        %3175 = vmatprep.subr.bf16.mxu0 %v3112
        %3176 = vmatpush1.bf16.msra.mxu0 %v3111
        %3177 = vmatprep.subr.bf16.mxu0 %v3114
        %3178 = vmatpush1.bf16.msra.mxu0 %v3113
        %3179 = vmatprep.subr.bf16.mxu0 %v3116
        %3180 = vmatpush1.bf16.msra.mxu0 %v3115
        %3181 = vmatprep.subr.bf16.mxu0 %v3118
        %3182 = vmatpush1.bf16.msra.mxu0 %v3117
        %3183 = vmatprep.subr.bf16.mxu0 %v3120
        %3184 = vmatpush1.bf16.msra.mxu0 %v3119
        %3185 = vmatprep.subr.bf16.mxu0 %v3122
        %3186 = vmatpush1.bf16.msra.mxu0 %v3121
        %3187 = vmatprep.subr.bf16.mxu0 %v3124
        %3188 = vmatpush1.bf16.msra.mxu0 %v3123
        %3189 = vmatprep.subr.bf16.mxu0 %v3126
        %3190 = vmatpush1.bf16.msra.mxu0 %v3125
        %3191 = vmatprep.subr.bf16.mxu0 %v3128
        %3192 = vmatpush1.bf16.msra.mxu0 %v3127
        %3193 = vmatprep.subr.bf16.mxu0 %v3130
        %3194 = vmatpush1.bf16.msra.mxu0 %v3129
        %3195 = vmatprep.mubr.bf16.mxu0 %v2961
        %3196 = vmatmul.mubr.bf16.gmra.mrb[0].mxu0 %v2960
        %v3197 = vpop.f32.mrb[0].mxu0
        %v3198 = vadd.f32 %v2998, %v3197
        %v3199 = vpop.f32.mrb[0].mxu0
        %v3200 = vadd.f32 %v3002, %v3199
        %v3201 = vpop.f32.mrb[0].mxu0
        %v3202 = vpop.f32.mrb[0].mxu0
        %3203 = vdwg.mxu0
        %v3204 = vmax.f32 %v3198, 0.0
        %v3205 = vmax.f32 %v3200, 0.0
        %v3206 = vpack.c.bf16 %v3204, %v3204
        %v3207 = vpack.c.bf16 %v3205, %v3205
        %s3208 = scalar_lea.vmem [#allocation9], 512
        %v3209 = vld [vmem:[%s3208] sm:$0xff]
        %v3210 = vld [vmem:[%s3208 + $0x8] sm:$0xff]
        %v3211 = vld [vmem:[%s3208 + $0x10] sm:$0xff]
        %v3212 = vld [vmem:[%s3208 + $0x18] sm:$0xff]
        %v3213 = vld [vmem:[%s3208 + $0x20] sm:$0xff]
        %v3214 = vld [vmem:[%s3208 + $0x28] sm:$0xff]
        %v3215 = vld [vmem:[%s3208 + $0x30] sm:$0xff]
        %v3216 = vld [vmem:[%s3208 + $0x38] sm:$0xff]
        %v3217 = vld [vmem:[%s3208 + $0x40] sm:$0xff]
        %v3218 = vld [vmem:[%s3208 + $0x48] sm:$0xff]
        %v3219 = vld [vmem:[%s3208 + $0x50] sm:$0xff]
        %v3220 = vld [vmem:[%s3208 + $0x58] sm:$0xff]
        %v3221 = vld [vmem:[%s3208 + $0x60] sm:$0xff]
        %v3222 = vld [vmem:[%s3208 + $0x68] sm:$0xff]
        %v3223 = vld [vmem:[%s3208 + $0x70] sm:$0xff]
        %v3224 = vld [vmem:[%s3208 + $0x78] sm:$0xff]
        %v3225 = vld [vmem:[%s3208 + $0x80] sm:$0xff]
        %v3226 = vld [vmem:[%s3208 + $0x88] sm:$0xff]
        %v3227 = vld [vmem:[%s3208 + $0x90] sm:$0xff]
        %v3228 = vld [vmem:[%s3208 + $0x98] sm:$0xff]
        %v3229 = vld [vmem:[%s3208 + $0xa0] sm:$0xff]
        %v3230 = vld [vmem:[%s3208 + $0xa8] sm:$0xff]
        %v3231 = vld [vmem:[%s3208 + $0xb0] sm:$0xff]
        %v3232 = vld [vmem:[%s3208 + $0xb8] sm:$0xff]
        %v3233 = vld [vmem:[%s3208 + $0xc0] sm:$0xff]
        %v3234 = vld [vmem:[%s3208 + $0xc8] sm:$0xff]
        %v3235 = vld [vmem:[%s3208 + $0xd0] sm:$0xff]
        %v3236 = vld [vmem:[%s3208 + $0xd8] sm:$0xff]
        %v3237 = vld [vmem:[%s3208 + $0xe0] sm:$0xff]
        %v3238 = vld [vmem:[%s3208 + $0xe8] sm:$0xff]
        %v3239 = vld [vmem:[%s3208 + $0xf0] sm:$0xff]
        %v3240 = vld [vmem:[%s3208 + $0xf8] sm:$0xff]
        %v3241 = vlaneseq
        %v3242 = vshrl.u32 %v3241, 7
        %v3243 = vsub.s32 2, %v3242
        %v3244 = vrot.slane %v544, %v3243
        %v3245 = vlaneseq
        %v3246 = vshrl.u32 %v3245, 7
        %v3247 = vsub.s32 2, %v3246
        %v3248 = vrot.slane %v545, %v3247
        %v3281 = vunpack.c.l.b16 %v3209
        %v3282 = vunpack.c.h.b16 %v3209
        %v3283 = vunpack.c.l.b16 %v3210
        %v3284 = vunpack.c.h.b16 %v3210
        %v3285 = vunpack.c.l.b16 %v3211
        %v3286 = vunpack.c.h.b16 %v3211
        %v3287 = vunpack.c.l.b16 %v3212
        %v3288 = vunpack.c.h.b16 %v3212
        %v3289 = vunpack.c.l.b16 %v3213
        %v3290 = vunpack.c.h.b16 %v3213
        %v3291 = vunpack.c.l.b16 %v3214
        %v3292 = vunpack.c.h.b16 %v3214
        %v3293 = vunpack.c.l.b16 %v3215
        %v3294 = vunpack.c.h.b16 %v3215
        %v3295 = vunpack.c.l.b16 %v3216
        %v3296 = vunpack.c.h.b16 %v3216
        %v3297 = vunpack.c.l.b16 %v3217
        %v3298 = vunpack.c.h.b16 %v3217
        %v3299 = vunpack.c.l.b16 %v3218
        %v3300 = vunpack.c.h.b16 %v3218
        %v3301 = vunpack.c.l.b16 %v3219
        %v3302 = vunpack.c.h.b16 %v3219
        %v3303 = vunpack.c.l.b16 %v3220
        %v3304 = vunpack.c.h.b16 %v3220
        %v3305 = vunpack.c.l.b16 %v3221
        %v3306 = vunpack.c.h.b16 %v3221
        %v3307 = vunpack.c.l.b16 %v3222
        %v3308 = vunpack.c.h.b16 %v3222
        %v3309 = vunpack.c.l.b16 %v3223
        %v3310 = vunpack.c.h.b16 %v3223
        %v3311 = vunpack.c.l.b16 %v3224
        %v3312 = vunpack.c.h.b16 %v3224
        %v3313 = vunpack.c.l.b16 %v3225
        %v3314 = vunpack.c.h.b16 %v3225
        %v3315 = vunpack.c.l.b16 %v3226
        %v3316 = vunpack.c.h.b16 %v3226
        %v3317 = vunpack.c.l.b16 %v3227
        %v3318 = vunpack.c.h.b16 %v3227
        %v3319 = vunpack.c.l.b16 %v3228
        %v3320 = vunpack.c.h.b16 %v3228
        %v3321 = vunpack.c.l.b16 %v3229
        %v3322 = vunpack.c.h.b16 %v3229
        %v3323 = vunpack.c.l.b16 %v3230
        %v3324 = vunpack.c.h.b16 %v3230
        %v3325 = vunpack.c.l.b16 %v3231
        %v3326 = vunpack.c.h.b16 %v3231
        %v3327 = vunpack.c.l.b16 %v3232
        %v3328 = vunpack.c.h.b16 %v3232
        %v3329 = vunpack.c.l.b16 %v3233
        %v3330 = vunpack.c.h.b16 %v3233
        %v3331 = vunpack.c.l.b16 %v3234
        %v3332 = vunpack.c.h.b16 %v3234
        %v3333 = vunpack.c.l.b16 %v3235
        %v3334 = vunpack.c.h.b16 %v3235
        %v3335 = vunpack.c.l.b16 %v3236
        %v3336 = vunpack.c.h.b16 %v3236
        %v3337 = vunpack.c.l.b16 %v3237
        %v3338 = vunpack.c.h.b16 %v3237
        %v3339 = vunpack.c.l.b16 %v3238
        %v3340 = vunpack.c.h.b16 %v3238
        %v3341 = vunpack.c.l.b16 %v3239
        %v3342 = vunpack.c.h.b16 %v3239
        %v3343 = vunpack.c.l.b16 %v3240
        %v3344 = vunpack.c.h.b16 %v3240
        %v3345 = vpack.c.b16 %v3283, %v3281
        %v3346 = vpack.c.b16 %v3284, %v3282
        %v3347 = vpack.c.b16 %v3287, %v3285
        %v3348 = vpack.c.b16 %v3288, %v3286
        %v3349 = vpack.c.b16 %v3291, %v3289
        %v3350 = vpack.c.b16 %v3292, %v3290
        %v3351 = vpack.c.b16 %v3295, %v3293
        %v3352 = vpack.c.b16 %v3296, %v3294
        %v3353 = vpack.c.b16 %v3299, %v3297
        %v3354 = vpack.c.b16 %v3300, %v3298
        %v3355 = vpack.c.b16 %v3303, %v3301
        %v3356 = vpack.c.b16 %v3304, %v3302
        %v3357 = vpack.c.b16 %v3307, %v3305
        %v3358 = vpack.c.b16 %v3308, %v3306
        %v3359 = vpack.c.b16 %v3311, %v3309
        %v3360 = vpack.c.b16 %v3312, %v3310
        %v3361 = vpack.c.b16 %v3315, %v3313
        %v3362 = vpack.c.b16 %v3316, %v3314
        %v3363 = vpack.c.b16 %v3319, %v3317
        %v3364 = vpack.c.b16 %v3320, %v3318
        %v3365 = vpack.c.b16 %v3323, %v3321
        %v3366 = vpack.c.b16 %v3324, %v3322
        %v3367 = vpack.c.b16 %v3327, %v3325
        %v3368 = vpack.c.b16 %v3328, %v3326
        %v3369 = vpack.c.b16 %v3331, %v3329
        %v3370 = vpack.c.b16 %v3332, %v3330
        %v3371 = vpack.c.b16 %v3335, %v3333
        %v3372 = vpack.c.b16 %v3336, %v3334
        %v3373 = vpack.c.b16 %v3339, %v3337
        %v3374 = vpack.c.b16 %v3340, %v3338
        %v3375 = vpack.c.b16 %v3343, %v3341
        %v3376 = vpack.c.b16 %v3344, %v3342
        %3409 = vmatprep.subr.bf16.mxu0 %v3346
        %3410 = vmatpush1.bf16.msra.mxu0 %v3345
        %3411 = vmatprep.subr.bf16.mxu0 %v3348
        %3412 = vmatpush1.bf16.msra.mxu0 %v3347
        %3413 = vmatprep.subr.bf16.mxu0 %v3350
        %3414 = vmatpush1.bf16.msra.mxu0 %v3349
        %3415 = vmatprep.subr.bf16.mxu0 %v3352
        %3416 = vmatpush1.bf16.msra.mxu0 %v3351
        %3417 = vmatprep.subr.bf16.mxu0 %v3354
        %3418 = vmatpush1.bf16.msra.mxu0 %v3353
        %3419 = vmatprep.subr.bf16.mxu0 %v3356
        %3420 = vmatpush1.bf16.msra.mxu0 %v3355
        %3421 = vmatprep.subr.bf16.mxu0 %v3358
        %3422 = vmatpush1.bf16.msra.mxu0 %v3357
        %3423 = vmatprep.subr.bf16.mxu0 %v3360
        %3424 = vmatpush1.bf16.msra.mxu0 %v3359
        %3425 = vmatprep.subr.bf16.mxu0 %v3362
        %3426 = vmatpush1.bf16.msra.mxu0 %v3361
        %3427 = vmatprep.subr.bf16.mxu0 %v3364
        %3428 = vmatpush1.bf16.msra.mxu0 %v3363
        %3429 = vmatprep.subr.bf16.mxu0 %v3366
        %3430 = vmatpush1.bf16.msra.mxu0 %v3365
        %3431 = vmatprep.subr.bf16.mxu0 %v3368
        %3432 = vmatpush1.bf16.msra.mxu0 %v3367
        %3433 = vmatprep.subr.bf16.mxu0 %v3370
        %3434 = vmatpush1.bf16.msra.mxu0 %v3369
        %3435 = vmatprep.subr.bf16.mxu0 %v3372
        %3436 = vmatpush1.bf16.msra.mxu0 %v3371
        %3437 = vmatprep.subr.bf16.mxu0 %v3374
        %3438 = vmatpush1.bf16.msra.mxu0 %v3373
        %3439 = vmatprep.subr.bf16.mxu0 %v3376
        %3440 = vmatpush1.bf16.msra.mxu0 %v3375
        %3441 = vmatprep.mubr.bf16.mxu0 %v3207
        %3442 = vmatmul.mubr.bf16.gmra.mrb[0].mxu0 %v3206
        %v3443 = vpop.f32.mrb[0].mxu0
        %v3444 = vadd.f32 %v3244, %v3443
        %v3445 = vpop.f32.mrb[0].mxu0
        %v3446 = vadd.f32 %v3248, %v3445
        %v3447 = vpop.f32.mrb[0].mxu0
        %v3448 = vpop.f32.mrb[0].mxu0
        %3449 = vdwg.mxu0
        %v3450 = vadd.f32 %v3444, %v2958
        %v3451 = vadd.f32 %v3446, %v2959
        %v3452 = vadd.f32 %v3450, %v3451
        %3453 = vadd.xlane.f32.xlu0 %v3452
        %v3454 = vpop.xlane.xlu0 %3453
        %v3455 = vmul.f32 %v3454, %v695
        %v3456 = vsub.f32 %v3450, %v3455
        %v3457 = vsub.f32 %v3451, %v3455
        %v3458 = vmul.f32 %v3456, %v3456
        %v3459 = vmul.f32 %v3457, %v3457
        %v3460 = vadd.f32 %v3458, %v3459
        %3461 = vadd.xlane.f32.xlu0 %v3460
        %v3462 = vpop.xlane.xlu0 %3461
        %v3463 = vmul.f32 %v3462, %v695
        %v3464 = vadd.f32 %v3463, 1e-05
        %v3465 = vrsqrt.pop %v3464
        %v3466 = vmul.f32 %v3456, %v3465
        %v3467 = vmul.f32 %v3457, %v3465
        %v3468 = vlaneseq
        %v3469 = vshrl.u32 %v3468, 7
        %v3470 = vsub.s32 3, %v3469
        %v3471 = vrot.slane %v544, %v3470
        %v3472 = vlaneseq
        %v3473 = vshrl.u32 %v3472, 7
        %v3474 = vsub.s32 3, %v3473
        %v3475 = vrot.slane %v545, %v3474
        %v3476 = vmul.f32 %v3466, %v3471
        %v3477 = vmul.f32 %v3467, %v3475
        %v3478 = vlaneseq
        %v3479 = vshrl.u32 %v3478, 7
        %v3480 = vsub.s32 4, %v3479
        %v3481 = vrot.slane %v544, %v3480
        %v3482 = vlaneseq
        %v3483 = vshrl.u32 %v3482, 7
        %v3484 = vsub.s32 4, %v3483
        %v3485 = vrot.slane %v545, %v3484
        %v3486 = vadd.f32 %v3476, %v3481
        %v3487 = vadd.f32 %v3477, %v3485
        %v3488 = vpack.c.bf16 %v3486, %v3486
        %v3489 = vpack.c.bf16 %v3487, %v3487
        %s3490 = scalar_lea.vmem [#allocation9], 768
        %v3491 = vld [vmem:[%s3490] sm:$0xff]
        %v3492 = vld [vmem:[%s3490 + $0x8] sm:$0xff]
        %v3493 = vld [vmem:[%s3490 + $0x10] sm:$0xff]
        %v3494 = vld [vmem:[%s3490 + $0x18] sm:$0xff]
        %v3495 = vld [vmem:[%s3490 + $0x20] sm:$0xff]
        %v3496 = vld [vmem:[%s3490 + $0x28] sm:$0xff]
        %v3497 = vld [vmem:[%s3490 + $0x30] sm:$0xff]
        %v3498 = vld [vmem:[%s3490 + $0x38] sm:$0xff]
        %v3499 = vld [vmem:[%s3490 + $0x40] sm:$0xff]
        %v3500 = vld [vmem:[%s3490 + $0x48] sm:$0xff]
        %v3501 = vld [vmem:[%s3490 + $0x50] sm:$0xff]
        %v3502 = vld [vmem:[%s3490 + $0x58] sm:$0xff]
        %v3503 = vld [vmem:[%s3490 + $0x60] sm:$0xff]
        %v3504 = vld [vmem:[%s3490 + $0x68] sm:$0xff]
        %v3505 = vld [vmem:[%s3490 + $0x70] sm:$0xff]
        %v3506 = vld [vmem:[%s3490 + $0x78] sm:$0xff]
        %v3507 = vld [vmem:[%s3490 + $0x80] sm:$0xff]
        %v3508 = vld [vmem:[%s3490 + $0x88] sm:$0xff]
        %v3509 = vld [vmem:[%s3490 + $0x90] sm:$0xff]
        %v3510 = vld [vmem:[%s3490 + $0x98] sm:$0xff]
        %v3511 = vld [vmem:[%s3490 + $0xa0] sm:$0xff]
        %v3512 = vld [vmem:[%s3490 + $0xa8] sm:$0xff]
        %v3513 = vld [vmem:[%s3490 + $0xb0] sm:$0xff]
        %v3514 = vld [vmem:[%s3490 + $0xb8] sm:$0xff]
        %v3515 = vld [vmem:[%s3490 + $0xc0] sm:$0xff]
        %v3516 = vld [vmem:[%s3490 + $0xc8] sm:$0xff]
        %v3517 = vld [vmem:[%s3490 + $0xd0] sm:$0xff]
        %v3518 = vld [vmem:[%s3490 + $0xd8] sm:$0xff]
        %v3519 = vld [vmem:[%s3490 + $0xe0] sm:$0xff]
        %v3520 = vld [vmem:[%s3490 + $0xe8] sm:$0xff]
        %v3521 = vld [vmem:[%s3490 + $0xf0] sm:$0xff]
        %v3522 = vld [vmem:[%s3490 + $0xf8] sm:$0xff]
        %v3523 = vlaneseq
        %v3524 = vshrl.u32 %v3523, 7
        %v3525 = vsub.s32 5, %v3524
        %v3526 = vrot.slane %v544, %v3525
        %v3527 = vlaneseq
        %v3528 = vshrl.u32 %v3527, 7
        %v3529 = vsub.s32 5, %v3528
        %v3530 = vrot.slane %v545, %v3529
        %v3563 = vunpack.c.l.b16 %v3491
        %v3564 = vunpack.c.h.b16 %v3491
        %v3565 = vunpack.c.l.b16 %v3492
        %v3566 = vunpack.c.h.b16 %v3492
        %v3567 = vunpack.c.l.b16 %v3493
        %v3568 = vunpack.c.h.b16 %v3493
        %v3569 = vunpack.c.l.b16 %v3494
        %v3570 = vunpack.c.h.b16 %v3494
        %v3571 = vunpack.c.l.b16 %v3495
        %v3572 = vunpack.c.h.b16 %v3495
        %v3573 = vunpack.c.l.b16 %v3496
        %v3574 = vunpack.c.h.b16 %v3496
        %v3575 = vunpack.c.l.b16 %v3497
        %v3576 = vunpack.c.h.b16 %v3497
        %v3577 = vunpack.c.l.b16 %v3498
        %v3578 = vunpack.c.h.b16 %v3498
        %v3579 = vunpack.c.l.b16 %v3499
        %v3580 = vunpack.c.h.b16 %v3499
        %v3581 = vunpack.c.l.b16 %v3500
        %v3582 = vunpack.c.h.b16 %v3500
        %v3583 = vunpack.c.l.b16 %v3501
        %v3584 = vunpack.c.h.b16 %v3501
        %v3585 = vunpack.c.l.b16 %v3502
        %v3586 = vunpack.c.h.b16 %v3502
        %v3587 = vunpack.c.l.b16 %v3503
        %v3588 = vunpack.c.h.b16 %v3503
        %v3589 = vunpack.c.l.b16 %v3504
        %v3590 = vunpack.c.h.b16 %v3504
        %v3591 = vunpack.c.l.b16 %v3505
        %v3592 = vunpack.c.h.b16 %v3505
        %v3593 = vunpack.c.l.b16 %v3506
        %v3594 = vunpack.c.h.b16 %v3506
        %v3595 = vunpack.c.l.b16 %v3507
        %v3596 = vunpack.c.h.b16 %v3507
        %v3597 = vunpack.c.l.b16 %v3508
        %v3598 = vunpack.c.h.b16 %v3508
        %v3599 = vunpack.c.l.b16 %v3509
        %v3600 = vunpack.c.h.b16 %v3509
        %v3601 = vunpack.c.l.b16 %v3510
        %v3602 = vunpack.c.h.b16 %v3510
        %v3603 = vunpack.c.l.b16 %v3511
        %v3604 = vunpack.c.h.b16 %v3511
        %v3605 = vunpack.c.l.b16 %v3512
        %v3606 = vunpack.c.h.b16 %v3512
        %v3607 = vunpack.c.l.b16 %v3513
        %v3608 = vunpack.c.h.b16 %v3513
        %v3609 = vunpack.c.l.b16 %v3514
        %v3610 = vunpack.c.h.b16 %v3514
        %v3611 = vunpack.c.l.b16 %v3515
        %v3612 = vunpack.c.h.b16 %v3515
        %v3613 = vunpack.c.l.b16 %v3516
        %v3614 = vunpack.c.h.b16 %v3516
        %v3615 = vunpack.c.l.b16 %v3517
        %v3616 = vunpack.c.h.b16 %v3517
        %v3617 = vunpack.c.l.b16 %v3518
        %v3618 = vunpack.c.h.b16 %v3518
        %v3619 = vunpack.c.l.b16 %v3519
        %v3620 = vunpack.c.h.b16 %v3519
        %v3621 = vunpack.c.l.b16 %v3520
        %v3622 = vunpack.c.h.b16 %v3520
        %v3623 = vunpack.c.l.b16 %v3521
        %v3624 = vunpack.c.h.b16 %v3521
        %v3625 = vunpack.c.l.b16 %v3522
        %v3626 = vunpack.c.h.b16 %v3522
        %v3627 = vpack.c.b16 %v3565, %v3563
        %v3628 = vpack.c.b16 %v3566, %v3564
        %v3629 = vpack.c.b16 %v3569, %v3567
        %v3630 = vpack.c.b16 %v3570, %v3568
        %v3631 = vpack.c.b16 %v3573, %v3571
        %v3632 = vpack.c.b16 %v3574, %v3572
        %v3633 = vpack.c.b16 %v3577, %v3575
        %v3634 = vpack.c.b16 %v3578, %v3576
        %v3635 = vpack.c.b16 %v3581, %v3579
        %v3636 = vpack.c.b16 %v3582, %v3580
        %v3637 = vpack.c.b16 %v3585, %v3583
        %v3638 = vpack.c.b16 %v3586, %v3584
        %v3639 = vpack.c.b16 %v3589, %v3587
        %v3640 = vpack.c.b16 %v3590, %v3588
        %v3641 = vpack.c.b16 %v3593, %v3591
        %v3642 = vpack.c.b16 %v3594, %v3592
        %v3643 = vpack.c.b16 %v3597, %v3595
        %v3644 = vpack.c.b16 %v3598, %v3596
        %v3645 = vpack.c.b16 %v3601, %v3599
        %v3646 = vpack.c.b16 %v3602, %v3600
        %v3647 = vpack.c.b16 %v3605, %v3603
        %v3648 = vpack.c.b16 %v3606, %v3604
        %v3649 = vpack.c.b16 %v3609, %v3607
        %v3650 = vpack.c.b16 %v3610, %v3608
        %v3651 = vpack.c.b16 %v3613, %v3611
        %v3652 = vpack.c.b16 %v3614, %v3612
        %v3653 = vpack.c.b16 %v3617, %v3615
        %v3654 = vpack.c.b16 %v3618, %v3616
        %v3655 = vpack.c.b16 %v3621, %v3619
        %v3656 = vpack.c.b16 %v3622, %v3620
        %v3657 = vpack.c.b16 %v3625, %v3623
        %v3658 = vpack.c.b16 %v3626, %v3624
        %3691 = vmatprep.subr.bf16.mxu0 %v3628
        %3692 = vmatpush1.bf16.msra.mxu0 %v3627
        %3693 = vmatprep.subr.bf16.mxu0 %v3630
        %3694 = vmatpush1.bf16.msra.mxu0 %v3629
        %3695 = vmatprep.subr.bf16.mxu0 %v3632
        %3696 = vmatpush1.bf16.msra.mxu0 %v3631
        %3697 = vmatprep.subr.bf16.mxu0 %v3634
        %3698 = vmatpush1.bf16.msra.mxu0 %v3633
        %3699 = vmatprep.subr.bf16.mxu0 %v3636
        %3700 = vmatpush1.bf16.msra.mxu0 %v3635
        %3701 = vmatprep.subr.bf16.mxu0 %v3638
        %3702 = vmatpush1.bf16.msra.mxu0 %v3637
        %3703 = vmatprep.subr.bf16.mxu0 %v3640
        %3704 = vmatpush1.bf16.msra.mxu0 %v3639
        %3705 = vmatprep.subr.bf16.mxu0 %v3642
        %3706 = vmatpush1.bf16.msra.mxu0 %v3641
        %3707 = vmatprep.subr.bf16.mxu0 %v3644
        %3708 = vmatpush1.bf16.msra.mxu0 %v3643
        %3709 = vmatprep.subr.bf16.mxu0 %v3646
        %3710 = vmatpush1.bf16.msra.mxu0 %v3645
        %3711 = vmatprep.subr.bf16.mxu0 %v3648
        %3712 = vmatpush1.bf16.msra.mxu0 %v3647
        %3713 = vmatprep.subr.bf16.mxu0 %v3650
        %3714 = vmatpush1.bf16.msra.mxu0 %v3649
        %3715 = vmatprep.subr.bf16.mxu0 %v3652
        %3716 = vmatpush1.bf16.msra.mxu0 %v3651
        %3717 = vmatprep.subr.bf16.mxu0 %v3654
        %3718 = vmatpush1.bf16.msra.mxu0 %v3653
        %3719 = vmatprep.subr.bf16.mxu0 %v3656
        %3720 = vmatpush1.bf16.msra.mxu0 %v3655
        %3721 = vmatprep.subr.bf16.mxu0 %v3658
        %3722 = vmatpush1.bf16.msra.mxu0 %v3657
        %3723 = vmatprep.mubr.bf16.mxu0 %v3489
        %3724 = vmatmul.mubr.bf16.gmra.mrb[0].mxu0 %v3488
        %v3725 = vpop.f32.mrb[0].mxu0
        %v3726 = vadd.f32 %v3526, %v3725
        %v3727 = vpop.f32.mrb[0].mxu0
        %v3728 = vadd.f32 %v3530, %v3727
        %v3729 = vpop.f32.mrb[0].mxu0
        %v3730 = vpop.f32.mrb[0].mxu0
        %3731 = vdwg.mxu0
        %v3732 = vmax.f32 %v3726, 0.0
        %v3733 = vmax.f32 %v3728, 0.0
        %v3734 = vpack.c.bf16 %v3732, %v3732
        %v3735 = vpack.c.bf16 %v3733, %v3733
        %v3736 = vld [vmem:[#allocation15] sm:$0xf]
        %v3737 = vld [vmem:[#allocation15 + $0x4] sm:$0xf]
        %v3738 = vld [vmem:[#allocation15 + $0x8] sm:$0xf]
        %v3739 = vld [vmem:[#allocation15 + $0xc] sm:$0xf]
        %v3740 = vld [vmem:[#allocation15 + $0x10] sm:$0xf]
        %v3741 = vld [vmem:[#allocation15 + $0x14] sm:$0xf]
        %v3742 = vld [vmem:[#allocation15 + $0x18] sm:$0xf]
        %v3743 = vld [vmem:[#allocation15 + $0x1c] sm:$0xf]
        %v3744 = vld [vmem:[#allocation15 + $0x20] sm:$0xf]
        %v3745 = vld [vmem:[#allocation15 + $0x24] sm:$0xf]
        %v3746 = vld [vmem:[#allocation15 + $0x28] sm:$0xf]
        %v3747 = vld [vmem:[#allocation15 + $0x2c] sm:$0xf]
        %v3748 = vld [vmem:[#allocation15 + $0x30] sm:$0xf]
        %v3749 = vld [vmem:[#allocation15 + $0x34] sm:$0xf]
        %v3750 = vld [vmem:[#allocation15 + $0x38] sm:$0xf]
        %v3751 = vld [vmem:[#allocation15 + $0x3c] sm:$0xf]
        %v3752 = vld [vmem:[#allocation15 + $0x40] sm:$0xf]
        %v3753 = vld [vmem:[#allocation15 + $0x44] sm:$0xf]
        %v3754 = vld [vmem:[#allocation15 + $0x48] sm:$0xf]
        %v3755 = vld [vmem:[#allocation15 + $0x4c] sm:$0xf]
        %v3756 = vld [vmem:[#allocation15 + $0x50] sm:$0xf]
        %v3757 = vld [vmem:[#allocation15 + $0x54] sm:$0xf]
        %v3758 = vld [vmem:[#allocation15 + $0x58] sm:$0xf]
        %v3759 = vld [vmem:[#allocation15 + $0x5c] sm:$0xf]
        %v3760 = vld [vmem:[#allocation15 + $0x60] sm:$0xf]
        %v3761 = vld [vmem:[#allocation15 + $0x64] sm:$0xf]
        %v3762 = vld [vmem:[#allocation15 + $0x68] sm:$0xf]
        %v3763 = vld [vmem:[#allocation15 + $0x6c] sm:$0xf]
        %v3764 = vld [vmem:[#allocation15 + $0x70] sm:$0xf]
        %v3765 = vld [vmem:[#allocation15 + $0x74] sm:$0xf]
        %v3766 = vld [vmem:[#allocation15 + $0x78] sm:$0xf]
        %v3767 = vld [vmem:[#allocation15 + $0x7c] sm:$0xf]
        %v3768 = vld [vmem:[%s10] sm:$0x1]
        %v3770 = vlaneseq
        %v3771 = vshrl.u32 %v3770, 7
        %v3772 = vsub.s32 0, %v3771
        %v3773 = vrot.slane %v3768, %v3772
        %v3807 = vunpack.c.l.b16 %v3736
        %v3808 = vunpack.c.l.b16 %v3737
        %v3809 = vunpack.c.l.b16 %v3738
        %v3810 = vunpack.c.l.b16 %v3739
        %v3811 = vunpack.c.l.b16 %v3740
        %v3812 = vunpack.c.l.b16 %v3741
        %v3813 = vunpack.c.l.b16 %v3742
        %v3814 = vunpack.c.l.b16 %v3743
        %v3815 = vunpack.c.l.b16 %v3744
        %v3816 = vunpack.c.l.b16 %v3745
        %v3817 = vunpack.c.l.b16 %v3746
        %v3818 = vunpack.c.l.b16 %v3747
        %v3819 = vunpack.c.l.b16 %v3748
        %v3820 = vunpack.c.l.b16 %v3749
        %v3821 = vunpack.c.l.b16 %v3750
        %v3822 = vunpack.c.l.b16 %v3751
        %v3823 = vunpack.c.l.b16 %v3752
        %v3824 = vunpack.c.l.b16 %v3753
        %v3825 = vunpack.c.l.b16 %v3754
        %v3826 = vunpack.c.l.b16 %v3755
        %v3827 = vunpack.c.l.b16 %v3756
        %v3828 = vunpack.c.l.b16 %v3757
        %v3829 = vunpack.c.l.b16 %v3758
        %v3830 = vunpack.c.l.b16 %v3759
        %v3831 = vunpack.c.l.b16 %v3760
        %v3832 = vunpack.c.l.b16 %v3761
        %v3833 = vunpack.c.l.b16 %v3762
        %v3834 = vunpack.c.l.b16 %v3763
        %v3835 = vunpack.c.l.b16 %v3764
        %v3836 = vunpack.c.l.b16 %v3765
        %v3837 = vunpack.c.l.b16 %v3766
        %v3838 = vunpack.c.l.b16 %v3767
        %v3839 = vpack.c.b16 %v3808, %v3807
        %v3840 = vpack.c.b16 %v3810, %v3809
        %v3841 = vpack.c.b16 %v3812, %v3811
        %v3842 = vpack.c.b16 %v3814, %v3813
        %v3843 = vpack.c.b16 %v3816, %v3815
        %v3844 = vpack.c.b16 %v3818, %v3817
        %v3845 = vpack.c.b16 %v3820, %v3819
        %v3846 = vpack.c.b16 %v3822, %v3821
        %v3847 = vpack.c.b16 %v3824, %v3823
        %v3848 = vpack.c.b16 %v3826, %v3825
        %v3849 = vpack.c.b16 %v3828, %v3827
        %v3850 = vpack.c.b16 %v3830, %v3829
        %v3851 = vpack.c.b16 %v3832, %v3831
        %v3852 = vpack.c.b16 %v3834, %v3833
        %v3853 = vpack.c.b16 %v3836, %v3835
        %v3854 = vpack.c.b16 %v3838, %v3837
        %3871 = vmatprep.subr.bf16.mxu0 0
        %3872 = vmatpush1.bf16.msra.mxu0 %v3839
        %3873 = vmatprep.subr.bf16.mxu0 0
        %3874 = vmatpush1.bf16.msra.mxu0 %v3840
        %3875 = vmatprep.subr.bf16.mxu0 0
        %3876 = vmatpush1.bf16.msra.mxu0 %v3841
        %3877 = vmatprep.subr.bf16.mxu0 0
        %3878 = vmatpush1.bf16.msra.mxu0 %v3842
        %3879 = vmatprep.subr.bf16.mxu0 0
        %3880 = vmatpush1.bf16.msra.mxu0 %v3843
        %3881 = vmatprep.subr.bf16.mxu0 0
        %3882 = vmatpush1.bf16.msra.mxu0 %v3844
        %3883 = vmatprep.subr.bf16.mxu0 0
        %3884 = vmatpush1.bf16.msra.mxu0 %v3845
        %3885 = vmatprep.subr.bf16.mxu0 0
        %3886 = vmatpush1.bf16.msra.mxu0 %v3846
        %3887 = vmatprep.subr.bf16.mxu0 0
        %3888 = vmatpush1.bf16.msra.mxu0 %v3847
        %3889 = vmatprep.subr.bf16.mxu0 0
        %3890 = vmatpush1.bf16.msra.mxu0 %v3848
        %3891 = vmatprep.subr.bf16.mxu0 0
        %3892 = vmatpush1.bf16.msra.mxu0 %v3849
        %3893 = vmatprep.subr.bf16.mxu0 0
        %3894 = vmatpush1.bf16.msra.mxu0 %v3850
        %3895 = vmatprep.subr.bf16.mxu0 0
        %3896 = vmatpush1.bf16.msra.mxu0 %v3851
        %3897 = vmatprep.subr.bf16.mxu0 0
        %3898 = vmatpush1.bf16.msra.mxu0 %v3852
        %3899 = vmatprep.subr.bf16.mxu0 0
        %3900 = vmatpush1.bf16.msra.mxu0 %v3853
        %3901 = vmatprep.subr.bf16.mxu0 0
        %3902 = vmatpush1.bf16.msra.mxu0 %v3854
        %3903 = vmatprep.mubr.bf16.mxu0 %v3735
        %3904 = vmatmul.mubr.bf16.gmra.mrb[0].mxu0 %v3734
        %v3905 = vpop.f32.mrb[0].mxu0
        %v3906 = vadd.f32 %v3773, %v3905
        %v3907 = vpop.f32.mrb[0].mxu0
        %v3908 = vpop.f32.mrb[0].mxu0
        %v3909 = vpop.f32.mrb[0].mxu0
        %3910 = vdwg.mxu0
        %v3911 = vpack.c.bf16 %v3906, %v3906
        %3912 = vst [vmem:[%s537] sm:$0xf] %v3911
        %s3913 = sand.u32 %s288, 1
        %s3914 = scalar_lea.sflag [#allocation5], %s3913
        %s3915 = sand.u32 %s288, 1
        %s3916 = smul.addr %s3915, 4
        %s3917 = scalar_lea.vmem [#allocation17], %s3916
        // Predicated region
        $region97: #{tpu_custom_call.1} parent=63 // pred_check
          %p3918 = pneg %p298
        $region98: #{tpu_custom_call.1} parent=63 // pred_check_branch
          %3920 = sbr.rel (%p3918) target = $region100
        $region99: #{tpu_custom_call.1} parent=63 // pred_region
          %s3922 = ssub.s32 64, 64
          %3923 = vsyncadd %s3914, %s3922
          %s3924 = smul.addr %s34, 64
          %s3925 = scalar_lea.hbm %s11, %s3924
          %s3927 = sshll.u32 %s3917, 4
          %s3928 = int_to_ptr.vmem [resolvable:$true] %s3927
          %3930 = dma.vmem_to_hbm [thread:$0]  %s3928, 64, %s3925, %s3914
        $region100: #{tpu_custom_call.1} parent=63 // pred_fallthru
          _
      $region64: #{tpu_custom_call.1} parent=5 // pred_fallthru
        _
      %p3931 = scmp.le.s32.totalorder 2, %s29
      // Predicated region
      $region101: #{tpu_custom_call.1} parent=5 // pred_check
        %p3932 = pneg %p3931
      $region102: #{tpu_custom_call.1} parent=5 // pred_check_branch
        %3934 = sbr.rel (%p3932) target = $region104
      $region103: #{tpu_custom_call.1} parent=5 // pred_region
        %s3935 = ssub.s32 %s29, 2
        // Predicated region
        $region105: #{tpu_custom_call.1} parent=103 // pred_check
          %p3936 = pneg %p304
        $region106: #{tpu_custom_call.1} parent=103 // pred_check_branch
          %3938 = sbr.rel (%p3936) target = $region108
        $region107: #{tpu_custom_call.1} parent=103 // pred_region
          %s3939 = sand.u32 %s289, 1
          %s3940 = scalar_lea.sflag [#allocation5], %s3939
          %s3941 = sand.u32 %s289, 1
          %s3942 = smul.addr %s3941, 4
          %s3943 = scalar_lea.vmem [#allocation17], %s3942
          %3944 = dma.done %s3940, 64
        $region108: #{tpu_custom_call.1} parent=103 // pred_fallthru
          _
      $region104: #{tpu_custom_call.1} parent=5 // pred_fallthru
        _
    $region6: #{tpu_custom_call.1} parent=1 // loop_footer
      %s33 = sadd.s32 1, %s29
    $region7: #{tpu_custom_call.1} parent=1 // loop_footer_branch
      %28 = sbr.rel target = $region3
    $region8: #{tpu_custom_call.1} parent=1 // loop_exit
      _
    %3945 = vsyncpa [#allocation4], 1
    %s3946 = scalar_lea.sflag [#allocation4], 1
    %3947 = vsyncpa %s3946, 1
    %3948 = vsyncpa [#allocation7], 1
    %s3949 = scalar_lea.sflag [#allocation7], 1
    %3950 = vsyncpa %s3949, 1
    %3951 = vsyncpa [#allocation10], 1
    %3952 = vsyncpa [#allocation13], 1
    %3953 = vsyncpa [#allocation16], 1
    %3954 = vsyncpa [#allocation5], 1
    %s3955 = scalar_lea.sflag [#allocation5], 1
    %3956 = vsyncpa %s3955, 1

// kernel: tpu_custom_call.1
$region0: #{tpu_custom_call.1}
  #allocation0 [shape = 'u32[]', space=smem, size = 0x4, offset = 0x4, fixed_abs, tag = 'smem constant byte address 0x4 - core index']
  #allocation1 [shape = 'u32[144,128]{1,0:T(1,128)}', space=vmem, size = 0x12000, scoped, tag = 'internal scratch']
  #allocation2 [shape = 'f32[8,256]{1,0:T(8,128)}', space=vmem, size = 0x2000, scoped, tag = 'scratch operand']
  %s0 = inlined_call_operand.hbm [shape: bf16[2,8,128], index: 0, kind: input, shape index: {}]
  %s1 = inlined_call_operand.hbm [shape: bf16[2,8,256], index: 1, kind: input, shape index: {}]
  %s2 = inlined_call_operand.vmem [shape: s32[2,1,8], index: 2, kind: input, shape index: {}]
  %s3 = inlined_call_operand.hbm [shape: bf16[128,256], index: 3, kind: input, shape index: {}]
  %s4 = inlined_call_operand.hbm [shape: bf16[4,256,256], index: 4, kind: input, shape index: {}]
  %s5 = inlined_call_operand.hbm [shape: bf16[256,768], index: 5, kind: input, shape index: {}]
  %s6 = inlined_call_operand.hbm [shape: bf16[256,256], index: 6, kind: input, shape index: {}]
  %s7 = inlined_call_operand.vmem [shape: f32[1,768], index: 7, kind: input, shape index: {}]
  %s8 = inlined_call_operand.hbm [shape: f32[14,256], index: 8, kind: input, shape index: {}]
  %s9 = inlined_call_operand.hbm [shape: bf16[256,128], index: 9, kind: input, shape index: {}]
  %s10 = inlined_call_operand.vmem [shape: f32[1,128], index: 10, kind: input, shape index: {}]
  %s11 = inlined_call_operand.hbm [shape: bf16[2,8,128], index: 11, kind: output, shape index: {}]
  %s12 = sld [smem:[#allocation0]]
  $region109: #{tpu_custom_call.1} parent=0
    _
  %s14 = ssub.s32 1, %s12
  %s15 = scalar_select 0, %s14, %s12
  $region1: #{tpu_custom_call.1} parent=0
    #allocation3 [shape = 'u8[4096]{0}', space=vmem, size = 0x1000, scoped, tag = 'input window, operand 0']
    #allocation4 [shape = 's32[2]{0}', space=sflag, size = 0x8, scoped, tag = 'scoped memory for tpu_custom_call.1']
    #allocation5 [shape = 's32[2]{0}', space=sflag, size = 0x8, scoped, tag = 'scoped memory for tpu_custom_call.1']
    #allocation6 [shape = 'u8[8192]{0}', space=vmem, size = 0x2000, scoped, tag = 'input window, operand 1']
    #allocation7 [shape = 's32[2]{0}', space=sflag, size = 0x8, scoped, tag = 'scoped memory for tpu_custom_call.1']
    #allocation8 [shape = 'u8[65536]{0}', space=vmem, size = 0x10000, scoped, tag = 'input window, operand 3, single buffered']
    #allocation9 [shape = 'u8[524288]{0}', space=vmem, size = 0x80000, scoped, tag = 'input window, operand 4, single buffered']
    #allocation10 [shape = 's32[1]{0}', space=sflag, size = 0x4, scoped, tag = 'scoped memory for tpu_custom_call.1']
    #allocation11 [shape = 'u8[393216]{0}', space=vmem, size = 0x60000, scoped, tag = 'input window, operand 5, single buffered']
    #allocation12 [shape = 'u8[131072]{0}', space=vmem, size = 0x20000, scoped, tag = 'input window, operand 6, single buffered']
    #allocation13 [shape = 's32[1]{0}', space=sflag, size = 0x4, scoped, tag = 'scoped memory for tpu_custom_call.1']
    #allocation14 [shape = 'u8[16384]{0}', space=vmem, size = 0x4000, scoped, tag = 'input window, operand 8, single buffered']
    #allocation15 [shape = 'u8[65536]{0}', space=vmem, size = 0x10000, scoped, tag = 'input window, operand 9, single buffered']
    #allocation16 [shape = 's32[1]{0}', space=sflag, size = 0x4, scoped, tag = 'scoped memory for tpu_custom_call.1']
    #allocation17 [shape = 'u8[4096]{0}', space=vmem, size = 0x1000, scoped, tag = 'output window, operand 0']
    %16 = vsyncpa [#allocation4], 0
    %s17 = scalar_lea.sflag [#allocation4], 1
    %18 = vsyncpa %s17, 0
    %19 = vsyncpa [#allocation7], 0
    %s20 = scalar_lea.sflag [#allocation7], 1
    %21 = vsyncpa %s20, 0
    %22 = vsyncpa [#allocation10], 0
    %23 = vsyncpa [#allocation13], 0
    %24 = vsyncpa [#allocation16], 0
    %25 = vsyncpa [#allocation5], 0
    %s26 = scalar_lea.sflag [#allocation5], 1
    %27 = vsyncpa %s26, 0
    loop: start=0, step=1, limit=4
    $region2: #{tpu_custom_call.1} parent=1 // loop_pre_header
      _
    $region3: #{tpu_custom_call.1} parent=1 // loop_header
      %s29 = sphi 0, %s33
      %p30 = scmp.ge.s32.totalorder %s29, 4
      %s39 = sphi 0, %s41
      %s42 = sphi 0, %s39
      %s43 = sphi 0, %s42
      %s59 = sphi 0, %s43
      %s65 = sphi 0, %s67
      %s68 = sphi 0, %s65
      %s69 = sphi 0, %s68
      %s85 = sphi 0, %s69
      %s91 = sphi 0, %s93
      %s94 = sphi 0, %s91
      %s95 = sphi 0, %s94
      %s111 = sphi 0, %s95
      %s115 = sphi 0, %s115
      %s117 = sphi 0, %s115
      %s118 = sphi 0, %s117
      %s132 = sphi 0, %s118
      %s136 = sphi 0, %s136
      %s138 = sphi 0, %s136
      %s139 = sphi 0, %s138
      %s153 = sphi 0, %s139
      %s157 = sphi 0, %s157
      %s159 = sphi 0, %s157
      %s160 = sphi 0, %s159
      %s174 = sphi 0, %s160
      %s178 = sphi 0, %s178
      %s180 = sphi 0, %s178
      %s181 = sphi 0, %s180
      %s195 = sphi 0, %s181
      %s199 = sphi 0, %s199
      %s201 = sphi 0, %s199
      %s202 = sphi 0, %s201
      %s216 = sphi 0, %s202
      %s220 = sphi 0, %s220
      %s222 = sphi 0, %s220
      %s223 = sphi 0, %s222
      %s237 = sphi 0, %s223
      %s241 = sphi 0, %s241
      %s243 = sphi 0, %s241
      %s244 = sphi 0, %s243
      %s258 = sphi 0, %s244
      %s262 = sphi 0, %s262
      %s264 = sphi 0, %s262
      %s265 = sphi 0, %s264
      %s279 = sphi 0, %s265
      %s285 = sphi 0, %s287
      %s288 = sphi 0, %s285
      %s289 = sphi 0, %s288
      %s305 = sphi 0, %s289
    $region4: #{tpu_custom_call.1} parent=1 // loop_header_branch
      %32 = sbr.rel (%p30) target = $region8
    $region5: #{tpu_custom_call.1} parent=1 // loop_body
      %s34 = ssub.s32 %s29, 1
      %s35 = ssub.s32 %s29, 2
      %s36 = sadd.s32 %s29, 1
      %s37 = ssub.s32 %s29, %s36
      %p38 = scmp.eq.s32.totalorder %s37, 0
      %s40 = sadd.s32 %s39, 1
      %s41 = scalar_select %p38, %s39, %s40
      %p44 = pneg %p38
      %p45 = scmp.eq.s32.totalorder %s29, 1
      %p46 = por %p44, %p45
      %p47 = scmp.ne.s32.totalorder %s39, %s42
      %p48 = scmp.eq.s32.totalorder %s29, 0
      %p49 = por %p47, %p48
      %p50 = scmp.ne.s32.totalorder %s39, %s42
      %p51 = scmp.eq.s32.totalorder %s34, 1
      %p52 = por %p50, %p51
      %p53 = scmp.ne.s32.totalorder %s42, %s43
      %p54 = scmp.eq.s32.totalorder %s34, 0
      %p55 = por %p53, %p54
      %p56 = scmp.ne.s32.totalorder %s42, %s43
      %p57 = scmp.eq.s32.totalorder %s35, 1
      %p58 = por %p56, %p57
      %p60 = scmp.ne.s32.totalorder %s43, %s59
      %p61 = scmp.eq.s32.totalorder %s35, 0
      %p62 = por %p60, %p61
      %s63 = ssub.s32 %s29, %s36
      %p64 = scmp.eq.s32.totalorder %s63, 0
      %s66 = sadd.s32 %s65, 1
      %s67 = scalar_select %p64, %s65, %s66
      %p70 = pneg %p64
      %p71 = scmp.eq.s32.totalorder %s29, 1
      %p72 = por %p70, %p71
      %p73 = scmp.ne.s32.totalorder %s65, %s68
      %p74 = scmp.eq.s32.totalorder %s29, 0
      %p75 = por %p73, %p74
      %p76 = scmp.ne.s32.totalorder %s65, %s68
      %p77 = scmp.eq.s32.totalorder %s34, 1
      %p78 = por %p76, %p77
      %p79 = scmp.ne.s32.totalorder %s68, %s69
      %p80 = scmp.eq.s32.totalorder %s34, 0
      %p81 = por %p79, %p80
      %p82 = scmp.ne.s32.totalorder %s68, %s69
      %p83 = scmp.eq.s32.totalorder %s35, 1
      %p84 = por %p82, %p83
      %p86 = scmp.ne.s32.totalorder %s69, %s85
      %p87 = scmp.eq.s32.totalorder %s35, 0
      %p88 = por %p86, %p87
      %s89 = ssub.s32 %s29, %s36
      %p90 = scmp.eq.s32.totalorder %s89, 0
      %s92 = sadd.s32 %s91, 1
      %s93 = scalar_select %p90, %s91, %s92
      %p96 = pneg %p90
      %p97 = scmp.eq.s32.totalorder %s29, 1
      %p98 = por %p96, %p97
      %p99 = scmp.ne.s32.totalorder %s91, %s94
      %p100 = scmp.eq.s32.totalorder %s29, 0
      %p101 = por %p99, %p100
      %p102 = scmp.ne.s32.totalorder %s91, %s94
      %p103 = scmp.eq.s32.totalorder %s34, 1
      %p104 = por %p102, %p103
      %p105 = scmp.ne.s32.totalorder %s94, %s95
      %p106 = scmp.eq.s32.totalorder %s34, 0
      %p107 = por %p105, %p106
      %p108 = scmp.ne.s32.totalorder %s94, %s95
      %p109 = scmp.eq.s32.totalorder %s35, 1
      %p110 = por %p108, %p109
      %p112 = scmp.ne.s32.totalorder %s95, %s111
      %p113 = scmp.eq.s32.totalorder %s35, 0
      %p114 = por %p112, %p113
      %s116 = sadd.s32 %s115, 1
      %p119 = scmp.eq.s32.totalorder %s29, 1
      %p120 = scmp.ne.s32.totalorder %s115, %s117
      %p121 = scmp.eq.s32.totalorder %s29, 0
      %p122 = por %p120, %p121
      %p123 = scmp.ne.s32.totalorder %s115, %s117
      %p124 = scmp.eq.s32.totalorder %s34, 1
      %p125 = por %p123, %p124
      %p126 = scmp.ne.s32.totalorder %s117, %s118
      %p127 = scmp.eq.s32.totalorder %s34, 0
      %p128 = por %p126, %p127
      %p129 = scmp.ne.s32.totalorder %s117, %s118
      %p130 = scmp.eq.s32.totalorder %s35, 1
      %p131 = por %p129, %p130
      %p133 = scmp.ne.s32.totalorder %s118, %s132
      %p134 = scmp.eq.s32.totalorder %s35, 0
      %p135 = por %p133, %p134
      %s137 = sadd.s32 %s136, 1
      %p140 = scmp.eq.s32.totalorder %s29, 1
      %p141 = scmp.ne.s32.totalorder %s136, %s138
      %p142 = scmp.eq.s32.totalorder %s29, 0
      %p143 = por %p141, %p142
      %p144 = scmp.ne.s32.totalorder %s136, %s138
      %p145 = scmp.eq.s32.totalorder %s34, 1
      %p146 = por %p144, %p145
      %p147 = scmp.ne.s32.totalorder %s138, %s139
      %p148 = scmp.eq.s32.totalorder %s34, 0
      %p149 = por %p147, %p148
      %p150 = scmp.ne.s32.totalorder %s138, %s139
      %p151 = scmp.eq.s32.totalorder %s35, 1
      %p152 = por %p150, %p151
      %p154 = scmp.ne.s32.totalorder %s139, %s153
      %p155 = scmp.eq.s32.totalorder %s35, 0
      %p156 = por %p154, %p155
      %s158 = sadd.s32 %s157, 1
      %p161 = scmp.eq.s32.totalorder %s29, 1
      %p162 = scmp.ne.s32.totalorder %s157, %s159
      %p163 = scmp.eq.s32.totalorder %s29, 0
      %p164 = por %p162, %p163
      %p165 = scmp.ne.s32.totalorder %s157, %s159
      %p166 = scmp.eq.s32.totalorder %s34, 1
      %p167 = por %p165, %p166
      %p168 = scmp.ne.s32.totalorder %s159, %s160
      %p169 = scmp.eq.s32.totalorder %s34, 0
      %p170 = por %p168, %p169
      %p171 = scmp.ne.s32.totalorder %s159, %s160
      %p172 = scmp.eq.s32.totalorder %s35, 1
      %p173 = por %p171, %p172
      %p175 = scmp.ne.s32.totalorder %s160, %s174
      %p176 = scmp.eq.s32.totalorder %s35, 0
      %p177 = por %p175, %p176
      %s179 = sadd.s32 %s178, 1
      %p182 = scmp.eq.s32.totalorder %s29, 1
      %p183 = scmp.ne.s32.totalorder %s178, %s180
      %p184 = scmp.eq.s32.totalorder %s29, 0
      %p185 = por %p183, %p184
      %p186 = scmp.ne.s32.totalorder %s178, %s180
      %p187 = scmp.eq.s32.totalorder %s34, 1
      %p188 = por %p186, %p187
      %p189 = scmp.ne.s32.totalorder %s180, %s181
      %p190 = scmp.eq.s32.totalorder %s34, 0
      %p191 = por %p189, %p190
      %p192 = scmp.ne.s32.totalorder %s180, %s181
      %p193 = scmp.eq.s32.totalorder %s35, 1
      %p194 = por %p192, %p193
      %p196 = scmp.ne.s32.totalorder %s181, %s195
      %p197 = scmp.eq.s32.totalorder %s35, 0
      %p198 = por %p196, %p197
      %s200 = sadd.s32 %s199, 1
      %p203 = scmp.eq.s32.totalorder %s29, 1
      %p204 = scmp.ne.s32.totalorder %s199, %s201
      %p205 = scmp.eq.s32.totalorder %s29, 0
      %p206 = por %p204, %p205
      %p207 = scmp.ne.s32.totalorder %s199, %s201
      %p208 = scmp.eq.s32.totalorder %s34, 1
      %p209 = por %p207, %p208
      %p210 = scmp.ne.s32.totalorder %s201, %s202
      %p211 = scmp.eq.s32.totalorder %s34, 0
      %p212 = por %p210, %p211
      %p213 = scmp.ne.s32.totalorder %s201, %s202
      %p214 = scmp.eq.s32.totalorder %s35, 1
      %p215 = por %p213, %p214
      %p217 = scmp.ne.s32.totalorder %s202, %s216
      %p218 = scmp.eq.s32.totalorder %s35, 0
      %p219 = por %p217, %p218
      %s221 = sadd.s32 %s220, 1
      %p224 = scmp.eq.s32.totalorder %s29, 1
      %p225 = scmp.ne.s32.totalorder %s220, %s222
      %p226 = scmp.eq.s32.totalorder %s29, 0
      %p227 = por %p225, %p226
      %p228 = scmp.ne.s32.totalorder %s220, %s222
      %p229 = scmp.eq.s32.totalorder %s34, 1
      %p230 = por %p228, %p229
      %p231 = scmp.ne.s32.totalorder %s222, %s223
      %p232 = scmp.eq.s32.totalorder %s34, 0
      %p233 = por %p231, %p232
      %p234 = scmp.ne.s32.totalorder %s222, %s223
      %p235 = scmp.eq.s32.totalorder %s35, 1
      %p236 = por %p234, %p235
      %p238 = scmp.ne.s32.totalorder %s223, %s237
      %p239 = scmp.eq.s32.totalorder %s35, 0
      %p240 = por %p238, %p239
      %s242 = sadd.s32 %s241, 1
      %p245 = scmp.eq.s32.totalorder %s29, 1
      %p246 = scmp.ne.s32.totalorder %s241, %s243
      %p247 = scmp.eq.s32.totalorder %s29, 0
      %p248 = por %p246, %p247
      %p249 = scmp.ne.s32.totalorder %s241, %s243
      %p250 = scmp.eq.s32.totalorder %s34, 1
      %p251 = por %p249, %p250
      %p252 = scmp.ne.s32.totalorder %s243, %s244
      %p253 = scmp.eq.s32.totalorder %s34, 0
      %p254 = por %p252, %p253
      %p255 = scmp.ne.s32.totalorder %s243, %s244
      %p256 = scmp.eq.s32.totalorder %s35, 1
      %p257 = por %p255, %p256
      %p259 = scmp.ne.s32.totalorder %s244, %s258
      %p260 = scmp.eq.s32.totalorder %s35, 0
      %p261 = por %p259, %p260
      %s263 = sadd.s32 %s262, 1
      %p266 = scmp.eq.s32.totalorder %s29, 1
      %p267 = scmp.ne.s32.totalorder %s262, %s264
      %p268 = scmp.eq.s32.totalorder %s29, 0
      %p269 = por %p267, %p268
      %p270 = scmp.ne.s32.totalorder %s262, %s264
      %p271 = scmp.eq.s32.totalorder %s34, 1
      %p272 = por %p270, %p271
      %p273 = scmp.ne.s32.totalorder %s264, %s265
      %p274 = scmp.eq.s32.totalorder %s34, 0
      %p275 = por %p273, %p274
      %p276 = scmp.ne.s32.totalorder %s264, %s265
      %p277 = scmp.eq.s32.totalorder %s35, 1
      %p278 = por %p276, %p277
      %p280 = scmp.ne.s32.totalorder %s265, %s279
      %p281 = scmp.eq.s32.totalorder %s35, 0
      %p282 = por %p280, %p281
      %s283 = ssub.s32 %s29, %s36
      %p284 = scmp.eq.s32.totalorder %s283, 0
      %s286 = sadd.s32 %s285, 1
      %s287 = scalar_select %p284, %s285, %s286
      %p290 = pneg %p284
      %p291 = scmp.eq.s32.totalorder %s29, 1
      %p292 = por %p290, %p291
      %p293 = scmp.ne.s32.totalorder %s285, %s288
      %p294 = scmp.eq.s32.totalorder %s29, 0
      %p295 = por %p293, %p294
      %p296 = scmp.ne.s32.totalorder %s285, %s288
      %p297 = scmp.eq.s32.totalorder %s34, 1
      %p298 = por %p296, %p297
      %p299 = scmp.ne.s32.totalorder %s288, %s289
      %p300 = scmp.eq.s32.totalorder %s34, 0
      %p301 = por %p299, %p300
      %p302 = scmp.ne.s32.totalorder %s288, %s289
      %p303 = scmp.eq.s32.totalorder %s35, 1
      %p304 = por %p302, %p303
      %p306 = scmp.ne.s32.totalorder %s289, %s305
      %p307 = scmp.eq.s32.totalorder %s35, 0
      %p308 = por %p306, %p307
      %p309 = scmp.le.s32.totalorder 1, %s29
      %p310 = scmp.lt.s32.totalorder %s29, 3
      %p311 = pnand %p309, %p310
      %p312 = pneg %p311
      // Predicated region
      $region9: #{tpu_custom_call.1} parent=5 // pred_check
        _
      $region10: #{tpu_custom_call.1} parent=5 // pred_check_branch
        %314 = sbr.rel (%p311) target = $region12
      $region11: #{tpu_custom_call.1} parent=5 // pred_region
        %s315 = ssub.s32 %s29, 1
        // Predicated region
        $region13: #{tpu_custom_call.1} parent=11 // pred_check
          %p316 = pneg %p128
        $region14: #{tpu_custom_call.1} parent=11 // pred_check_branch
          %318 = sbr.rel (%p316) target = $region16
        $region15: #{tpu_custom_call.1} parent=11 // pred_region
          %s320 = ssub.s32 2048, 2048
          %321 = vsyncadd [#allocation7], %s320
          %s322 = sshll.u32 [#allocation8], 4
          %s323 = int_to_ptr.vmem [resolvable:$true] %s322
          %328 = dma.hbm_to_vmem [thread:$0]  %s3, 2048, %s323, [#allocation7], 128, 128, 8
        $region16: #{tpu_custom_call.1} parent=11 // pred_fallthru
          _
        // Predicated region
        $region17: #{tpu_custom_call.1} parent=11 // pred_check
          %p329 = pneg %p149
        $region18: #{tpu_custom_call.1} parent=11 // pred_check_branch
          %331 = sbr.rel (%p329) target = $region20
        $region19: #{tpu_custom_call.1} parent=11 // pred_region
          %s333 = ssub.s32 16384, 16384
          %334 = vsyncadd [#allocation10], %s333
          %s335 = sshll.u32 [#allocation9], 4
          %s336 = int_to_ptr.vmem [resolvable:$true] %s335
          %341 = dma.hbm_to_vmem [thread:$0]  %s4, 16384, %s336, [#allocation10], 128, 128, 8
        $region20: #{tpu_custom_call.1} parent=11 // pred_fallthru
          _
        // Predicated region
        $region21: #{tpu_custom_call.1} parent=11 // pred_check
          %p342 = pneg %p170
        $region22: #{tpu_custom_call.1} parent=11 // pred_check_branch
          %344 = sbr.rel (%p342) target = $region24
        $region23: #{tpu_custom_call.1} parent=11 // pred_region
          %s346 = ssub.s32 12288, 12288
          %347 = vsyncadd [#allocation10], %s346
          %s348 = sshll.u32 [#allocation11], 4
          %s349 = int_to_ptr.vmem [resolvable:$true] %s348
          %354 = dma.hbm_to_vmem [thread:$0]  %s5, 12288, %s349, [#allocation10], 384, 384, 24
        $region24: #{tpu_custom_call.1} parent=11 // pred_fallthru
          _
        // Predicated region
        $region25: #{tpu_custom_call.1} parent=11 // pred_check
          %p355 = pneg %p191
        $region26: #{tpu_custom_call.1} parent=11 // pred_check_branch
          %357 = sbr.rel (%p355) target = $region28
        $region27: #{tpu_custom_call.1} parent=11 // pred_region
          %s359 = ssub.s32 4096, 4096
          %360 = vsyncadd [#allocation13], %s359
          %s361 = sshll.u32 [#allocation12], 4
          %s362 = int_to_ptr.vmem [resolvable:$true] %s361
          %367 = dma.hbm_to_vmem [thread:$0]  %s6, 4096, %s362, [#allocation13], 128, 128, 8
        $region28: #{tpu_custom_call.1} parent=11 // pred_fallthru
          _
        // Predicated region
        $region29: #{tpu_custom_call.1} parent=11 // pred_check
          %p368 = pneg %p212
        $region30: #{tpu_custom_call.1} parent=11 // pred_check_branch
          %370 = sbr.rel (%p368) target = $region32
        $region31: #{tpu_custom_call.1} parent=11 // pred_region
          _
        $region32: #{tpu_custom_call.1} parent=11 // pred_fallthru
          _
        // Predicated region
        $region33: #{tpu_custom_call.1} parent=11 // pred_check
          %p371 = pneg %p233
        $region34: #{tpu_custom_call.1} parent=11 // pred_check_branch
          %373 = sbr.rel (%p371) target = $region36
        $region35: #{tpu_custom_call.1} parent=11 // pred_region
          %s375 = ssub.s32 512, 512
          %376 = vsyncadd [#allocation13], %s375
          %s377 = sshll.u32 [#allocation14], 4
          %s378 = int_to_ptr.vmem [resolvable:$true] %s377
          %383 = dma.hbm_to_vmem [thread:$0]  %s8, 512, %s378, [#allocation13], 256, 256, 16
        $region36: #{tpu_custom_call.1} parent=11 // pred_fallthru
          _
        // Predicated region
        $region37: #{tpu_custom_call.1} parent=11 // pred_check
          %p384 = pneg %p254
        $region38: #{tpu_custom_call.1} parent=11 // pred_check_branch
          %386 = sbr.rel (%p384) target = $region40
        $region39: #{tpu_custom_call.1} parent=11 // pred_region
          %s388 = ssub.s32 2048, 2048
          %389 = vsyncadd [#allocation16], %s388
          %s390 = sshll.u32 [#allocation15], 4
          %s391 = int_to_ptr.vmem [resolvable:$true] %s390
          %396 = dma.hbm_to_vmem [thread:$0]  %s9, 2048, %s391, [#allocation16], 64, 64, 4
        $region40: #{tpu_custom_call.1} parent=11 // pred_fallthru
          _
        // Predicated region
        $region41: #{tpu_custom_call.1} parent=11 // pred_check
          %p397 = pneg %p275
        $region42: #{tpu_custom_call.1} parent=11 // pred_check_branch
          %399 = sbr.rel (%p397) target = $region44
        $region43: #{tpu_custom_call.1} parent=11 // pred_region
          _
        $region44: #{tpu_custom_call.1} parent=11 // pred_fallthru
          _
      $region12: #{tpu_custom_call.1} parent=5 // pred_fallthru
        _
      %p400 = scmp.lt.s32.totalorder %s29, 2
      // Predicated region
      $region45: #{tpu_custom_call.1} parent=5 // pred_check
        %p401 = pneg %p400
      $region46: #{tpu_custom_call.1} parent=5 // pred_check_branch
        %403 = sbr.rel (%p401) target = $region48
      $region47: #{tpu_custom_call.1} parent=5 // pred_region
        // Predicated region
        $region49: #{tpu_custom_call.1} parent=47 // pred_check
          %p404 = pneg %p49
        $region50: #{tpu_custom_call.1} parent=47 // pred_check_branch
          %406 = sbr.rel (%p404) target = $region52
        $region51: #{tpu_custom_call.1} parent=47 // pred_region
          %s407 = sand.u32 %s39, 1
          %s408 = scalar_lea.sflag [#allocation4], %s407
          %s409 = sand.u32 %s39, 1
          %s410 = smul.addr %s409, 4
          %s411 = scalar_lea.vmem [#allocation3], %s410
          %s413 = ssub.s32 64, 64
          %414 = vsyncadd %s408, %s413
          %s415 = smul.addr %s29, 64
          %s416 = scalar_lea.hbm %s0, %s415
          %s418 = sshll.u32 %s411, 4
          %s419 = int_to_ptr.vmem [resolvable:$true] %s418
          %421 = dma.hbm_to_vmem [thread:$0]  %s416, 64, %s419, %s408
        $region52: #{tpu_custom_call.1} parent=47 // pred_fallthru
          _
        // Predicated region
        $region53: #{tpu_custom_call.1} parent=47 // pred_check
          %p422 = pneg %p75
        $region54: #{tpu_custom_call.1} parent=47 // pred_check_branch
          %424 = sbr.rel (%p422) target = $region56
        $region55: #{tpu_custom_call.1} parent=47 // pred_region
          %s425 = sand.u32 %s29, 1
          %s426 = scalar_lea.sflag [#allocation7], %s425
          %s427 = sand.u32 %s65, 1
          %s428 = smul.addr %s427, 8
          %s429 = scalar_lea.vmem [#allocation6], %s428
          %s431 = ssub.s32 128, 128
          %432 = vsyncadd %s426, %s431
          %s433 = smul.addr %s29, 2
          %s434 = smul.addr %s433, 64
          %s435 = scalar_lea.hbm %s1, %s434
          %s437 = sshll.u32 %s429, 4
          %s438 = int_to_ptr.vmem [resolvable:$true] %s437
          %440 = dma.hbm_to_vmem [thread:$0]  %s435, 128, %s438, %s426
        $region56: #{tpu_custom_call.1} parent=47 // pred_fallthru
          _
        // Predicated region
        $region57: #{tpu_custom_call.1} parent=47 // pred_check
          %p441 = pneg %p101
        $region58: #{tpu_custom_call.1} parent=47 // pred_check_branch
          %443 = sbr.rel (%p441) target = $region60
        $region59: #{tpu_custom_call.1} parent=47 // pred_region
          %p444 = scmp.lt.s32.totalorder %s29, 1
          %s445 = scalar_select %p444, %s29, 1
          %s446 = scalar_lea.vmem %s2, %s445
        $region60: #{tpu_custom_call.1} parent=47 // pred_fallthru
          _
      $region48: #{tpu_custom_call.1} parent=5 // pred_fallthru
        _
      %p447 = scmp.le.s32.totalorder 1, %s29
      %p448 = scmp.lt.s32.totalorder %s29, 3
      %p449 = pnand %p447, %p448
      %p450 = pneg %p449
      // Predicated region
      $region61: #{tpu_custom_call.1} parent=5 // pred_check
        _
      $region62: #{tpu_custom_call.1} parent=5 // pred_check_branch
        %452 = sbr.rel (%p449) target = $region64
      $region63: #{tpu_custom_call.1} parent=5 // pred_region
        %s453 = ssub.s32 %s29, 1
        %s454 = sand.u32 %s42, 1
        %s455 = scalar_lea.sflag [#allocation4], %s454
        %s456 = sand.u32 %s42, 1
        %s457 = smul.addr %s456, 4
        %s458 = scalar_lea.vmem [#allocation3], %s457
        // Predicated region
        $region65: #{tpu_custom_call.1} parent=63 // pred_check
          %p459 = pneg %p55
        $region66: #{tpu_custom_call.1} parent=63 // pred_check_branch
          %461 = sbr.rel (%p459) target = $region68
        $region67: #{tpu_custom_call.1} parent=63 // pred_region
          %462 = dma.done %s455, 64
        $region68: #{tpu_custom_call.1} parent=63 // pred_fallthru
          _
        %s463 = sand.u32 %s34, 1
        %s464 = scalar_lea.sflag [#allocation7], %s463
        %s465 = sand.u32 %s68, 1
        %s466 = smul.addr %s465, 8
        %s467 = scalar_lea.vmem [#allocation6], %s466
        // Predicated region
        $region69: #{tpu_custom_call.1} parent=63 // pred_check
          %p468 = pneg %p81
        $region70: #{tpu_custom_call.1} parent=63 // pred_check_branch
          %470 = sbr.rel (%p468) target = $region72
        $region71: #{tpu_custom_call.1} parent=63 // pred_region
          %471 = dma.done %s464, 128
        $region72: #{tpu_custom_call.1} parent=63 // pred_fallthru
          _
        // Predicated region
        $region73: #{tpu_custom_call.1} parent=63 // pred_check
          %p472 = pneg %p128
        $region74: #{tpu_custom_call.1} parent=63 // pred_check_branch
          %474 = sbr.rel (%p472) target = $region76
        $region75: #{tpu_custom_call.1} parent=63 // pred_region
          %475 = dma.done [#allocation7], 2048
        $region76: #{tpu_custom_call.1} parent=63 // pred_fallthru
          _
        // Predicated region
        $region77: #{tpu_custom_call.1} parent=63 // pred_check
          %p476 = pneg %p149
        $region78: #{tpu_custom_call.1} parent=63 // pred_check_branch
          %478 = sbr.rel (%p476) target = $region80
        $region79: #{tpu_custom_call.1} parent=63 // pred_region
          %479 = dma.done [#allocation10], 16384
        $region80: #{tpu_custom_call.1} parent=63 // pred_fallthru
          _
        // Predicated region
        $region81: #{tpu_custom_call.1} parent=63 // pred_check
          %p480 = pneg %p170
        $region82: #{tpu_custom_call.1} parent=63 // pred_check_branch
          %482 = sbr.rel (%p480) target = $region84
        $region83: #{tpu_custom_call.1} parent=63 // pred_region
          %483 = dma.done [#allocation10], 12288
        $region84: #{tpu_custom_call.1} parent=63 // pred_fallthru
          _
        // Predicated region
        $region85: #{tpu_custom_call.1} parent=63 // pred_check
          %p484 = pneg %p191
        $region86: #{tpu_custom_call.1} parent=63 // pred_check_branch
          %486 = sbr.rel (%p484) target = $region88
        $region87: #{tpu_custom_call.1} parent=63 // pred_region
          %487 = dma.done [#allocation13], 4096
        $region88: #{tpu_custom_call.1} parent=63 // pred_fallthru
          _
        // Predicated region
        $region89: #{tpu_custom_call.1} parent=63 // pred_check
          %p488 = pneg %p233
        $region90: #{tpu_custom_call.1} parent=63 // pred_check_branch
          %490 = sbr.rel (%p488) target = $region92
        $region91: #{tpu_custom_call.1} parent=63 // pred_region
          %491 = dma.done [#allocation13], 512
        $region92: #{tpu_custom_call.1} parent=63 // pred_fallthru
          _
        // Predicated region
        $region93: #{tpu_custom_call.1} parent=63 // pred_check
          %p492 = pneg %p254
        $region94: #{tpu_custom_call.1} parent=63 // pred_check_branch
          %494 = sbr.rel (%p492) target = $region96
        $region95: #{tpu_custom_call.1} parent=63 // pred_region
          %495 = dma.done [#allocation16], 2048
        $region96: #{tpu_custom_call.1} parent=63 // pred_fallthru
          _
        %s496 = sand.u32 %s42, 1
        %s497 = scalar_lea.sflag [#allocation4], %s496
        %s498 = sand.u32 %s42, 1
        %s499 = smul.addr %s498, 4
        %s500 = scalar_lea.vmem [#allocation3], %s499
        %p501 = pneg %p55
        %p502 = pneg %p52
        %s503 = sand.u32 %s34, 1
        %s504 = scalar_lea.sflag [#allocation7], %s503
        %s505 = sand.u32 %s68, 1
        %s506 = smul.addr %s505, 8
        %s507 = scalar_lea.vmem [#allocation6], %s506
        %p508 = pneg %p81
        %p509 = pneg %p78
        %p510 = scmp.lt.s32.totalorder %s34, 1
        %s511 = scalar_select %p510, %s34, 1
        %s512 = scalar_lea.vmem %s2, %s511
        %p513 = pneg %p107
        %p514 = pneg %p104
        %p515 = pneg %p128
        %p516 = pneg %p125
        %p517 = pneg %p149
        %p518 = pneg %p146
        %p519 = pneg %p170
        %p520 = pneg %p167
        %p521 = pneg %p191
        %p522 = pneg %p188
        %p523 = pneg %p212
        %p524 = pneg %p209
        %p525 = pneg %p233
        %p526 = pneg %p230
        %p527 = pneg %p254
        %p528 = pneg %p251
        %p529 = pneg %p275
        %p530 = pneg %p272
        %p531 = pneg %p301
        %p532 = pneg %p298
        %s533 = sand.u32 %s288, 1
        %s534 = scalar_lea.sflag [#allocation5], %s533
        %s535 = sand.u32 %s288, 1
        %s536 = smul.addr %s535, 4
        %s537 = scalar_lea.vmem [#allocation17], %s536
        %p538 = scmp.lt.s32.totalorder %s34, 1
        %s539 = scalar_select %p538, %s34, 1
        %s540 = scalar_lea.vmem %s2, %s539
        %v542 = vld [vmem:[#allocation14] sm:$0xff]
        %v543 = vld [vmem:[#allocation14 + $0x8] sm:$0xff]
        %v544 = vld [vmem:[#allocation14 + $0x10] sm:$0x3f]
        %v545 = vld [vmem:[#allocation14 + $0x18] sm:$0x3f]
        %v546 = vld [vmem:[%s458] sm:$0xf]
        %v547 = vld [vmem:[#allocation8] sm:$0xff]
        %v548 = vld [vmem:[#allocation8 + $0x8] sm:$0xff]
        %v549 = vld [vmem:[#allocation8 + $0x10] sm:$0xff]
        %v550 = vld [vmem:[#allocation8 + $0x18] sm:$0xff]
        %v551 = vld [vmem:[#allocation8 + $0x20] sm:$0xff]
        %v552 = vld [vmem:[#allocation8 + $0x28] sm:$0xff]
        %v553 = vld [vmem:[#allocation8 + $0x30] sm:$0xff]
        %v554 = vld [vmem:[#allocation8 + $0x38] sm:$0xff]
        %v555 = vld [vmem:[#allocation8 + $0x40] sm:$0xff]
        %v556 = vld [vmem:[#allocation8 + $0x48] sm:$0xff]
        %v557 = vld [vmem:[#allocation8 + $0x50] sm:$0xff]
        %v558 = vld [vmem:[#allocation8 + $0x58] sm:$0xff]
        %v559 = vld [vmem:[#allocation8 + $0x60] sm:$0xff]
        %v560 = vld [vmem:[#allocation8 + $0x68] sm:$0xff]
        %v561 = vld [vmem:[#allocation8 + $0x70] sm:$0xff]
        %v562 = vld [vmem:[#allocation8 + $0x78] sm:$0xff]
        %v563 = vlaneseq
        %v564 = vshrl.u32 %v563, 7
        %v565 = vsub.s32 0, %v564
        %v566 = vrot.slane %v542, %v565
        %v567 = vlaneseq
        %v568 = vshrl.u32 %v567, 7
        %v569 = vsub.s32 0, %v568
        %v570 = vrot.slane %v543, %v569
        %v587 = vunpack.c.l.b16 %v547
        %v588 = vunpack.c.h.b16 %v547
        %v589 = vunpack.c.l.b16 %v548
        %v590 = vunpack.c.h.b16 %v548
        %v591 = vunpack.c.l.b16 %v549
        %v592 = vunpack.c.h.b16 %v549
        %v593 = vunpack.c.l.b16 %v550
        %v594 = vunpack.c.h.b16 %v550
        %v595 = vunpack.c.l.b16 %v551
        %v596 = vunpack.c.h.b16 %v551
        %v597 = vunpack.c.l.b16 %v552
        %v598 = vunpack.c.h.b16 %v552
        %v599 = vunpack.c.l.b16 %v553
        %v600 = vunpack.c.h.b16 %v553
        %v601 = vunpack.c.l.b16 %v554
        %v602 = vunpack.c.h.b16 %v554
        %v603 = vunpack.c.l.b16 %v555
        %v604 = vunpack.c.h.b16 %v555
        %v605 = vunpack.c.l.b16 %v556
        %v606 = vunpack.c.h.b16 %v556
        %v607 = vunpack.c.l.b16 %v557
        %v608 = vunpack.c.h.b16 %v557
        %v609 = vunpack.c.l.b16 %v558
        %v610 = vunpack.c.h.b16 %v558
        %v611 = vunpack.c.l.b16 %v559
        %v612 = vunpack.c.h.b16 %v559
        %v613 = vunpack.c.l.b16 %v560
        %v614 = vunpack.c.h.b16 %v560
        %v615 = vunpack.c.l.b16 %v561
        %v616 = vunpack.c.h.b16 %v561
        %v617 = vunpack.c.l.b16 %v562
        %v618 = vunpack.c.h.b16 %v562
        %v619 = vpack.c.b16 %v589, %v587
        %v620 = vpack.c.b16 %v590, %v588
        %v621 = vpack.c.b16 %v593, %v591
        %v622 = vpack.c.b16 %v594, %v592
        %v623 = vpack.c.b16 %v597, %v595
        %v624 = vpack.c.b16 %v598, %v596
        %v625 = vpack.c.b16 %v601, %v599
        %v626 = vpack.c.b16 %v602, %v600
        %v627 = vpack.c.b16 %v605, %v603
        %v628 = vpack.c.b16 %v606, %v604
        %v629 = vpack.c.b16 %v609, %v607
        %v630 = vpack.c.b16 %v610, %v608
        %v631 = vpack.c.b16 %v613, %v611
        %v632 = vpack.c.b16 %v614, %v612
        %v633 = vpack.c.b16 %v617, %v615
        %v634 = vpack.c.b16 %v618, %v616
        %651 = vmatprep.subr.bf16.mxu0 %v620
        %652 = vmatpush1.bf16.msra.mxu0 %v619
        %653 = vmatprep.subr.bf16.mxu0 %v622
        %654 = vmatpush1.bf16.msra.mxu0 %v621
        %655 = vmatprep.subr.bf16.mxu0 %v624
        %656 = vmatpush1.bf16.msra.mxu0 %v623
        %657 = vmatprep.subr.bf16.mxu0 %v626
        %658 = vmatpush1.bf16.msra.mxu0 %v625
        %659 = vmatprep.subr.bf16.mxu0 %v628
        %660 = vmatpush1.bf16.msra.mxu0 %v627
        %661 = vmatprep.subr.bf16.mxu0 %v630
        %662 = vmatpush1.bf16.msra.mxu0 %v629
        %663 = vmatprep.subr.bf16.mxu0 %v632
        %664 = vmatpush1.bf16.msra.mxu0 %v631
        %665 = vmatprep.subr.bf16.mxu0 %v634
        %666 = vmatpush1.bf16.msra.mxu0 %v633
        %667 = vmatprep.subr.bf16.mxu0 0
        %668 = vmatpush1.bf16.msra.mxu0 0
        %669 = vmatprep.subr.bf16.mxu0 0
        %670 = vmatpush1.bf16.msra.mxu0 0
        %671 = vmatprep.subr.bf16.mxu0 0
        %672 = vmatpush1.bf16.msra.mxu0 0
        %673 = vmatprep.subr.bf16.mxu0 0
        %674 = vmatpush1.bf16.msra.mxu0 0
        %675 = vmatprep.subr.bf16.mxu0 0
        %676 = vmatpush1.bf16.msra.mxu0 0
        %677 = vmatprep.subr.bf16.mxu0 0
        %678 = vmatpush1.bf16.msra.mxu0 0
        %679 = vmatprep.subr.bf16.mxu0 0
        %680 = vmatpush1.bf16.msra.mxu0 0
        %681 = vmatprep.subr.bf16.mxu0 0
        %682 = vmatpush1.bf16.msra.mxu0 0
        %683 = vmatprep.mubr.bf16.mxu0 0
        %684 = vmatmul.mubr.bf16.gmra.mrb[0].mxu0 %v546
        %v685 = vpop.f32.mrb[0].mxu0
        %v686 = vadd.f32 %v566, %v685
        %v687 = vpop.f32.mrb[0].mxu0
        %v688 = vadd.f32 %v570, %v687
        %v689 = vpop.f32.mrb[0].mxu0
        %v690 = vpop.f32.mrb[0].mxu0
        %691 = vdwg.mxu0
        %v692 = vadd.f32 %v686, %v688
        %693 = vadd.xlane.f32.xlu0 %v692
        %v694 = vpop.xlane.xlu0 %693
        %v695 = vrcp.pop 256.0
        %v696 = vmul.f32 %v694, %v695
        %v697 = vsub.f32 %v686, %v696
        %v698 = vsub.f32 %v688, %v696
        %v699 = vmul.f32 %v697, %v697
        %v700 = vmul.f32 %v698, %v698
        %v701 = vadd.f32 %v699, %v700
        %702 = vadd.xlane.f32.xlu0 %v701
        %v703 = vpop.xlane.xlu0 %702
        %v704 = vmul.f32 %v703, %v695
        %v705 = vadd.f32 %v704, 1e-05
        %v706 = vrsqrt.pop %v705
        %v707 = vmul.f32 %v697, %v706
        %v708 = vmul.f32 %v698, %v706
        %v709 = vlaneseq
        %v710 = vshrl.u32 %v709, 7
        %v711 = vsub.s32 1, %v710
        %v712 = vrot.slane %v542, %v711
        %v713 = vlaneseq
        %v714 = vshrl.u32 %v713, 7
        %v715 = vsub.s32 1, %v714
        %v716 = vrot.slane %v543, %v715
        %v717 = vmul.f32 %v707, %v712
        %v718 = vmul.f32 %v708, %v716
        %v719 = vlaneseq
        %v720 = vshrl.u32 %v719, 7
        %v721 = vsub.s32 2, %v720
        %v722 = vrot.slane %v542, %v721
        %v723 = vlaneseq
        %v724 = vshrl.u32 %v723, 7
        %v725 = vsub.s32 2, %v724
        %v726 = vrot.slane %v543, %v725
        %v727 = vadd.f32 %v717, %v722
        %v728 = vadd.f32 %v718, %v726
        %v729 = vmax.f32 %v727, 0.0
        %v730 = vmax.f32 %v728, 0.0
        %v731 = vpack.c.bf16 %v729, %v729
        %v732 = vpack.c.bf16 %v730, %v730
        %v733 = vld [vmem:[#allocation9] sm:$0xff]
        %v734 = vld [vmem:[#allocation9 + $0x8] sm:$0xff]
        %v735 = vld [vmem:[#allocation9 + $0x10] sm:$0xff]
        %v736 = vld [vmem:[#allocation9 + $0x18] sm:$0xff]
        %v737 = vld [vmem:[#allocation9 + $0x20] sm:$0xff]
        %v738 = vld [vmem:[#allocation9 + $0x28] sm:$0xff]
        %v739 = vld [vmem:[#allocation9 + $0x30] sm:$0xff]
        %v740 = vld [vmem:[#allocation9 + $0x38] sm:$0xff]
        %v741 = vld [vmem:[#allocation9 + $0x40] sm:$0xff]
        %v742 = vld [vmem:[#allocation9 + $0x48] sm:$0xff]
        %v743 = vld [vmem:[#allocation9 + $0x50] sm:$0xff]
        %v744 = vld [vmem:[#allocation9 + $0x58] sm:$0xff]
        %v745 = vld [vmem:[#allocation9 + $0x60] sm:$0xff]
        %v746 = vld [vmem:[#allocation9 + $0x68] sm:$0xff]
        %v747 = vld [vmem:[#allocation9 + $0x70] sm:$0xff]
        %v748 = vld [vmem:[#allocation9 + $0x78] sm:$0xff]
        %v749 = vld [vmem:[#allocation9 + $0x80] sm:$0xff]
        %v750 = vld [vmem:[#allocation9 + $0x88] sm:$0xff]
        %v751 = vld [vmem:[#allocation9 + $0x90] sm:$0xff]
        %v752 = vld [vmem:[#allocation9 + $0x98] sm:$0xff]
        %v753 = vld [vmem:[#allocation9 + $0xa0] sm:$0xff]
        %v754 = vld [vmem:[#allocation9 + $0xa8] sm:$0xff]
        %v755 = vld [vmem:[#allocation9 + $0xb0] sm:$0xff]
        %v756 = vld [vmem:[#allocation9 + $0xb8] sm:$0xff]
        %v757 = vld [vmem:[#allocation9 + $0xc0] sm:$0xff]
        %v758 = vld [vmem:[#allocation9 + $0xc8] sm:$0xff]
        %v759 = vld [vmem:[#allocation9 + $0xd0] sm:$0xff]
        %v760 = vld [vmem:[#allocation9 + $0xd8] sm:$0xff]
        %v761 = vld [vmem:[#allocation9 + $0xe0] sm:$0xff]
        %v762 = vld [vmem:[#allocation9 + $0xe8] sm:$0xff]
        %v763 = vld [vmem:[#allocation9 + $0xf0] sm:$0xff]
        %v764 = vld [vmem:[#allocation9 + $0xf8] sm:$0xff]
        %v765 = vlaneseq
        %v766 = vshrl.u32 %v765, 7
        %v767 = vsub.s32 3, %v766
        %v768 = vrot.slane %v542, %v767
        %v769 = vlaneseq
        %v770 = vshrl.u32 %v769, 7
        %v771 = vsub.s32 3, %v770
        %v772 = vrot.slane %v543, %v771
        %v805 = vunpack.c.l.b16 %v733
        %v806 = vunpack.c.h.b16 %v733
        %v807 = vunpack.c.l.b16 %v734
        %v808 = vunpack.c.h.b16 %v734
        %v809 = vunpack.c.l.b16 %v735
        %v810 = vunpack.c.h.b16 %v735
        %v811 = vunpack.c.l.b16 %v736
        %v812 = vunpack.c.h.b16 %v736
        %v813 = vunpack.c.l.b16 %v737
        %v814 = vunpack.c.h.b16 %v737
        %v815 = vunpack.c.l.b16 %v738
        %v816 = vunpack.c.h.b16 %v738
        %v817 = vunpack.c.l.b16 %v739
        %v818 = vunpack.c.h.b16 %v739
        %v819 = vunpack.c.l.b16 %v740
        %v820 = vunpack.c.h.b16 %v740
        %v821 = vunpack.c.l.b16 %v741
        %v822 = vunpack.c.h.b16 %v741
        %v823 = vunpack.c.l.b16 %v742
        %v824 = vunpack.c.h.b16 %v742
        %v825 = vunpack.c.l.b16 %v743
        %v826 = vunpack.c.h.b16 %v743
        %v827 = vunpack.c.l.b16 %v744
        %v828 = vunpack.c.h.b16 %v744
        %v829 = vunpack.c.l.b16 %v745
        %v830 = vunpack.c.h.b16 %v745
        %v831 = vunpack.c.l.b16 %v746
        %v832 = vunpack.c.h.b16 %v746
        %v833 = vunpack.c.l.b16 %v747
        %v834 = vunpack.c.h.b16 %v747
        %v835 = vunpack.c.l.b16 %v748
        %v836 = vunpack.c.h.b16 %v748
        %v837 = vunpack.c.l.b16 %v749
        %v838 = vunpack.c.h.b16 %v749
        %v839 = vunpack.c.l.b16 %v750
        %v840 = vunpack.c.h.b16 %v750
        %v841 = vunpack.c.l.b16 %v751
        %v842 = vunpack.c.h.b16 %v751
        %v843 = vunpack.c.l.b16 %v752
        %v844 = vunpack.c.h.b16 %v752
        %v845 = vunpack.c.l.b16 %v753
        %v846 = vunpack.c.h.b16 %v753
        %v847 = vunpack.c.l.b16 %v754
        %v848 = vunpack.c.h.b16 %v754
        %v849 = vunpack.c.l.b16 %v755
        %v850 = vunpack.c.h.b16 %v755
        %v851 = vunpack.c.l.b16 %v756
        %v852 = vunpack.c.h.b16 %v756
        %v853 = vunpack.c.l.b16 %v757
        %v854 = vunpack.c.h.b16 %v757
        %v855 = vunpack.c.l.b16 %v758
        %v856 = vunpack.c.h.b16 %v758
        %v857 = vunpack.c.l.b16 %v759
        %v858 = vunpack.c.h.b16 %v759
        %v859 = vunpack.c.l.b16 %v760
        %v860 = vunpack.c.h.b16 %v760
        %v861 = vunpack.c.l.b16 %v761
        %v862 = vunpack.c.h.b16 %v761
        %v863 = vunpack.c.l.b16 %v762
        %v864 = vunpack.c.h.b16 %v762
        %v865 = vunpack.c.l.b16 %v763
        %v866 = vunpack.c.h.b16 %v763
        %v867 = vunpack.c.l.b16 %v764
        %v868 = vunpack.c.h.b16 %v764
        %v869 = vpack.c.b16 %v807, %v805
        %v870 = vpack.c.b16 %v808, %v806
        %v871 = vpack.c.b16 %v811, %v809
        %v872 = vpack.c.b16 %v812, %v810
        %v873 = vpack.c.b16 %v815, %v813
        %v874 = vpack.c.b16 %v816, %v814
        %v875 = vpack.c.b16 %v819, %v817
        %v876 = vpack.c.b16 %v820, %v818
        %v877 = vpack.c.b16 %v823, %v821
        %v878 = vpack.c.b16 %v824, %v822
        %v879 = vpack.c.b16 %v827, %v825
        %v880 = vpack.c.b16 %v828, %v826
        %v881 = vpack.c.b16 %v831, %v829
        %v882 = vpack.c.b16 %v832, %v830
        %v883 = vpack.c.b16 %v835, %v833
        %v884 = vpack.c.b16 %v836, %v834
        %v885 = vpack.c.b16 %v839, %v837
        %v886 = vpack.c.b16 %v840, %v838
        %v887 = vpack.c.b16 %v843, %v841
        %v888 = vpack.c.b16 %v844, %v842
        %v889 = vpack.c.b16 %v847, %v845
        %v890 = vpack.c.b16 %v848, %v846
        %v891 = vpack.c.b16 %v851, %v849
        %v892 = vpack.c.b16 %v852, %v850
        %v893 = vpack.c.b16 %v855, %v853
        %v894 = vpack.c.b16 %v856, %v854
        %v895 = vpack.c.b16 %v859, %v857
        %v896 = vpack.c.b16 %v860, %v858
        %v897 = vpack.c.b16 %v863, %v861
        %v898 = vpack.c.b16 %v864, %v862
        %v899 = vpack.c.b16 %v867, %v865
        %v900 = vpack.c.b16 %v868, %v866
        %933 = vmatprep.subr.bf16.mxu0 %v870
        %934 = vmatpush1.bf16.msra.mxu0 %v869
        %935 = vmatprep.subr.bf16.mxu0 %v872
        %936 = vmatpush1.bf16.msra.mxu0 %v871
        %937 = vmatprep.subr.bf16.mxu0 %v874
        %938 = vmatpush1.bf16.msra.mxu0 %v873
        %939 = vmatprep.subr.bf16.mxu0 %v876
        %940 = vmatpush1.bf16.msra.mxu0 %v875
        %941 = vmatprep.subr.bf16.mxu0 %v878
        %942 = vmatpush1.bf16.msra.mxu0 %v877
        %943 = vmatprep.subr.bf16.mxu0 %v880
        %944 = vmatpush1.bf16.msra.mxu0 %v879
        %945 = vmatprep.subr.bf16.mxu0 %v882
        %946 = vmatpush1.bf16.msra.mxu0 %v881
        %947 = vmatprep.subr.bf16.mxu0 %v884
        %948 = vmatpush1.bf16.msra.mxu0 %v883
        %949 = vmatprep.subr.bf16.mxu0 %v886
        %950 = vmatpush1.bf16.msra.mxu0 %v885
        %951 = vmatprep.subr.bf16.mxu0 %v888
        %952 = vmatpush1.bf16.msra.mxu0 %v887
        %953 = vmatprep.subr.bf16.mxu0 %v890
        %954 = vmatpush1.bf16.msra.mxu0 %v889
        %955 = vmatprep.subr.bf16.mxu0 %v892
        %956 = vmatpush1.bf16.msra.mxu0 %v891
        %957 = vmatprep.subr.bf16.mxu0 %v894
        %958 = vmatpush1.bf16.msra.mxu0 %v893
        %959 = vmatprep.subr.bf16.mxu0 %v896
        %960 = vmatpush1.bf16.msra.mxu0 %v895
        %961 = vmatprep.subr.bf16.mxu0 %v898
        %962 = vmatpush1.bf16.msra.mxu0 %v897
        %963 = vmatprep.subr.bf16.mxu0 %v900
        %964 = vmatpush1.bf16.msra.mxu0 %v899
        %965 = vmatprep.mubr.bf16.mxu0 %v732
        %966 = vmatmul.mubr.bf16.gmra.mrb[0].mxu0 %v731
        %v967 = vpop.f32.mrb[0].mxu0
        %v968 = vadd.f32 %v768, %v967
        %v969 = vpop.f32.mrb[0].mxu0
        %v970 = vadd.f32 %v772, %v969
        %v971 = vpop.f32.mrb[0].mxu0
        %v972 = vpop.f32.mrb[0].mxu0
        %973 = vdwg.mxu0
        %v974 = vadd.f32 %v968, %v970
        %975 = vadd.xlane.f32.xlu0 %v974
        %v976 = vpop.xlane.xlu0 %975
        %v977 = vmul.f32 %v976, %v695
        %v978 = vsub.f32 %v968, %v977
        %v979 = vsub.f32 %v970, %v977
        %v980 = vmul.f32 %v978, %v978
        %v981 = vmul.f32 %v979, %v979
        %v982 = vadd.f32 %v980, %v981
        %983 = vadd.xlane.f32.xlu0 %v982
        %v984 = vpop.xlane.xlu0 %983
        %v985 = vmul.f32 %v984, %v695
        %v986 = vadd.f32 %v985, 1e-05
        %v987 = vrsqrt.pop %v986
        %v988 = vmul.f32 %v978, %v987
        %v989 = vmul.f32 %v979, %v987
        %v990 = vlaneseq
        %v991 = vshrl.u32 %v990, 7
        %v992 = vsub.s32 4, %v991
        %v993 = vrot.slane %v542, %v992
        %v994 = vlaneseq
        %v995 = vshrl.u32 %v994, 7
        %v996 = vsub.s32 4, %v995
        %v997 = vrot.slane %v543, %v996
        %v998 = vmul.f32 %v988, %v993
        %v999 = vmul.f32 %v989, %v997
        %v1000 = vlaneseq
        %v1001 = vshrl.u32 %v1000, 7
        %v1002 = vsub.s32 5, %v1001
        %v1003 = vrot.slane %v542, %v1002
        %v1004 = vlaneseq
        %v1005 = vshrl.u32 %v1004, 7
        %v1006 = vsub.s32 5, %v1005
        %v1007 = vrot.slane %v543, %v1006
        %v1008 = vadd.f32 %v998, %v1003
        %v1009 = vadd.f32 %v999, %v1007
        %v1010 = vmax.f32 %v1008, 0.0
        %v1011 = vmax.f32 %v1009, 0.0
        %v1012 = vld [vmem:[%s467] sm:$0xff]
        %v1013 = vunpack.c.l.bf16 %v1012
        %v1014 = vunpack.c.h.bf16 %v1012
        %v1015 = vadd.f32 %v1010, %v1013
        %v1016 = vadd.f32 %v1011, %v1014
        %v1017 = vpack.c.bf16 %v1015, %v1015
        %v1018 = vpack.c.bf16 %v1016, %v1016
        %v1019 = vld [vmem:[#allocation11] sm:$0xff]
        %v1020 = vld [vmem:[#allocation11 + $0x8] sm:$0xff]
        %v1021 = vld [vmem:[#allocation11 + $0x10] sm:$0xff]
        %v1022 = vld [vmem:[#allocation11 + $0x18] sm:$0xff]
        %v1023 = vld [vmem:[#allocation11 + $0x20] sm:$0xff]
        %v1024 = vld [vmem:[#allocation11 + $0x28] sm:$0xff]
        %v1025 = vld [vmem:[#allocation11 + $0x30] sm:$0xff]
        %v1026 = vld [vmem:[#allocation11 + $0x38] sm:$0xff]
        %v1027 = vld [vmem:[#allocation11 + $0x40] sm:$0xff]
        %v1028 = vld [vmem:[#allocation11 + $0x48] sm:$0xff]
        %v1029 = vld [vmem:[#allocation11 + $0x50] sm:$0xff]
        %v1030 = vld [vmem:[#allocation11 + $0x58] sm:$0xff]
        %v1031 = vld [vmem:[#allocation11 + $0x60] sm:$0xff]
        %v1032 = vld [vmem:[#allocation11 + $0x68] sm:$0xff]
        %v1033 = vld [vmem:[#allocation11 + $0x70] sm:$0xff]
        %v1034 = vld [vmem:[#allocation11 + $0x78] sm:$0xff]
        %v1035 = vld [vmem:[#allocation11 + $0x80] sm:$0xff]
        %v1036 = vld [vmem:[#allocation11 + $0x88] sm:$0xff]
        %v1037 = vld [vmem:[#allocation11 + $0x90] sm:$0xff]
        %v1038 = vld [vmem:[#allocation11 + $0x98] sm:$0xff]
        %v1039 = vld [vmem:[#allocation11 + $0xa0] sm:$0xff]
        %v1040 = vld [vmem:[#allocation11 + $0xa8] sm:$0xff]
        %v1041 = vld [vmem:[#allocation11 + $0xb0] sm:$0xff]
        %v1042 = vld [vmem:[#allocation11 + $0xb8] sm:$0xff]
        %v1043 = vld [vmem:[#allocation11 + $0xc0] sm:$0xff]
        %v1044 = vld [vmem:[#allocation11 + $0xc8] sm:$0xff]
        %v1045 = vld [vmem:[#allocation11 + $0xd0] sm:$0xff]
        %v1046 = vld [vmem:[#allocation11 + $0xd8] sm:$0xff]
        %v1047 = vld [vmem:[#allocation11 + $0xe0] sm:$0xff]
        %v1048 = vld [vmem:[#allocation11 + $0xe8] sm:$0xff]
        %v1049 = vld [vmem:[#allocation11 + $0xf0] sm:$0xff]
        %v1050 = vld [vmem:[#allocation11 + $0xf8] sm:$0xff]
        %v1051 = vld [vmem:[#allocation11 + $0x100] sm:$0xff]
        %v1052 = vld [vmem:[#allocation11 + $0x108] sm:$0xff]
        %v1053 = vld [vmem:[#allocation11 + $0x110] sm:$0xff]
        %v1054 = vld [vmem:[#allocation11 + $0x118] sm:$0xff]
        %v1055 = vld [vmem:[#allocation11 + $0x120] sm:$0xff]
        %v1056 = vld [vmem:[#allocation11 + $0x128] sm:$0xff]
        %v1057 = vld [vmem:[#allocation11 + $0x130] sm:$0xff]
        %v1058 = vld [vmem:[#allocation11 + $0x138] sm:$0xff]
        %v1059 = vld [vmem:[#allocation11 + $0x140] sm:$0xff]
        %v1060 = vld [vmem:[#allocation11 + $0x148] sm:$0xff]
        %v1061 = vld [vmem:[#allocation11 + $0x150] sm:$0xff]
        %v1062 = vld [vmem:[#allocation11 + $0x158] sm:$0xff]
        %v1063 = vld [vmem:[#allocation11 + $0x160] sm:$0xff]
        %v1064 = vld [vmem:[#allocation11 + $0x168] sm:$0xff]
        %v1065 = vld [vmem:[#allocation11 + $0x170] sm:$0xff]
        %v1066 = vld [vmem:[#allocation11 + $0x178] sm:$0xff]
        %v1067 = vld [vmem:[#allocation11 + $0x180] sm:$0xff]
        %v1068 = vld [vmem:[#allocation11 + $0x188] sm:$0xff]
        %v1069 = vld [vmem:[#allocation11 + $0x190] sm:$0xff]
        %v1070 = vld [vmem:[#allocation11 + $0x198] sm:$0xff]
        %v1071 = vld [vmem:[#allocation11 + $0x1a0] sm:$0xff]
        %v1072 = vld [vmem:[#allocation11 + $0x1a8] sm:$0xff]
        %v1073 = vld [vmem:[#allocation11 + $0x1b0] sm:$0xff]
        %v1074 = vld [vmem:[#allocation11 + $0x1b8] sm:$0xff]
        %v1075 = vld [vmem:[#allocation11 + $0x1c0] sm:$0xff]
        %v1076 = vld [vmem:[#allocation11 + $0x1c8] sm:$0xff]
        %v1077 = vld [vmem:[#allocation11 + $0x1d0] sm:$0xff]
        %v1078 = vld [vmem:[#allocation11 + $0x1d8] sm:$0xff]
        %v1079 = vld [vmem:[#allocation11 + $0x1e0] sm:$0xff]
        %v1080 = vld [vmem:[#allocation11 + $0x1e8] sm:$0xff]
        %v1081 = vld [vmem:[#allocation11 + $0x1f0] sm:$0xff]
        %v1082 = vld [vmem:[#allocation11 + $0x1f8] sm:$0xff]
        %v1083 = vld [vmem:[#allocation11 + $0x200] sm:$0xff]
        %v1084 = vld [vmem:[#allocation11 + $0x208] sm:$0xff]
        %v1085 = vld [vmem:[#allocation11 + $0x210] sm:$0xff]
        %v1086 = vld [vmem:[#allocation11 + $0x218] sm:$0xff]
        %v1087 = vld [vmem:[#allocation11 + $0x220] sm:$0xff]
        %v1088 = vld [vmem:[#allocation11 + $0x228] sm:$0xff]
        %v1089 = vld [vmem:[#allocation11 + $0x230] sm:$0xff]
        %v1090 = vld [vmem:[#allocation11 + $0x238] sm:$0xff]
        %v1091 = vld [vmem:[#allocation11 + $0x240] sm:$0xff]
        %v1092 = vld [vmem:[#allocation11 + $0x248] sm:$0xff]
        %v1093 = vld [vmem:[#allocation11 + $0x250] sm:$0xff]
        %v1094 = vld [vmem:[#allocation11 + $0x258] sm:$0xff]
        %v1095 = vld [vmem:[#allocation11 + $0x260] sm:$0xff]
        %v1096 = vld [vmem:[#allocation11 + $0x268] sm:$0xff]
        %v1097 = vld [vmem:[#allocation11 + $0x270] sm:$0xff]
        %v1098 = vld [vmem:[#allocation11 + $0x278] sm:$0xff]
        %v1099 = vld [vmem:[#allocation11 + $0x280] sm:$0xff]
        %v1100 = vld [vmem:[#allocation11 + $0x288] sm:$0xff]
        %v1101 = vld [vmem:[#allocation11 + $0x290] sm:$0xff]
        %v1102 = vld [vmem:[#allocation11 + $0x298] sm:$0xff]
        %v1103 = vld [vmem:[#allocation11 + $0x2a0] sm:$0xff]
        %v1104 = vld [vmem:[#allocation11 + $0x2a8] sm:$0xff]
        %v1105 = vld [vmem:[#allocation11 + $0x2b0] sm:$0xff]
        %v1106 = vld [vmem:[#allocation11 + $0x2b8] sm:$0xff]
        %v1107 = vld [vmem:[#allocation11 + $0x2c0] sm:$0xff]
        %v1108 = vld [vmem:[#allocation11 + $0x2c8] sm:$0xff]
        %v1109 = vld [vmem:[#allocation11 + $0x2d0] sm:$0xff]
        %v1110 = vld [vmem:[#allocation11 + $0x2d8] sm:$0xff]
        %v1111 = vld [vmem:[#allocation11 + $0x2e0] sm:$0xff]
        %v1112 = vld [vmem:[#allocation11 + $0x2e8] sm:$0xff]
        %v1113 = vld [vmem:[#allocation11 + $0x2f0] sm:$0xff]
        %v1114 = vld [vmem:[#allocation11 + $0x2f8] sm:$0xff]
        %v1115 = vld [vmem:[%s7] sm:$0x3f]
        %v1117 = vlaneseq
        %v1118 = vshrl.u32 %v1117, 7
        %v1119 = vsub.s32 0, %v1118
        %v1120 = vrot.slane %v1115, %v1119
        %v1121 = vlaneseq
        %v1122 = vshrl.u32 %v1121, 7
        %v1123 = vsub.s32 1, %v1122
        %v1124 = vrot.slane %v1115, %v1123
        %v1125 = vlaneseq
        %v1126 = vshrl.u32 %v1125, 7
        %v1127 = vsub.s32 2, %v1126
        %v1128 = vrot.slane %v1115, %v1127
        %v1129 = vlaneseq
        %v1130 = vshrl.u32 %v1129, 7
        %v1131 = vsub.s32 3, %v1130
        %v1132 = vrot.slane %v1115, %v1131
        %v1133 = vlaneseq
        %v1134 = vshrl.u32 %v1133, 7
        %v1135 = vsub.s32 4, %v1134
        %v1136 = vrot.slane %v1115, %v1135
        %v1137 = vlaneseq
        %v1138 = vshrl.u32 %v1137, 7
        %v1139 = vsub.s32 5, %v1138
        %v1140 = vrot.slane %v1115, %v1139
        %v1243 = vunpack.c.l.b16 %v1019
        %v1244 = vunpack.c.h.b16 %v1019
        %v1245 = vunpack.c.l.b16 %v1020
        %v1246 = vunpack.c.h.b16 %v1020
        %v1247 = vunpack.c.l.b16 %v1021
        %v1248 = vunpack.c.h.b16 %v1021
        %v1249 = vunpack.c.l.b16 %v1022
        %v1250 = vunpack.c.h.b16 %v1022
        %v1251 = vunpack.c.l.b16 %v1023
        %v1252 = vunpack.c.h.b16 %v1023
        %v1253 = vunpack.c.l.b16 %v1024
        %v1254 = vunpack.c.h.b16 %v1024
        %v1255 = vunpack.c.l.b16 %v1025
        %v1256 = vunpack.c.h.b16 %v1025
        %v1257 = vunpack.c.l.b16 %v1026
        %v1258 = vunpack.c.h.b16 %v1026
        %v1259 = vunpack.c.l.b16 %v1027
        %v1260 = vunpack.c.h.b16 %v1027
        %v1261 = vunpack.c.l.b16 %v1028
        %v1262 = vunpack.c.h.b16 %v1028
        %v1263 = vunpack.c.l.b16 %v1029
        %v1264 = vunpack.c.h.b16 %v1029
        %v1265 = vunpack.c.l.b16 %v1030
        %v1266 = vunpack.c.h.b16 %v1030
        %v1267 = vunpack.c.l.b16 %v1031
        %v1268 = vunpack.c.h.b16 %v1031
        %v1269 = vunpack.c.l.b16 %v1032
        %v1270 = vunpack.c.h.b16 %v1032
        %v1271 = vunpack.c.l.b16 %v1033
        %v1272 = vunpack.c.h.b16 %v1033
        %v1273 = vunpack.c.l.b16 %v1034
        %v1274 = vunpack.c.h.b16 %v1034
        %v1275 = vunpack.c.l.b16 %v1035
        %v1276 = vunpack.c.h.b16 %v1035
        %v1277 = vunpack.c.l.b16 %v1036
        %v1278 = vunpack.c.h.b16 %v1036
        %v1279 = vunpack.c.l.b16 %v1037
        %v1280 = vunpack.c.h.b16 %v1037
        %v1281 = vunpack.c.l.b16 %v1038
        %v1282 = vunpack.c.h.b16 %v1038
        %v1283 = vunpack.c.l.b16 %v1039
        %v1284 = vunpack.c.h.b16 %v1039
        %v1285 = vunpack.c.l.b16 %v1040
        %v1286 = vunpack.c.h.b16 %v1040
        %v1287 = vunpack.c.l.b16 %v1041
        %v1288 = vunpack.c.h.b16 %v1041
        %v1289 = vunpack.c.l.b16 %v1042
        %v1290 = vunpack.c.h.b16 %v1042
        %v1291 = vunpack.c.l.b16 %v1043
        %v1292 = vunpack.c.h.b16 %v1043
        %v1293 = vunpack.c.l.b16 %v1044
        %v1294 = vunpack.c.h.b16 %v1044
        %v1295 = vunpack.c.l.b16 %v1045
        %v1296 = vunpack.c.h.b16 %v1045
        %v1297 = vunpack.c.l.b16 %v1046
        %v1298 = vunpack.c.h.b16 %v1046
        %v1299 = vunpack.c.l.b16 %v1047
        %v1300 = vunpack.c.h.b16 %v1047
        %v1301 = vunpack.c.l.b16 %v1048
        %v1302 = vunpack.c.h.b16 %v1048
        %v1303 = vunpack.c.l.b16 %v1049
        %v1304 = vunpack.c.h.b16 %v1049
        %v1305 = vunpack.c.l.b16 %v1050
        %v1306 = vunpack.c.h.b16 %v1050
        %v1307 = vunpack.c.l.b16 %v1051
        %v1308 = vunpack.c.h.b16 %v1051
        %v1309 = vunpack.c.l.b16 %v1052
        %v1310 = vunpack.c.h.b16 %v1052
        %v1311 = vunpack.c.l.b16 %v1053
        %v1312 = vunpack.c.h.b16 %v1053
        %v1313 = vunpack.c.l.b16 %v1054
        %v1314 = vunpack.c.h.b16 %v1054
        %v1315 = vunpack.c.l.b16 %v1055
        %v1316 = vunpack.c.h.b16 %v1055
        %v1317 = vunpack.c.l.b16 %v1056
        %v1318 = vunpack.c.h.b16 %v1056
        %v1319 = vunpack.c.l.b16 %v1057
        %v1320 = vunpack.c.h.b16 %v1057
        %v1321 = vunpack.c.l.b16 %v1058
        %v1322 = vunpack.c.h.b16 %v1058
        %v1323 = vunpack.c.l.b16 %v1059
        %v1324 = vunpack.c.h.b16 %v1059
        %v1325 = vunpack.c.l.b16 %v1060
        %v1326 = vunpack.c.h.b16 %v1060
        %v1327 = vunpack.c.l.b16 %v1061
        %v1328 = vunpack.c.h.b16 %v1061
        %v1329 = vunpack.c.l.b16 %v1062
        %v1330 = vunpack.c.h.b16 %v1062
        %v1331 = vunpack.c.l.b16 %v1063
        %v1332 = vunpack.c.h.b16 %v1063
        %v1333 = vunpack.c.l.b16 %v1064
        %v1334 = vunpack.c.h.b16 %v1064
        %v1335 = vunpack.c.l.b16 %v1065
        %v1336 = vunpack.c.h.b16 %v1065
        %v1337 = vunpack.c.l.b16 %v1066
        %v1338 = vunpack.c.h.b16 %v1066
        %v1339 = vunpack.c.l.b16 %v1067
        %v1340 = vunpack.c.h.b16 %v1067
        %v1341 = vunpack.c.l.b16 %v1068
        %v1342 = vunpack.c.h.b16 %v1068
        %v1343 = vunpack.c.l.b16 %v1069
        %v1344 = vunpack.c.h.b16 %v1069
        %v1345 = vunpack.c.l.b16 %v1070
        %v1346 = vunpack.c.h.b16 %v1070
        %v1347 = vunpack.c.l.b16 %v1071
        %v1348 = vunpack.c.h.b16 %v1071
        %v1349 = vunpack.c.l.b16 %v1072
        %v1350 = vunpack.c.h.b16 %v1072
        %v1351 = vunpack.c.l.b16 %v1073
        %v1352 = vunpack.c.h.b16 %v1073
        %v1353 = vunpack.c.l.b16 %v1074
        %v1354 = vunpack.c.h.b16 %v1074
        %v1355 = vunpack.c.l.b16 %v1075
        %v1356 = vunpack.c.h.b16 %v1075
        %v1357 = vunpack.c.l.b16 %v1076
        %v1358 = vunpack.c.h.b16 %v1076
        %v1359 = vunpack.c.l.b16 %v1077
        %v1360 = vunpack.c.h.b16 %v1077
        %v1361 = vunpack.c.l.b16 %v1078
        %v1362 = vunpack.c.h.b16 %v1078
        %v1363 = vunpack.c.l.b16 %v1079
        %v1364 = vunpack.c.h.b16 %v1079
        %v1365 = vunpack.c.l.b16 %v1080
        %v1366 = vunpack.c.h.b16 %v1080
        %v1367 = vunpack.c.l.b16 %v1081
        %v1368 = vunpack.c.h.b16 %v1081
        %v1369 = vunpack.c.l.b16 %v1082
        %v1370 = vunpack.c.h.b16 %v1082
        %v1371 = vunpack.c.l.b16 %v1083
        %v1372 = vunpack.c.h.b16 %v1083
        %v1373 = vunpack.c.l.b16 %v1084
        %v1374 = vunpack.c.h.b16 %v1084
        %v1375 = vunpack.c.l.b16 %v1085
        %v1376 = vunpack.c.h.b16 %v1085
        %v1377 = vunpack.c.l.b16 %v1086
        %v1378 = vunpack.c.h.b16 %v1086
        %v1379 = vunpack.c.l.b16 %v1087
        %v1380 = vunpack.c.h.b16 %v1087
        %v1381 = vunpack.c.l.b16 %v1088
        %v1382 = vunpack.c.h.b16 %v1088
        %v1383 = vunpack.c.l.b16 %v1089
        %v1384 = vunpack.c.h.b16 %v1089
        %v1385 = vunpack.c.l.b16 %v1090
        %v1386 = vunpack.c.h.b16 %v1090
        %v1387 = vunpack.c.l.b16 %v1091
        %v1388 = vunpack.c.h.b16 %v1091
        %v1389 = vunpack.c.l.b16 %v1092
        %v1390 = vunpack.c.h.b16 %v1092
        %v1391 = vunpack.c.l.b16 %v1093
        %v1392 = vunpack.c.h.b16 %v1093
        %v1393 = vunpack.c.l.b16 %v1094
        %v1394 = vunpack.c.h.b16 %v1094
        %v1395 = vunpack.c.l.b16 %v1095
        %v1396 = vunpack.c.h.b16 %v1095
        %v1397 = vunpack.c.l.b16 %v1096
        %v1398 = vunpack.c.h.b16 %v1096
        %v1399 = vunpack.c.l.b16 %v1097
        %v1400 = vunpack.c.h.b16 %v1097
        %v1401 = vunpack.c.l.b16 %v1098
        %v1402 = vunpack.c.h.b16 %v1098
        %v1403 = vunpack.c.l.b16 %v1099
        %v1404 = vunpack.c.h.b16 %v1099
        %v1405 = vunpack.c.l.b16 %v1100
        %v1406 = vunpack.c.h.b16 %v1100
        %v1407 = vunpack.c.l.b16 %v1101
        %v1408 = vunpack.c.h.b16 %v1101
        %v1409 = vunpack.c.l.b16 %v1102
        %v1410 = vunpack.c.h.b16 %v1102
        %v1411 = vunpack.c.l.b16 %v1103
        %v1412 = vunpack.c.h.b16 %v1103
        %v1413 = vunpack.c.l.b16 %v1104
        %v1414 = vunpack.c.h.b16 %v1104
        %v1415 = vunpack.c.l.b16 %v1105
        %v1416 = vunpack.c.h.b16 %v1105
        %v1417 = vunpack.c.l.b16 %v1106
        %v1418 = vunpack.c.h.b16 %v1106
        %v1419 = vunpack.c.l.b16 %v1107
        %v1420 = vunpack.c.h.b16 %v1107
        %v1421 = vunpack.c.l.b16 %v1108
        %v1422 = vunpack.c.h.b16 %v1108
        %v1423 = vunpack.c.l.b16 %v1109
        %v1424 = vunpack.c.h.b16 %v1109
        %v1425 = vunpack.c.l.b16 %v1110
        %v1426 = vunpack.c.h.b16 %v1110
        %v1427 = vunpack.c.l.b16 %v1111
        %v1428 = vunpack.c.h.b16 %v1111
        %v1429 = vunpack.c.l.b16 %v1112
        %v1430 = vunpack.c.h.b16 %v1112
        %v1431 = vunpack.c.l.b16 %v1113
        %v1432 = vunpack.c.h.b16 %v1113
        %v1433 = vunpack.c.l.b16 %v1114
        %v1434 = vunpack.c.h.b16 %v1114
        %v1435 = vpack.c.b16 %v1249, %v1243
        %v1436 = vpack.c.b16 %v1250, %v1244
        %v1437 = vpack.c.b16 %v1251, %v1245
        %v1438 = vpack.c.b16 %v1252, %v1246
        %v1439 = vpack.c.b16 %v1253, %v1247
        %v1440 = vpack.c.b16 %v1254, %v1248
        %v1441 = vpack.c.b16 %v1261, %v1255
        %v1442 = vpack.c.b16 %v1262, %v1256
        %v1443 = vpack.c.b16 %v1263, %v1257
        %v1444 = vpack.c.b16 %v1264, %v1258
        %v1445 = vpack.c.b16 %v1265, %v1259
        %v1446 = vpack.c.b16 %v1266, %v1260
        %v1447 = vpack.c.b16 %v1273, %v1267
        %v1448 = vpack.c.b16 %v1274, %v1268
        %v1449 = vpack.c.b16 %v1275, %v1269
        %v1450 = vpack.c.b16 %v1276, %v1270
        %v1451 = vpack.c.b16 %v1277, %v1271
        %v1452 = vpack.c.b16 %v1278, %v1272
        %v1453 = vpack.c.b16 %v1285, %v1279
        %v1454 = vpack.c.b16 %v1286, %v1280
        %v1455 = vpack.c.b16 %v1287, %v1281
        %v1456 = vpack.c.b16 %v1288, %v1282
        %v1457 = vpack.c.b16 %v1289, %v1283
        %v1458 = vpack.c.b16 %v1290, %v1284
        %v1459 = vpack.c.b16 %v1297, %v1291
        %v1460 = vpack.c.b16 %v1298, %v1292
        %v1461 = vpack.c.b16 %v1299, %v1293
        %v1462 = vpack.c.b16 %v1300, %v1294
        %v1463 = vpack.c.b16 %v1301, %v1295
        %v1464 = vpack.c.b16 %v1302, %v1296
        %v1465 = vpack.c.b16 %v1309, %v1303
        %v1466 = vpack.c.b16 %v1310, %v1304
        %v1467 = vpack.c.b16 %v1311, %v1305
        %v1468 = vpack.c.b16 %v1312, %v1306
        %v1469 = vpack.c.b16 %v1313, %v1307
        %v1470 = vpack.c.b16 %v1314, %v1308
        %v1471 = vpack.c.b16 %v1321, %v1315
        %v1472 = vpack.c.b16 %v1322, %v1316
        %v1473 = vpack.c.b16 %v1323, %v1317
        %v1474 = vpack.c.b16 %v1324, %v1318
        %v1475 = vpack.c.b16 %v1325, %v1319
        %v1476 = vpack.c.b16 %v1326, %v1320
        %v1477 = vpack.c.b16 %v1333, %v1327
        %v1478 = vpack.c.b16 %v1334, %v1328
        %v1479 = vpack.c.b16 %v1335, %v1329
        %v1480 = vpack.c.b16 %v1336, %v1330
        %v1481 = vpack.c.b16 %v1337, %v1331
        %v1482 = vpack.c.b16 %v1338, %v1332
        %v1483 = vpack.c.b16 %v1345, %v1339
        %v1484 = vpack.c.b16 %v1346, %v1340
        %v1485 = vpack.c.b16 %v1347, %v1341
        %v1486 = vpack.c.b16 %v1348, %v1342
        %v1487 = vpack.c.b16 %v1349, %v1343
        %v1488 = vpack.c.b16 %v1350, %v1344
        %v1489 = vpack.c.b16 %v1357, %v1351
        %v1490 = vpack.c.b16 %v1358, %v1352
        %v1491 = vpack.c.b16 %v1359, %v1353
        %v1492 = vpack.c.b16 %v1360, %v1354
        %v1493 = vpack.c.b16 %v1361, %v1355
        %v1494 = vpack.c.b16 %v1362, %v1356
        %v1495 = vpack.c.b16 %v1369, %v1363
        %v1496 = vpack.c.b16 %v1370, %v1364
        %v1497 = vpack.c.b16 %v1371, %v1365
        %v1498 = vpack.c.b16 %v1372, %v1366
        %v1499 = vpack.c.b16 %v1373, %v1367
        %v1500 = vpack.c.b16 %v1374, %v1368
        %v1501 = vpack.c.b16 %v1381, %v1375
        %v1502 = vpack.c.b16 %v1382, %v1376
        %v1503 = vpack.c.b16 %v1383, %v1377
        %v1504 = vpack.c.b16 %v1384, %v1378
        %v1505 = vpack.c.b16 %v1385, %v1379
        %v1506 = vpack.c.b16 %v1386, %v1380
        %v1507 = vpack.c.b16 %v1393, %v1387
        %v1508 = vpack.c.b16 %v1394, %v1388
        %v1509 = vpack.c.b16 %v1395, %v1389
        %v1510 = vpack.c.b16 %v1396, %v1390
        %v1511 = vpack.c.b16 %v1397, %v1391
        %v1512 = vpack.c.b16 %v1398, %v1392
        %v1513 = vpack.c.b16 %v1405, %v1399
        %v1514 = vpack.c.b16 %v1406, %v1400
        %v1515 = vpack.c.b16 %v1407, %v1401
        %v1516 = vpack.c.b16 %v1408, %v1402
        %v1517 = vpack.c.b16 %v1409, %v1403
        %v1518 = vpack.c.b16 %v1410, %v1404
        %v1519 = vpack.c.b16 %v1417, %v1411
        %v1520 = vpack.c.b16 %v1418, %v1412
        %v1521 = vpack.c.b16 %v1419, %v1413
        %v1522 = vpack.c.b16 %v1420, %v1414
        %v1523 = vpack.c.b16 %v1421, %v1415
        %v1524 = vpack.c.b16 %v1422, %v1416
        %v1525 = vpack.c.b16 %v1429, %v1423
        %v1526 = vpack.c.b16 %v1430, %v1424
        %v1527 = vpack.c.b16 %v1431, %v1425
        %v1528 = vpack.c.b16 %v1432, %v1426
        %v1529 = vpack.c.b16 %v1433, %v1427
        %v1530 = vpack.c.b16 %v1434, %v1428
        %1627 = vmatprep.subr.bf16.mxu0 %v1436
        %1628 = vmatpush1.bf16.msra.mxu0 %v1435
        %1629 = vmatprep.subr.bf16.mxu0 %v1442
        %1630 = vmatpush1.bf16.msra.mxu0 %v1441
        %1631 = vmatprep.subr.bf16.mxu0 %v1448
        %1632 = vmatpush1.bf16.msra.mxu0 %v1447
        %1633 = vmatprep.subr.bf16.mxu0 %v1454
        %1634 = vmatpush1.bf16.msra.mxu0 %v1453
        %1635 = vmatprep.subr.bf16.mxu0 %v1460
        %1636 = vmatpush1.bf16.msra.mxu0 %v1459
        %1637 = vmatprep.subr.bf16.mxu0 %v1466
        %1638 = vmatpush1.bf16.msra.mxu0 %v1465
        %1639 = vmatprep.subr.bf16.mxu0 %v1472
        %1640 = vmatpush1.bf16.msra.mxu0 %v1471
        %1641 = vmatprep.subr.bf16.mxu0 %v1478
        %1642 = vmatpush1.bf16.msra.mxu0 %v1477
        %1643 = vmatprep.subr.bf16.mxu0 %v1484
        %1644 = vmatpush1.bf16.msra.mxu0 %v1483
        %1645 = vmatprep.subr.bf16.mxu0 %v1490
        %1646 = vmatpush1.bf16.msra.mxu0 %v1489
        %1647 = vmatprep.subr.bf16.mxu0 %v1496
        %1648 = vmatpush1.bf16.msra.mxu0 %v1495
        %1649 = vmatprep.subr.bf16.mxu0 %v1502
        %1650 = vmatpush1.bf16.msra.mxu0 %v1501
        %1651 = vmatprep.subr.bf16.mxu0 %v1508
        %1652 = vmatpush1.bf16.msra.mxu0 %v1507
        %1653 = vmatprep.subr.bf16.mxu0 %v1514
        %1654 = vmatpush1.bf16.msra.mxu0 %v1513
        %1655 = vmatprep.subr.bf16.mxu0 %v1520
        %1656 = vmatpush1.bf16.msra.mxu0 %v1519
        %1657 = vmatprep.subr.bf16.mxu0 %v1526
        %1658 = vmatpush1.bf16.msra.mxu0 %v1525
        %1659 = vmatprep.mubr.bf16.mxu0 %v1018
        %1660 = vmatmul.mubr.bf16.gmra.mrb[0].mxu0 %v1017
        %v1661 = vpop.f32.mrb[0].mxu0
        %v1662 = vadd.f32 %v1120, %v1661
        %v1663 = vpop.f32.mrb[0].mxu0
        %v1664 = vadd.f32 %v1124, %v1663
        %v1665 = vpop.f32.mrb[0].mxu0
        %v1666 = vpop.f32.mrb[0].mxu0
        %1667 = vdwg.mxu0
        %1668 = vmatprep.subr.bf16.mxu0 %v1438
        %1669 = vmatpush1.bf16.msra.mxu0 %v1437
        %1670 = vmatprep.subr.bf16.mxu0 %v1444
        %1671 = vmatpush1.bf16.msra.mxu0 %v1443
        %1672 = vmatprep.subr.bf16.mxu0 %v1450
        %1673 = vmatpush1.bf16.msra.mxu0 %v1449
        %1674 = vmatprep.subr.bf16.mxu0 %v1456
        %1675 = vmatpush1.bf16.msra.mxu0 %v1455
        %1676 = vmatprep.subr.bf16.mxu0 %v1462
        %1677 = vmatpush1.bf16.msra.mxu0 %v1461
        %1678 = vmatprep.subr.bf16.mxu0 %v1468
        %1679 = vmatpush1.bf16.msra.mxu0 %v1467
        %1680 = vmatprep.subr.bf16.mxu0 %v1474
        %1681 = vmatpush1.bf16.msra.mxu0 %v1473
        %1682 = vmatprep.subr.bf16.mxu0 %v1480
        %1683 = vmatpush1.bf16.msra.mxu0 %v1479
        %1684 = vmatprep.subr.bf16.mxu0 %v1486
        %1685 = vmatpush1.bf16.msra.mxu0 %v1485
        %1686 = vmatprep.subr.bf16.mxu0 %v1492
        %1687 = vmatpush1.bf16.msra.mxu0 %v1491
        %1688 = vmatprep.subr.bf16.mxu0 %v1498
        %1689 = vmatpush1.bf16.msra.mxu0 %v1497
        %1690 = vmatprep.subr.bf16.mxu0 %v1504
        %1691 = vmatpush1.bf16.msra.mxu0 %v1503
        %1692 = vmatprep.subr.bf16.mxu0 %v1510
        %1693 = vmatpush1.bf16.msra.mxu0 %v1509
        %1694 = vmatprep.subr.bf16.mxu0 %v1516
        %1695 = vmatpush1.bf16.msra.mxu0 %v1515
        %1696 = vmatprep.subr.bf16.mxu0 %v1522
        %1697 = vmatpush1.bf16.msra.mxu0 %v1521
        %1698 = vmatprep.subr.bf16.mxu0 %v1528
        %1699 = vmatpush1.bf16.msra.mxu0 %v1527
        %1700 = vmatprep.mubr.bf16.mxu0 %v1018
        %1701 = vmatmul.mubr.bf16.gmra.mrb[0].mxu0 %v1017
        %v1702 = vpop.f32.mrb[0].mxu0
        %v1703 = vadd.f32 %v1128, %v1702
        %v1704 = vpop.f32.mrb[0].mxu0
        %v1705 = vadd.f32 %v1132, %v1704
        %v1706 = vpop.f32.mrb[0].mxu0
        %v1707 = vpop.f32.mrb[0].mxu0
        %1708 = vdwg.mxu0
        %1709 = vmatprep.subr.bf16.mxu0 %v1440
        %1710 = vmatpush1.bf16.msra.mxu0 %v1439
        %1711 = vmatprep.subr.bf16.mxu0 %v1446
        %1712 = vmatpush1.bf16.msra.mxu0 %v1445
        %1713 = vmatprep.subr.bf16.mxu0 %v1452
        %1714 = vmatpush1.bf16.msra.mxu0 %v1451
        %1715 = vmatprep.subr.bf16.mxu0 %v1458
        %1716 = vmatpush1.bf16.msra.mxu0 %v1457
        %1717 = vmatprep.subr.bf16.mxu0 %v1464
        %1718 = vmatpush1.bf16.msra.mxu0 %v1463
        %1719 = vmatprep.subr.bf16.mxu0 %v1470
        %1720 = vmatpush1.bf16.msra.mxu0 %v1469
        %1721 = vmatprep.subr.bf16.mxu0 %v1476
        %1722 = vmatpush1.bf16.msra.mxu0 %v1475
        %1723 = vmatprep.subr.bf16.mxu0 %v1482
        %1724 = vmatpush1.bf16.msra.mxu0 %v1481
        %1725 = vmatprep.subr.bf16.mxu0 %v1488
        %1726 = vmatpush1.bf16.msra.mxu0 %v1487
        %1727 = vmatprep.subr.bf16.mxu0 %v1494
        %1728 = vmatpush1.bf16.msra.mxu0 %v1493
        %1729 = vmatprep.subr.bf16.mxu0 %v1500
        %1730 = vmatpush1.bf16.msra.mxu0 %v1499
        %1731 = vmatprep.subr.bf16.mxu0 %v1506
        %1732 = vmatpush1.bf16.msra.mxu0 %v1505
        %1733 = vmatprep.subr.bf16.mxu0 %v1512
        %1734 = vmatpush1.bf16.msra.mxu0 %v1511
        %1735 = vmatprep.subr.bf16.mxu0 %v1518
        %1736 = vmatpush1.bf16.msra.mxu0 %v1517
        %1737 = vmatprep.subr.bf16.mxu0 %v1524
        %1738 = vmatpush1.bf16.msra.mxu0 %v1523
        %1739 = vmatprep.subr.bf16.mxu0 %v1530
        %1740 = vmatpush1.bf16.msra.mxu0 %v1529
        %1741 = vmatprep.mubr.bf16.mxu0 %v1018
        %1742 = vmatmul.mubr.bf16.gmra.mrb[0].mxu0 %v1017
        %v1743 = vpop.f32.mrb[0].mxu0
        %v1744 = vadd.f32 %v1136, %v1743
        %v1745 = vpop.f32.mrb[0].mxu0
        %v1746 = vadd.f32 %v1140, %v1745
        %v1747 = vpop.f32.mrb[0].mxu0
        %v1748 = vpop.f32.mrb[0].mxu0
        %1749 = vdwg.mxu0
        %v1750 = vpack.c.bf16 %v1662, %v1662
        %v1751 = vpack.c.bf16 %v1664, %v1664
        %v1752 = vpack.c.bf16 %v1703, %v1703
        %v1753 = vpack.c.bf16 %v1705, %v1705
        %v1754 = vpack.c.bf16 %v1744, %v1744
        %v1755 = vpack.c.bf16 %v1746, %v1746
        %v1756 = vld [vmem:[%s540] sm:$0x1]
        %v1757 = vcvt.s32.f32 %v1756
        %v1758 = vmul.f32 %v1757, -1e+09
        %v1760 = vlaneseq
        %v1761 = vshrl.u32 %v1760, 7
        %v1762 = vsub.s32 0, %v1761
        %v1763 = vrot.slane %v1758, %v1762
        %vm1765 = vcmask 261120
        %v1767 = vsel %vm1765, %v1750, 0
        %v1770 = vsel %vm1765, %v1752, 0
        %1772 = vmatprep.subr.bf16.mxu0 0
        %1773 = vmatpush1.bf16.xpose.msra.mxu0 %v1770
        %1774 = vmatprep.subr.bf16.mxu0 0
        %1775 = vmatpush1.bf16.xpose.msra.mxu0 0
        %1776 = vmatprep.subr.bf16.mxu0 0
        %1777 = vmatpush1.bf16.xpose.msra.mxu0 0
        %1778 = vmatprep.subr.bf16.mxu0 0
        %1779 = vmatpush1.bf16.xpose.msra.mxu0 0
        %1780 = vmatprep.subr.bf16.mxu0 0
        %1781 = vmatpush1.bf16.xpose.msra.mxu0 0
        %1782 = vmatprep.subr.bf16.mxu0 0
        %1783 = vmatpush1.bf16.xpose.msra.mxu0 0
        %1784 = vmatprep.subr.bf16.mxu0 0
        %1785 = vmatpush1.bf16.xpose.msra.mxu0 0
        %1786 = vmatprep.subr.bf16.mxu0 0
        %1787 = vmatpush1.bf16.xpose.msra.mxu0 0
        %1788 = vmatprep.subr.bf16.mxu0 0
        %1789 = vmatpush1.bf16.xpose.msra.mxu0 0
        %1790 = vmatprep.subr.bf16.mxu0 0
        %1791 = vmatpush1.bf16.xpose.msra.mxu0 0
        %1792 = vmatprep.subr.bf16.mxu0 0
        %1793 = vmatpush1.bf16.xpose.msra.mxu0 0
        %1794 = vmatprep.subr.bf16.mxu0 0
        %1795 = vmatpush1.bf16.xpose.msra.mxu0 0
        %1796 = vmatprep.subr.bf16.mxu0 0
        %1797 = vmatpush1.bf16.xpose.msra.mxu0 0
        %1798 = vmatprep.subr.bf16.mxu0 0
        %1799 = vmatpush1.bf16.xpose.msra.mxu0 0
        %1800 = vmatprep.subr.bf16.mxu0 0
        %1801 = vmatpush1.bf16.xpose.msra.mxu0 0
        %1802 = vmatprep.subr.bf16.mxu0 0
        %1803 = vmatpush1.bf16.xpose.msra.mxu0 0
        %1804 = vmatprep.mubr.bf16.mxu0 0
        %1805 = vmatmul.mubr.bf16.gmra.mrb[0].mxu0 %v1767
        %v1806 = vpop.f32.mrb[0].mxu0
        %v1807 = vadd.f32 %v1763, %v1806
        %v1808 = vpop.f32.mrb[0].mxu0
        %v1809 = vpop.f32.mrb[0].mxu0
        %v1810 = vpop.f32.mrb[0].mxu0
        %1811 = vdwg.mxu0
        %vm1812 = vcmask 64512
        %v1813 = vsel %vm1812, %v1807, -inf
        %1814 = vmax.xlane.f32.xlu0 %v1813
        %v1815 = vpop.xlane.xlu0 %1814
        %v1816 = vsub.f32 %v1807, %v1815
        %v1817 = vmul.f32 %v1816, 1.442695
        %v1818 = vpow.pop %v1817
        %v1819 = vsel %vm1812, %v1818, 0.0
        %1820 = vadd.xlane.f32.xlu0 %v1819
        %v1821 = vpop.xlane.xlu0 %1820
        %v1822 = vrcp.pop %v1821
        %v1823 = vmul.f32 %v1818, %v1822
        %v1824 = vpack.c.bf16 %v1823, %v1823
        %v1826 = vsel %vm1812, %v1824, 0
        %vm1828 = vcmask 1043456
        %v1830 = vsel %vm1828, %v1754, 0
        %1832 = vmatprep.subr.bf16.mxu0 0
        %1833 = vmatpush1.bf16.msra.mxu0 %v1830
        %1834 = vmatprep.subr.bf16.mxu0 0
        %1835 = vmatpush1.bf16.msra.mxu0 0
        %1836 = vmatprep.subr.bf16.mxu0 0
        %1837 = vmatpush1.bf16.msra.mxu0 0
        %1838 = vmatprep.subr.bf16.mxu0 0
        %1839 = vmatpush1.bf16.msra.mxu0 0
        %1840 = vmatprep.subr.bf16.mxu0 0
        %1841 = vmatpush1.bf16.msra.mxu0 0
        %1842 = vmatprep.subr.bf16.mxu0 0
        %1843 = vmatpush1.bf16.msra.mxu0 0
        %1844 = vmatprep.subr.bf16.mxu0 0
        %1845 = vmatpush1.bf16.msra.mxu0 0
        %1846 = vmatprep.subr.bf16.mxu0 0
        %1847 = vmatpush1.bf16.msra.mxu0 0
        %1848 = vmatprep.subr.bf16.mxu0 0
        %1849 = vmatpush1.bf16.msra.mxu0 0
        %1850 = vmatprep.subr.bf16.mxu0 0
        %1851 = vmatpush1.bf16.msra.mxu0 0
        %1852 = vmatprep.subr.bf16.mxu0 0
        %1853 = vmatpush1.bf16.msra.mxu0 0
        %1854 = vmatprep.subr.bf16.mxu0 0
        %1855 = vmatpush1.bf16.msra.mxu0 0
        %1856 = vmatprep.subr.bf16.mxu0 0
        %1857 = vmatpush1.bf16.msra.mxu0 0
        %1858 = vmatprep.subr.bf16.mxu0 0
        %1859 = vmatpush1.bf16.msra.mxu0 0
        %1860 = vmatprep.subr.bf16.mxu0 0
        %1861 = vmatpush1.bf16.msra.mxu0 0
        %1862 = vmatprep.subr.bf16.mxu0 0
        %1863 = vmatpush1.bf16.msra.mxu0 0
        %1864 = vmatprep.mubr.bf16.mxu0 0
        %1865 = vmatmul.mubr.bf16.gmra.mrb[0].mxu0 %v1826
        %v1866 = vpop.f32.mrb[0].mxu0
        %v1867 = vadd.f32 0.0, %v1866
        %v1868 = vpop.f32.mrb[0].mxu0
        %v1869 = vpop.f32.mrb[0].mxu0
        %v1870 = vpop.f32.mrb[0].mxu0
        %1871 = vdwg.mxu0
        %1872 = vst.msk [vmem:[#allocation2] sm:$0xff] %vm1765, %v1867
        %1874 = vrot.lane.b32.xlu0 %v1750, 96
        %v1875 = vpop.permute.xlu0 %1874
        %1877 = vrot.lane.b32.xlu0 %v1752, 96
        %v1878 = vpop.permute.xlu0 %1877
        %v1880 = vsel %vm1765, %v1875, 0
        %v1883 = vsel %vm1765, %v1878, 0
        %1885 = vmatprep.subr.bf16.mxu0 0
        %1886 = vmatpush1.bf16.xpose.msra.mxu0 %v1883
        %1887 = vmatprep.subr.bf16.mxu0 0
        %1888 = vmatpush1.bf16.xpose.msra.mxu0 0
        %1889 = vmatprep.subr.bf16.mxu0 0
        %1890 = vmatpush1.bf16.xpose.msra.mxu0 0
        %1891 = vmatprep.subr.bf16.mxu0 0
        %1892 = vmatpush1.bf16.xpose.msra.mxu0 0
        %1893 = vmatprep.subr.bf16.mxu0 0
        %1894 = vmatpush1.bf16.xpose.msra.mxu0 0
        %1895 = vmatprep.subr.bf16.mxu0 0
        %1896 = vmatpush1.bf16.xpose.msra.mxu0 0
        %1897 = vmatprep.subr.bf16.mxu0 0
        %1898 = vmatpush1.bf16.xpose.msra.mxu0 0
        %1899 = vmatprep.subr.bf16.mxu0 0
        %1900 = vmatpush1.bf16.xpose.msra.mxu0 0
        %1901 = vmatprep.subr.bf16.mxu0 0
        %1902 = vmatpush1.bf16.xpose.msra.mxu0 0
        %1903 = vmatprep.subr.bf16.mxu0 0
        %1904 = vmatpush1.bf16.xpose.msra.mxu0 0
        %1905 = vmatprep.subr.bf16.mxu0 0
        %1906 = vmatpush1.bf16.xpose.msra.mxu0 0
        %1907 = vmatprep.subr.bf16.mxu0 0
        %1908 = vmatpush1.bf16.xpose.msra.mxu0 0
        %1909 = vmatprep.subr.bf16.mxu0 0
        %1910 = vmatpush1.bf16.xpose.msra.mxu0 0
        %1911 = vmatprep.subr.bf16.mxu0 0
        %1912 = vmatpush1.bf16.xpose.msra.mxu0 0
        %1913 = vmatprep.subr.bf16.mxu0 0
        %1914 = vmatpush1.bf16.xpose.msra.mxu0 0
        %1915 = vmatprep.subr.bf16.mxu0 0
        %1916 = vmatpush1.bf16.xpose.msra.mxu0 0
        %1917 = vmatprep.mubr.bf16.mxu0 0
        %1918 = vmatmul.mubr.bf16.gmra.mrb[0].mxu0 %v1880
        %v1919 = vpop.f32.mrb[0].mxu0
        %v1920 = vadd.f32 %v1763, %v1919
        %v1921 = vpop.f32.mrb[0].mxu0
        %v1922 = vpop.f32.mrb[0].mxu0
        %v1923 = vpop.f32.mrb[0].mxu0
        %1924 = vdwg.mxu0
        %v1925 = vsel %vm1812, %v1920, -inf
        %1926 = vmax.xlane.f32.xlu0 %v1925
        %v1927 = vpop.xlane.xlu0 %1926
        %v1928 = vsub.f32 %v1920, %v1927
        %v1929 = vmul.f32 %v1928, 1.442695
        %v1930 = vpow.pop %v1929
        %v1931 = vsel %vm1812, %v1930, 0.0
        %1932 = vadd.xlane.f32.xlu0 %v1931
        %v1933 = vpop.xlane.xlu0 %1932
        %v1934 = vrcp.pop %v1933
        %v1935 = vmul.f32 %v1930, %v1934
        %v1936 = vpack.c.bf16 %v1935, %v1935
        %1938 = vrot.lane.b32.xlu0 %v1754, 96
        %v1939 = vpop.permute.xlu0 %1938
        %v1941 = vsel %vm1812, %v1936, 0
        %v1944 = vsel %vm1828, %v1939, 0
        %1946 = vmatprep.subr.bf16.mxu0 0
        %1947 = vmatpush1.bf16.msra.mxu0 %v1944
        %1948 = vmatprep.subr.bf16.mxu0 0
        %1949 = vmatpush1.bf16.msra.mxu0 0
        %1950 = vmatprep.subr.bf16.mxu0 0
        %1951 = vmatpush1.bf16.msra.mxu0 0
        %1952 = vmatprep.subr.bf16.mxu0 0
        %1953 = vmatpush1.bf16.msra.mxu0 0
        %1954 = vmatprep.subr.bf16.mxu0 0
        %1955 = vmatpush1.bf16.msra.mxu0 0
        %1956 = vmatprep.subr.bf16.mxu0 0
        %1957 = vmatpush1.bf16.msra.mxu0 0
        %1958 = vmatprep.subr.bf16.mxu0 0
        %1959 = vmatpush1.bf16.msra.mxu0 0
        %1960 = vmatprep.subr.bf16.mxu0 0
        %1961 = vmatpush1.bf16.msra.mxu0 0
        %1962 = vmatprep.subr.bf16.mxu0 0
        %1963 = vmatpush1.bf16.msra.mxu0 0
        %1964 = vmatprep.subr.bf16.mxu0 0
        %1965 = vmatpush1.bf16.msra.mxu0 0
        %1966 = vmatprep.subr.bf16.mxu0 0
        %1967 = vmatpush1.bf16.msra.mxu0 0
        %1968 = vmatprep.subr.bf16.mxu0 0
        %1969 = vmatpush1.bf16.msra.mxu0 0
        %1970 = vmatprep.subr.bf16.mxu0 0
        %1971 = vmatpush1.bf16.msra.mxu0 0
        %1972 = vmatprep.subr.bf16.mxu0 0
        %1973 = vmatpush1.bf16.msra.mxu0 0
        %1974 = vmatprep.subr.bf16.mxu0 0
        %1975 = vmatpush1.bf16.msra.mxu0 0
        %1976 = vmatprep.subr.bf16.mxu0 0
        %1977 = vmatpush1.bf16.msra.mxu0 0
        %1978 = vmatprep.mubr.bf16.mxu0 0
        %1979 = vmatmul.mubr.bf16.gmra.mrb[0].mxu0 %v1941
        %v1980 = vpop.f32.mrb[0].mxu0
        %v1981 = vadd.f32 0.0, %v1980
        %v1982 = vpop.f32.mrb[0].mxu0
        %v1983 = vpop.f32.mrb[0].mxu0
        %v1984 = vpop.f32.mrb[0].mxu0
        %1985 = vdwg.mxu0
        %1987 = vrot.lane.b32.xlu0 %v1981, 32
        %v1988 = vpop.permute.xlu0 %1987
        %vm1990 = vcmask 523520
        %1991 = vst.msk [vmem:[#allocation2] sm:$0xff] %vm1990, %v1988
        %1992 = vrot.lane.b32.xlu0 %v1750, 64
        %v1993 = vpop.permute.xlu0 %1992
        %1994 = vrot.lane.b32.xlu0 %v1752, 64
        %v1995 = vpop.permute.xlu0 %1994
        %v1997 = vsel %vm1765, %v1993, 0
        %v2000 = vsel %vm1765, %v1995, 0
        %2002 = vmatprep.subr.bf16.mxu0 0
        %2003 = vmatpush1.bf16.xpose.msra.mxu0 %v2000
        %2004 = vmatprep.subr.bf16.mxu0 0
        %2005 = vmatpush1.bf16.xpose.msra.mxu0 0
        %2006 = vmatprep.subr.bf16.mxu0 0
        %2007 = vmatpush1.bf16.xpose.msra.mxu0 0
        %2008 = vmatprep.subr.bf16.mxu0 0
        %2009 = vmatpush1.bf16.xpose.msra.mxu0 0
        %2010 = vmatprep.subr.bf16.mxu0 0
        %2011 = vmatpush1.bf16.xpose.msra.mxu0 0
        %2012 = vmatprep.subr.bf16.mxu0 0
        %2013 = vmatpush1.bf16.xpose.msra.mxu0 0
        %2014 = vmatprep.subr.bf16.mxu0 0
        %2015 = vmatpush1.bf16.xpose.msra.mxu0 0
        %2016 = vmatprep.subr.bf16.mxu0 0
        %2017 = vmatpush1.bf16.xpose.msra.mxu0 0
        %2018 = vmatprep.subr.bf16.mxu0 0
        %2019 = vmatpush1.bf16.xpose.msra.mxu0 0
        %2020 = vmatprep.subr.bf16.mxu0 0
        %2021 = vmatpush1.bf16.xpose.msra.mxu0 0
        %2022 = vmatprep.subr.bf16.mxu0 0
        %2023 = vmatpush1.bf16.xpose.msra.mxu0 0
        %2024 = vmatprep.subr.bf16.mxu0 0
        %2025 = vmatpush1.bf16.xpose.msra.mxu0 0
        %2026 = vmatprep.subr.bf16.mxu0 0
        %2027 = vmatpush1.bf16.xpose.msra.mxu0 0
        %2028 = vmatprep.subr.bf16.mxu0 0
        %2029 = vmatpush1.bf16.xpose.msra.mxu0 0
        %2030 = vmatprep.subr.bf16.mxu0 0
        %2031 = vmatpush1.bf16.xpose.msra.mxu0 0
        %2032 = vmatprep.subr.bf16.mxu0 0
        %2033 = vmatpush1.bf16.xpose.msra.mxu0 0
        %2034 = vmatprep.mubr.bf16.mxu0 0
        %2035 = vmatmul.mubr.bf16.gmra.mrb[0].mxu0 %v1997
        %v2036 = vpop.f32.mrb[0].mxu0
        %v2037 = vadd.f32 %v1763, %v2036
        %v2038 = vpop.f32.mrb[0].mxu0
        %v2039 = vpop.f32.mrb[0].mxu0
        %v2040 = vpop.f32.mrb[0].mxu0
        %2041 = vdwg.mxu0
        %v2042 = vsel %vm1812, %v2037, -inf
        %2043 = vmax.xlane.f32.xlu0 %v2042
        %v2044 = vpop.xlane.xlu0 %2043
        %v2045 = vsub.f32 %v2037, %v2044
        %v2046 = vmul.f32 %v2045, 1.442695
        %v2047 = vpow.pop %v2046
        %v2048 = vsel %vm1812, %v2047, 0.0
        %2049 = vadd.xlane.f32.xlu0 %v2048
        %v2050 = vpop.xlane.xlu0 %2049
        %v2051 = vrcp.pop %v2050
        %v2052 = vmul.f32 %v2047, %v2051
        %v2053 = vpack.c.bf16 %v2052, %v2052
        %2054 = vrot.lane.b32.xlu0 %v1754, 64
        %v2055 = vpop.permute.xlu0 %2054
        %v2057 = vsel %vm1812, %v2053, 0
        %v2060 = vsel %vm1828, %v2055, 0
        %2062 = vmatprep.subr.bf16.mxu0 0
        %2063 = vmatpush1.bf16.msra.mxu0 %v2060
        %2064 = vmatprep.subr.bf16.mxu0 0
        %2065 = vmatpush1.bf16.msra.mxu0 0
        %2066 = vmatprep.subr.bf16.mxu0 0
        %2067 = vmatpush1.bf16.msra.mxu0 0
        %2068 = vmatprep.subr.bf16.mxu0 0
        %2069 = vmatpush1.bf16.msra.mxu0 0
        %2070 = vmatprep.subr.bf16.mxu0 0
        %2071 = vmatpush1.bf16.msra.mxu0 0
        %2072 = vmatprep.subr.bf16.mxu0 0
        %2073 = vmatpush1.bf16.msra.mxu0 0
        %2074 = vmatprep.subr.bf16.mxu0 0
        %2075 = vmatpush1.bf16.msra.mxu0 0
        %2076 = vmatprep.subr.bf16.mxu0 0
        %2077 = vmatpush1.bf16.msra.mxu0 0
        %2078 = vmatprep.subr.bf16.mxu0 0
        %2079 = vmatpush1.bf16.msra.mxu0 0
        %2080 = vmatprep.subr.bf16.mxu0 0
        %2081 = vmatpush1.bf16.msra.mxu0 0
        %2082 = vmatprep.subr.bf16.mxu0 0
        %2083 = vmatpush1.bf16.msra.mxu0 0
        %2084 = vmatprep.subr.bf16.mxu0 0
        %2085 = vmatpush1.bf16.msra.mxu0 0
        %2086 = vmatprep.subr.bf16.mxu0 0
        %2087 = vmatpush1.bf16.msra.mxu0 0
        %2088 = vmatprep.subr.bf16.mxu0 0
        %2089 = vmatpush1.bf16.msra.mxu0 0
        %2090 = vmatprep.subr.bf16.mxu0 0
        %2091 = vmatpush1.bf16.msra.mxu0 0
        %2092 = vmatprep.subr.bf16.mxu0 0
        %2093 = vmatpush1.bf16.msra.mxu0 0
        %2094 = vmatprep.mubr.bf16.mxu0 0
        %2095 = vmatmul.mubr.bf16.gmra.mrb[0].mxu0 %v2057
        %v2096 = vpop.f32.mrb[0].mxu0
        %v2097 = vadd.f32 0.0, %v2096
        %v2098 = vpop.f32.mrb[0].mxu0
        %v2099 = vpop.f32.mrb[0].mxu0
        %v2100 = vpop.f32.mrb[0].mxu0
        %2101 = vdwg.mxu0
        %2103 = vrot.lane.b32.xlu0 %v2097, 64
        %v2104 = vpop.permute.xlu0 %2103
        %vm2106 = vcmask 785920
        %2107 = vst.msk [vmem:[#allocation2] sm:$0xff] %vm2106, %v2104
        %2108 = vrot.lane.b32.xlu0 %v1750, 32
        %v2109 = vpop.permute.xlu0 %2108
        %2110 = vrot.lane.b32.xlu0 %v1752, 32
        %v2111 = vpop.permute.xlu0 %2110
        %v2113 = vsel %vm1765, %v2109, 0
        %v2116 = vsel %vm1765, %v2111, 0
        %2118 = vmatprep.subr.bf16.mxu0 0
        %2119 = vmatpush1.bf16.xpose.msra.mxu0 %v2116
        %2120 = vmatprep.subr.bf16.mxu0 0
        %2121 = vmatpush1.bf16.xpose.msra.mxu0 0
        %2122 = vmatprep.subr.bf16.mxu0 0
        %2123 = vmatpush1.bf16.xpose.msra.mxu0 0
        %2124 = vmatprep.subr.bf16.mxu0 0
        %2125 = vmatpush1.bf16.xpose.msra.mxu0 0
        %2126 = vmatprep.subr.bf16.mxu0 0
        %2127 = vmatpush1.bf16.xpose.msra.mxu0 0
        %2128 = vmatprep.subr.bf16.mxu0 0
        %2129 = vmatpush1.bf16.xpose.msra.mxu0 0
        %2130 = vmatprep.subr.bf16.mxu0 0
        %2131 = vmatpush1.bf16.xpose.msra.mxu0 0
        %2132 = vmatprep.subr.bf16.mxu0 0
        %2133 = vmatpush1.bf16.xpose.msra.mxu0 0
        %2134 = vmatprep.subr.bf16.mxu0 0
        %2135 = vmatpush1.bf16.xpose.msra.mxu0 0
        %2136 = vmatprep.subr.bf16.mxu0 0
        %2137 = vmatpush1.bf16.xpose.msra.mxu0 0
        %2138 = vmatprep.subr.bf16.mxu0 0
        %2139 = vmatpush1.bf16.xpose.msra.mxu0 0
        %2140 = vmatprep.subr.bf16.mxu0 0
        %2141 = vmatpush1.bf16.xpose.msra.mxu0 0
        %2142 = vmatprep.subr.bf16.mxu0 0
        %2143 = vmatpush1.bf16.xpose.msra.mxu0 0
        %2144 = vmatprep.subr.bf16.mxu0 0
        %2145 = vmatpush1.bf16.xpose.msra.mxu0 0
        %2146 = vmatprep.subr.bf16.mxu0 0
        %2147 = vmatpush1.bf16.xpose.msra.mxu0 0
        %2148 = vmatprep.subr.bf16.mxu0 0
        %2149 = vmatpush1.bf16.xpose.msra.mxu0 0
        %2150 = vmatprep.mubr.bf16.mxu0 0
        %2151 = vmatmul.mubr.bf16.gmra.mrb[0].mxu0 %v2113
        %v2152 = vpop.f32.mrb[0].mxu0
        %v2153 = vadd.f32 %v1763, %v2152
        %v2154 = vpop.f32.mrb[0].mxu0
        %v2155 = vpop.f32.mrb[0].mxu0
        %v2156 = vpop.f32.mrb[0].mxu0
        %2157 = vdwg.mxu0
        %v2158 = vsel %vm1812, %v2153, -inf
        %2159 = vmax.xlane.f32.xlu0 %v2158
        %v2160 = vpop.xlane.xlu0 %2159
        %v2161 = vsub.f32 %v2153, %v2160
        %v2162 = vmul.f32 %v2161, 1.442695
        %v2163 = vpow.pop %v2162
        %v2164 = vsel %vm1812, %v2163, 0.0
        %2165 = vadd.xlane.f32.xlu0 %v2164
        %v2166 = vpop.xlane.xlu0 %2165
        %v2167 = vrcp.pop %v2166
        %v2168 = vmul.f32 %v2163, %v2167
        %v2169 = vpack.c.bf16 %v2168, %v2168
        %2170 = vrot.lane.b32.xlu0 %v1754, 32
        %v2171 = vpop.permute.xlu0 %2170
        %v2173 = vsel %vm1812, %v2169, 0
        %v2176 = vsel %vm1828, %v2171, 0
        %2178 = vmatprep.subr.bf16.mxu0 0
        %2179 = vmatpush1.bf16.msra.mxu0 %v2176
        %2180 = vmatprep.subr.bf16.mxu0 0
        %2181 = vmatpush1.bf16.msra.mxu0 0
        %2182 = vmatprep.subr.bf16.mxu0 0
        %2183 = vmatpush1.bf16.msra.mxu0 0
        %2184 = vmatprep.subr.bf16.mxu0 0
        %2185 = vmatpush1.bf16.msra.mxu0 0
        %2186 = vmatprep.subr.bf16.mxu0 0
        %2187 = vmatpush1.bf16.msra.mxu0 0
        %2188 = vmatprep.subr.bf16.mxu0 0
        %2189 = vmatpush1.bf16.msra.mxu0 0
        %2190 = vmatprep.subr.bf16.mxu0 0
        %2191 = vmatpush1.bf16.msra.mxu0 0
        %2192 = vmatprep.subr.bf16.mxu0 0
        %2193 = vmatpush1.bf16.msra.mxu0 0
        %2194 = vmatprep.subr.bf16.mxu0 0
        %2195 = vmatpush1.bf16.msra.mxu0 0
        %2196 = vmatprep.subr.bf16.mxu0 0
        %2197 = vmatpush1.bf16.msra.mxu0 0
        %2198 = vmatprep.subr.bf16.mxu0 0
        %2199 = vmatpush1.bf16.msra.mxu0 0
        %2200 = vmatprep.subr.bf16.mxu0 0
        %2201 = vmatpush1.bf16.msra.mxu0 0
        %2202 = vmatprep.subr.bf16.mxu0 0
        %2203 = vmatpush1.bf16.msra.mxu0 0
        %2204 = vmatprep.subr.bf16.mxu0 0
        %2205 = vmatpush1.bf16.msra.mxu0 0
        %2206 = vmatprep.subr.bf16.mxu0 0
        %2207 = vmatpush1.bf16.msra.mxu0 0
        %2208 = vmatprep.subr.bf16.mxu0 0
        %2209 = vmatpush1.bf16.msra.mxu0 0
        %2210 = vmatprep.mubr.bf16.mxu0 0
        %2211 = vmatmul.mubr.bf16.gmra.mrb[0].mxu0 %v2173
        %v2212 = vpop.f32.mrb[0].mxu0
        %v2213 = vadd.f32 0.0, %v2212
        %v2214 = vpop.f32.mrb[0].mxu0
        %v2215 = vpop.f32.mrb[0].mxu0
        %v2216 = vpop.f32.mrb[0].mxu0
        %2217 = vdwg.mxu0
        %2219 = vrot.lane.b32.xlu0 %v2213, 96
        %v2220 = vpop.permute.xlu0 %2219
        %vm2222 = vcmask 1048320
        %2223 = vst.msk [vmem:[#allocation2] sm:$0xff] %vm2222, %v2220
        %v2225 = vsel %vm1765, %v1751, 0
        %v2228 = vsel %vm1765, %v1753, 0
        %2230 = vmatprep.subr.bf16.mxu0 0
        %2231 = vmatpush1.bf16.xpose.msra.mxu0 %v2228
        %2232 = vmatprep.subr.bf16.mxu0 0
        %2233 = vmatpush1.bf16.xpose.msra.mxu0 0
        %2234 = vmatprep.subr.bf16.mxu0 0
        %2235 = vmatpush1.bf16.xpose.msra.mxu0 0
        %2236 = vmatprep.subr.bf16.mxu0 0
        %2237 = vmatpush1.bf16.xpose.msra.mxu0 0
        %2238 = vmatprep.subr.bf16.mxu0 0
        %2239 = vmatpush1.bf16.xpose.msra.mxu0 0
        %2240 = vmatprep.subr.bf16.mxu0 0
        %2241 = vmatpush1.bf16.xpose.msra.mxu0 0
        %2242 = vmatprep.subr.bf16.mxu0 0
        %2243 = vmatpush1.bf16.xpose.msra.mxu0 0
        %2244 = vmatprep.subr.bf16.mxu0 0
        %2245 = vmatpush1.bf16.xpose.msra.mxu0 0
        %2246 = vmatprep.subr.bf16.mxu0 0
        %2247 = vmatpush1.bf16.xpose.msra.mxu0 0
        %2248 = vmatprep.subr.bf16.mxu0 0
        %2249 = vmatpush1.bf16.xpose.msra.mxu0 0
        %2250 = vmatprep.subr.bf16.mxu0 0
        %2251 = vmatpush1.bf16.xpose.msra.mxu0 0
        %2252 = vmatprep.subr.bf16.mxu0 0
        %2253 = vmatpush1.bf16.xpose.msra.mxu0 0
        %2254 = vmatprep.subr.bf16.mxu0 0
        %2255 = vmatpush1.bf16.xpose.msra.mxu0 0
        %2256 = vmatprep.subr.bf16.mxu0 0
        %2257 = vmatpush1.bf16.xpose.msra.mxu0 0
        %2258 = vmatprep.subr.bf16.mxu0 0
        %2259 = vmatpush1.bf16.xpose.msra.mxu0 0
        %2260 = vmatprep.subr.bf16.mxu0 0
        %2261 = vmatpush1.bf16.xpose.msra.mxu0 0
        %2262 = vmatprep.mubr.bf16.mxu0 0
        %2263 = vmatmul.mubr.bf16.gmra.mrb[0].mxu0 %v2225
        %v2264 = vpop.f32.mrb[0].mxu0
        %v2265 = vadd.f32 %v1763, %v2264
        %v2266 = vpop.f32.mrb[0].mxu0
        %v2267 = vpop.f32.mrb[0].mxu0
        %v2268 = vpop.f32.mrb[0].mxu0
        %2269 = vdwg.mxu0
        %v2270 = vsel %vm1812, %v2265, -inf
        %2271 = vmax.xlane.f32.xlu0 %v2270
        %v2272 = vpop.xlane.xlu0 %2271
        %v2273 = vsub.f32 %v2265, %v2272
        %v2274 = vmul.f32 %v2273, 1.442695
        %v2275 = vpow.pop %v2274
        %v2276 = vsel %vm1812, %v2275, 0.0
        %2277 = vadd.xlane.f32.xlu0 %v2276
        %v2278 = vpop.xlane.xlu0 %2277
        %v2279 = vrcp.pop %v2278
        %v2280 = vmul.f32 %v2275, %v2279
        %v2281 = vpack.c.bf16 %v2280, %v2280
        %v2283 = vsel %vm1812, %v2281, 0
        %v2286 = vsel %vm1828, %v1755, 0
        %2288 = vmatprep.subr.bf16.mxu0 0
        %2289 = vmatpush1.bf16.msra.mxu0 %v2286
        %2290 = vmatprep.subr.bf16.mxu0 0
        %2291 = vmatpush1.bf16.msra.mxu0 0
        %2292 = vmatprep.subr.bf16.mxu0 0
        %2293 = vmatpush1.bf16.msra.mxu0 0
        %2294 = vmatprep.subr.bf16.mxu0 0
        %2295 = vmatpush1.bf16.msra.mxu0 0
        %2296 = vmatprep.subr.bf16.mxu0 0
        %2297 = vmatpush1.bf16.msra.mxu0 0
        %2298 = vmatprep.subr.bf16.mxu0 0
        %2299 = vmatpush1.bf16.msra.mxu0 0
        %2300 = vmatprep.subr.bf16.mxu0 0
        %2301 = vmatpush1.bf16.msra.mxu0 0
        %2302 = vmatprep.subr.bf16.mxu0 0
        %2303 = vmatpush1.bf16.msra.mxu0 0
        %2304 = vmatprep.subr.bf16.mxu0 0
        %2305 = vmatpush1.bf16.msra.mxu0 0
        %2306 = vmatprep.subr.bf16.mxu0 0
        %2307 = vmatpush1.bf16.msra.mxu0 0
        %2308 = vmatprep.subr.bf16.mxu0 0
        %2309 = vmatpush1.bf16.msra.mxu0 0
        %2310 = vmatprep.subr.bf16.mxu0 0
        %2311 = vmatpush1.bf16.msra.mxu0 0
        %2312 = vmatprep.subr.bf16.mxu0 0
        %2313 = vmatpush1.bf16.msra.mxu0 0
        %2314 = vmatprep.subr.bf16.mxu0 0
        %2315 = vmatpush1.bf16.msra.mxu0 0
        %2316 = vmatprep.subr.bf16.mxu0 0
        %2317 = vmatpush1.bf16.msra.mxu0 0
        %2318 = vmatprep.subr.bf16.mxu0 0
        %2319 = vmatpush1.bf16.msra.mxu0 0
        %2320 = vmatprep.mubr.bf16.mxu0 0
        %2321 = vmatmul.mubr.bf16.gmra.mrb[0].mxu0 %v2283
        %v2322 = vpop.f32.mrb[0].mxu0
        %v2323 = vadd.f32 0.0, %v2322
        %v2324 = vpop.f32.mrb[0].mxu0
        %v2325 = vpop.f32.mrb[0].mxu0
        %v2326 = vpop.f32.mrb[0].mxu0
        %2327 = vdwg.mxu0
        %2328 = vst.msk [vmem:[#allocation2 + $0x8] sm:$0xff] %vm1765, %v2323
        %2330 = vrot.lane.b32.xlu0 %v1751, 96
        %v2331 = vpop.permute.xlu0 %2330
        %2333 = vrot.lane.b32.xlu0 %v1753, 96
        %v2334 = vpop.permute.xlu0 %2333
        %v2336 = vsel %vm1765, %v2331, 0
        %v2339 = vsel %vm1765, %v2334, 0
        %2341 = vmatprep.subr.bf16.mxu0 0
        %2342 = vmatpush1.bf16.xpose.msra.mxu0 %v2339
        %2343 = vmatprep.subr.bf16.mxu0 0
        %2344 = vmatpush1.bf16.xpose.msra.mxu0 0
        %2345 = vmatprep.subr.bf16.mxu0 0
        %2346 = vmatpush1.bf16.xpose.msra.mxu0 0
        %2347 = vmatprep.subr.bf16.mxu0 0
        %2348 = vmatpush1.bf16.xpose.msra.mxu0 0
        %2349 = vmatprep.subr.bf16.mxu0 0
        %2350 = vmatpush1.bf16.xpose.msra.mxu0 0
        %2351 = vmatprep.subr.bf16.mxu0 0
        %2352 = vmatpush1.bf16.xpose.msra.mxu0 0
        %2353 = vmatprep.subr.bf16.mxu0 0
        %2354 = vmatpush1.bf16.xpose.msra.mxu0 0
        %2355 = vmatprep.subr.bf16.mxu0 0
        %2356 = vmatpush1.bf16.xpose.msra.mxu0 0
        %2357 = vmatprep.subr.bf16.mxu0 0
        %2358 = vmatpush1.bf16.xpose.msra.mxu0 0
        %2359 = vmatprep.subr.bf16.mxu0 0
        %2360 = vmatpush1.bf16.xpose.msra.mxu0 0
        %2361 = vmatprep.subr.bf16.mxu0 0
        %2362 = vmatpush1.bf16.xpose.msra.mxu0 0
        %2363 = vmatprep.subr.bf16.mxu0 0
        %2364 = vmatpush1.bf16.xpose.msra.mxu0 0
        %2365 = vmatprep.subr.bf16.mxu0 0
        %2366 = vmatpush1.bf16.xpose.msra.mxu0 0
        %2367 = vmatprep.subr.bf16.mxu0 0
        %2368 = vmatpush1.bf16.xpose.msra.mxu0 0
        %2369 = vmatprep.subr.bf16.mxu0 0
        %2370 = vmatpush1.bf16.xpose.msra.mxu0 0
        %2371 = vmatprep.subr.bf16.mxu0 0
        %2372 = vmatpush1.bf16.xpose.msra.mxu0 0
        %2373 = vmatprep.mubr.bf16.mxu0 0
        %2374 = vmatmul.mubr.bf16.gmra.mrb[0].mxu0 %v2336
        %v2375 = vpop.f32.mrb[0].mxu0
        %v2376 = vadd.f32 %v1763, %v2375
        %v2377 = vpop.f32.mrb[0].mxu0
        %v2378 = vpop.f32.mrb[0].mxu0
        %v2379 = vpop.f32.mrb[0].mxu0
        %2380 = vdwg.mxu0
        %v2381 = vsel %vm1812, %v2376, -inf
        %2382 = vmax.xlane.f32.xlu0 %v2381
        %v2383 = vpop.xlane.xlu0 %2382
        %v2384 = vsub.f32 %v2376, %v2383
        %v2385 = vmul.f32 %v2384, 1.442695
        %v2386 = vpow.pop %v2385
        %v2387 = vsel %vm1812, %v2386, 0.0
        %2388 = vadd.xlane.f32.xlu0 %v2387
        %v2389 = vpop.xlane.xlu0 %2388
        %v2390 = vrcp.pop %v2389
        %v2391 = vmul.f32 %v2386, %v2390
        %v2392 = vpack.c.bf16 %v2391, %v2391
        %2394 = vrot.lane.b32.xlu0 %v1755, 96
        %v2395 = vpop.permute.xlu0 %2394
        %v2397 = vsel %vm1812, %v2392, 0
        %v2400 = vsel %vm1828, %v2395, 0
        %2402 = vmatprep.subr.bf16.mxu0 0
        %2403 = vmatpush1.bf16.msra.mxu0 %v2400
        %2404 = vmatprep.subr.bf16.mxu0 0
        %2405 = vmatpush1.bf16.msra.mxu0 0
        %2406 = vmatprep.subr.bf16.mxu0 0
        %2407 = vmatpush1.bf16.msra.mxu0 0
        %2408 = vmatprep.subr.bf16.mxu0 0
        %2409 = vmatpush1.bf16.msra.mxu0 0
        %2410 = vmatprep.subr.bf16.mxu0 0
        %2411 = vmatpush1.bf16.msra.mxu0 0
        %2412 = vmatprep.subr.bf16.mxu0 0
        %2413 = vmatpush1.bf16.msra.mxu0 0
        %2414 = vmatprep.subr.bf16.mxu0 0
        %2415 = vmatpush1.bf16.msra.mxu0 0
        %2416 = vmatprep.subr.bf16.mxu0 0
        %2417 = vmatpush1.bf16.msra.mxu0 0
        %2418 = vmatprep.subr.bf16.mxu0 0
        %2419 = vmatpush1.bf16.msra.mxu0 0
        %2420 = vmatprep.subr.bf16.mxu0 0
        %2421 = vmatpush1.bf16.msra.mxu0 0
        %2422 = vmatprep.subr.bf16.mxu0 0
        %2423 = vmatpush1.bf16.msra.mxu0 0
        %2424 = vmatprep.subr.bf16.mxu0 0
        %2425 = vmatpush1.bf16.msra.mxu0 0
        %2426 = vmatprep.subr.bf16.mxu0 0
        %2427 = vmatpush1.bf16.msra.mxu0 0
        %2428 = vmatprep.subr.bf16.mxu0 0
        %2429 = vmatpush1.bf16.msra.mxu0 0
        %2430 = vmatprep.subr.bf16.mxu0 0
        %2431 = vmatpush1.bf16.msra.mxu0 0
        %2432 = vmatprep.subr.bf16.mxu0 0
        %2433 = vmatpush1.bf16.msra.mxu0 0
        %2434 = vmatprep.mubr.bf16.mxu0 0
        %2435 = vmatmul.mubr.bf16.gmra.mrb[0].mxu0 %v2397
        %v2436 = vpop.f32.mrb[0].mxu0
        %v2437 = vadd.f32 0.0, %v2436
        %v2438 = vpop.f32.mrb[0].mxu0
        %v2439 = vpop.f32.mrb[0].mxu0
        %v2440 = vpop.f32.mrb[0].mxu0
        %2441 = vdwg.mxu0
        %2443 = vrot.lane.b32.xlu0 %v2437, 32
        %v2444 = vpop.permute.xlu0 %2443
        %2446 = vst.msk [vmem:[#allocation2 + $0x8] sm:$0xff] %vm1990, %v2444
        %2447 = vrot.lane.b32.xlu0 %v1751, 64
        %v2448 = vpop.permute.xlu0 %2447
        %2449 = vrot.lane.b32.xlu0 %v1753, 64
        %v2450 = vpop.permute.xlu0 %2449
        %v2452 = vsel %vm1765, %v2448, 0
        %v2455 = vsel %vm1765, %v2450, 0
        %2457 = vmatprep.subr.bf16.mxu0 0
        %2458 = vmatpush1.bf16.xpose.msra.mxu0 %v2455
        %2459 = vmatprep.subr.bf16.mxu0 0
        %2460 = vmatpush1.bf16.xpose.msra.mxu0 0
        %2461 = vmatprep.subr.bf16.mxu0 0
        %2462 = vmatpush1.bf16.xpose.msra.mxu0 0
        %2463 = vmatprep.subr.bf16.mxu0 0
        %2464 = vmatpush1.bf16.xpose.msra.mxu0 0
        %2465 = vmatprep.subr.bf16.mxu0 0
        %2466 = vmatpush1.bf16.xpose.msra.mxu0 0
        %2467 = vmatprep.subr.bf16.mxu0 0
        %2468 = vmatpush1.bf16.xpose.msra.mxu0 0
        %2469 = vmatprep.subr.bf16.mxu0 0
        %2470 = vmatpush1.bf16.xpose.msra.mxu0 0
        %2471 = vmatprep.subr.bf16.mxu0 0
        %2472 = vmatpush1.bf16.xpose.msra.mxu0 0
        %2473 = vmatprep.subr.bf16.mxu0 0
        %2474 = vmatpush1.bf16.xpose.msra.mxu0 0
        %2475 = vmatprep.subr.bf16.mxu0 0
        %2476 = vmatpush1.bf16.xpose.msra.mxu0 0
        %2477 = vmatprep.subr.bf16.mxu0 0
        %2478 = vmatpush1.bf16.xpose.msra.mxu0 0
        %2479 = vmatprep.subr.bf16.mxu0 0
        %2480 = vmatpush1.bf16.xpose.msra.mxu0 0
        %2481 = vmatprep.subr.bf16.mxu0 0
        %2482 = vmatpush1.bf16.xpose.msra.mxu0 0
        %2483 = vmatprep.subr.bf16.mxu0 0
        %2484 = vmatpush1.bf16.xpose.msra.mxu0 0
        %2485 = vmatprep.subr.bf16.mxu0 0
        %2486 = vmatpush1.bf16.xpose.msra.mxu0 0
        %2487 = vmatprep.subr.bf16.mxu0 0
        %2488 = vmatpush1.bf16.xpose.msra.mxu0 0
        %2489 = vmatprep.mubr.bf16.mxu0 0
        %2490 = vmatmul.mubr.bf16.gmra.mrb[0].mxu0 %v2452
        %v2491 = vpop.f32.mrb[0].mxu0
        %v2492 = vadd.f32 %v1763, %v2491
        %v2493 = vpop.f32.mrb[0].mxu0
        %v2494 = vpop.f32.mrb[0].mxu0
        %v2495 = vpop.f32.mrb[0].mxu0
        %2496 = vdwg.mxu0
        %v2497 = vsel %vm1812, %v2492, -inf
        %2498 = vmax.xlane.f32.xlu0 %v2497
        %v2499 = vpop.xlane.xlu0 %2498
        %v2500 = vsub.f32 %v2492, %v2499
        %v2501 = vmul.f32 %v2500, 1.442695
        %v2502 = vpow.pop %v2501
        %v2503 = vsel %vm1812, %v2502, 0.0
        %2504 = vadd.xlane.f32.xlu0 %v2503
        %v2505 = vpop.xlane.xlu0 %2504
        %v2506 = vrcp.pop %v2505
        %v2507 = vmul.f32 %v2502, %v2506
        %v2508 = vpack.c.bf16 %v2507, %v2507
        %2509 = vrot.lane.b32.xlu0 %v1755, 64
        %v2510 = vpop.permute.xlu0 %2509
        %v2512 = vsel %vm1812, %v2508, 0
        %v2515 = vsel %vm1828, %v2510, 0
        %2517 = vmatprep.subr.bf16.mxu0 0
        %2518 = vmatpush1.bf16.msra.mxu0 %v2515
        %2519 = vmatprep.subr.bf16.mxu0 0
        %2520 = vmatpush1.bf16.msra.mxu0 0
        %2521 = vmatprep.subr.bf16.mxu0 0
        %2522 = vmatpush1.bf16.msra.mxu0 0
        %2523 = vmatprep.subr.bf16.mxu0 0
        %2524 = vmatpush1.bf16.msra.mxu0 0
        %2525 = vmatprep.subr.bf16.mxu0 0
        %2526 = vmatpush1.bf16.msra.mxu0 0
        %2527 = vmatprep.subr.bf16.mxu0 0
        %2528 = vmatpush1.bf16.msra.mxu0 0
        %2529 = vmatprep.subr.bf16.mxu0 0
        %2530 = vmatpush1.bf16.msra.mxu0 0
        %2531 = vmatprep.subr.bf16.mxu0 0
        %2532 = vmatpush1.bf16.msra.mxu0 0
        %2533 = vmatprep.subr.bf16.mxu0 0
        %2534 = vmatpush1.bf16.msra.mxu0 0
        %2535 = vmatprep.subr.bf16.mxu0 0
        %2536 = vmatpush1.bf16.msra.mxu0 0
        %2537 = vmatprep.subr.bf16.mxu0 0
        %2538 = vmatpush1.bf16.msra.mxu0 0
        %2539 = vmatprep.subr.bf16.mxu0 0
        %2540 = vmatpush1.bf16.msra.mxu0 0
        %2541 = vmatprep.subr.bf16.mxu0 0
        %2542 = vmatpush1.bf16.msra.mxu0 0
        %2543 = vmatprep.subr.bf16.mxu0 0
        %2544 = vmatpush1.bf16.msra.mxu0 0
        %2545 = vmatprep.subr.bf16.mxu0 0
        %2546 = vmatpush1.bf16.msra.mxu0 0
        %2547 = vmatprep.subr.bf16.mxu0 0
        %2548 = vmatpush1.bf16.msra.mxu0 0
        %2549 = vmatprep.mubr.bf16.mxu0 0
        %2550 = vmatmul.mubr.bf16.gmra.mrb[0].mxu0 %v2512
        %v2551 = vpop.f32.mrb[0].mxu0
        %v2552 = vadd.f32 0.0, %v2551
        %v2553 = vpop.f32.mrb[0].mxu0
        %v2554 = vpop.f32.mrb[0].mxu0
        %v2555 = vpop.f32.mrb[0].mxu0
        %2556 = vdwg.mxu0
        %2558 = vrot.lane.b32.xlu0 %v2552, 64
        %v2559 = vpop.permute.xlu0 %2558
        %2561 = vst.msk [vmem:[#allocation2 + $0x8] sm:$0xff] %vm2106, %v2559
        %2562 = vrot.lane.b32.xlu0 %v1751, 32
        %v2563 = vpop.permute.xlu0 %2562
        %2564 = vrot.lane.b32.xlu0 %v1753, 32
        %v2565 = vpop.permute.xlu0 %2564
        %v2567 = vsel %vm1765, %v2563, 0
        %v2570 = vsel %vm1765, %v2565, 0
        %2572 = vmatprep.subr.bf16.mxu0 0
        %2573 = vmatpush1.bf16.xpose.msra.mxu0 %v2570
        %2574 = vmatprep.subr.bf16.mxu0 0
        %2575 = vmatpush1.bf16.xpose.msra.mxu0 0
        %2576 = vmatprep.subr.bf16.mxu0 0
        %2577 = vmatpush1.bf16.xpose.msra.mxu0 0
        %2578 = vmatprep.subr.bf16.mxu0 0
        %2579 = vmatpush1.bf16.xpose.msra.mxu0 0
        %2580 = vmatprep.subr.bf16.mxu0 0
        %2581 = vmatpush1.bf16.xpose.msra.mxu0 0
        %2582 = vmatprep.subr.bf16.mxu0 0
        %2583 = vmatpush1.bf16.xpose.msra.mxu0 0
        %2584 = vmatprep.subr.bf16.mxu0 0
        %2585 = vmatpush1.bf16.xpose.msra.mxu0 0
        %2586 = vmatprep.subr.bf16.mxu0 0
        %2587 = vmatpush1.bf16.xpose.msra.mxu0 0
        %2588 = vmatprep.subr.bf16.mxu0 0
        %2589 = vmatpush1.bf16.xpose.msra.mxu0 0
        %2590 = vmatprep.subr.bf16.mxu0 0
        %2591 = vmatpush1.bf16.xpose.msra.mxu0 0
        %2592 = vmatprep.subr.bf16.mxu0 0
        %2593 = vmatpush1.bf16.xpose.msra.mxu0 0
        %2594 = vmatprep.subr.bf16.mxu0 0
        %2595 = vmatpush1.bf16.xpose.msra.mxu0 0
        %2596 = vmatprep.subr.bf16.mxu0 0
        %2597 = vmatpush1.bf16.xpose.msra.mxu0 0
        %2598 = vmatprep.subr.bf16.mxu0 0
        %2599 = vmatpush1.bf16.xpose.msra.mxu0 0
        %2600 = vmatprep.subr.bf16.mxu0 0
        %2601 = vmatpush1.bf16.xpose.msra.mxu0 0
        %2602 = vmatprep.subr.bf16.mxu0 0
        %2603 = vmatpush1.bf16.xpose.msra.mxu0 0
        %2604 = vmatprep.mubr.bf16.mxu0 0
        %2605 = vmatmul.mubr.bf16.gmra.mrb[0].mxu0 %v2567
        %v2606 = vpop.f32.mrb[0].mxu0
        %v2607 = vadd.f32 %v1763, %v2606
        %v2608 = vpop.f32.mrb[0].mxu0
        %v2609 = vpop.f32.mrb[0].mxu0
        %v2610 = vpop.f32.mrb[0].mxu0
        %2611 = vdwg.mxu0
        %v2612 = vsel %vm1812, %v2607, -inf
        %2613 = vmax.xlane.f32.xlu0 %v2612
        %v2614 = vpop.xlane.xlu0 %2613
        %v2615 = vsub.f32 %v2607, %v2614
        %v2616 = vmul.f32 %v2615, 1.442695
        %v2617 = vpow.pop %v2616
        %v2618 = vsel %vm1812, %v2617, 0.0
        %2619 = vadd.xlane.f32.xlu0 %v2618
        %v2620 = vpop.xlane.xlu0 %2619
        %v2621 = vrcp.pop %v2620
        %v2622 = vmul.f32 %v2617, %v2621
        %v2623 = vpack.c.bf16 %v2622, %v2622
        %2624 = vrot.lane.b32.xlu0 %v1755, 32
        %v2625 = vpop.permute.xlu0 %2624
        %v2627 = vsel %vm1812, %v2623, 0
        %v2630 = vsel %vm1828, %v2625, 0
        %2632 = vmatprep.subr.bf16.mxu0 0
        %2633 = vmatpush1.bf16.msra.mxu0 %v2630
        %2634 = vmatprep.subr.bf16.mxu0 0
        %2635 = vmatpush1.bf16.msra.mxu0 0
        %2636 = vmatprep.subr.bf16.mxu0 0
        %2637 = vmatpush1.bf16.msra.mxu0 0
        %2638 = vmatprep.subr.bf16.mxu0 0
        %2639 = vmatpush1.bf16.msra.mxu0 0
        %2640 = vmatprep.subr.bf16.mxu0 0
        %2641 = vmatpush1.bf16.msra.mxu0 0
        %2642 = vmatprep.subr.bf16.mxu0 0
        %2643 = vmatpush1.bf16.msra.mxu0 0
        %2644 = vmatprep.subr.bf16.mxu0 0
        %2645 = vmatpush1.bf16.msra.mxu0 0
        %2646 = vmatprep.subr.bf16.mxu0 0
        %2647 = vmatpush1.bf16.msra.mxu0 0
        %2648 = vmatprep.subr.bf16.mxu0 0
        %2649 = vmatpush1.bf16.msra.mxu0 0
        %2650 = vmatprep.subr.bf16.mxu0 0
        %2651 = vmatpush1.bf16.msra.mxu0 0
        %2652 = vmatprep.subr.bf16.mxu0 0
        %2653 = vmatpush1.bf16.msra.mxu0 0
        %2654 = vmatprep.subr.bf16.mxu0 0
        %2655 = vmatpush1.bf16.msra.mxu0 0
        %2656 = vmatprep.subr.bf16.mxu0 0
        %2657 = vmatpush1.bf16.msra.mxu0 0
        %2658 = vmatprep.subr.bf16.mxu0 0
        %2659 = vmatpush1.bf16.msra.mxu0 0
        %2660 = vmatprep.subr.bf16.mxu0 0
        %2661 = vmatpush1.bf16.msra.mxu0 0
        %2662 = vmatprep.subr.bf16.mxu0 0
        %2663 = vmatpush1.bf16.msra.mxu0 0
        %2664 = vmatprep.mubr.bf16.mxu0 0
        %2665 = vmatmul.mubr.bf16.gmra.mrb[0].mxu0 %v2627
        %v2666 = vpop.f32.mrb[0].mxu0
        %v2667 = vadd.f32 0.0, %v2666
        %v2668 = vpop.f32.mrb[0].mxu0
        %v2669 = vpop.f32.mrb[0].mxu0
        %v2670 = vpop.f32.mrb[0].mxu0
        %2671 = vdwg.mxu0
        %2673 = vrot.lane.b32.xlu0 %v2667, 96
        %v2674 = vpop.permute.xlu0 %2673
        %2676 = vst.msk [vmem:[#allocation2 + $0x8] sm:$0xff] %vm2222, %v2674
        %v2677 = vld [vmem:[#allocation2] sm:$0xff]
        %v2678 = vld [vmem:[#allocation2 + $0x8] sm:$0xff]
        %v2679 = vpack.c.bf16 %v2677, %v2677
        %v2680 = vpack.c.bf16 %v2678, %v2678
        %v2681 = vld [vmem:[#allocation12] sm:$0xff]
        %v2682 = vld [vmem:[#allocation12 + $0x8] sm:$0xff]
        %v2683 = vld [vmem:[#allocation12 + $0x10] sm:$0xff]
        %v2684 = vld [vmem:[#allocation12 + $0x18] sm:$0xff]
        %v2685 = vld [vmem:[#allocation12 + $0x20] sm:$0xff]
        %v2686 = vld [vmem:[#allocation12 + $0x28] sm:$0xff]
        %v2687 = vld [vmem:[#allocation12 + $0x30] sm:$0xff]
        %v2688 = vld [vmem:[#allocation12 + $0x38] sm:$0xff]
        %v2689 = vld [vmem:[#allocation12 + $0x40] sm:$0xff]
        %v2690 = vld [vmem:[#allocation12 + $0x48] sm:$0xff]
        %v2691 = vld [vmem:[#allocation12 + $0x50] sm:$0xff]
        %v2692 = vld [vmem:[#allocation12 + $0x58] sm:$0xff]
        %v2693 = vld [vmem:[#allocation12 + $0x60] sm:$0xff]
        %v2694 = vld [vmem:[#allocation12 + $0x68] sm:$0xff]
        %v2695 = vld [vmem:[#allocation12 + $0x70] sm:$0xff]
        %v2696 = vld [vmem:[#allocation12 + $0x78] sm:$0xff]
        %v2697 = vld [vmem:[#allocation12 + $0x80] sm:$0xff]
        %v2698 = vld [vmem:[#allocation12 + $0x88] sm:$0xff]
        %v2699 = vld [vmem:[#allocation12 + $0x90] sm:$0xff]
        %v2700 = vld [vmem:[#allocation12 + $0x98] sm:$0xff]
        %v2701 = vld [vmem:[#allocation12 + $0xa0] sm:$0xff]
        %v2702 = vld [vmem:[#allocation12 + $0xa8] sm:$0xff]
        %v2703 = vld [vmem:[#allocation12 + $0xb0] sm:$0xff]
        %v2704 = vld [vmem:[#allocation12 + $0xb8] sm:$0xff]
        %v2705 = vld [vmem:[#allocation12 + $0xc0] sm:$0xff]
        %v2706 = vld [vmem:[#allocation12 + $0xc8] sm:$0xff]
        %v2707 = vld [vmem:[#allocation12 + $0xd0] sm:$0xff]
        %v2708 = vld [vmem:[#allocation12 + $0xd8] sm:$0xff]
        %v2709 = vld [vmem:[#allocation12 + $0xe0] sm:$0xff]
        %v2710 = vld [vmem:[#allocation12 + $0xe8] sm:$0xff]
        %v2711 = vld [vmem:[#allocation12 + $0xf0] sm:$0xff]
        %v2712 = vld [vmem:[#allocation12 + $0xf8] sm:$0xff]
        %v2713 = vlaneseq
        %v2714 = vshrl.u32 %v2713, 7
        %v2715 = vsub.s32 6, %v2714
        %v2716 = vrot.slane %v542, %v2715
        %v2717 = vlaneseq
        %v2718 = vshrl.u32 %v2717, 7
        %v2719 = vsub.s32 6, %v2718
        %v2720 = vrot.slane %v543, %v2719
        %v2753 = vunpack.c.l.b16 %v2681
        %v2754 = vunpack.c.h.b16 %v2681
        %v2755 = vunpack.c.l.b16 %v2682
        %v2756 = vunpack.c.h.b16 %v2682
        %v2757 = vunpack.c.l.b16 %v2683
        %v2758 = vunpack.c.h.b16 %v2683
        %v2759 = vunpack.c.l.b16 %v2684
        %v2760 = vunpack.c.h.b16 %v2684
        %v2761 = vunpack.c.l.b16 %v2685
        %v2762 = vunpack.c.h.b16 %v2685
        %v2763 = vunpack.c.l.b16 %v2686
        %v2764 = vunpack.c.h.b16 %v2686
        %v2765 = vunpack.c.l.b16 %v2687
        %v2766 = vunpack.c.h.b16 %v2687
        %v2767 = vunpack.c.l.b16 %v2688
        %v2768 = vunpack.c.h.b16 %v2688
        %v2769 = vunpack.c.l.b16 %v2689
        %v2770 = vunpack.c.h.b16 %v2689
        %v2771 = vunpack.c.l.b16 %v2690
        %v2772 = vunpack.c.h.b16 %v2690
        %v2773 = vunpack.c.l.b16 %v2691
        %v2774 = vunpack.c.h.b16 %v2691
        %v2775 = vunpack.c.l.b16 %v2692
        %v2776 = vunpack.c.h.b16 %v2692
        %v2777 = vunpack.c.l.b16 %v2693
        %v2778 = vunpack.c.h.b16 %v2693
        %v2779 = vunpack.c.l.b16 %v2694
        %v2780 = vunpack.c.h.b16 %v2694
        %v2781 = vunpack.c.l.b16 %v2695
        %v2782 = vunpack.c.h.b16 %v2695
        %v2783 = vunpack.c.l.b16 %v2696
        %v2784 = vunpack.c.h.b16 %v2696
        %v2785 = vunpack.c.l.b16 %v2697
        %v2786 = vunpack.c.h.b16 %v2697
        %v2787 = vunpack.c.l.b16 %v2698
        %v2788 = vunpack.c.h.b16 %v2698
        %v2789 = vunpack.c.l.b16 %v2699
        %v2790 = vunpack.c.h.b16 %v2699
        %v2791 = vunpack.c.l.b16 %v2700
        %v2792 = vunpack.c.h.b16 %v2700
        %v2793 = vunpack.c.l.b16 %v2701
        %v2794 = vunpack.c.h.b16 %v2701
        %v2795 = vunpack.c.l.b16 %v2702
        %v2796 = vunpack.c.h.b16 %v2702
        %v2797 = vunpack.c.l.b16 %v2703
        %v2798 = vunpack.c.h.b16 %v2703
        %v2799 = vunpack.c.l.b16 %v2704
        %v2800 = vunpack.c.h.b16 %v2704
        %v2801 = vunpack.c.l.b16 %v2705
        %v2802 = vunpack.c.h.b16 %v2705
        %v2803 = vunpack.c.l.b16 %v2706
        %v2804 = vunpack.c.h.b16 %v2706
        %v2805 = vunpack.c.l.b16 %v2707
        %v2806 = vunpack.c.h.b16 %v2707
        %v2807 = vunpack.c.l.b16 %v2708
        %v2808 = vunpack.c.h.b16 %v2708
        %v2809 = vunpack.c.l.b16 %v2709
        %v2810 = vunpack.c.h.b16 %v2709
        %v2811 = vunpack.c.l.b16 %v2710
        %v2812 = vunpack.c.h.b16 %v2710
        %v2813 = vunpack.c.l.b16 %v2711
        %v2814 = vunpack.c.h.b16 %v2711
        %v2815 = vunpack.c.l.b16 %v2712
        %v2816 = vunpack.c.h.b16 %v2712
        %v2817 = vpack.c.b16 %v2755, %v2753
        %v2818 = vpack.c.b16 %v2756, %v2754
        %v2819 = vpack.c.b16 %v2759, %v2757
        %v2820 = vpack.c.b16 %v2760, %v2758
        %v2821 = vpack.c.b16 %v2763, %v2761
        %v2822 = vpack.c.b16 %v2764, %v2762
        %v2823 = vpack.c.b16 %v2767, %v2765
        %v2824 = vpack.c.b16 %v2768, %v2766
        %v2825 = vpack.c.b16 %v2771, %v2769
        %v2826 = vpack.c.b16 %v2772, %v2770
        %v2827 = vpack.c.b16 %v2775, %v2773
        %v2828 = vpack.c.b16 %v2776, %v2774
        %v2829 = vpack.c.b16 %v2779, %v2777
        %v2830 = vpack.c.b16 %v2780, %v2778
        %v2831 = vpack.c.b16 %v2783, %v2781
        %v2832 = vpack.c.b16 %v2784, %v2782
        %v2833 = vpack.c.b16 %v2787, %v2785
        %v2834 = vpack.c.b16 %v2788, %v2786
        %v2835 = vpack.c.b16 %v2791, %v2789
        %v2836 = vpack.c.b16 %v2792, %v2790
        %v2837 = vpack.c.b16 %v2795, %v2793
        %v2838 = vpack.c.b16 %v2796, %v2794
        %v2839 = vpack.c.b16 %v2799, %v2797
        %v2840 = vpack.c.b16 %v2800, %v2798
        %v2841 = vpack.c.b16 %v2803, %v2801
        %v2842 = vpack.c.b16 %v2804, %v2802
        %v2843 = vpack.c.b16 %v2807, %v2805
        %v2844 = vpack.c.b16 %v2808, %v2806
        %v2845 = vpack.c.b16 %v2811, %v2809
        %v2846 = vpack.c.b16 %v2812, %v2810
        %v2847 = vpack.c.b16 %v2815, %v2813
        %v2848 = vpack.c.b16 %v2816, %v2814
        %2881 = vmatprep.subr.bf16.mxu0 %v2818
        %2882 = vmatpush1.bf16.msra.mxu0 %v2817
        %2883 = vmatprep.subr.bf16.mxu0 %v2820
        %2884 = vmatpush1.bf16.msra.mxu0 %v2819
        %2885 = vmatprep.subr.bf16.mxu0 %v2822
        %2886 = vmatpush1.bf16.msra.mxu0 %v2821
        %2887 = vmatprep.subr.bf16.mxu0 %v2824
        %2888 = vmatpush1.bf16.msra.mxu0 %v2823
        %2889 = vmatprep.subr.bf16.mxu0 %v2826
        %2890 = vmatpush1.bf16.msra.mxu0 %v2825
        %2891 = vmatprep.subr.bf16.mxu0 %v2828
        %2892 = vmatpush1.bf16.msra.mxu0 %v2827
        %2893 = vmatprep.subr.bf16.mxu0 %v2830
        %2894 = vmatpush1.bf16.msra.mxu0 %v2829
        %2895 = vmatprep.subr.bf16.mxu0 %v2832
        %2896 = vmatpush1.bf16.msra.mxu0 %v2831
        %2897 = vmatprep.subr.bf16.mxu0 %v2834
        %2898 = vmatpush1.bf16.msra.mxu0 %v2833
        %2899 = vmatprep.subr.bf16.mxu0 %v2836
        %2900 = vmatpush1.bf16.msra.mxu0 %v2835
        %2901 = vmatprep.subr.bf16.mxu0 %v2838
        %2902 = vmatpush1.bf16.msra.mxu0 %v2837
        %2903 = vmatprep.subr.bf16.mxu0 %v2840
        %2904 = vmatpush1.bf16.msra.mxu0 %v2839
        %2905 = vmatprep.subr.bf16.mxu0 %v2842
        %2906 = vmatpush1.bf16.msra.mxu0 %v2841
        %2907 = vmatprep.subr.bf16.mxu0 %v2844
        %2908 = vmatpush1.bf16.msra.mxu0 %v2843
        %2909 = vmatprep.subr.bf16.mxu0 %v2846
        %2910 = vmatpush1.bf16.msra.mxu0 %v2845
        %2911 = vmatprep.subr.bf16.mxu0 %v2848
        %2912 = vmatpush1.bf16.msra.mxu0 %v2847
        %2913 = vmatprep.mubr.bf16.mxu0 %v2680
        %2914 = vmatmul.mubr.bf16.gmra.mrb[0].mxu0 %v2679
        %v2915 = vpop.f32.mrb[0].mxu0
        %v2916 = vadd.f32 %v2716, %v2915
        %v2917 = vpop.f32.mrb[0].mxu0
        %v2918 = vadd.f32 %v2720, %v2917
        %v2919 = vpop.f32.mrb[0].mxu0
        %v2920 = vpop.f32.mrb[0].mxu0
        %2921 = vdwg.mxu0
        %v2922 = vadd.f32 %v1015, %v2916
        %v2923 = vadd.f32 %v1016, %v2918
        %v2924 = vadd.f32 %v2922, %v2923
        %2925 = vadd.xlane.f32.xlu0 %v2924
        %v2926 = vpop.xlane.xlu0 %2925
        %v2927 = vmul.f32 %v2926, %v695
        %v2928 = vsub.f32 %v2922, %v2927
        %v2929 = vsub.f32 %v2923, %v2927
        %v2930 = vmul.f32 %v2928, %v2928
        %v2931 = vmul.f32 %v2929, %v2929
        %v2932 = vadd.f32 %v2930, %v2931
        %2933 = vadd.xlane.f32.xlu0 %v2932
        %v2934 = vpop.xlane.xlu0 %2933
        %v2935 = vmul.f32 %v2934, %v695
        %v2936 = vadd.f32 %v2935, 1e-05
        %v2937 = vrsqrt.pop %v2936
        %v2938 = vmul.f32 %v2928, %v2937
        %v2939 = vmul.f32 %v2929, %v2937
        %v2940 = vlaneseq
        %v2941 = vshrl.u32 %v2940, 7
        %v2942 = vsub.s32 7, %v2941
        %v2943 = vrot.slane %v542, %v2942
        %v2944 = vlaneseq
        %v2945 = vshrl.u32 %v2944, 7
        %v2946 = vsub.s32 7, %v2945
        %v2947 = vrot.slane %v543, %v2946
        %v2948 = vmul.f32 %v2938, %v2943
        %v2949 = vmul.f32 %v2939, %v2947
        %v2950 = vlaneseq
        %v2951 = vshrl.u32 %v2950, 7
        %v2952 = vsub.s32 0, %v2951
        %v2953 = vrot.slane %v544, %v2952
        %v2954 = vlaneseq
        %v2955 = vshrl.u32 %v2954, 7
        %v2956 = vsub.s32 0, %v2955
        %v2957 = vrot.slane %v545, %v2956
        %v2958 = vadd.f32 %v2948, %v2953
        %v2959 = vadd.f32 %v2949, %v2957
        %v2960 = vpack.c.bf16 %v2958, %v2958
        %v2961 = vpack.c.bf16 %v2959, %v2959
        %s2962 = scalar_lea.vmem [#allocation9], 256
        %v2963 = vld [vmem:[%s2962] sm:$0xff]
        %v2964 = vld [vmem:[%s2962 + $0x8] sm:$0xff]
        %v2965 = vld [vmem:[%s2962 + $0x10] sm:$0xff]
        %v2966 = vld [vmem:[%s2962 + $0x18] sm:$0xff]
        %v2967 = vld [vmem:[%s2962 + $0x20] sm:$0xff]
        %v2968 = vld [vmem:[%s2962 + $0x28] sm:$0xff]
        %v2969 = vld [vmem:[%s2962 + $0x30] sm:$0xff]
        %v2970 = vld [vmem:[%s2962 + $0x38] sm:$0xff]
        %v2971 = vld [vmem:[%s2962 + $0x40] sm:$0xff]
        %v2972 = vld [vmem:[%s2962 + $0x48] sm:$0xff]
        %v2973 = vld [vmem:[%s2962 + $0x50] sm:$0xff]
        %v2974 = vld [vmem:[%s2962 + $0x58] sm:$0xff]
        %v2975 = vld [vmem:[%s2962 + $0x60] sm:$0xff]
        %v2976 = vld [vmem:[%s2962 + $0x68] sm:$0xff]
        %v2977 = vld [vmem:[%s2962 + $0x70] sm:$0xff]
        %v2978 = vld [vmem:[%s2962 + $0x78] sm:$0xff]
        %v2979 = vld [vmem:[%s2962 + $0x80] sm:$0xff]
        %v2980 = vld [vmem:[%s2962 + $0x88] sm:$0xff]
        %v2981 = vld [vmem:[%s2962 + $0x90] sm:$0xff]
        %v2982 = vld [vmem:[%s2962 + $0x98] sm:$0xff]
        %v2983 = vld [vmem:[%s2962 + $0xa0] sm:$0xff]
        %v2984 = vld [vmem:[%s2962 + $0xa8] sm:$0xff]
        %v2985 = vld [vmem:[%s2962 + $0xb0] sm:$0xff]
        %v2986 = vld [vmem:[%s2962 + $0xb8] sm:$0xff]
        %v2987 = vld [vmem:[%s2962 + $0xc0] sm:$0xff]
        %v2988 = vld [vmem:[%s2962 + $0xc8] sm:$0xff]
        %v2989 = vld [vmem:[%s2962 + $0xd0] sm:$0xff]
        %v2990 = vld [vmem:[%s2962 + $0xd8] sm:$0xff]
        %v2991 = vld [vmem:[%s2962 + $0xe0] sm:$0xff]
        %v2992 = vld [vmem:[%s2962 + $0xe8] sm:$0xff]
        %v2993 = vld [vmem:[%s2962 + $0xf0] sm:$0xff]
        %v2994 = vld [vmem:[%s2962 + $0xf8] sm:$0xff]
        %v2995 = vlaneseq
        %v2996 = vshrl.u32 %v2995, 7
        %v2997 = vsub.s32 1, %v2996
        %v2998 = vrot.slane %v544, %v2997
        %v2999 = vlaneseq
        %v3000 = vshrl.u32 %v2999, 7
        %v3001 = vsub.s32 1, %v3000
        %v3002 = vrot.slane %v545, %v3001
        %v3035 = vunpack.c.l.b16 %v2963
        %v3036 = vunpack.c.h.b16 %v2963
        %v3037 = vunpack.c.l.b16 %v2964
        %v3038 = vunpack.c.h.b16 %v2964
        %v3039 = vunpack.c.l.b16 %v2965
        %v3040 = vunpack.c.h.b16 %v2965
        %v3041 = vunpack.c.l.b16 %v2966
        %v3042 = vunpack.c.h.b16 %v2966
        %v3043 = vunpack.c.l.b16 %v2967
        %v3044 = vunpack.c.h.b16 %v2967
        %v3045 = vunpack.c.l.b16 %v2968
        %v3046 = vunpack.c.h.b16 %v2968
        %v3047 = vunpack.c.l.b16 %v2969
        %v3048 = vunpack.c.h.b16 %v2969
        %v3049 = vunpack.c.l.b16 %v2970
        %v3050 = vunpack.c.h.b16 %v2970
        %v3051 = vunpack.c.l.b16 %v2971
        %v3052 = vunpack.c.h.b16 %v2971
        %v3053 = vunpack.c.l.b16 %v2972
        %v3054 = vunpack.c.h.b16 %v2972
        %v3055 = vunpack.c.l.b16 %v2973
        %v3056 = vunpack.c.h.b16 %v2973
        %v3057 = vunpack.c.l.b16 %v2974
        %v3058 = vunpack.c.h.b16 %v2974
        %v3059 = vunpack.c.l.b16 %v2975
        %v3060 = vunpack.c.h.b16 %v2975
        %v3061 = vunpack.c.l.b16 %v2976
        %v3062 = vunpack.c.h.b16 %v2976
        %v3063 = vunpack.c.l.b16 %v2977
        %v3064 = vunpack.c.h.b16 %v2977
        %v3065 = vunpack.c.l.b16 %v2978
        %v3066 = vunpack.c.h.b16 %v2978
        %v3067 = vunpack.c.l.b16 %v2979
        %v3068 = vunpack.c.h.b16 %v2979
        %v3069 = vunpack.c.l.b16 %v2980
        %v3070 = vunpack.c.h.b16 %v2980
        %v3071 = vunpack.c.l.b16 %v2981
        %v3072 = vunpack.c.h.b16 %v2981
        %v3073 = vunpack.c.l.b16 %v2982
        %v3074 = vunpack.c.h.b16 %v2982
        %v3075 = vunpack.c.l.b16 %v2983
        %v3076 = vunpack.c.h.b16 %v2983
        %v3077 = vunpack.c.l.b16 %v2984
        %v3078 = vunpack.c.h.b16 %v2984
        %v3079 = vunpack.c.l.b16 %v2985
        %v3080 = vunpack.c.h.b16 %v2985
        %v3081 = vunpack.c.l.b16 %v2986
        %v3082 = vunpack.c.h.b16 %v2986
        %v3083 = vunpack.c.l.b16 %v2987
        %v3084 = vunpack.c.h.b16 %v2987
        %v3085 = vunpack.c.l.b16 %v2988
        %v3086 = vunpack.c.h.b16 %v2988
        %v3087 = vunpack.c.l.b16 %v2989
        %v3088 = vunpack.c.h.b16 %v2989
        %v3089 = vunpack.c.l.b16 %v2990
        %v3090 = vunpack.c.h.b16 %v2990
        %v3091 = vunpack.c.l.b16 %v2991
        %v3092 = vunpack.c.h.b16 %v2991
        %v3093 = vunpack.c.l.b16 %v2992
        %v3094 = vunpack.c.h.b16 %v2992
        %v3095 = vunpack.c.l.b16 %v2993
        %v3096 = vunpack.c.h.b16 %v2993
        %v3097 = vunpack.c.l.b16 %v2994
        %v3098 = vunpack.c.h.b16 %v2994
        %v3099 = vpack.c.b16 %v3037, %v3035
        %v3100 = vpack.c.b16 %v3038, %v3036
        %v3101 = vpack.c.b16 %v3041, %v3039
        %v3102 = vpack.c.b16 %v3042, %v3040
        %v3103 = vpack.c.b16 %v3045, %v3043
        %v3104 = vpack.c.b16 %v3046, %v3044
        %v3105 = vpack.c.b16 %v3049, %v3047
        %v3106 = vpack.c.b16 %v3050, %v3048
        %v3107 = vpack.c.b16 %v3053, %v3051
        %v3108 = vpack.c.b16 %v3054, %v3052
        %v3109 = vpack.c.b16 %v3057, %v3055
        %v3110 = vpack.c.b16 %v3058, %v3056
        %v3111 = vpack.c.b16 %v3061, %v3059
        %v3112 = vpack.c.b16 %v3062, %v3060
        %v3113 = vpack.c.b16 %v3065, %v3063
        %v3114 = vpack.c.b16 %v3066, %v3064
        %v3115 = vpack.c.b16 %v3069, %v3067
        %v3116 = vpack.c.b16 %v3070, %v3068
        %v3117 = vpack.c.b16 %v3073, %v3071
        %v3118 = vpack.c.b16 %v3074, %v3072
        %v3119 = vpack.c.b16 %v3077, %v3075
        %v3120 = vpack.c.b16 %v3078, %v3076
        %v3121 = vpack.c.b16 %v3081, %v3079
        %v3122 = vpack.c.b16 %v3082, %v3080
        %v3123 = vpack.c.b16 %v3085, %v3083
        %v3124 = vpack.c.b16 %v3086, %v3084
        %v3125 = vpack.c.b16 %v3089, %v3087
        %v3126 = vpack.c.b16 %v3090, %v3088
        %v3127 = vpack.c.b16 %v3093, %v3091
        %v3128 = vpack.c.b16 %v3094, %v3092
        %v3129 = vpack.c.b16 %v3097, %v3095
        %v3130 = vpack.c.b16 %v3098, %v3096
        %3163 = vmatprep.subr.bf16.mxu0 %v3100
        %3164 = vmatpush1.bf16.msra.mxu0 %v3099
        %3165 = vmatprep.subr.bf16.mxu0 %v3102
        %3166 = vmatpush1.bf16.msra.mxu0 %v3101
        %3167 = vmatprep.subr.bf16.mxu0 %v3104
        %3168 = vmatpush1.bf16.msra.mxu0 %v3103
        %3169 = vmatprep.subr.bf16.mxu0 %v3106
        %3170 = vmatpush1.bf16.msra.mxu0 %v3105
        %3171 = vmatprep.subr.bf16.mxu0 %v3108
        %3172 = vmatpush1.bf16.msra.mxu0 %v3107
        %3173 = vmatprep.subr.bf16.mxu0 %v3110
        %3174 = vmatpush1.bf16.msra.mxu0 %v3109
        %3175 = vmatprep.subr.bf16.mxu0 %v3112
        %3176 = vmatpush1.bf16.msra.mxu0 %v3111
        %3177 = vmatprep.subr.bf16.mxu0 %v3114
        %3178 = vmatpush1.bf16.msra.mxu0 %v3113
        %3179 = vmatprep.subr.bf16.mxu0 %v3116
        %3180 = vmatpush1.bf16.msra.mxu0 %v3115
        %3181 = vmatprep.subr.bf16.mxu0 %v3118
        %3182 = vmatpush1.bf16.msra.mxu0 %v3117
        %3183 = vmatprep.subr.bf16.mxu0 %v3120
        %3184 = vmatpush1.bf16.msra.mxu0 %v3119
        %3185 = vmatprep.subr.bf16.mxu0 %v3122
        %3186 = vmatpush1.bf16.msra.mxu0 %v3121
        %3187 = vmatprep.subr.bf16.mxu0 %v3124
        %3188 = vmatpush1.bf16.msra.mxu0 %v3123
        %3189 = vmatprep.subr.bf16.mxu0 %v3126
        %3190 = vmatpush1.bf16.msra.mxu0 %v3125
        %3191 = vmatprep.subr.bf16.mxu0 %v3128
        %3192 = vmatpush1.bf16.msra.mxu0 %v3127
        %3193 = vmatprep.subr.bf16.mxu0 %v3130
        %3194 = vmatpush1.bf16.msra.mxu0 %v3129
        %3195 = vmatprep.mubr.bf16.mxu0 %v2961
        %3196 = vmatmul.mubr.bf16.gmra.mrb[0].mxu0 %v2960
        %v3197 = vpop.f32.mrb[0].mxu0
        %v3198 = vadd.f32 %v2998, %v3197
        %v3199 = vpop.f32.mrb[0].mxu0
        %v3200 = vadd.f32 %v3002, %v3199
        %v3201 = vpop.f32.mrb[0].mxu0
        %v3202 = vpop.f32.mrb[0].mxu0
        %3203 = vdwg.mxu0
        %v3204 = vmax.f32 %v3198, 0.0
        %v3205 = vmax.f32 %v3200, 0.0
        %v3206 = vpack.c.bf16 %v3204, %v3204
        %v3207 = vpack.c.bf16 %v3205, %v3205
        %s3208 = scalar_lea.vmem [#allocation9], 512
        %v3209 = vld [vmem:[%s3208] sm:$0xff]
        %v3210 = vld [vmem:[%s3208 + $0x8] sm:$0xff]
        %v3211 = vld [vmem:[%s3208 + $0x10] sm:$0xff]
        %v3212 = vld [vmem:[%s3208 + $0x18] sm:$0xff]
        %v3213 = vld [vmem:[%s3208 + $0x20] sm:$0xff]
        %v3214 = vld [vmem:[%s3208 + $0x28] sm:$0xff]
        %v3215 = vld [vmem:[%s3208 + $0x30] sm:$0xff]
        %v3216 = vld [vmem:[%s3208 + $0x38] sm:$0xff]
        %v3217 = vld [vmem:[%s3208 + $0x40] sm:$0xff]
        %v3218 = vld [vmem:[%s3208 + $0x48] sm:$0xff]
        %v3219 = vld [vmem:[%s3208 + $0x50] sm:$0xff]
        %v3220 = vld [vmem:[%s3208 + $0x58] sm:$0xff]
        %v3221 = vld [vmem:[%s3208 + $0x60] sm:$0xff]
        %v3222 = vld [vmem:[%s3208 + $0x68] sm:$0xff]
        %v3223 = vld [vmem:[%s3208 + $0x70] sm:$0xff]
        %v3224 = vld [vmem:[%s3208 + $0x78] sm:$0xff]
        %v3225 = vld [vmem:[%s3208 + $0x80] sm:$0xff]
        %v3226 = vld [vmem:[%s3208 + $0x88] sm:$0xff]
        %v3227 = vld [vmem:[%s3208 + $0x90] sm:$0xff]
        %v3228 = vld [vmem:[%s3208 + $0x98] sm:$0xff]
        %v3229 = vld [vmem:[%s3208 + $0xa0] sm:$0xff]
        %v3230 = vld [vmem:[%s3208 + $0xa8] sm:$0xff]
        %v3231 = vld [vmem:[%s3208 + $0xb0] sm:$0xff]
        %v3232 = vld [vmem:[%s3208 + $0xb8] sm:$0xff]
        %v3233 = vld [vmem:[%s3208 + $0xc0] sm:$0xff]
        %v3234 = vld [vmem:[%s3208 + $0xc8] sm:$0xff]
        %v3235 = vld [vmem:[%s3208 + $0xd0] sm:$0xff]
        %v3236 = vld [vmem:[%s3208 + $0xd8] sm:$0xff]
        %v3237 = vld [vmem:[%s3208 + $0xe0] sm:$0xff]
        %v3238 = vld [vmem:[%s3208 + $0xe8] sm:$0xff]
        %v3239 = vld [vmem:[%s3208 + $0xf0] sm:$0xff]
        %v3240 = vld [vmem:[%s3208 + $0xf8] sm:$0xff]
        %v3241 = vlaneseq
        %v3242 = vshrl.u32 %v3241, 7
        %v3243 = vsub.s32 2, %v3242
        %v3244 = vrot.slane %v544, %v3243
        %v3245 = vlaneseq
        %v3246 = vshrl.u32 %v3245, 7
        %v3247 = vsub.s32 2, %v3246
        %v3248 = vrot.slane %v545, %v3247
        %v3281 = vunpack.c.l.b16 %v3209
        %v3282 = vunpack.c.h.b16 %v3209
        %v3283 = vunpack.c.l.b16 %v3210
        %v3284 = vunpack.c.h.b16 %v3210
        %v3285 = vunpack.c.l.b16 %v3211
        %v3286 = vunpack.c.h.b16 %v3211
        %v3287 = vunpack.c.l.b16 %v3212
        %v3288 = vunpack.c.h.b16 %v3212
        %v3289 = vunpack.c.l.b16 %v3213
        %v3290 = vunpack.c.h.b16 %v3213
        %v3291 = vunpack.c.l.b16 %v3214
        %v3292 = vunpack.c.h.b16 %v3214
        %v3293 = vunpack.c.l.b16 %v3215
        %v3294 = vunpack.c.h.b16 %v3215
        %v3295 = vunpack.c.l.b16 %v3216
        %v3296 = vunpack.c.h.b16 %v3216
        %v3297 = vunpack.c.l.b16 %v3217
        %v3298 = vunpack.c.h.b16 %v3217
        %v3299 = vunpack.c.l.b16 %v3218
        %v3300 = vunpack.c.h.b16 %v3218
        %v3301 = vunpack.c.l.b16 %v3219
        %v3302 = vunpack.c.h.b16 %v3219
        %v3303 = vunpack.c.l.b16 %v3220
        %v3304 = vunpack.c.h.b16 %v3220
        %v3305 = vunpack.c.l.b16 %v3221
        %v3306 = vunpack.c.h.b16 %v3221
        %v3307 = vunpack.c.l.b16 %v3222
        %v3308 = vunpack.c.h.b16 %v3222
        %v3309 = vunpack.c.l.b16 %v3223
        %v3310 = vunpack.c.h.b16 %v3223
        %v3311 = vunpack.c.l.b16 %v3224
        %v3312 = vunpack.c.h.b16 %v3224
        %v3313 = vunpack.c.l.b16 %v3225
        %v3314 = vunpack.c.h.b16 %v3225
        %v3315 = vunpack.c.l.b16 %v3226
        %v3316 = vunpack.c.h.b16 %v3226
        %v3317 = vunpack.c.l.b16 %v3227
        %v3318 = vunpack.c.h.b16 %v3227
        %v3319 = vunpack.c.l.b16 %v3228
        %v3320 = vunpack.c.h.b16 %v3228
        %v3321 = vunpack.c.l.b16 %v3229
        %v3322 = vunpack.c.h.b16 %v3229
        %v3323 = vunpack.c.l.b16 %v3230
        %v3324 = vunpack.c.h.b16 %v3230
        %v3325 = vunpack.c.l.b16 %v3231
        %v3326 = vunpack.c.h.b16 %v3231
        %v3327 = vunpack.c.l.b16 %v3232
        %v3328 = vunpack.c.h.b16 %v3232
        %v3329 = vunpack.c.l.b16 %v3233
        %v3330 = vunpack.c.h.b16 %v3233
        %v3331 = vunpack.c.l.b16 %v3234
        %v3332 = vunpack.c.h.b16 %v3234
        %v3333 = vunpack.c.l.b16 %v3235
        %v3334 = vunpack.c.h.b16 %v3235
        %v3335 = vunpack.c.l.b16 %v3236
        %v3336 = vunpack.c.h.b16 %v3236
        %v3337 = vunpack.c.l.b16 %v3237
        %v3338 = vunpack.c.h.b16 %v3237
        %v3339 = vunpack.c.l.b16 %v3238
        %v3340 = vunpack.c.h.b16 %v3238
        %v3341 = vunpack.c.l.b16 %v3239
        %v3342 = vunpack.c.h.b16 %v3239
        %v3343 = vunpack.c.l.b16 %v3240
        %v3344 = vunpack.c.h.b16 %v3240
        %v3345 = vpack.c.b16 %v3283, %v3281
        %v3346 = vpack.c.b16 %v3284, %v3282
        %v3347 = vpack.c.b16 %v3287, %v3285
        %v3348 = vpack.c.b16 %v3288, %v3286
        %v3349 = vpack.c.b16 %v3291, %v3289
        %v3350 = vpack.c.b16 %v3292, %v3290
        %v3351 = vpack.c.b16 %v3295, %v3293
        %v3352 = vpack.c.b16 %v3296, %v3294
        %v3353 = vpack.c.b16 %v3299, %v3297
        %v3354 = vpack.c.b16 %v3300, %v3298
        %v3355 = vpack.c.b16 %v3303, %v3301
        %v3356 = vpack.c.b16 %v3304, %v3302
        %v3357 = vpack.c.b16 %v3307, %v3305
        %v3358 = vpack.c.b16 %v3308, %v3306
        %v3359 = vpack.c.b16 %v3311, %v3309
        %v3360 = vpack.c.b16 %v3312, %v3310
        %v3361 = vpack.c.b16 %v3315, %v3313
        %v3362 = vpack.c.b16 %v3316, %v3314
        %v3363 = vpack.c.b16 %v3319, %v3317
        %v3364 = vpack.c.b16 %v3320, %v3318
        %v3365 = vpack.c.b16 %v3323, %v3321
        %v3366 = vpack.c.b16 %v3324, %v3322
        %v3367 = vpack.c.b16 %v3327, %v3325
        %v3368 = vpack.c.b16 %v3328, %v3326
        %v3369 = vpack.c.b16 %v3331, %v3329
        %v3370 = vpack.c.b16 %v3332, %v3330
        %v3371 = vpack.c.b16 %v3335, %v3333
        %v3372 = vpack.c.b16 %v3336, %v3334
        %v3373 = vpack.c.b16 %v3339, %v3337
        %v3374 = vpack.c.b16 %v3340, %v3338
        %v3375 = vpack.c.b16 %v3343, %v3341
        %v3376 = vpack.c.b16 %v3344, %v3342
        %3409 = vmatprep.subr.bf16.mxu0 %v3346
        %3410 = vmatpush1.bf16.msra.mxu0 %v3345
        %3411 = vmatprep.subr.bf16.mxu0 %v3348
        %3412 = vmatpush1.bf16.msra.mxu0 %v3347
        %3413 = vmatprep.subr.bf16.mxu0 %v3350
        %3414 = vmatpush1.bf16.msra.mxu0 %v3349
        %3415 = vmatprep.subr.bf16.mxu0 %v3352
        %3416 = vmatpush1.bf16.msra.mxu0 %v3351
        %3417 = vmatprep.subr.bf16.mxu0 %v3354
        %3418 = vmatpush1.bf16.msra.mxu0 %v3353
        %3419 = vmatprep.subr.bf16.mxu0 %v3356
        %3420 = vmatpush1.bf16.msra.mxu0 %v3355
        %3421 = vmatprep.subr.bf16.mxu0 %v3358
        %3422 = vmatpush1.bf16.msra.mxu0 %v3357
        %3423 = vmatprep.subr.bf16.mxu0 %v3360
        %3424 = vmatpush1.bf16.msra.mxu0 %v3359
        %3425 = vmatprep.subr.bf16.mxu0 %v3362
        %3426 = vmatpush1.bf16.msra.mxu0 %v3361
        %3427 = vmatprep.subr.bf16.mxu0 %v3364
        %3428 = vmatpush1.bf16.msra.mxu0 %v3363
        %3429 = vmatprep.subr.bf16.mxu0 %v3366
        %3430 = vmatpush1.bf16.msra.mxu0 %v3365
        %3431 = vmatprep.subr.bf16.mxu0 %v3368
        %3432 = vmatpush1.bf16.msra.mxu0 %v3367
        %3433 = vmatprep.subr.bf16.mxu0 %v3370
        %3434 = vmatpush1.bf16.msra.mxu0 %v3369
        %3435 = vmatprep.subr.bf16.mxu0 %v3372
        %3436 = vmatpush1.bf16.msra.mxu0 %v3371
        %3437 = vmatprep.subr.bf16.mxu0 %v3374
        %3438 = vmatpush1.bf16.msra.mxu0 %v3373
        %3439 = vmatprep.subr.bf16.mxu0 %v3376
        %3440 = vmatpush1.bf16.msra.mxu0 %v3375
        %3441 = vmatprep.mubr.bf16.mxu0 %v3207
        %3442 = vmatmul.mubr.bf16.gmra.mrb[0].mxu0 %v3206
        %v3443 = vpop.f32.mrb[0].mxu0
        %v3444 = vadd.f32 %v3244, %v3443
        %v3445 = vpop.f32.mrb[0].mxu0
        %v3446 = vadd.f32 %v3248, %v3445
        %v3447 = vpop.f32.mrb[0].mxu0
        %v3448 = vpop.f32.mrb[0].mxu0
        %3449 = vdwg.mxu0
        %v3450 = vadd.f32 %v3444, %v2958
        %v3451 = vadd.f32 %v3446, %v2959
        %v3452 = vadd.f32 %v3450, %v3451
        %3453 = vadd.xlane.f32.xlu0 %v3452
        %v3454 = vpop.xlane.xlu0 %3453
        %v3455 = vmul.f32 %v3454, %v695
        %v3456 = vsub.f32 %v3450, %v3455
        %v3457 = vsub.f32 %v3451, %v3455
        %v3458 = vmul.f32 %v3456, %v3456
        %v3459 = vmul.f32 %v3457, %v3457
        %v3460 = vadd.f32 %v3458, %v3459
        %3461 = vadd.xlane.f32.xlu0 %v3460
        %v3462 = vpop.xlane.xlu0 %3461
        %v3463 = vmul.f32 %v3462, %v695
        %v3464 = vadd.f32 %v3463, 1e-05
        %v3465 = vrsqrt.pop %v3464
        %v3466 = vmul.f32 %v3456, %v3465
        %v3467 = vmul.f32 %v3457, %v3465
        %v3468 = vlaneseq
        %v3469 = vshrl.u32 %v3468, 7
        %v3470 = vsub.s32 3, %v3469
        %v3471 = vrot.slane %v544, %v3470
        %v3472 = vlaneseq
        %v3473 = vshrl.u32 %v3472, 7
        %v3474 = vsub.s32 3, %v3473
        %v3475 = vrot.slane %v545, %v3474
        %v3476 = vmul.f32 %v3466, %v3471
        %v3477 = vmul.f32 %v3467, %v3475
        %v3478 = vlaneseq
        %v3479 = vshrl.u32 %v3478, 7
        %v3480 = vsub.s32 4, %v3479
        %v3481 = vrot.slane %v544, %v3480
        %v3482 = vlaneseq
        %v3483 = vshrl.u32 %v3482, 7
        %v3484 = vsub.s32 4, %v3483
        %v3485 = vrot.slane %v545, %v3484
        %v3486 = vadd.f32 %v3476, %v3481
        %v3487 = vadd.f32 %v3477, %v3485
        %v3488 = vpack.c.bf16 %v3486, %v3486
        %v3489 = vpack.c.bf16 %v3487, %v3487
        %s3490 = scalar_lea.vmem [#allocation9], 768
        %v3491 = vld [vmem:[%s3490] sm:$0xff]
        %v3492 = vld [vmem:[%s3490 + $0x8] sm:$0xff]
        %v3493 = vld [vmem:[%s3490 + $0x10] sm:$0xff]
        %v3494 = vld [vmem:[%s3490 + $0x18] sm:$0xff]
        %v3495 = vld [vmem:[%s3490 + $0x20] sm:$0xff]
        %v3496 = vld [vmem:[%s3490 + $0x28] sm:$0xff]
        %v3497 = vld [vmem:[%s3490 + $0x30] sm:$0xff]
        %v3498 = vld [vmem:[%s3490 + $0x38] sm:$0xff]
        %v3499 = vld [vmem:[%s3490 + $0x40] sm:$0xff]
        %v3500 = vld [vmem:[%s3490 + $0x48] sm:$0xff]
        %v3501 = vld [vmem:[%s3490 + $0x50] sm:$0xff]
        %v3502 = vld [vmem:[%s3490 + $0x58] sm:$0xff]
        %v3503 = vld [vmem:[%s3490 + $0x60] sm:$0xff]
        %v3504 = vld [vmem:[%s3490 + $0x68] sm:$0xff]
        %v3505 = vld [vmem:[%s3490 + $0x70] sm:$0xff]
        %v3506 = vld [vmem:[%s3490 + $0x78] sm:$0xff]
        %v3507 = vld [vmem:[%s3490 + $0x80] sm:$0xff]
        %v3508 = vld [vmem:[%s3490 + $0x88] sm:$0xff]
        %v3509 = vld [vmem:[%s3490 + $0x90] sm:$0xff]
        %v3510 = vld [vmem:[%s3490 + $0x98] sm:$0xff]
        %v3511 = vld [vmem:[%s3490 + $0xa0] sm:$0xff]
        %v3512 = vld [vmem:[%s3490 + $0xa8] sm:$0xff]
        %v3513 = vld [vmem:[%s3490 + $0xb0] sm:$0xff]
        %v3514 = vld [vmem:[%s3490 + $0xb8] sm:$0xff]
        %v3515 = vld [vmem:[%s3490 + $0xc0] sm:$0xff]
        %v3516 = vld [vmem:[%s3490 + $0xc8] sm:$0xff]
        %v3517 = vld [vmem:[%s3490 + $0xd0] sm:$0xff]
        %v3518 = vld [vmem:[%s3490 + $0xd8] sm:$0xff]
        %v3519 = vld [vmem:[%s3490 + $0xe0] sm:$0xff]
        %v3520 = vld [vmem:[%s3490 + $0xe8] sm:$0xff]
        %v3521 = vld [vmem:[%s3490 + $0xf0] sm:$0xff]
        %v3522 = vld [vmem:[%s3490 + $0xf8] sm:$0xff]
        %v3523 = vlaneseq
        %v3524 = vshrl.u32 %v3523, 7
        %v3525 = vsub.s32 5, %v3524
        %v3526 = vrot.slane %v544, %v3525
        %v3527 = vlaneseq
        %v3528 = vshrl.u32 %v3527, 7
        %v3529 = vsub.s32 5, %v3528
        %v3530 = vrot.slane %v545, %v3529
        %v3563 = vunpack.c.l.b16 %v3491
        %v3564 = vunpack.c.h.b16 %v3491
        %v3565 = vunpack.c.l.b16 %v3492
        %v3566 = vunpack.c.h.b16 %v3492
        %v3567 = vunpack.c.l.b16 %v3493
        %v3568 = vunpack.c.h.b16 %v3493
        %v3569 = vunpack.c.l.b16 %v3494
        %v3570 = vunpack.c.h.b16 %v3494
        %v3571 = vunpack.c.l.b16 %v3495
        %v3572 = vunpack.c.h.b16 %v3495
        %v3573 = vunpack.c.l.b16 %v3496
        %v3574 = vunpack.c.h.b16 %v3496
        %v3575 = vunpack.c.l.b16 %v3497
        %v3576 = vunpack.c.h.b16 %v3497
        %v3577 = vunpack.c.l.b16 %v3498
        %v3578 = vunpack.c.h.b16 %v3498
        %v3579 = vunpack.c.l.b16 %v3499
        %v3580 = vunpack.c.h.b16 %v3499
        %v3581 = vunpack.c.l.b16 %v3500
        %v3582 = vunpack.c.h.b16 %v3500
        %v3583 = vunpack.c.l.b16 %v3501
        %v3584 = vunpack.c.h.b16 %v3501
        %v3585 = vunpack.c.l.b16 %v3502
        %v3586 = vunpack.c.h.b16 %v3502
        %v3587 = vunpack.c.l.b16 %v3503
        %v3588 = vunpack.c.h.b16 %v3503
        %v3589 = vunpack.c.l.b16 %v3504
        %v3590 = vunpack.c.h.b16 %v3504
        %v3591 = vunpack.c.l.b16 %v3505
        %v3592 = vunpack.c.h.b16 %v3505
        %v3593 = vunpack.c.l.b16 %v3506
        %v3594 = vunpack.c.h.b16 %v3506
        %v3595 = vunpack.c.l.b16 %v3507
        %v3596 = vunpack.c.h.b16 %v3507
        %v3597 = vunpack.c.l.b16 %v3508
        %v3598 = vunpack.c.h.b16 %v3508
        %v3599 = vunpack.c.l.b16 %v3509
        %v3600 = vunpack.c.h.b16 %v3509
        %v3601 = vunpack.c.l.b16 %v3510
        %v3602 = vunpack.c.h.b16 %v3510
        %v3603 = vunpack.c.l.b16 %v3511
        %v3604 = vunpack.c.h.b16 %v3511
        %v3605 = vunpack.c.l.b16 %v3512
        %v3606 = vunpack.c.h.b16 %v3512
        %v3607 = vunpack.c.l.b16 %v3513
        %v3608 = vunpack.c.h.b16 %v3513
        %v3609 = vunpack.c.l.b16 %v3514
        %v3610 = vunpack.c.h.b16 %v3514
        %v3611 = vunpack.c.l.b16 %v3515
        %v3612 = vunpack.c.h.b16 %v3515
        %v3613 = vunpack.c.l.b16 %v3516
        %v3614 = vunpack.c.h.b16 %v3516
        %v3615 = vunpack.c.l.b16 %v3517
        %v3616 = vunpack.c.h.b16 %v3517
        %v3617 = vunpack.c.l.b16 %v3518
        %v3618 = vunpack.c.h.b16 %v3518
        %v3619 = vunpack.c.l.b16 %v3519
        %v3620 = vunpack.c.h.b16 %v3519
        %v3621 = vunpack.c.l.b16 %v3520
        %v3622 = vunpack.c.h.b16 %v3520
        %v3623 = vunpack.c.l.b16 %v3521
        %v3624 = vunpack.c.h.b16 %v3521
        %v3625 = vunpack.c.l.b16 %v3522
        %v3626 = vunpack.c.h.b16 %v3522
        %v3627 = vpack.c.b16 %v3565, %v3563
        %v3628 = vpack.c.b16 %v3566, %v3564
        %v3629 = vpack.c.b16 %v3569, %v3567
        %v3630 = vpack.c.b16 %v3570, %v3568
        %v3631 = vpack.c.b16 %v3573, %v3571
        %v3632 = vpack.c.b16 %v3574, %v3572
        %v3633 = vpack.c.b16 %v3577, %v3575
        %v3634 = vpack.c.b16 %v3578, %v3576
        %v3635 = vpack.c.b16 %v3581, %v3579
        %v3636 = vpack.c.b16 %v3582, %v3580
        %v3637 = vpack.c.b16 %v3585, %v3583
        %v3638 = vpack.c.b16 %v3586, %v3584
        %v3639 = vpack.c.b16 %v3589, %v3587
        %v3640 = vpack.c.b16 %v3590, %v3588
        %v3641 = vpack.c.b16 %v3593, %v3591
        %v3642 = vpack.c.b16 %v3594, %v3592
        %v3643 = vpack.c.b16 %v3597, %v3595
        %v3644 = vpack.c.b16 %v3598, %v3596
        %v3645 = vpack.c.b16 %v3601, %v3599
        %v3646 = vpack.c.b16 %v3602, %v3600
        %v3647 = vpack.c.b16 %v3605, %v3603
        %v3648 = vpack.c.b16 %v3606, %v3604
        %v3649 = vpack.c.b16 %v3609, %v3607
        %v3650 = vpack.c.b16 %v3610, %v3608
        %v3651 = vpack.c.b16 %v3613, %v3611
        %v3652 = vpack.c.b16 %v3614, %v3612
        %v3653 = vpack.c.b16 %v3617, %v3615
        %v3654 = vpack.c.b16 %v3618, %v3616
        %v3655 = vpack.c.b16 %v3621, %v3619
        %v3656 = vpack.c.b16 %v3622, %v3620
        %v3657 = vpack.c.b16 %v3625, %v3623
        %v3658 = vpack.c.b16 %v3626, %v3624
        %3691 = vmatprep.subr.bf16.mxu0 %v3628
        %3692 = vmatpush1.bf16.msra.mxu0 %v3627
        %3693 = vmatprep.subr.bf16.mxu0 %v3630
        %3694 = vmatpush1.bf16.msra.mxu0 %v3629
        %3695 = vmatprep.subr.bf16.mxu0 %v3632
        %3696 = vmatpush1.bf16.msra.mxu0 %v3631
        %3697 = vmatprep.subr.bf16.mxu0 %v3634
        %3698 = vmatpush1.bf16.msra.mxu0 %v3633
        %3699 = vmatprep.subr.bf16.mxu0 %v3636
        %3700 = vmatpush1.bf16.msra.mxu0 %v3635
        %3701 = vmatprep.subr.bf16.mxu0 %v3638
        %3702 = vmatpush1.bf16.msra.mxu0 %v3637
        %3703 = vmatprep.subr.bf16.mxu0 %v3640
        %3704 = vmatpush1.bf16.msra.mxu0 %v3639
        %3705 = vmatprep.subr.bf16.mxu0 %v3642
        %3706 = vmatpush1.bf16.msra.mxu0 %v3641
        %3707 = vmatprep.subr.bf16.mxu0 %v3644
        %3708 = vmatpush1.bf16.msra.mxu0 %v3643
        %3709 = vmatprep.subr.bf16.mxu0 %v3646
        %3710 = vmatpush1.bf16.msra.mxu0 %v3645
        %3711 = vmatprep.subr.bf16.mxu0 %v3648
        %3712 = vmatpush1.bf16.msra.mxu0 %v3647
        %3713 = vmatprep.subr.bf16.mxu0 %v3650
        %3714 = vmatpush1.bf16.msra.mxu0 %v3649
        %3715 = vmatprep.subr.bf16.mxu0 %v3652
        %3716 = vmatpush1.bf16.msra.mxu0 %v3651
        %3717 = vmatprep.subr.bf16.mxu0 %v3654
        %3718 = vmatpush1.bf16.msra.mxu0 %v3653
        %3719 = vmatprep.subr.bf16.mxu0 %v3656
        %3720 = vmatpush1.bf16.msra.mxu0 %v3655
        %3721 = vmatprep.subr.bf16.mxu0 %v3658
        %3722 = vmatpush1.bf16.msra.mxu0 %v3657
        %3723 = vmatprep.mubr.bf16.mxu0 %v3489
        %3724 = vmatmul.mubr.bf16.gmra.mrb[0].mxu0 %v3488
        %v3725 = vpop.f32.mrb[0].mxu0
        %v3726 = vadd.f32 %v3526, %v3725
        %v3727 = vpop.f32.mrb[0].mxu0
        %v3728 = vadd.f32 %v3530, %v3727
        %v3729 = vpop.f32.mrb[0].mxu0
        %v3730 = vpop.f32.mrb[0].mxu0
        %3731 = vdwg.mxu0
        %v3732 = vmax.f32 %v3726, 0.0
        %v3733 = vmax.f32 %v3728, 0.0
        %v3734 = vpack.c.bf16 %v3732, %v3732
        %v3735 = vpack.c.bf16 %v3733, %v3733
        %v3736 = vld [vmem:[#allocation15] sm:$0xf]
        %v3737 = vld [vmem:[#allocation15 + $0x4] sm:$0xf]
        %v3738 = vld [vmem:[#allocation15 + $0x8] sm:$0xf]
        %v3739 = vld [vmem:[#allocation15 + $0xc] sm:$0xf]
        %v3740 = vld [vmem:[#allocation15 + $0x10] sm:$0xf]
        %v3741 = vld [vmem:[#allocation15 + $0x14] sm:$0xf]
        %v3742 = vld [vmem:[#allocation15 + $0x18] sm:$0xf]
        %v3743 = vld [vmem:[#allocation15 + $0x1c] sm:$0xf]
        %v3744 = vld [vmem:[#allocation15 + $0x20] sm:$0xf]
        %v3745 = vld [vmem:[#allocation15 + $0x24] sm:$0xf]
        %v3746 = vld [vmem:[#allocation15 + $0x28] sm:$0xf]
        %v3747 = vld [vmem:[#allocation15 + $0x2c] sm:$0xf]
        %v3748 = vld [vmem:[#allocation15 + $0x30] sm:$0xf]
        %v3749 = vld [vmem:[#allocation15 + $0x34] sm:$0xf]
        %v3750 = vld [vmem:[#allocation15 + $0x38] sm:$0xf]
        %v3751 = vld [vmem:[#allocation15 + $0x3c] sm:$0xf]
        %v3752 = vld [vmem:[#allocation15 + $0x40] sm:$0xf]
        %v3753 = vld [vmem:[#allocation15 + $0x44] sm:$0xf]
        %v3754 = vld [vmem:[#allocation15 + $0x48] sm:$0xf]
        %v3755 = vld [vmem:[#allocation15 + $0x4c] sm:$0xf]
        %v3756 = vld [vmem:[#allocation15 + $0x50] sm:$0xf]
        %v3757 = vld [vmem:[#allocation15 + $0x54] sm:$0xf]
        %v3758 = vld [vmem:[#allocation15 + $0x58] sm:$0xf]
        %v3759 = vld [vmem:[#allocation15 + $0x5c] sm:$0xf]
        %v3760 = vld [vmem:[#allocation15 + $0x60] sm:$0xf]
        %v3761 = vld [vmem:[#allocation15 + $0x64] sm:$0xf]
        %v3762 = vld [vmem:[#allocation15 + $0x68] sm:$0xf]
        %v3763 = vld [vmem:[#allocation15 + $0x6c] sm:$0xf]
        %v3764 = vld [vmem:[#allocation15 + $0x70] sm:$0xf]
        %v3765 = vld [vmem:[#allocation15 + $0x74] sm:$0xf]
        %v3766 = vld [vmem:[#allocation15 + $0x78] sm:$0xf]
        %v3767 = vld [vmem:[#allocation15 + $0x7c] sm:$0xf]
        %v3768 = vld [vmem:[%s10] sm:$0x1]
        %v3770 = vlaneseq
        %v3771 = vshrl.u32 %v3770, 7
        %v3772 = vsub.s32 0, %v3771
        %v3773 = vrot.slane %v3768, %v3772
        %v3807 = vunpack.c.l.b16 %v3736
        %v3808 = vunpack.c.l.b16 %v3737
        %v3809 = vunpack.c.l.b16 %v3738
        %v3810 = vunpack.c.l.b16 %v3739
        %v3811 = vunpack.c.l.b16 %v3740
        %v3812 = vunpack.c.l.b16 %v3741
        %v3813 = vunpack.c.l.b16 %v3742
        %v3814 = vunpack.c.l.b16 %v3743
        %v3815 = vunpack.c.l.b16 %v3744
        %v3816 = vunpack.c.l.b16 %v3745
        %v3817 = vunpack.c.l.b16 %v3746
        %v3818 = vunpack.c.l.b16 %v3747
        %v3819 = vunpack.c.l.b16 %v3748
        %v3820 = vunpack.c.l.b16 %v3749
        %v3821 = vunpack.c.l.b16 %v3750
        %v3822 = vunpack.c.l.b16 %v3751
        %v3823 = vunpack.c.l.b16 %v3752
        %v3824 = vunpack.c.l.b16 %v3753
        %v3825 = vunpack.c.l.b16 %v3754
        %v3826 = vunpack.c.l.b16 %v3755
        %v3827 = vunpack.c.l.b16 %v3756
        %v3828 = vunpack.c.l.b16 %v3757
        %v3829 = vunpack.c.l.b16 %v3758
        %v3830 = vunpack.c.l.b16 %v3759
        %v3831 = vunpack.c.l.b16 %v3760
        %v3832 = vunpack.c.l.b16 %v3761
        %v3833 = vunpack.c.l.b16 %v3762
        %v3834 = vunpack.c.l.b16 %v3763
        %v3835 = vunpack.c.l.b16 %v3764
        %v3836 = vunpack.c.l.b16 %v3765
        %v3837 = vunpack.c.l.b16 %v3766
        %v3838 = vunpack.c.l.b16 %v3767
        %v3839 = vpack.c.b16 %v3808, %v3807
        %v3840 = vpack.c.b16 %v3810, %v3809
        %v3841 = vpack.c.b16 %v3812, %v3811
        %v3842 = vpack.c.b16 %v3814, %v3813
        %v3843 = vpack.c.b16 %v3816, %v3815
        %v3844 = vpack.c.b16 %v3818, %v3817
        %v3845 = vpack.c.b16 %v3820, %v3819
        %v3846 = vpack.c.b16 %v3822, %v3821
        %v3847 = vpack.c.b16 %v3824, %v3823
        %v3848 = vpack.c.b16 %v3826, %v3825
        %v3849 = vpack.c.b16 %v3828, %v3827
        %v3850 = vpack.c.b16 %v3830, %v3829
        %v3851 = vpack.c.b16 %v3832, %v3831
        %v3852 = vpack.c.b16 %v3834, %v3833
        %v3853 = vpack.c.b16 %v3836, %v3835
        %v3854 = vpack.c.b16 %v3838, %v3837
        %3871 = vmatprep.subr.bf16.mxu0 0
        %3872 = vmatpush1.bf16.msra.mxu0 %v3839
        %3873 = vmatprep.subr.bf16.mxu0 0
        %3874 = vmatpush1.bf16.msra.mxu0 %v3840
        %3875 = vmatprep.subr.bf16.mxu0 0
        %3876 = vmatpush1.bf16.msra.mxu0 %v3841
        %3877 = vmatprep.subr.bf16.mxu0 0
        %3878 = vmatpush1.bf16.msra.mxu0 %v3842
        %3879 = vmatprep.subr.bf16.mxu0 0
        %3880 = vmatpush1.bf16.msra.mxu0 %v3843
        %3881 = vmatprep.subr.bf16.mxu0 0
        %3882 = vmatpush1.bf16.msra.mxu0 %v3844
        %3883 = vmatprep.subr.bf16.mxu0 0
        %3884 = vmatpush1.bf16.msra.mxu0 %v3845
        %3885 = vmatprep.subr.bf16.mxu0 0
        %3886 = vmatpush1.bf16.msra.mxu0 %v3846
        %3887 = vmatprep.subr.bf16.mxu0 0
        %3888 = vmatpush1.bf16.msra.mxu0 %v3847
        %3889 = vmatprep.subr.bf16.mxu0 0
        %3890 = vmatpush1.bf16.msra.mxu0 %v3848
        %3891 = vmatprep.subr.bf16.mxu0 0
        %3892 = vmatpush1.bf16.msra.mxu0 %v3849
        %3893 = vmatprep.subr.bf16.mxu0 0
        %3894 = vmatpush1.bf16.msra.mxu0 %v3850
        %3895 = vmatprep.subr.bf16.mxu0 0
        %3896 = vmatpush1.bf16.msra.mxu0 %v3851
        %3897 = vmatprep.subr.bf16.mxu0 0
        %3898 = vmatpush1.bf16.msra.mxu0 %v3852
        %3899 = vmatprep.subr.bf16.mxu0 0
        %3900 = vmatpush1.bf16.msra.mxu0 %v3853
        %3901 = vmatprep.subr.bf16.mxu0 0
        %3902 = vmatpush1.bf16.msra.mxu0 %v3854
        %3903 = vmatprep.mubr.bf16.mxu0 %v3735
        %3904 = vmatmul.mubr.bf16.gmra.mrb[0].mxu0 %v3734
        %v3905 = vpop.f32.mrb[0].mxu0
        %v3906 = vadd.f32 %v3773, %v3905
        %v3907 = vpop.f32.mrb[0].mxu0
        %v3908 = vpop.f32.mrb[0].mxu0
        %v3909 = vpop.f32.mrb[0].mxu0
        %3910 = vdwg.mxu0
        %v3911 = vpack.c.bf16 %v3906, %v3906
        %3912 = vst [vmem:[%s537] sm:$0xf] %v3911
        %s3913 = sand.u32 %s288, 1
        %s3914 = scalar_lea.sflag [#allocation5], %s3913
        %s3915 = sand.u32 %s288, 1
        %s3916 = smul.addr %s3915, 4
        %s3917 = scalar_lea.vmem [#allocation17], %s3916
        // Predicated region
        $region97: #{tpu_custom_call.1} parent=63 // pred_check
          %p3918 = pneg %p298
        $region98: #{tpu_custom_call.1} parent=63 // pred_check_branch
          %3920 = sbr.rel (%p3918) target = $region100
        $region99: #{tpu_custom_call.1} parent=63 // pred_region
          %s3922 = ssub.s32 64, 64
          %3923 = vsyncadd %s3914, %s3922
          %s3924 = smul.addr %s34, 64
          %s3925 = scalar_lea.hbm %s11, %s3924
          %s3927 = sshll.u32 %s3917, 4
          %s3928 = int_to_ptr.vmem [resolvable:$true] %s3927
          %3930 = dma.vmem_to_hbm [thread:$0]  %s3928, 64, %s3925, %s3914
        $region100: #{tpu_custom_call.1} parent=63 // pred_fallthru
          _
      $region64: #{tpu_custom_call.1} parent=5 // pred_fallthru
        _
      %p3931 = scmp.le.s32.totalorder 2, %s29
      // Predicated region
      $region101: #{tpu_custom_call.1} parent=5 // pred_check
        %p3932 = pneg %p3931
      $region102: #{tpu_custom_call.1} parent=5 // pred_check_branch
        %3934 = sbr.rel (%p3932) target = $region104
      $region103: #{tpu_custom_call.1} parent=5 // pred_region
        %s3935 = ssub.s32 %s29, 2
        // Predicated region
        $region105: #{tpu_custom_call.1} parent=103 // pred_check
          %p3936 = pneg %p304
        $region106: #{tpu_custom_call.1} parent=103 // pred_check_branch
          %3938 = sbr.rel (%p3936) target = $region108
        $region107: #{tpu_custom_call.1} parent=103 // pred_region
          %s3939 = sand.u32 %s289, 1
          %s3940 = scalar_lea.sflag [#allocation5], %s3939
          %s3941 = sand.u32 %s289, 1
          %s3942 = smul.addr %s3941, 4
          %s3943 = scalar_lea.vmem [#allocation17], %s3942
          %3944 = dma.done %s3940, 64
        $region108: #{tpu_custom_call.1} parent=103 // pred_fallthru
          _
      $region104: #{tpu_custom_call.1} parent=5 // pred_fallthru
        _
    $region6: #{tpu_custom_call.1} parent=1 // loop_footer
      %s33 = sadd.s32 1, %s29
    $region7: #{tpu_custom_call.1} parent=1 // loop_footer_branch
      %28 = sbr.rel target = $region3
    $region8: #{tpu_custom_call.1} parent=1 // loop_exit
      _
    %3945 = vsyncpa [#allocation4], 1
    %s3946 = scalar_lea.sflag [#allocation4], 1
    %3947 = vsyncpa %s3946, 1
    %3948 = vsyncpa [#allocation7], 1
    %s3949 = scalar_lea.sflag [#allocation7], 1
    %3950 = vsyncpa %s3949, 1
    %3951 = vsyncpa [#allocation10], 1
    %3952 = vsyncpa [#allocation13], 1
    %3953 = vsyncpa [#allocation16], 1
    %3954 = vsyncpa [#allocation5], 1
    %s3955 = scalar_lea.sflag [#allocation5], 1
    %3956 = vsyncpa %s3955, 1

</llo_original>
